<compile_context>
chip_gen: v7x
topology: tpu7x:2x2x1
jax: 0.10.0
libtpu: 0.0.40
codegen_flags: <defaults>
</compile_context>

<pallas_src>
import functools

import jax
import jax.numpy as jnp
from jax import lax
from jax.experimental import pallas as pl
from jax.experimental.pallas import tpu as pltpu

_EPS = 1e-5


# ---------------------------------------------------------------------------
# In-kernel helpers
# ---------------------------------------------------------------------------
def _conv3x3(xp, wv_ref, H, W, C):
    """3x3 'same' conv via lane-shifted VPU FMAs, taps merged by lane shift.

    xp     : (N, H+2, (W+4)*C) zero-padded NHWC-flat input value (channels
             innermost on lanes, 1 zero row top/bottom, 2 zero cols per side).
    wv_ref : (3*(4C-1), W*C) merged per-lane tap weights; row g =
             dy*(4C-1)+(s-1) is the summed weight of every (dx, ci) tap whose
             source lane sits exactly s lanes right of the output lane.
    Returns the conv output flattened to (N*H, W*C) float32.
    """
    N = xp.shape[0]
    WC = W * C
    G = 4 * C - 1                              # distinct source-lane shifts
    # Hoist the three dy row-slices out of the tap loop (3 sublane shifts
    # instead of one per tap group).
    rows = [xp[:, dy:dy + H, :] for dy in range(3)]
    z = jnp.zeros((N, H, WC), jnp.float32)
    for dy in range(3):
        xr = rows[dy]
        for si in range(G):
            s = si + 1
            w_row = wv_ref[dy * G + si:dy * G + si + 1, :]     # (1, WC)
            z = z + xr[:, :, s:s + WC] * w_row
    return z.reshape(N * H, WC)


def _bn_scale_shift(z2d, proj_ref, g_ref, b_ref, inv_count):
    """Fold batch-statistics BatchNorm into per-lane scale/shift (computed once).

    z2d      : (N*H, W*C) conv output (+bias).
    proj_ref : (W*C, W*C) channel-periodic projector, proj[a,b]=1 iff a%C==b%C,
               so a single matmul both folds lane sums to per-channel totals
               and broadcasts them back to every lane of that channel.
    g_ref/b_ref : BN gamma/beta pre-tiled to (1, W*C).
    """
    csum = jnp.sum(z2d, axis=0, keepdims=True)                 # (1, WC)
    cssq = jnp.sum(z2d * z2d, axis=0, keepdims=True)           # (1, WC)
    mean = jnp.dot(csum, proj_ref[...],
                   preferred_element_type=jnp.float32) * inv_count
    ex2 = jnp.dot(cssq, proj_ref[...],
                  preferred_element_type=jnp.float32) * inv_count
    var = ex2 - mean * mean                    # biased variance (training mode)
    scale = g_ref[...] * lax.rsqrt(var + _EPS)
    shift = b_ref[...] - mean * scale
    return scale, shift


# ---------------------------------------------------------------------------
# Fused ResidualBlock kernel (single invocation, everything VMEM-resident)
# ---------------------------------------------------------------------------
def _resblock_kernel(xpad_ref, res_ref, wv1_ref, wv2_ref, proj_ref,
                     cb1_ref, g1_ref, be1_ref, cb2_ref, g2_ref, be2_ref,
                     o_ref, hpad_ref, *, H, W, C, inv_count):
    N = xpad_ref.shape[0]
    WC = W * C

    # conv1 (+bias) -> BN1 (batch stats) -> ReLU
    z1 = _conv3x3(xpad_ref[...], wv1_ref, H, W, C) + cb1_ref[...]
    s1, t1 = _bn_scale_shift(z1, proj_ref, g1_ref, be1_ref, inv_count)
    h = jnp.maximum(z1 * s1 + t1, 0.0)                          # (N*H, WC)

    # Zero-pad the activation in a VMEM scratch for conv2 (the intermediate
    # never round-trips HBM; the ~12 KB halo zero-fill is negligible).
    hpad_ref[...] = jnp.zeros_like(hpad_ref)
    hpad_ref[:, 1:1 + H, 2 * C:2 * C + WC] = h.reshape(N, H, WC)

    # conv2 (+bias) -> BN2 -> +residual
    z2 = _conv3x3(hpad_ref[...], wv2_ref, H, W, C) + cb2_ref[...]
    s2, t2 = _bn_scale_shift(z2, proj_ref, g2_ref, be2_ref, inv_count)
    o_ref[...] = z2 * s2 + t2 + res_ref[...]


# ---------------------------------------------------------------------------
# Wrapper-side layout plumbing
# ---------------------------------------------------------------------------
def _merged_tap_weights(w4, W):
    """(3,3,Cin,Cout) conv weights -> (3*(4C-1), W*C) merged tap rows.

    Row g = dy*(4C-1) + (s-1) holds, at output lane l = w*C + co, the sum of
    w4[dy, dx, co + di - (C-1), co] over all (dx, di) with dx*C + di + 1 == s
    (zero where the input-channel index falls outside [0, C)).  Taps sharing a
    source-lane shift read the same physical (zero-padded) lane, so summing
    their weights wrapper-side is exact and cuts 9*(2C-1) FMA groups to
    3*(4C-1).
    """
    C = w4.shape[-1]
    wp = jnp.pad(w4, ((0, 0), (0, 0), (C - 1, C - 1), (0, 0)))
    co = jnp.arange(C)
    rows = []
    for dy in range(3):
        for s in range(1, 4 * C):
            acc = jnp.zeros((C,), jnp.float32)
            for dx in range(3):
                di = s - 1 - dx * C
                if 0 <= di <= 2 * C - 2:
                    acc = acc + wp[dy, dx, di + co, co]
            rows.append(jnp.tile(acc, W))
    return jnp.stack(rows, axis=0).astype(jnp.float32)


def init_params(key, channels):
    C = channels
    k1, k2, k3, k4, k5, k6, k7, k8 = jax.random.split(key, 8)
    w1 = jax.random.normal(k1, (3, 3, C, C), jnp.float32) * 0.1  # (ky,kx,Ci,Co)
    w2 = jax.random.normal(k2, (3, 3, C, C), jnp.float32) * 0.1
    return {
        "w1_4d": w1, "w2_4d": w2,
        "b1": jax.random.normal(k3, (1, C), jnp.float32) * 0.1,  # conv biases
        "b2": jax.random.normal(k4, (1, C), jnp.float32) * 0.1,
        # BatchNorm affine params (non-trivial, to exercise the folded FMA).
        "g1": 1.0 + 0.1 * jax.random.normal(k5, (1, C), jnp.float32),
        "beta1": 0.1 * jax.random.normal(k6, (1, C), jnp.float32),
        "g2": 1.0 + 0.1 * jax.random.normal(k7, (1, C), jnp.float32),
        "beta2": 0.1 * jax.random.normal(k8, (1, C), jnp.float32),
    }


def residual_block(x_nchw, params):
    """Forward pass matching ResidualBlock.forward (input/output in NCHW)."""
    N, C, H, W = x_nchw.shape
    WC = W * C
    WPC = (W + 4) * C
    inv_count = 1.0 / float(N * H * W)

    x_nhwc = jnp.transpose(x_nchw, (0, 2, 3, 1)).astype(jnp.float32)
    # Exact padded slab: 1 zero row top/bottom, 2 zero columns left/right
    # (the per-lane shift trick conflates column and channel offsets).
    xpad = jnp.pad(x_nhwc, ((0, 0), (1, 1), (2, 2), (0, 0))).reshape(N, H + 2, WPC)
    xres = x_nhwc.reshape(N * H, WC)

    # Channel-periodic projector: proj[a, b] = 1 iff a % C == b % C.
    proj = jnp.tile(jnp.eye(C, dtype=jnp.float32), (W, W))

    wv1 = _merged_tap_weights(params["w1_4d"], W)
    wv2 = _merged_tap_weights(params["w2_4d"], W)
    tile_w = lambda v: jnp.tile(v.astype(jnp.float32), (1, W))   # (1,C)->(1,WC)

    out2d = pl.pallas_call(
        functools.partial(_resblock_kernel, H=H, W=W, C=C, inv_count=inv_count),
        out_shape=jax.ShapeDtypeStruct((N * H, WC), jnp.float32),
        scratch_shapes=[pltpu.VMEM((N, H + 2, WPC), jnp.float32)],
    )(xpad, xres, wv1, wv2, proj,
      tile_w(params["b1"]), tile_w(params["g1"]), tile_w(params["beta1"]),
      tile_w(params["b2"]), tile_w(params["g2"]), tile_w(params["beta2"]))

    out = out2d.reshape(N, H, W, C)
    return jnp.transpose(out, (0, 3, 1, 2))                      # back to NCHW


# ---------------------------------------------------------------------------
# Pure-JAX reference (sanity check only)
# ---------------------------------------------------------------------------
def _reference(x_nchw, params):
    def conv(x, w_hwio, b):
        y = lax.conv_general_dilated(
            x, w_hwio, window_strides=(1, 1), padding="SAME",
            dimension_numbers=("NCHW", "HWIO", "NCHW"))
        return y + b.reshape(1, -1, 1, 1)

    def bn(x, g, beta):
        mean = jnp.mean(x, axis=(0, 2, 3), keepdims=True)
        var = jnp.mean((x - mean) ** 2, axis=(0, 2, 3), keepdims=True)
        return ((x - mean) * lax.rsqrt(var + _EPS)
                * g.reshape(1, -1, 1, 1) + beta.reshape(1, -1, 1, 1))

    h = conv(x_nchw, params["w1_4d"], params["b1"])
    h = jnp.maximum(bn(h, params["g1"], params["beta1"]), 0.0)
    h = conv(h, params["w2_4d"], params["b2"])
    h = bn(h, params["g2"], params["beta2"])
    return h + x_nchw


if __name__ == "__main__":
    key = jax.random.PRNGKey(0)
    kx, kp = jax.random.split(key)

    N, C, H, W = 2, 4, 16, 16
    x = jax.random.normal(kx, (N, C, H, W), jnp.float32)   # NCHW like PyTorch
    params = init_params(kp, C)

    out = jax.block_until_ready(jax.jit(residual_block)(x, params))

    ref = jax.block_until_ready(_reference(x, params))
    assert out.shape == (N, C, H, W)
    assert jnp.allclose(out, ref, atol=2e-2, rtol=2e-2), "mismatch vs reference"

    print("KERNEL_OK")
</pallas_src>

<mosaic_0001>
module attributes {stable_mosaic.version = 11 : i64} {
  func.func @_resblock_kernel(%arg0: memref<2x18x80xf32, #tpu.memory_space<vmem>>, %arg1: memref<32x64xf32, #tpu.memory_space<vmem>>, %arg2: memref<45x64xf32, #tpu.memory_space<vmem>>, %arg3: memref<45x64xf32, #tpu.memory_space<vmem>>, %arg4: memref<64x64xf32, #tpu.memory_space<vmem>>, %arg5: memref<1x64xf32, #tpu.memory_space<vmem>>, %arg6: memref<1x64xf32, #tpu.memory_space<vmem>>, %arg7: memref<1x64xf32, #tpu.memory_space<vmem>>, %arg8: memref<1x64xf32, #tpu.memory_space<vmem>>, %arg9: memref<1x64xf32, #tpu.memory_space<vmem>>, %arg10: memref<1x64xf32, #tpu.memory_space<vmem>>, %arg11: memref<32x64xf32, #tpu.memory_space<vmem>>, %arg12: memref<2x18x80xf32, #tpu.memory_space<vmem>>) attributes {dimension_semantics = [], scalar_prefetch = 0 : i64, scratch_operands = 1 : i64, tpu.core_type = #tpu.core_type<tc>} {
    %c0 = arith.constant 0 : index
    %c0_0 = arith.constant 0 : index
    %c0_1 = arith.constant 0 : index
    %0 = vector.load %arg0[%c0, %c0_0, %c0_1] : memref<2x18x80xf32, #tpu.memory_space<vmem>>, vector<2x18x80xf32>
    %1 = vector.extract_strided_slice %0 {offsets = [0, 0, 0], sizes = [2, 16, 80], strides = [1, 1, 1]} : vector<2x18x80xf32> to vector<2x16x80xf32>
    %2 = vector.extract_strided_slice %0 {offsets = [0, 1, 0], sizes = [2, 16, 80], strides = [1, 1, 1]} : vector<2x18x80xf32> to vector<2x16x80xf32>
    %3 = vector.extract_strided_slice %0 {offsets = [0, 2, 0], sizes = [2, 16, 80], strides = [1, 1, 1]} : vector<2x18x80xf32> to vector<2x16x80xf32>
    %cst = arith.constant 0.000000e+00 : f32
    %4 = vector.broadcast %cst : f32 to vector<2x16x64xf32>
    %c0_2 = arith.constant 0 : index
    %c0_3 = arith.constant 0 : index
    %5 = vector.load %arg2[%c0_2, %c0_3] : memref<45x64xf32, #tpu.memory_space<vmem>>, vector<1x64xf32>
    %6 = vector.extract_strided_slice %1 {offsets = [0, 0, 1], sizes = [2, 16, 64], strides = [1, 1, 1]} : vector<2x16x80xf32> to vector<2x16x64xf32>
    %7 = vector.shape_cast %5 : vector<1x64xf32> to vector<1x1x64xf32>
    %8 = vector.broadcast %7 : vector<1x1x64xf32> to vector<2x16x64xf32>
    %9 = arith.mulf %6, %8 : vector<2x16x64xf32>
    %10 = arith.addf %4, %9 : vector<2x16x64xf32>
    %c1 = arith.constant 1 : index
    %c0_4 = arith.constant 0 : index
    %11 = vector.load %arg2[%c1, %c0_4] : memref<45x64xf32, #tpu.memory_space<vmem>>, vector<1x64xf32>
    %12 = vector.extract_strided_slice %1 {offsets = [0, 0, 2], sizes = [2, 16, 64], strides = [1, 1, 1]} : vector<2x16x80xf32> to vector<2x16x64xf32>
    %13 = vector.shape_cast %11 : vector<1x64xf32> to vector<1x1x64xf32>
    %14 = vector.broadcast %13 : vector<1x1x64xf32> to vector<2x16x64xf32>
    %15 = arith.mulf %12, %14 : vector<2x16x64xf32>
    %16 = arith.addf %10, %15 : vector<2x16x64xf32>
    %c2 = arith.constant 2 : index
    %c0_5 = arith.constant 0 : index
    %17 = vector.load %arg2[%c2, %c0_5] : memref<45x64xf32, #tpu.memory_space<vmem>>, vector<1x64xf32>
    %18 = vector.extract_strided_slice %1 {offsets = [0, 0, 3], sizes = [2, 16, 64], strides = [1, 1, 1]} : vector<2x16x80xf32> to vector<2x16x64xf32>
    %19 = vector.shape_cast %17 : vector<1x64xf32> to vector<1x1x64xf32>
    %20 = vector.broadcast %19 : vector<1x1x64xf32> to vector<2x16x64xf32>
    %21 = arith.mulf %18, %20 : vector<2x16x64xf32>
    %22 = arith.addf %16, %21 : vector<2x16x64xf32>
    %c3 = arith.constant 3 : index
    %c0_6 = arith.constant 0 : index
    %23 = vector.load %arg2[%c3, %c0_6] : memref<45x64xf32, #tpu.memory_space<vmem>>, vector<1x64xf32>
    %24 = vector.extract_strided_slice %1 {offsets = [0, 0, 4], sizes = [2, 16, 64], strides = [1, 1, 1]} : vector<2x16x80xf32> to vector<2x16x64xf32>
    %25 = vector.shape_cast %23 : vector<1x64xf32> to vector<1x1x64xf32>
    %26 = vector.broadcast %25 : vector<1x1x64xf32> to vector<2x16x64xf32>
    %27 = arith.mulf %24, %26 : vector<2x16x64xf32>
    %28 = arith.addf %22, %27 : vector<2x16x64xf32>
    %c4 = arith.constant 4 : index
    %c0_7 = arith.constant 0 : index
    %29 = vector.load %arg2[%c4, %c0_7] : memref<45x64xf32, #tpu.memory_space<vmem>>, vector<1x64xf32>
    %30 = vector.extract_strided_slice %1 {offsets = [0, 0, 5], sizes = [2, 16, 64], strides = [1, 1, 1]} : vector<2x16x80xf32> to vector<2x16x64xf32>
    %31 = vector.shape_cast %29 : vector<1x64xf32> to vector<1x1x64xf32>
    %32 = vector.broadcast %31 : vector<1x1x64xf32> to vector<2x16x64xf32>
    %33 = arith.mulf %30, %32 : vector<2x16x64xf32>
    %34 = arith.addf %28, %33 : vector<2x16x64xf32>
    %c5 = arith.constant 5 : index
    %c0_8 = arith.constant 0 : index
    %35 = vector.load %arg2[%c5, %c0_8] : memref<45x64xf32, #tpu.memory_space<vmem>>, vector<1x64xf32>
    %36 = vector.extract_strided_slice %1 {offsets = [0, 0, 6], sizes = [2, 16, 64], strides = [1, 1, 1]} : vector<2x16x80xf32> to vector<2x16x64xf32>
    %37 = vector.shape_cast %35 : vector<1x64xf32> to vector<1x1x64xf32>
    %38 = vector.broadcast %37 : vector<1x1x64xf32> to vector<2x16x64xf32>
    %39 = arith.mulf %36, %38 : vector<2x16x64xf32>
    %40 = arith.addf %34, %39 : vector<2x16x64xf32>
    %c6 = arith.constant 6 : index
    %c0_9 = arith.constant 0 : index
    %41 = vector.load %arg2[%c6, %c0_9] : memref<45x64xf32, #tpu.memory_space<vmem>>, vector<1x64xf32>
    %42 = vector.extract_strided_slice %1 {offsets = [0, 0, 7], sizes = [2, 16, 64], strides = [1, 1, 1]} : vector<2x16x80xf32> to vector<2x16x64xf32>
    %43 = vector.shape_cast %41 : vector<1x64xf32> to vector<1x1x64xf32>
    %44 = vector.broadcast %43 : vector<1x1x64xf32> to vector<2x16x64xf32>
    %45 = arith.mulf %42, %44 : vector<2x16x64xf32>
    %46 = arith.addf %40, %45 : vector<2x16x64xf32>
    %c7 = arith.constant 7 : index
    %c0_10 = arith.constant 0 : index
    %47 = vector.load %arg2[%c7, %c0_10] : memref<45x64xf32, #tpu.memory_space<vmem>>, vector<1x64xf32>
    %48 = vector.extract_strided_slice %1 {offsets = [0, 0, 8], sizes = [2, 16, 64], strides = [1, 1, 1]} : vector<2x16x80xf32> to vector<2x16x64xf32>
    %49 = vector.shape_cast %47 : vector<1x64xf32> to vector<1x1x64xf32>
    %50 = vector.broadcast %49 : vector<1x1x64xf32> to vector<2x16x64xf32>
    %51 = arith.mulf %48, %50 : vector<2x16x64xf32>
    %52 = arith.addf %46, %51 : vector<2x16x64xf32>
    %c8 = arith.constant 8 : index
    %c0_11 = arith.constant 0 : index
    %53 = vector.load %arg2[%c8, %c0_11] : memref<45x64xf32, #tpu.memory_space<vmem>>, vector<1x64xf32>
    %54 = vector.extract_strided_slice %1 {offsets = [0, 0, 9], sizes = [2, 16, 64], strides = [1, 1, 1]} : vector<2x16x80xf32> to vector<2x16x64xf32>
    %55 = vector.shape_cast %53 : vector<1x64xf32> to vector<1x1x64xf32>
    %56 = vector.broadcast %55 : vector<1x1x64xf32> to vector<2x16x64xf32>
    %57 = arith.mulf %54, %56 : vector<2x16x64xf32>
    %58 = arith.addf %52, %57 : vector<2x16x64xf32>
    %c9 = arith.constant 9 : index
    %c0_12 = arith.constant 0 : index
    %59 = vector.load %arg2[%c9, %c0_12] : memref<45x64xf32, #tpu.memory_space<vmem>>, vector<1x64xf32>
    %60 = vector.extract_strided_slice %1 {offsets = [0, 0, 10], sizes = [2, 16, 64], strides = [1, 1, 1]} : vector<2x16x80xf32> to vector<2x16x64xf32>
    %61 = vector.shape_cast %59 : vector<1x64xf32> to vector<1x1x64xf32>
    %62 = vector.broadcast %61 : vector<1x1x64xf32> to vector<2x16x64xf32>
    %63 = arith.mulf %60, %62 : vector<2x16x64xf32>
    %64 = arith.addf %58, %63 : vector<2x16x64xf32>
    %c10 = arith.constant 10 : index
    %c0_13 = arith.constant 0 : index
    %65 = vector.load %arg2[%c10, %c0_13] : memref<45x64xf32, #tpu.memory_space<vmem>>, vector<1x64xf32>
    %66 = vector.extract_strided_slice %1 {offsets = [0, 0, 11], sizes = [2, 16, 64], strides = [1, 1, 1]} : vector<2x16x80xf32> to vector<2x16x64xf32>
    %67 = vector.shape_cast %65 : vector<1x64xf32> to vector<1x1x64xf32>
    %68 = vector.broadcast %67 : vector<1x1x64xf32> to vector<2x16x64xf32>
    %69 = arith.mulf %66, %68 : vector<2x16x64xf32>
    %70 = arith.addf %64, %69 : vector<2x16x64xf32>
    %c11 = arith.constant 11 : index
    %c0_14 = arith.constant 0 : index
    %71 = vector.load %arg2[%c11, %c0_14] : memref<45x64xf32, #tpu.memory_space<vmem>>, vector<1x64xf32>
    %72 = vector.extract_strided_slice %1 {offsets = [0, 0, 12], sizes = [2, 16, 64], strides = [1, 1, 1]} : vector<2x16x80xf32> to vector<2x16x64xf32>
    %73 = vector.shape_cast %71 : vector<1x64xf32> to vector<1x1x64xf32>
    %74 = vector.broadcast %73 : vector<1x1x64xf32> to vector<2x16x64xf32>
    %75 = arith.mulf %72, %74 : vector<2x16x64xf32>
    %76 = arith.addf %70, %75 : vector<2x16x64xf32>
    %c12 = arith.constant 12 : index
    %c0_15 = arith.constant 0 : index
    %77 = vector.load %arg2[%c12, %c0_15] : memref<45x64xf32, #tpu.memory_space<vmem>>, vector<1x64xf32>
    %78 = vector.extract_strided_slice %1 {offsets = [0, 0, 13], sizes = [2, 16, 64], strides = [1, 1, 1]} : vector<2x16x80xf32> to vector<2x16x64xf32>
    %79 = vector.shape_cast %77 : vector<1x64xf32> to vector<1x1x64xf32>
    %80 = vector.broadcast %79 : vector<1x1x64xf32> to vector<2x16x64xf32>
    %81 = arith.mulf %78, %80 : vector<2x16x64xf32>
    %82 = arith.addf %76, %81 : vector<2x16x64xf32>
    %c13 = arith.constant 13 : index
    %c0_16 = arith.constant 0 : index
    %83 = vector.load %arg2[%c13, %c0_16] : memref<45x64xf32, #tpu.memory_space<vmem>>, vector<1x64xf32>
    %84 = vector.extract_strided_slice %1 {offsets = [0, 0, 14], sizes = [2, 16, 64], strides = [1, 1, 1]} : vector<2x16x80xf32> to vector<2x16x64xf32>
    %85 = vector.shape_cast %83 : vector<1x64xf32> to vector<1x1x64xf32>
    %86 = vector.broadcast %85 : vector<1x1x64xf32> to vector<2x16x64xf32>
    %87 = arith.mulf %84, %86 : vector<2x16x64xf32>
    %88 = arith.addf %82, %87 : vector<2x16x64xf32>
    %c14 = arith.constant 14 : index
    %c0_17 = arith.constant 0 : index
    %89 = vector.load %arg2[%c14, %c0_17] : memref<45x64xf32, #tpu.memory_space<vmem>>, vector<1x64xf32>
    %90 = vector.extract_strided_slice %1 {offsets = [0, 0, 15], sizes = [2, 16, 64], strides = [1, 1, 1]} : vector<2x16x80xf32> to vector<2x16x64xf32>
    %91 = vector.shape_cast %89 : vector<1x64xf32> to vector<1x1x64xf32>
    %92 = vector.broadcast %91 : vector<1x1x64xf32> to vector<2x16x64xf32>
    %93 = arith.mulf %90, %92 : vector<2x16x64xf32>
    %94 = arith.addf %88, %93 : vector<2x16x64xf32>
    %c15 = arith.constant 15 : index
    %c0_18 = arith.constant 0 : index
    %95 = vector.load %arg2[%c15, %c0_18] : memref<45x64xf32, #tpu.memory_space<vmem>>, vector<1x64xf32>
    %96 = vector.extract_strided_slice %2 {offsets = [0, 0, 1], sizes = [2, 16, 64], strides = [1, 1, 1]} : vector<2x16x80xf32> to vector<2x16x64xf32>
    %97 = vector.shape_cast %95 : vector<1x64xf32> to vector<1x1x64xf32>
    %98 = vector.broadcast %97 : vector<1x1x64xf32> to vector<2x16x64xf32>
    %99 = arith.mulf %96, %98 : vector<2x16x64xf32>
    %100 = arith.addf %94, %99 : vector<2x16x64xf32>
    %c16 = arith.constant 16 : index
    %c0_19 = arith.constant 0 : index
    %101 = vector.load %arg2[%c16, %c0_19] : memref<45x64xf32, #tpu.memory_space<vmem>>, vector<1x64xf32>
    %102 = vector.extract_strided_slice %2 {offsets = [0, 0, 2], sizes = [2, 16, 64], strides = [1, 1, 1]} : vector<2x16x80xf32> to vector<2x16x64xf32>
    %103 = vector.shape_cast %101 : vector<1x64xf32> to vector<1x1x64xf32>
    %104 = vector.broadcast %103 : vector<1x1x64xf32> to vector<2x16x64xf32>
    %105 = arith.mulf %102, %104 : vector<2x16x64xf32>
    %106 = arith.addf %100, %105 : vector<2x16x64xf32>
    %c17 = arith.constant 17 : index
    %c0_20 = arith.constant 0 : index
    %107 = vector.load %arg2[%c17, %c0_20] : memref<45x64xf32, #tpu.memory_space<vmem>>, vector<1x64xf32>
    %108 = vector.extract_strided_slice %2 {offsets = [0, 0, 3], sizes = [2, 16, 64], strides = [1, 1, 1]} : vector<2x16x80xf32> to vector<2x16x64xf32>
    %109 = vector.shape_cast %107 : vector<1x64xf32> to vector<1x1x64xf32>
    %110 = vector.broadcast %109 : vector<1x1x64xf32> to vector<2x16x64xf32>
    %111 = arith.mulf %108, %110 : vector<2x16x64xf32>
    %112 = arith.addf %106, %111 : vector<2x16x64xf32>
    %c18 = arith.constant 18 : index
    %c0_21 = arith.constant 0 : index
    %113 = vector.load %arg2[%c18, %c0_21] : memref<45x64xf32, #tpu.memory_space<vmem>>, vector<1x64xf32>
    %114 = vector.extract_strided_slice %2 {offsets = [0, 0, 4], sizes = [2, 16, 64], strides = [1, 1, 1]} : vector<2x16x80xf32> to vector<2x16x64xf32>
    %115 = vector.shape_cast %113 : vector<1x64xf32> to vector<1x1x64xf32>
    %116 = vector.broadcast %115 : vector<1x1x64xf32> to vector<2x16x64xf32>
    %117 = arith.mulf %114, %116 : vector<2x16x64xf32>
    %118 = arith.addf %112, %117 : vector<2x16x64xf32>
    %c19 = arith.constant 19 : index
    %c0_22 = arith.constant 0 : index
    %119 = vector.load %arg2[%c19, %c0_22] : memref<45x64xf32, #tpu.memory_space<vmem>>, vector<1x64xf32>
    %120 = vector.extract_strided_slice %2 {offsets = [0, 0, 5], sizes = [2, 16, 64], strides = [1, 1, 1]} : vector<2x16x80xf32> to vector<2x16x64xf32>
    %121 = vector.shape_cast %119 : vector<1x64xf32> to vector<1x1x64xf32>
    %122 = vector.broadcast %121 : vector<1x1x64xf32> to vector<2x16x64xf32>
    %123 = arith.mulf %120, %122 : vector<2x16x64xf32>
    %124 = arith.addf %118, %123 : vector<2x16x64xf32>
    %c20 = arith.constant 20 : index
    %c0_23 = arith.constant 0 : index
    %125 = vector.load %arg2[%c20, %c0_23] : memref<45x64xf32, #tpu.memory_space<vmem>>, vector<1x64xf32>
    %126 = vector.extract_strided_slice %2 {offsets = [0, 0, 6], sizes = [2, 16, 64], strides = [1, 1, 1]} : vector<2x16x80xf32> to vector<2x16x64xf32>
    %127 = vector.shape_cast %125 : vector<1x64xf32> to vector<1x1x64xf32>
    %128 = vector.broadcast %127 : vector<1x1x64xf32> to vector<2x16x64xf32>
    %129 = arith.mulf %126, %128 : vector<2x16x64xf32>
    %130 = arith.addf %124, %129 : vector<2x16x64xf32>
    %c21 = arith.constant 21 : index
    %c0_24 = arith.constant 0 : index
    %131 = vector.load %arg2[%c21, %c0_24] : memref<45x64xf32, #tpu.memory_space<vmem>>, vector<1x64xf32>
    %132 = vector.extract_strided_slice %2 {offsets = [0, 0, 7], sizes = [2, 16, 64], strides = [1, 1, 1]} : vector<2x16x80xf32> to vector<2x16x64xf32>
    %133 = vector.shape_cast %131 : vector<1x64xf32> to vector<1x1x64xf32>
    %134 = vector.broadcast %133 : vector<1x1x64xf32> to vector<2x16x64xf32>
    %135 = arith.mulf %132, %134 : vector<2x16x64xf32>
    %136 = arith.addf %130, %135 : vector<2x16x64xf32>
    %c22 = arith.constant 22 : index
    %c0_25 = arith.constant 0 : index
    %137 = vector.load %arg2[%c22, %c0_25] : memref<45x64xf32, #tpu.memory_space<vmem>>, vector<1x64xf32>
    %138 = vector.extract_strided_slice %2 {offsets = [0, 0, 8], sizes = [2, 16, 64], strides = [1, 1, 1]} : vector<2x16x80xf32> to vector<2x16x64xf32>
    %139 = vector.shape_cast %137 : vector<1x64xf32> to vector<1x1x64xf32>
    %140 = vector.broadcast %139 : vector<1x1x64xf32> to vector<2x16x64xf32>
    %141 = arith.mulf %138, %140 : vector<2x16x64xf32>
    %142 = arith.addf %136, %141 : vector<2x16x64xf32>
    %c23 = arith.constant 23 : index
    %c0_26 = arith.constant 0 : index
    %143 = vector.load %arg2[%c23, %c0_26] : memref<45x64xf32, #tpu.memory_space<vmem>>, vector<1x64xf32>
    %144 = vector.extract_strided_slice %2 {offsets = [0, 0, 9], sizes = [2, 16, 64], strides = [1, 1, 1]} : vector<2x16x80xf32> to vector<2x16x64xf32>
    %145 = vector.shape_cast %143 : vector<1x64xf32> to vector<1x1x64xf32>
    %146 = vector.broadcast %145 : vector<1x1x64xf32> to vector<2x16x64xf32>
    %147 = arith.mulf %144, %146 : vector<2x16x64xf32>
    %148 = arith.addf %142, %147 : vector<2x16x64xf32>
    %c24 = arith.constant 24 : index
    %c0_27 = arith.constant 0 : index
    %149 = vector.load %arg2[%c24, %c0_27] : memref<45x64xf32, #tpu.memory_space<vmem>>, vector<1x64xf32>
    %150 = vector.extract_strided_slice %2 {offsets = [0, 0, 10], sizes = [2, 16, 64], strides = [1, 1, 1]} : vector<2x16x80xf32> to vector<2x16x64xf32>
    %151 = vector.shape_cast %149 : vector<1x64xf32> to vector<1x1x64xf32>
    %152 = vector.broadcast %151 : vector<1x1x64xf32> to vector<2x16x64xf32>
    %153 = arith.mulf %150, %152 : vector<2x16x64xf32>
    %154 = arith.addf %148, %153 : vector<2x16x64xf32>
    %c25 = arith.constant 25 : index
    %c0_28 = arith.constant 0 : index
    %155 = vector.load %arg2[%c25, %c0_28] : memref<45x64xf32, #tpu.memory_space<vmem>>, vector<1x64xf32>
    %156 = vector.extract_strided_slice %2 {offsets = [0, 0, 11], sizes = [2, 16, 64], strides = [1, 1, 1]} : vector<2x16x80xf32> to vector<2x16x64xf32>
    %157 = vector.shape_cast %155 : vector<1x64xf32> to vector<1x1x64xf32>
    %158 = vector.broadcast %157 : vector<1x1x64xf32> to vector<2x16x64xf32>
    %159 = arith.mulf %156, %158 : vector<2x16x64xf32>
    %160 = arith.addf %154, %159 : vector<2x16x64xf32>
    %c26 = arith.constant 26 : index
    %c0_29 = arith.constant 0 : index
    %161 = vector.load %arg2[%c26, %c0_29] : memref<45x64xf32, #tpu.memory_space<vmem>>, vector<1x64xf32>
    %162 = vector.extract_strided_slice %2 {offsets = [0, 0, 12], sizes = [2, 16, 64], strides = [1, 1, 1]} : vector<2x16x80xf32> to vector<2x16x64xf32>
    %163 = vector.shape_cast %161 : vector<1x64xf32> to vector<1x1x64xf32>
    %164 = vector.broadcast %163 : vector<1x1x64xf32> to vector<2x16x64xf32>
    %165 = arith.mulf %162, %164 : vector<2x16x64xf32>
    %166 = arith.addf %160, %165 : vector<2x16x64xf32>
    %c27 = arith.constant 27 : index
    %c0_30 = arith.constant 0 : index
    %167 = vector.load %arg2[%c27, %c0_30] : memref<45x64xf32, #tpu.memory_space<vmem>>, vector<1x64xf32>
    %168 = vector.extract_strided_slice %2 {offsets = [0, 0, 13], sizes = [2, 16, 64], strides = [1, 1, 1]} : vector<2x16x80xf32> to vector<2x16x64xf32>
    %169 = vector.shape_cast %167 : vector<1x64xf32> to vector<1x1x64xf32>
    %170 = vector.broadcast %169 : vector<1x1x64xf32> to vector<2x16x64xf32>
    %171 = arith.mulf %168, %170 : vector<2x16x64xf32>
    %172 = arith.addf %166, %171 : vector<2x16x64xf32>
    %c28 = arith.constant 28 : index
    %c0_31 = arith.constant 0 : index
    %173 = vector.load %arg2[%c28, %c0_31] : memref<45x64xf32, #tpu.memory_space<vmem>>, vector<1x64xf32>
    %174 = vector.extract_strided_slice %2 {offsets = [0, 0, 14], sizes = [2, 16, 64], strides = [1, 1, 1]} : vector<2x16x80xf32> to vector<2x16x64xf32>
    %175 = vector.shape_cast %173 : vector<1x64xf32> to vector<1x1x64xf32>
    %176 = vector.broadcast %175 : vector<1x1x64xf32> to vector<2x16x64xf32>
    %177 = arith.mulf %174, %176 : vector<2x16x64xf32>
    %178 = arith.addf %172, %177 : vector<2x16x64xf32>
    %c29 = arith.constant 29 : index
    %c0_32 = arith.constant 0 : index
    %179 = vector.load %arg2[%c29, %c0_32] : memref<45x64xf32, #tpu.memory_space<vmem>>, vector<1x64xf32>
    %180 = vector.extract_strided_slice %2 {offsets = [0, 0, 15], sizes = [2, 16, 64], strides = [1, 1, 1]} : vector<2x16x80xf32> to vector<2x16x64xf32>
    %181 = vector.shape_cast %179 : vector<1x64xf32> to vector<1x1x64xf32>
    %182 = vector.broadcast %181 : vector<1x1x64xf32> to vector<2x16x64xf32>
    %183 = arith.mulf %180, %182 : vector<2x16x64xf32>
    %184 = arith.addf %178, %183 : vector<2x16x64xf32>
    %c30 = arith.constant 30 : index
    %c0_33 = arith.constant 0 : index
    %185 = vector.load %arg2[%c30, %c0_33] : memref<45x64xf32, #tpu.memory_space<vmem>>, vector<1x64xf32>
    %186 = vector.extract_strided_slice %3 {offsets = [0, 0, 1], sizes = [2, 16, 64], strides = [1, 1, 1]} : vector<2x16x80xf32> to vector<2x16x64xf32>
    %187 = vector.shape_cast %185 : vector<1x64xf32> to vector<1x1x64xf32>
    %188 = vector.broadcast %187 : vector<1x1x64xf32> to vector<2x16x64xf32>
    %189 = arith.mulf %186, %188 : vector<2x16x64xf32>
    %190 = arith.addf %184, %189 : vector<2x16x64xf32>
    %c31 = arith.constant 31 : index
    %c0_34 = arith.constant 0 : index
    %191 = vector.load %arg2[%c31, %c0_34] : memref<45x64xf32, #tpu.memory_space<vmem>>, vector<1x64xf32>
    %192 = vector.extract_strided_slice %3 {offsets = [0, 0, 2], sizes = [2, 16, 64], strides = [1, 1, 1]} : vector<2x16x80xf32> to vector<2x16x64xf32>
    %193 = vector.shape_cast %191 : vector<1x64xf32> to vector<1x1x64xf32>
    %194 = vector.broadcast %193 : vector<1x1x64xf32> to vector<2x16x64xf32>
    %195 = arith.mulf %192, %194 : vector<2x16x64xf32>
    %196 = arith.addf %190, %195 : vector<2x16x64xf32>
    %c32 = arith.constant 32 : index
    %c0_35 = arith.constant 0 : index
    %197 = vector.load %arg2[%c32, %c0_35] : memref<45x64xf32, #tpu.memory_space<vmem>>, vector<1x64xf32>
    %198 = vector.extract_strided_slice %3 {offsets = [0, 0, 3], sizes = [2, 16, 64], strides = [1, 1, 1]} : vector<2x16x80xf32> to vector<2x16x64xf32>
    %199 = vector.shape_cast %197 : vector<1x64xf32> to vector<1x1x64xf32>
    %200 = vector.broadcast %199 : vector<1x1x64xf32> to vector<2x16x64xf32>
    %201 = arith.mulf %198, %200 : vector<2x16x64xf32>
    %202 = arith.addf %196, %201 : vector<2x16x64xf32>
    %c33 = arith.constant 33 : index
    %c0_36 = arith.constant 0 : index
    %203 = vector.load %arg2[%c33, %c0_36] : memref<45x64xf32, #tpu.memory_space<vmem>>, vector<1x64xf32>
    %204 = vector.extract_strided_slice %3 {offsets = [0, 0, 4], sizes = [2, 16, 64], strides = [1, 1, 1]} : vector<2x16x80xf32> to vector<2x16x64xf32>
    %205 = vector.shape_cast %203 : vector<1x64xf32> to vector<1x1x64xf32>
    %206 = vector.broadcast %205 : vector<1x1x64xf32> to vector<2x16x64xf32>
    %207 = arith.mulf %204, %206 : vector<2x16x64xf32>
    %208 = arith.addf %202, %207 : vector<2x16x64xf32>
    %c34 = arith.constant 34 : index
    %c0_37 = arith.constant 0 : index
    %209 = vector.load %arg2[%c34, %c0_37] : memref<45x64xf32, #tpu.memory_space<vmem>>, vector<1x64xf32>
    %210 = vector.extract_strided_slice %3 {offsets = [0, 0, 5], sizes = [2, 16, 64], strides = [1, 1, 1]} : vector<2x16x80xf32> to vector<2x16x64xf32>
    %211 = vector.shape_cast %209 : vector<1x64xf32> to vector<1x1x64xf32>
    %212 = vector.broadcast %211 : vector<1x1x64xf32> to vector<2x16x64xf32>
    %213 = arith.mulf %210, %212 : vector<2x16x64xf32>
    %214 = arith.addf %208, %213 : vector<2x16x64xf32>
    %c35 = arith.constant 35 : index
    %c0_38 = arith.constant 0 : index
    %215 = vector.load %arg2[%c35, %c0_38] : memref<45x64xf32, #tpu.memory_space<vmem>>, vector<1x64xf32>
    %216 = vector.extract_strided_slice %3 {offsets = [0, 0, 6], sizes = [2, 16, 64], strides = [1, 1, 1]} : vector<2x16x80xf32> to vector<2x16x64xf32>
    %217 = vector.shape_cast %215 : vector<1x64xf32> to vector<1x1x64xf32>
    %218 = vector.broadcast %217 : vector<1x1x64xf32> to vector<2x16x64xf32>
    %219 = arith.mulf %216, %218 : vector<2x16x64xf32>
    %220 = arith.addf %214, %219 : vector<2x16x64xf32>
    %c36 = arith.constant 36 : index
    %c0_39 = arith.constant 0 : index
    %221 = vector.load %arg2[%c36, %c0_39] : memref<45x64xf32, #tpu.memory_space<vmem>>, vector<1x64xf32>
    %222 = vector.extract_strided_slice %3 {offsets = [0, 0, 7], sizes = [2, 16, 64], strides = [1, 1, 1]} : vector<2x16x80xf32> to vector<2x16x64xf32>
    %223 = vector.shape_cast %221 : vector<1x64xf32> to vector<1x1x64xf32>
    %224 = vector.broadcast %223 : vector<1x1x64xf32> to vector<2x16x64xf32>
    %225 = arith.mulf %222, %224 : vector<2x16x64xf32>
    %226 = arith.addf %220, %225 : vector<2x16x64xf32>
    %c37 = arith.constant 37 : index
    %c0_40 = arith.constant 0 : index
    %227 = vector.load %arg2[%c37, %c0_40] : memref<45x64xf32, #tpu.memory_space<vmem>>, vector<1x64xf32>
    %228 = vector.extract_strided_slice %3 {offsets = [0, 0, 8], sizes = [2, 16, 64], strides = [1, 1, 1]} : vector<2x16x80xf32> to vector<2x16x64xf32>
    %229 = vector.shape_cast %227 : vector<1x64xf32> to vector<1x1x64xf32>
    %230 = vector.broadcast %229 : vector<1x1x64xf32> to vector<2x16x64xf32>
    %231 = arith.mulf %228, %230 : vector<2x16x64xf32>
    %232 = arith.addf %226, %231 : vector<2x16x64xf32>
    %c38 = arith.constant 38 : index
    %c0_41 = arith.constant 0 : index
    %233 = vector.load %arg2[%c38, %c0_41] : memref<45x64xf32, #tpu.memory_space<vmem>>, vector<1x64xf32>
    %234 = vector.extract_strided_slice %3 {offsets = [0, 0, 9], sizes = [2, 16, 64], strides = [1, 1, 1]} : vector<2x16x80xf32> to vector<2x16x64xf32>
    %235 = vector.shape_cast %233 : vector<1x64xf32> to vector<1x1x64xf32>
    %236 = vector.broadcast %235 : vector<1x1x64xf32> to vector<2x16x64xf32>
    %237 = arith.mulf %234, %236 : vector<2x16x64xf32>
    %238 = arith.addf %232, %237 : vector<2x16x64xf32>
    %c39 = arith.constant 39 : index
    %c0_42 = arith.constant 0 : index
    %239 = vector.load %arg2[%c39, %c0_42] : memref<45x64xf32, #tpu.memory_space<vmem>>, vector<1x64xf32>
    %240 = vector.extract_strided_slice %3 {offsets = [0, 0, 10], sizes = [2, 16, 64], strides = [1, 1, 1]} : vector<2x16x80xf32> to vector<2x16x64xf32>
    %241 = vector.shape_cast %239 : vector<1x64xf32> to vector<1x1x64xf32>
    %242 = vector.broadcast %241 : vector<1x1x64xf32> to vector<2x16x64xf32>
    %243 = arith.mulf %240, %242 : vector<2x16x64xf32>
    %244 = arith.addf %238, %243 : vector<2x16x64xf32>
    %c40 = arith.constant 40 : index
    %c0_43 = arith.constant 0 : index
    %245 = vector.load %arg2[%c40, %c0_43] : memref<45x64xf32, #tpu.memory_space<vmem>>, vector<1x64xf32>
    %246 = vector.extract_strided_slice %3 {offsets = [0, 0, 11], sizes = [2, 16, 64], strides = [1, 1, 1]} : vector<2x16x80xf32> to vector<2x16x64xf32>
    %247 = vector.shape_cast %245 : vector<1x64xf32> to vector<1x1x64xf32>
    %248 = vector.broadcast %247 : vector<1x1x64xf32> to vector<2x16x64xf32>
    %249 = arith.mulf %246, %248 : vector<2x16x64xf32>
    %250 = arith.addf %244, %249 : vector<2x16x64xf32>
    %c41 = arith.constant 41 : index
    %c0_44 = arith.constant 0 : index
    %251 = vector.load %arg2[%c41, %c0_44] : memref<45x64xf32, #tpu.memory_space<vmem>>, vector<1x64xf32>
    %252 = vector.extract_strided_slice %3 {offsets = [0, 0, 12], sizes = [2, 16, 64], strides = [1, 1, 1]} : vector<2x16x80xf32> to vector<2x16x64xf32>
    %253 = vector.shape_cast %251 : vector<1x64xf32> to vector<1x1x64xf32>
    %254 = vector.broadcast %253 : vector<1x1x64xf32> to vector<2x16x64xf32>
    %255 = arith.mulf %252, %254 : vector<2x16x64xf32>
    %256 = arith.addf %250, %255 : vector<2x16x64xf32>
    %c42 = arith.constant 42 : index
    %c0_45 = arith.constant 0 : index
    %257 = vector.load %arg2[%c42, %c0_45] : memref<45x64xf32, #tpu.memory_space<vmem>>, vector<1x64xf32>
    %258 = vector.extract_strided_slice %3 {offsets = [0, 0, 13], sizes = [2, 16, 64], strides = [1, 1, 1]} : vector<2x16x80xf32> to vector<2x16x64xf32>
    %259 = vector.shape_cast %257 : vector<1x64xf32> to vector<1x1x64xf32>
    %260 = vector.broadcast %259 : vector<1x1x64xf32> to vector<2x16x64xf32>
    %261 = arith.mulf %258, %260 : vector<2x16x64xf32>
    %262 = arith.addf %256, %261 : vector<2x16x64xf32>
    %c43 = arith.constant 43 : index
    %c0_46 = arith.constant 0 : index
    %263 = vector.load %arg2[%c43, %c0_46] : memref<45x64xf32, #tpu.memory_space<vmem>>, vector<1x64xf32>
    %264 = vector.extract_strided_slice %3 {offsets = [0, 0, 14], sizes = [2, 16, 64], strides = [1, 1, 1]} : vector<2x16x80xf32> to vector<2x16x64xf32>
    %265 = vector.shape_cast %263 : vector<1x64xf32> to vector<1x1x64xf32>
    %266 = vector.broadcast %265 : vector<1x1x64xf32> to vector<2x16x64xf32>
    %267 = arith.mulf %264, %266 : vector<2x16x64xf32>
    %268 = arith.addf %262, %267 : vector<2x16x64xf32>
    %c44 = arith.constant 44 : index
    %c0_47 = arith.constant 0 : index
    %269 = vector.load %arg2[%c44, %c0_47] : memref<45x64xf32, #tpu.memory_space<vmem>>, vector<1x64xf32>
    %270 = vector.extract_strided_slice %3 {offsets = [0, 0, 15], sizes = [2, 16, 64], strides = [1, 1, 1]} : vector<2x16x80xf32> to vector<2x16x64xf32>
    %271 = vector.shape_cast %269 : vector<1x64xf32> to vector<1x1x64xf32>
    %272 = vector.broadcast %271 : vector<1x1x64xf32> to vector<2x16x64xf32>
    %273 = arith.mulf %270, %272 : vector<2x16x64xf32>
    %274 = arith.addf %268, %273 : vector<2x16x64xf32>
    %275 = vector.shape_cast %274 : vector<2x16x64xf32> to vector<32x64xf32>
    %c0_48 = arith.constant 0 : index
    %c0_49 = arith.constant 0 : index
    %276 = vector.load %arg5[%c0_48, %c0_49] : memref<1x64xf32, #tpu.memory_space<vmem>>, vector<1x64xf32>
    %277 = vector.broadcast %276 : vector<1x64xf32> to vector<32x64xf32>
    %278 = arith.addf %275, %277 : vector<32x64xf32>
    %cst_50 = arith.constant dense<0.000000e+00> : vector<64xf32>
    %279 = vector.multi_reduction <add>, %278, %cst_50 [0] : vector<32x64xf32> to vector<64xf32>
    %280 = vector.shape_cast %279 : vector<64xf32> to vector<1x64xf32>
    %281 = arith.mulf %278, %278 : vector<32x64xf32>
    %cst_51 = arith.constant dense<0.000000e+00> : vector<64xf32>
    %282 = vector.multi_reduction <add>, %281, %cst_51 [0] : vector<32x64xf32> to vector<64xf32>
    %283 = vector.shape_cast %282 : vector<64xf32> to vector<1x64xf32>
    %c0_52 = arith.constant 0 : index
    %c0_53 = arith.constant 0 : index
    %284 = vector.load %arg4[%c0_52, %c0_53] : memref<64x64xf32, #tpu.memory_space<vmem>>, vector<64x64xf32>
    %cst_54 = arith.constant dense<0.000000e+00> : vector<1x64xf32>
    %285 = tpu.matmul %280, %284, %cst_54 {dimension_numbers = #tpu.dot_dimension_numbers<[1], [0], [0], [1], [0, 0, 1, 1], [], []>} : vector<1x64xf32>, vector<64x64xf32>, vector<1x64xf32> -> vector<1x64xf32>
    %cst_55 = arith.constant 0.001953125 : f32
    %286 = vector.broadcast %cst_55 : f32 to vector<1x64xf32>
    %287 = arith.mulf %285, %286 : vector<1x64xf32>
    %c0_56 = arith.constant 0 : index
    %c0_57 = arith.constant 0 : index
    %288 = vector.load %arg4[%c0_56, %c0_57] : memref<64x64xf32, #tpu.memory_space<vmem>>, vector<64x64xf32>
    %cst_58 = arith.constant dense<0.000000e+00> : vector<1x64xf32>
    %289 = tpu.matmul %283, %288, %cst_58 {dimension_numbers = #tpu.dot_dimension_numbers<[1], [0], [0], [1], [0, 0, 1, 1], [], []>} : vector<1x64xf32>, vector<64x64xf32>, vector<1x64xf32> -> vector<1x64xf32>
    %cst_59 = arith.constant 0.001953125 : f32
    %290 = vector.broadcast %cst_59 : f32 to vector<1x64xf32>
    %291 = arith.mulf %289, %290 : vector<1x64xf32>
    %292 = arith.mulf %287, %287 : vector<1x64xf32>
    %293 = arith.subf %291, %292 : vector<1x64xf32>
    %c0_60 = arith.constant 0 : index
    %c0_61 = arith.constant 0 : index
    %294 = vector.load %arg6[%c0_60, %c0_61] : memref<1x64xf32, #tpu.memory_space<vmem>>, vector<1x64xf32>
    %cst_62 = arith.constant 9.99999974E-6 : f32
    %295 = vector.broadcast %cst_62 : f32 to vector<1x64xf32>
    %296 = arith.addf %293, %295 : vector<1x64xf32>
    %297 = math.rsqrt %296 : vector<1x64xf32>
    %298 = arith.mulf %294, %297 : vector<1x64xf32>
    %c0_63 = arith.constant 0 : index
    %c0_64 = arith.constant 0 : index
    %299 = vector.load %arg7[%c0_63, %c0_64] : memref<1x64xf32, #tpu.memory_space<vmem>>, vector<1x64xf32>
    %300 = arith.mulf %287, %298 : vector<1x64xf32>
    %301 = arith.subf %299, %300 : vector<1x64xf32>
    %302 = vector.broadcast %298 : vector<1x64xf32> to vector<32x64xf32>
    %303 = arith.mulf %278, %302 : vector<32x64xf32>
    %304 = vector.broadcast %301 : vector<1x64xf32> to vector<32x64xf32>
    %305 = arith.addf %303, %304 : vector<32x64xf32>
    %cst_65 = arith.constant 0.000000e+00 : f32
    %306 = vector.broadcast %cst_65 : f32 to vector<32x64xf32>
    %307 = arith.maximumf %305, %306 : vector<32x64xf32>
    %cst_66 = arith.constant 0.000000e+00 : f32
    %308 = vector.broadcast %cst_66 : f32 to vector<2x18x80xf32>
    %c0_67 = arith.constant 0 : index
    %c0_68 = arith.constant 0 : index
    %c0_69 = arith.constant 0 : index
    %309 = vector.load %arg12[%c0_67, %c0_68, %c0_69] : memref<2x18x80xf32, #tpu.memory_space<vmem>>, vector<2x18x80xf32>
    tpu.vector_store %arg12[%c0_67, %c0_68, %c0_69], %308 {strides = array<i32>} : memref<2x18x80xf32, #tpu.memory_space<vmem>>, vector<2x18x80xf32>,
    %310 = vector.shape_cast %307 : vector<32x64xf32> to vector<2x16x64xf32>
    %c0_70 = arith.constant 0 : index
    %c1_71 = arith.constant 1 : index
    %c8_72 = arith.constant 8 : index
    %311 = vector.load %arg12[%c0_70, %c1_71, %c8_72] : memref<2x18x80xf32, #tpu.memory_space<vmem>>, vector<2x16x64xf32>
    tpu.vector_store %arg12[%c0_70, %c1_71, %c8_72], %310 {strides = array<i32>} : memref<2x18x80xf32, #tpu.memory_space<vmem>>, vector<2x16x64xf32>,
    %c0_73 = arith.constant 0 : index
    %c0_74 = arith.constant 0 : index
    %c0_75 = arith.constant 0 : index
    %312 = vector.load %arg12[%c0_73, %c0_74, %c0_75] : memref<2x18x80xf32, #tpu.memory_space<vmem>>, vector<2x18x80xf32>
    %313 = vector.extract_strided_slice %312 {offsets = [0, 0, 0], sizes = [2, 16, 80], strides = [1, 1, 1]} : vector<2x18x80xf32> to vector<2x16x80xf32>
    %314 = vector.extract_strided_slice %312 {offsets = [0, 1, 0], sizes = [2, 16, 80], strides = [1, 1, 1]} : vector<2x18x80xf32> to vector<2x16x80xf32>
    %315 = vector.extract_strided_slice %312 {offsets = [0, 2, 0], sizes = [2, 16, 80], strides = [1, 1, 1]} : vector<2x18x80xf32> to vector<2x16x80xf32>
    %cst_76 = arith.constant 0.000000e+00 : f32
    %316 = vector.broadcast %cst_76 : f32 to vector<2x16x64xf32>
    %c0_77 = arith.constant 0 : index
    %c0_78 = arith.constant 0 : index
    %317 = vector.load %arg3[%c0_77, %c0_78] : memref<45x64xf32, #tpu.memory_space<vmem>>, vector<1x64xf32>
    %318 = vector.extract_strided_slice %313 {offsets = [0, 0, 1], sizes = [2, 16, 64], strides = [1, 1, 1]} : vector<2x16x80xf32> to vector<2x16x64xf32>
    %319 = vector.shape_cast %317 : vector<1x64xf32> to vector<1x1x64xf32>
    %320 = vector.broadcast %319 : vector<1x1x64xf32> to vector<2x16x64xf32>
    %321 = arith.mulf %318, %320 : vector<2x16x64xf32>
    %322 = arith.addf %316, %321 : vector<2x16x64xf32>
    %c1_79 = arith.constant 1 : index
    %c0_80 = arith.constant 0 : index
    %323 = vector.load %arg3[%c1_79, %c0_80] : memref<45x64xf32, #tpu.memory_space<vmem>>, vector<1x64xf32>
    %324 = vector.extract_strided_slice %313 {offsets = [0, 0, 2], sizes = [2, 16, 64], strides = [1, 1, 1]} : vector<2x16x80xf32> to vector<2x16x64xf32>
    %325 = vector.shape_cast %323 : vector<1x64xf32> to vector<1x1x64xf32>
    %326 = vector.broadcast %325 : vector<1x1x64xf32> to vector<2x16x64xf32>
    %327 = arith.mulf %324, %326 : vector<2x16x64xf32>
    %328 = arith.addf %322, %327 : vector<2x16x64xf32>
    %c2_81 = arith.constant 2 : index
    %c0_82 = arith.constant 0 : index
    %329 = vector.load %arg3[%c2_81, %c0_82] : memref<45x64xf32, #tpu.memory_space<vmem>>, vector<1x64xf32>
    %330 = vector.extract_strided_slice %313 {offsets = [0, 0, 3], sizes = [2, 16, 64], strides = [1, 1, 1]} : vector<2x16x80xf32> to vector<2x16x64xf32>
    %331 = vector.shape_cast %329 : vector<1x64xf32> to vector<1x1x64xf32>
    %332 = vector.broadcast %331 : vector<1x1x64xf32> to vector<2x16x64xf32>
    %333 = arith.mulf %330, %332 : vector<2x16x64xf32>
    %334 = arith.addf %328, %333 : vector<2x16x64xf32>
    %c3_83 = arith.constant 3 : index
    %c0_84 = arith.constant 0 : index
    %335 = vector.load %arg3[%c3_83, %c0_84] : memref<45x64xf32, #tpu.memory_space<vmem>>, vector<1x64xf32>
    %336 = vector.extract_strided_slice %313 {offsets = [0, 0, 4], sizes = [2, 16, 64], strides = [1, 1, 1]} : vector<2x16x80xf32> to vector<2x16x64xf32>
    %337 = vector.shape_cast %335 : vector<1x64xf32> to vector<1x1x64xf32>
    %338 = vector.broadcast %337 : vector<1x1x64xf32> to vector<2x16x64xf32>
    %339 = arith.mulf %336, %338 : vector<2x16x64xf32>
    %340 = arith.addf %334, %339 : vector<2x16x64xf32>
    %c4_85 = arith.constant 4 : index
    %c0_86 = arith.constant 0 : index
    %341 = vector.load %arg3[%c4_85, %c0_86] : memref<45x64xf32, #tpu.memory_space<vmem>>, vector<1x64xf32>
    %342 = vector.extract_strided_slice %313 {offsets = [0, 0, 5], sizes = [2, 16, 64], strides = [1, 1, 1]} : vector<2x16x80xf32> to vector<2x16x64xf32>
    %343 = vector.shape_cast %341 : vector<1x64xf32> to vector<1x1x64xf32>
    %344 = vector.broadcast %343 : vector<1x1x64xf32> to vector<2x16x64xf32>
    %345 = arith.mulf %342, %344 : vector<2x16x64xf32>
    %346 = arith.addf %340, %345 : vector<2x16x64xf32>
    %c5_87 = arith.constant 5 : index
    %c0_88 = arith.constant 0 : index
    %347 = vector.load %arg3[%c5_87, %c0_88] : memref<45x64xf32, #tpu.memory_space<vmem>>, vector<1x64xf32>
    %348 = vector.extract_strided_slice %313 {offsets = [0, 0, 6], sizes = [2, 16, 64], strides = [1, 1, 1]} : vector<2x16x80xf32> to vector<2x16x64xf32>
    %349 = vector.shape_cast %347 : vector<1x64xf32> to vector<1x1x64xf32>
    %350 = vector.broadcast %349 : vector<1x1x64xf32> to vector<2x16x64xf32>
    %351 = arith.mulf %348, %350 : vector<2x16x64xf32>
    %352 = arith.addf %346, %351 : vector<2x16x64xf32>
    %c6_89 = arith.constant 6 : index
    %c0_90 = arith.constant 0 : index
    %353 = vector.load %arg3[%c6_89, %c0_90] : memref<45x64xf32, #tpu.memory_space<vmem>>, vector<1x64xf32>
    %354 = vector.extract_strided_slice %313 {offsets = [0, 0, 7], sizes = [2, 16, 64], strides = [1, 1, 1]} : vector<2x16x80xf32> to vector<2x16x64xf32>
    %355 = vector.shape_cast %353 : vector<1x64xf32> to vector<1x1x64xf32>
    %356 = vector.broadcast %355 : vector<1x1x64xf32> to vector<2x16x64xf32>
    %357 = arith.mulf %354, %356 : vector<2x16x64xf32>
    %358 = arith.addf %352, %357 : vector<2x16x64xf32>
    %c7_91 = arith.constant 7 : index
    %c0_92 = arith.constant 0 : index
    %359 = vector.load %arg3[%c7_91, %c0_92] : memref<45x64xf32, #tpu.memory_space<vmem>>, vector<1x64xf32>
    %360 = vector.extract_strided_slice %313 {offsets = [0, 0, 8], sizes = [2, 16, 64], strides = [1, 1, 1]} : vector<2x16x80xf32> to vector<2x16x64xf32>
    %361 = vector.shape_cast %359 : vector<1x64xf32> to vector<1x1x64xf32>
    %362 = vector.broadcast %361 : vector<1x1x64xf32> to vector<2x16x64xf32>
    %363 = arith.mulf %360, %362 : vector<2x16x64xf32>
    %364 = arith.addf %358, %363 : vector<2x16x64xf32>
    %c8_93 = arith.constant 8 : index
    %c0_94 = arith.constant 0 : index
    %365 = vector.load %arg3[%c8_93, %c0_94] : memref<45x64xf32, #tpu.memory_space<vmem>>, vector<1x64xf32>
    %366 = vector.extract_strided_slice %313 {offsets = [0, 0, 9], sizes = [2, 16, 64], strides = [1, 1, 1]} : vector<2x16x80xf32> to vector<2x16x64xf32>
    %367 = vector.shape_cast %365 : vector<1x64xf32> to vector<1x1x64xf32>
    %368 = vector.broadcast %367 : vector<1x1x64xf32> to vector<2x16x64xf32>
    %369 = arith.mulf %366, %368 : vector<2x16x64xf32>
    %370 = arith.addf %364, %369 : vector<2x16x64xf32>
    %c9_95 = arith.constant 9 : index
    %c0_96 = arith.constant 0 : index
    %371 = vector.load %arg3[%c9_95, %c0_96] : memref<45x64xf32, #tpu.memory_space<vmem>>, vector<1x64xf32>
    %372 = vector.extract_strided_slice %313 {offsets = [0, 0, 10], sizes = [2, 16, 64], strides = [1, 1, 1]} : vector<2x16x80xf32> to vector<2x16x64xf32>
    %373 = vector.shape_cast %371 : vector<1x64xf32> to vector<1x1x64xf32>
    %374 = vector.broadcast %373 : vector<1x1x64xf32> to vector<2x16x64xf32>
    %375 = arith.mulf %372, %374 : vector<2x16x64xf32>
    %376 = arith.addf %370, %375 : vector<2x16x64xf32>
    %c10_97 = arith.constant 10 : index
    %c0_98 = arith.constant 0 : index
    %377 = vector.load %arg3[%c10_97, %c0_98] : memref<45x64xf32, #tpu.memory_space<vmem>>, vector<1x64xf32>
    %378 = vector.extract_strided_slice %313 {offsets = [0, 0, 11], sizes = [2, 16, 64], strides = [1, 1, 1]} : vector<2x16x80xf32> to vector<2x16x64xf32>
    %379 = vector.shape_cast %377 : vector<1x64xf32> to vector<1x1x64xf32>
    %380 = vector.broadcast %379 : vector<1x1x64xf32> to vector<2x16x64xf32>
    %381 = arith.mulf %378, %380 : vector<2x16x64xf32>
    %382 = arith.addf %376, %381 : vector<2x16x64xf32>
    %c11_99 = arith.constant 11 : index
    %c0_100 = arith.constant 0 : index
    %383 = vector.load %arg3[%c11_99, %c0_100] : memref<45x64xf32, #tpu.memory_space<vmem>>, vector<1x64xf32>
    %384 = vector.extract_strided_slice %313 {offsets = [0, 0, 12], sizes = [2, 16, 64], strides = [1, 1, 1]} : vector<2x16x80xf32> to vector<2x16x64xf32>
    %385 = vector.shape_cast %383 : vector<1x64xf32> to vector<1x1x64xf32>
    %386 = vector.broadcast %385 : vector<1x1x64xf32> to vector<2x16x64xf32>
    %387 = arith.mulf %384, %386 : vector<2x16x64xf32>
    %388 = arith.addf %382, %387 : vector<2x16x64xf32>
    %c12_101 = arith.constant 12 : index
    %c0_102 = arith.constant 0 : index
    %389 = vector.load %arg3[%c12_101, %c0_102] : memref<45x64xf32, #tpu.memory_space<vmem>>, vector<1x64xf32>
    %390 = vector.extract_strided_slice %313 {offsets = [0, 0, 13], sizes = [2, 16, 64], strides = [1, 1, 1]} : vector<2x16x80xf32> to vector<2x16x64xf32>
    %391 = vector.shape_cast %389 : vector<1x64xf32> to vector<1x1x64xf32>
    %392 = vector.broadcast %391 : vector<1x1x64xf32> to vector<2x16x64xf32>
    %393 = arith.mulf %390, %392 : vector<2x16x64xf32>
    %394 = arith.addf %388, %393 : vector<2x16x64xf32>
    %c13_103 = arith.constant 13 : index
    %c0_104 = arith.constant 0 : index
    %395 = vector.load %arg3[%c13_103, %c0_104] : memref<45x64xf32, #tpu.memory_space<vmem>>, vector<1x64xf32>
    %396 = vector.extract_strided_slice %313 {offsets = [0, 0, 14], sizes = [2, 16, 64], strides = [1, 1, 1]} : vector<2x16x80xf32> to vector<2x16x64xf32>
    %397 = vector.shape_cast %395 : vector<1x64xf32> to vector<1x1x64xf32>
    %398 = vector.broadcast %397 : vector<1x1x64xf32> to vector<2x16x64xf32>
    %399 = arith.mulf %396, %398 : vector<2x16x64xf32>
    %400 = arith.addf %394, %399 : vector<2x16x64xf32>
    %c14_105 = arith.constant 14 : index
    %c0_106 = arith.constant 0 : index
    %401 = vector.load %arg3[%c14_105, %c0_106] : memref<45x64xf32, #tpu.memory_space<vmem>>, vector<1x64xf32>
    %402 = vector.extract_strided_slice %313 {offsets = [0, 0, 15], sizes = [2, 16, 64], strides = [1, 1, 1]} : vector<2x16x80xf32> to vector<2x16x64xf32>
    %403 = vector.shape_cast %401 : vector<1x64xf32> to vector<1x1x64xf32>
    %404 = vector.broadcast %403 : vector<1x1x64xf32> to vector<2x16x64xf32>
    %405 = arith.mulf %402, %404 : vector<2x16x64xf32>
    %406 = arith.addf %400, %405 : vector<2x16x64xf32>
    %c15_107 = arith.constant 15 : index
    %c0_108 = arith.constant 0 : index
    %407 = vector.load %arg3[%c15_107, %c0_108] : memref<45x64xf32, #tpu.memory_space<vmem>>, vector<1x64xf32>
    %408 = vector.extract_strided_slice %314 {offsets = [0, 0, 1], sizes = [2, 16, 64], strides = [1, 1, 1]} : vector<2x16x80xf32> to vector<2x16x64xf32>
    %409 = vector.shape_cast %407 : vector<1x64xf32> to vector<1x1x64xf32>
    %410 = vector.broadcast %409 : vector<1x1x64xf32> to vector<2x16x64xf32>
    %411 = arith.mulf %408, %410 : vector<2x16x64xf32>
    %412 = arith.addf %406, %411 : vector<2x16x64xf32>
    %c16_109 = arith.constant 16 : index
    %c0_110 = arith.constant 0 : index
    %413 = vector.load %arg3[%c16_109, %c0_110] : memref<45x64xf32, #tpu.memory_space<vmem>>, vector<1x64xf32>
    %414 = vector.extract_strided_slice %314 {offsets = [0, 0, 2], sizes = [2, 16, 64], strides = [1, 1, 1]} : vector<2x16x80xf32> to vector<2x16x64xf32>
    %415 = vector.shape_cast %413 : vector<1x64xf32> to vector<1x1x64xf32>
    %416 = vector.broadcast %415 : vector<1x1x64xf32> to vector<2x16x64xf32>
    %417 = arith.mulf %414, %416 : vector<2x16x64xf32>
    %418 = arith.addf %412, %417 : vector<2x16x64xf32>
    %c17_111 = arith.constant 17 : index
    %c0_112 = arith.constant 0 : index
    %419 = vector.load %arg3[%c17_111, %c0_112] : memref<45x64xf32, #tpu.memory_space<vmem>>, vector<1x64xf32>
    %420 = vector.extract_strided_slice %314 {offsets = [0, 0, 3], sizes = [2, 16, 64], strides = [1, 1, 1]} : vector<2x16x80xf32> to vector<2x16x64xf32>
    %421 = vector.shape_cast %419 : vector<1x64xf32> to vector<1x1x64xf32>
    %422 = vector.broadcast %421 : vector<1x1x64xf32> to vector<2x16x64xf32>
    %423 = arith.mulf %420, %422 : vector<2x16x64xf32>
    %424 = arith.addf %418, %423 : vector<2x16x64xf32>
    %c18_113 = arith.constant 18 : index
    %c0_114 = arith.constant 0 : index
    %425 = vector.load %arg3[%c18_113, %c0_114] : memref<45x64xf32, #tpu.memory_space<vmem>>, vector<1x64xf32>
    %426 = vector.extract_strided_slice %314 {offsets = [0, 0, 4], sizes = [2, 16, 64], strides = [1, 1, 1]} : vector<2x16x80xf32> to vector<2x16x64xf32>
    %427 = vector.shape_cast %425 : vector<1x64xf32> to vector<1x1x64xf32>
    %428 = vector.broadcast %427 : vector<1x1x64xf32> to vector<2x16x64xf32>
    %429 = arith.mulf %426, %428 : vector<2x16x64xf32>
    %430 = arith.addf %424, %429 : vector<2x16x64xf32>
    %c19_115 = arith.constant 19 : index
    %c0_116 = arith.constant 0 : index
    %431 = vector.load %arg3[%c19_115, %c0_116] : memref<45x64xf32, #tpu.memory_space<vmem>>, vector<1x64xf32>
    %432 = vector.extract_strided_slice %314 {offsets = [0, 0, 5], sizes = [2, 16, 64], strides = [1, 1, 1]} : vector<2x16x80xf32> to vector<2x16x64xf32>
    %433 = vector.shape_cast %431 : vector<1x64xf32> to vector<1x1x64xf32>
    %434 = vector.broadcast %433 : vector<1x1x64xf32> to vector<2x16x64xf32>
    %435 = arith.mulf %432, %434 : vector<2x16x64xf32>
    %436 = arith.addf %430, %435 : vector<2x16x64xf32>
    %c20_117 = arith.constant 20 : index
    %c0_118 = arith.constant 0 : index
    %437 = vector.load %arg3[%c20_117, %c0_118] : memref<45x64xf32, #tpu.memory_space<vmem>>, vector<1x64xf32>
    %438 = vector.extract_strided_slice %314 {offsets = [0, 0, 6], sizes = [2, 16, 64], strides = [1, 1, 1]} : vector<2x16x80xf32> to vector<2x16x64xf32>
    %439 = vector.shape_cast %437 : vector<1x64xf32> to vector<1x1x64xf32>
    %440 = vector.broadcast %439 : vector<1x1x64xf32> to vector<2x16x64xf32>
    %441 = arith.mulf %438, %440 : vector<2x16x64xf32>
    %442 = arith.addf %436, %441 : vector<2x16x64xf32>
    %c21_119 = arith.constant 21 : index
    %c0_120 = arith.constant 0 : index
    %443 = vector.load %arg3[%c21_119, %c0_120] : memref<45x64xf32, #tpu.memory_space<vmem>>, vector<1x64xf32>
    %444 = vector.extract_strided_slice %314 {offsets = [0, 0, 7], sizes = [2, 16, 64], strides = [1, 1, 1]} : vector<2x16x80xf32> to vector<2x16x64xf32>
    %445 = vector.shape_cast %443 : vector<1x64xf32> to vector<1x1x64xf32>
    %446 = vector.broadcast %445 : vector<1x1x64xf32> to vector<2x16x64xf32>
    %447 = arith.mulf %444, %446 : vector<2x16x64xf32>
    %448 = arith.addf %442, %447 : vector<2x16x64xf32>
    %c22_121 = arith.constant 22 : index
    %c0_122 = arith.constant 0 : index
    %449 = vector.load %arg3[%c22_121, %c0_122] : memref<45x64xf32, #tpu.memory_space<vmem>>, vector<1x64xf32>
    %450 = vector.extract_strided_slice %314 {offsets = [0, 0, 8], sizes = [2, 16, 64], strides = [1, 1, 1]} : vector<2x16x80xf32> to vector<2x16x64xf32>
    %451 = vector.shape_cast %449 : vector<1x64xf32> to vector<1x1x64xf32>
    %452 = vector.broadcast %451 : vector<1x1x64xf32> to vector<2x16x64xf32>
    %453 = arith.mulf %450, %452 : vector<2x16x64xf32>
    %454 = arith.addf %448, %453 : vector<2x16x64xf32>
    %c23_123 = arith.constant 23 : index
    %c0_124 = arith.constant 0 : index
    %455 = vector.load %arg3[%c23_123, %c0_124] : memref<45x64xf32, #tpu.memory_space<vmem>>, vector<1x64xf32>
    %456 = vector.extract_strided_slice %314 {offsets = [0, 0, 9], sizes = [2, 16, 64], strides = [1, 1, 1]} : vector<2x16x80xf32> to vector<2x16x64xf32>
    %457 = vector.shape_cast %455 : vector<1x64xf32> to vector<1x1x64xf32>
    %458 = vector.broadcast %457 : vector<1x1x64xf32> to vector<2x16x64xf32>
    %459 = arith.mulf %456, %458 : vector<2x16x64xf32>
    %460 = arith.addf %454, %459 : vector<2x16x64xf32>
    %c24_125 = arith.constant 24 : index
    %c0_126 = arith.constant 0 : index
    %461 = vector.load %arg3[%c24_125, %c0_126] : memref<45x64xf32, #tpu.memory_space<vmem>>, vector<1x64xf32>
    %462 = vector.extract_strided_slice %314 {offsets = [0, 0, 10], sizes = [2, 16, 64], strides = [1, 1, 1]} : vector<2x16x80xf32> to vector<2x16x64xf32>
    %463 = vector.shape_cast %461 : vector<1x64xf32> to vector<1x1x64xf32>
    %464 = vector.broadcast %463 : vector<1x1x64xf32> to vector<2x16x64xf32>
    %465 = arith.mulf %462, %464 : vector<2x16x64xf32>
    %466 = arith.addf %460, %465 : vector<2x16x64xf32>
    %c25_127 = arith.constant 25 : index
    %c0_128 = arith.constant 0 : index
    %467 = vector.load %arg3[%c25_127, %c0_128] : memref<45x64xf32, #tpu.memory_space<vmem>>, vector<1x64xf32>
    %468 = vector.extract_strided_slice %314 {offsets = [0, 0, 11], sizes = [2, 16, 64], strides = [1, 1, 1]} : vector<2x16x80xf32> to vector<2x16x64xf32>
    %469 = vector.shape_cast %467 : vector<1x64xf32> to vector<1x1x64xf32>
    %470 = vector.broadcast %469 : vector<1x1x64xf32> to vector<2x16x64xf32>
    %471 = arith.mulf %468, %470 : vector<2x16x64xf32>
    %472 = arith.addf %466, %471 : vector<2x16x64xf32>
    %c26_129 = arith.constant 26 : index
    %c0_130 = arith.constant 0 : index
    %473 = vector.load %arg3[%c26_129, %c0_130] : memref<45x64xf32, #tpu.memory_space<vmem>>, vector<1x64xf32>
    %474 = vector.extract_strided_slice %314 {offsets = [0, 0, 12], sizes = [2, 16, 64], strides = [1, 1, 1]} : vector<2x16x80xf32> to vector<2x16x64xf32>
    %475 = vector.shape_cast %473 : vector<1x64xf32> to vector<1x1x64xf32>
    %476 = vector.broadcast %475 : vector<1x1x64xf32> to vector<2x16x64xf32>
    %477 = arith.mulf %474, %476 : vector<2x16x64xf32>
    %478 = arith.addf %472, %477 : vector<2x16x64xf32>
    %c27_131 = arith.constant 27 : index
    %c0_132 = arith.constant 0 : index
    %479 = vector.load %arg3[%c27_131, %c0_132] : memref<45x64xf32, #tpu.memory_space<vmem>>, vector<1x64xf32>
    %480 = vector.extract_strided_slice %314 {offsets = [0, 0, 13], sizes = [2, 16, 64], strides = [1, 1, 1]} : vector<2x16x80xf32> to vector<2x16x64xf32>
    %481 = vector.shape_cast %479 : vector<1x64xf32> to vector<1x1x64xf32>
    %482 = vector.broadcast %481 : vector<1x1x64xf32> to vector<2x16x64xf32>
    %483 = arith.mulf %480, %482 : vector<2x16x64xf32>
    %484 = arith.addf %478, %483 : vector<2x16x64xf32>
    %c28_133 = arith.constant 28 : index
    %c0_134 = arith.constant 0 : index
    %485 = vector.load %arg3[%c28_133, %c0_134] : memref<45x64xf32, #tpu.memory_space<vmem>>, vector<1x64xf32>
    %486 = vector.extract_strided_slice %314 {offsets = [0, 0, 14], sizes = [2, 16, 64], strides = [1, 1, 1]} : vector<2x16x80xf32> to vector<2x16x64xf32>
    %487 = vector.shape_cast %485 : vector<1x64xf32> to vector<1x1x64xf32>
    %488 = vector.broadcast %487 : vector<1x1x64xf32> to vector<2x16x64xf32>
    %489 = arith.mulf %486, %488 : vector<2x16x64xf32>
    %490 = arith.addf %484, %489 : vector<2x16x64xf32>
    %c29_135 = arith.constant 29 : index
    %c0_136 = arith.constant 0 : index
    %491 = vector.load %arg3[%c29_135, %c0_136] : memref<45x64xf32, #tpu.memory_space<vmem>>, vector<1x64xf32>
    %492 = vector.extract_strided_slice %314 {offsets = [0, 0, 15], sizes = [2, 16, 64], strides = [1, 1, 1]} : vector<2x16x80xf32> to vector<2x16x64xf32>
    %493 = vector.shape_cast %491 : vector<1x64xf32> to vector<1x1x64xf32>
    %494 = vector.broadcast %493 : vector<1x1x64xf32> to vector<2x16x64xf32>
    %495 = arith.mulf %492, %494 : vector<2x16x64xf32>
    %496 = arith.addf %490, %495 : vector<2x16x64xf32>
    %c30_137 = arith.constant 30 : index
    %c0_138 = arith.constant 0 : index
    %497 = vector.load %arg3[%c30_137, %c0_138] : memref<45x64xf32, #tpu.memory_space<vmem>>, vector<1x64xf32>
    %498 = vector.extract_strided_slice %315 {offsets = [0, 0, 1], sizes = [2, 16, 64], strides = [1, 1, 1]} : vector<2x16x80xf32> to vector<2x16x64xf32>
    %499 = vector.shape_cast %497 : vector<1x64xf32> to vector<1x1x64xf32>
    %500 = vector.broadcast %499 : vector<1x1x64xf32> to vector<2x16x64xf32>
    %501 = arith.mulf %498, %500 : vector<2x16x64xf32>
    %502 = arith.addf %496, %501 : vector<2x16x64xf32>
    %c31_139 = arith.constant 31 : index
    %c0_140 = arith.constant 0 : index
    %503 = vector.load %arg3[%c31_139, %c0_140] : memref<45x64xf32, #tpu.memory_space<vmem>>, vector<1x64xf32>
    %504 = vector.extract_strided_slice %315 {offsets = [0, 0, 2], sizes = [2, 16, 64], strides = [1, 1, 1]} : vector<2x16x80xf32> to vector<2x16x64xf32>
    %505 = vector.shape_cast %503 : vector<1x64xf32> to vector<1x1x64xf32>
    %506 = vector.broadcast %505 : vector<1x1x64xf32> to vector<2x16x64xf32>
    %507 = arith.mulf %504, %506 : vector<2x16x64xf32>
    %508 = arith.addf %502, %507 : vector<2x16x64xf32>
    %c32_141 = arith.constant 32 : index
    %c0_142 = arith.constant 0 : index
    %509 = vector.load %arg3[%c32_141, %c0_142] : memref<45x64xf32, #tpu.memory_space<vmem>>, vector<1x64xf32>
    %510 = vector.extract_strided_slice %315 {offsets = [0, 0, 3], sizes = [2, 16, 64], strides = [1, 1, 1]} : vector<2x16x80xf32> to vector<2x16x64xf32>
    %511 = vector.shape_cast %509 : vector<1x64xf32> to vector<1x1x64xf32>
    %512 = vector.broadcast %511 : vector<1x1x64xf32> to vector<2x16x64xf32>
    %513 = arith.mulf %510, %512 : vector<2x16x64xf32>
    %514 = arith.addf %508, %513 : vector<2x16x64xf32>
    %c33_143 = arith.constant 33 : index
    %c0_144 = arith.constant 0 : index
    %515 = vector.load %arg3[%c33_143, %c0_144] : memref<45x64xf32, #tpu.memory_space<vmem>>, vector<1x64xf32>
    %516 = vector.extract_strided_slice %315 {offsets = [0, 0, 4], sizes = [2, 16, 64], strides = [1, 1, 1]} : vector<2x16x80xf32> to vector<2x16x64xf32>
    %517 = vector.shape_cast %515 : vector<1x64xf32> to vector<1x1x64xf32>
    %518 = vector.broadcast %517 : vector<1x1x64xf32> to vector<2x16x64xf32>
    %519 = arith.mulf %516, %518 : vector<2x16x64xf32>
    %520 = arith.addf %514, %519 : vector<2x16x64xf32>
    %c34_145 = arith.constant 34 : index
    %c0_146 = arith.constant 0 : index
    %521 = vector.load %arg3[%c34_145, %c0_146] : memref<45x64xf32, #tpu.memory_space<vmem>>, vector<1x64xf32>
    %522 = vector.extract_strided_slice %315 {offsets = [0, 0, 5], sizes = [2, 16, 64], strides = [1, 1, 1]} : vector<2x16x80xf32> to vector<2x16x64xf32>
    %523 = vector.shape_cast %521 : vector<1x64xf32> to vector<1x1x64xf32>
    %524 = vector.broadcast %523 : vector<1x1x64xf32> to vector<2x16x64xf32>
    %525 = arith.mulf %522, %524 : vector<2x16x64xf32>
    %526 = arith.addf %520, %525 : vector<2x16x64xf32>
    %c35_147 = arith.constant 35 : index
    %c0_148 = arith.constant 0 : index
    %527 = vector.load %arg3[%c35_147, %c0_148] : memref<45x64xf32, #tpu.memory_space<vmem>>, vector<1x64xf32>
    %528 = vector.extract_strided_slice %315 {offsets = [0, 0, 6], sizes = [2, 16, 64], strides = [1, 1, 1]} : vector<2x16x80xf32> to vector<2x16x64xf32>
    %529 = vector.shape_cast %527 : vector<1x64xf32> to vector<1x1x64xf32>
    %530 = vector.broadcast %529 : vector<1x1x64xf32> to vector<2x16x64xf32>
    %531 = arith.mulf %528, %530 : vector<2x16x64xf32>
    %532 = arith.addf %526, %531 : vector<2x16x64xf32>
    %c36_149 = arith.constant 36 : index
    %c0_150 = arith.constant 0 : index
    %533 = vector.load %arg3[%c36_149, %c0_150] : memref<45x64xf32, #tpu.memory_space<vmem>>, vector<1x64xf32>
    %534 = vector.extract_strided_slice %315 {offsets = [0, 0, 7], sizes = [2, 16, 64], strides = [1, 1, 1]} : vector<2x16x80xf32> to vector<2x16x64xf32>
    %535 = vector.shape_cast %533 : vector<1x64xf32> to vector<1x1x64xf32>
    %536 = vector.broadcast %535 : vector<1x1x64xf32> to vector<2x16x64xf32>
    %537 = arith.mulf %534, %536 : vector<2x16x64xf32>
    %538 = arith.addf %532, %537 : vector<2x16x64xf32>
    %c37_151 = arith.constant 37 : index
    %c0_152 = arith.constant 0 : index
    %539 = vector.load %arg3[%c37_151, %c0_152] : memref<45x64xf32, #tpu.memory_space<vmem>>, vector<1x64xf32>
    %540 = vector.extract_strided_slice %315 {offsets = [0, 0, 8], sizes = [2, 16, 64], strides = [1, 1, 1]} : vector<2x16x80xf32> to vector<2x16x64xf32>
    %541 = vector.shape_cast %539 : vector<1x64xf32> to vector<1x1x64xf32>
    %542 = vector.broadcast %541 : vector<1x1x64xf32> to vector<2x16x64xf32>
    %543 = arith.mulf %540, %542 : vector<2x16x64xf32>
    %544 = arith.addf %538, %543 : vector<2x16x64xf32>
    %c38_153 = arith.constant 38 : index
    %c0_154 = arith.constant 0 : index
    %545 = vector.load %arg3[%c38_153, %c0_154] : memref<45x64xf32, #tpu.memory_space<vmem>>, vector<1x64xf32>
    %546 = vector.extract_strided_slice %315 {offsets = [0, 0, 9], sizes = [2, 16, 64], strides = [1, 1, 1]} : vector<2x16x80xf32> to vector<2x16x64xf32>
    %547 = vector.shape_cast %545 : vector<1x64xf32> to vector<1x1x64xf32>
    %548 = vector.broadcast %547 : vector<1x1x64xf32> to vector<2x16x64xf32>
    %549 = arith.mulf %546, %548 : vector<2x16x64xf32>
    %550 = arith.addf %544, %549 : vector<2x16x64xf32>
    %c39_155 = arith.constant 39 : index
    %c0_156 = arith.constant 0 : index
    %551 = vector.load %arg3[%c39_155, %c0_156] : memref<45x64xf32, #tpu.memory_space<vmem>>, vector<1x64xf32>
    %552 = vector.extract_strided_slice %315 {offsets = [0, 0, 10], sizes = [2, 16, 64], strides = [1, 1, 1]} : vector<2x16x80xf32> to vector<2x16x64xf32>
    %553 = vector.shape_cast %551 : vector<1x64xf32> to vector<1x1x64xf32>
    %554 = vector.broadcast %553 : vector<1x1x64xf32> to vector<2x16x64xf32>
    %555 = arith.mulf %552, %554 : vector<2x16x64xf32>
    %556 = arith.addf %550, %555 : vector<2x16x64xf32>
    %c40_157 = arith.constant 40 : index
    %c0_158 = arith.constant 0 : index
    %557 = vector.load %arg3[%c40_157, %c0_158] : memref<45x64xf32, #tpu.memory_space<vmem>>, vector<1x64xf32>
    %558 = vector.extract_strided_slice %315 {offsets = [0, 0, 11], sizes = [2, 16, 64], strides = [1, 1, 1]} : vector<2x16x80xf32> to vector<2x16x64xf32>
    %559 = vector.shape_cast %557 : vector<1x64xf32> to vector<1x1x64xf32>
    %560 = vector.broadcast %559 : vector<1x1x64xf32> to vector<2x16x64xf32>
    %561 = arith.mulf %558, %560 : vector<2x16x64xf32>
    %562 = arith.addf %556, %561 : vector<2x16x64xf32>
    %c41_159 = arith.constant 41 : index
    %c0_160 = arith.constant 0 : index
    %563 = vector.load %arg3[%c41_159, %c0_160] : memref<45x64xf32, #tpu.memory_space<vmem>>, vector<1x64xf32>
    %564 = vector.extract_strided_slice %315 {offsets = [0, 0, 12], sizes = [2, 16, 64], strides = [1, 1, 1]} : vector<2x16x80xf32> to vector<2x16x64xf32>
    %565 = vector.shape_cast %563 : vector<1x64xf32> to vector<1x1x64xf32>
    %566 = vector.broadcast %565 : vector<1x1x64xf32> to vector<2x16x64xf32>
    %567 = arith.mulf %564, %566 : vector<2x16x64xf32>
    %568 = arith.addf %562, %567 : vector<2x16x64xf32>
    %c42_161 = arith.constant 42 : index
    %c0_162 = arith.constant 0 : index
    %569 = vector.load %arg3[%c42_161, %c0_162] : memref<45x64xf32, #tpu.memory_space<vmem>>, vector<1x64xf32>
    %570 = vector.extract_strided_slice %315 {offsets = [0, 0, 13], sizes = [2, 16, 64], strides = [1, 1, 1]} : vector<2x16x80xf32> to vector<2x16x64xf32>
    %571 = vector.shape_cast %569 : vector<1x64xf32> to vector<1x1x64xf32>
    %572 = vector.broadcast %571 : vector<1x1x64xf32> to vector<2x16x64xf32>
    %573 = arith.mulf %570, %572 : vector<2x16x64xf32>
    %574 = arith.addf %568, %573 : vector<2x16x64xf32>
    %c43_163 = arith.constant 43 : index
    %c0_164 = arith.constant 0 : index
    %575 = vector.load %arg3[%c43_163, %c0_164] : memref<45x64xf32, #tpu.memory_space<vmem>>, vector<1x64xf32>
    %576 = vector.extract_strided_slice %315 {offsets = [0, 0, 14], sizes = [2, 16, 64], strides = [1, 1, 1]} : vector<2x16x80xf32> to vector<2x16x64xf32>
    %577 = vector.shape_cast %575 : vector<1x64xf32> to vector<1x1x64xf32>
    %578 = vector.broadcast %577 : vector<1x1x64xf32> to vector<2x16x64xf32>
    %579 = arith.mulf %576, %578 : vector<2x16x64xf32>
    %580 = arith.addf %574, %579 : vector<2x16x64xf32>
    %c44_165 = arith.constant 44 : index
    %c0_166 = arith.constant 0 : index
    %581 = vector.load %arg3[%c44_165, %c0_166] : memref<45x64xf32, #tpu.memory_space<vmem>>, vector<1x64xf32>
    %582 = vector.extract_strided_slice %315 {offsets = [0, 0, 15], sizes = [2, 16, 64], strides = [1, 1, 1]} : vector<2x16x80xf32> to vector<2x16x64xf32>
    %583 = vector.shape_cast %581 : vector<1x64xf32> to vector<1x1x64xf32>
    %584 = vector.broadcast %583 : vector<1x1x64xf32> to vector<2x16x64xf32>
    %585 = arith.mulf %582, %584 : vector<2x16x64xf32>
    %586 = arith.addf %580, %585 : vector<2x16x64xf32>
    %587 = vector.shape_cast %586 : vector<2x16x64xf32> to vector<32x64xf32>
    %c0_167 = arith.constant 0 : index
    %c0_168 = arith.constant 0 : index
    %588 = vector.load %arg8[%c0_167, %c0_168] : memref<1x64xf32, #tpu.memory_space<vmem>>, vector<1x64xf32>
    %589 = vector.broadcast %588 : vector<1x64xf32> to vector<32x64xf32>
    %590 = arith.addf %587, %589 : vector<32x64xf32>
    %cst_169 = arith.constant dense<0.000000e+00> : vector<64xf32>
    %591 = vector.multi_reduction <add>, %590, %cst_169 [0] : vector<32x64xf32> to vector<64xf32>
    %592 = vector.shape_cast %591 : vector<64xf32> to vector<1x64xf32>
    %593 = arith.mulf %590, %590 : vector<32x64xf32>
    %cst_170 = arith.constant dense<0.000000e+00> : vector<64xf32>
    %594 = vector.multi_reduction <add>, %593, %cst_170 [0] : vector<32x64xf32> to vector<64xf32>
    %595 = vector.shape_cast %594 : vector<64xf32> to vector<1x64xf32>
    %c0_171 = arith.constant 0 : index
    %c0_172 = arith.constant 0 : index
    %596 = vector.load %arg4[%c0_171, %c0_172] : memref<64x64xf32, #tpu.memory_space<vmem>>, vector<64x64xf32>
    %cst_173 = arith.constant dense<0.000000e+00> : vector<1x64xf32>
    %597 = tpu.matmul %592, %596, %cst_173 {dimension_numbers = #tpu.dot_dimension_numbers<[1], [0], [0], [1], [0, 0, 1, 1], [], []>} : vector<1x64xf32>, vector<64x64xf32>, vector<1x64xf32> -> vector<1x64xf32>
    %cst_174 = arith.constant 0.001953125 : f32
    %598 = vector.broadcast %cst_174 : f32 to vector<1x64xf32>
    %599 = arith.mulf %597, %598 : vector<1x64xf32>
    %c0_175 = arith.constant 0 : index
    %c0_176 = arith.constant 0 : index
    %600 = vector.load %arg4[%c0_175, %c0_176] : memref<64x64xf32, #tpu.memory_space<vmem>>, vector<64x64xf32>
    %cst_177 = arith.constant dense<0.000000e+00> : vector<1x64xf32>
    %601 = tpu.matmul %595, %600, %cst_177 {dimension_numbers = #tpu.dot_dimension_numbers<[1], [0], [0], [1], [0, 0, 1, 1], [], []>} : vector<1x64xf32>, vector<64x64xf32>, vector<1x64xf32> -> vector<1x64xf32>
    %cst_178 = arith.constant 0.001953125 : f32
    %602 = vector.broadcast %cst_178 : f32 to vector<1x64xf32>
    %603 = arith.mulf %601, %602 : vector<1x64xf32>
    %604 = arith.mulf %599, %599 : vector<1x64xf32>
    %605 = arith.subf %603, %604 : vector<1x64xf32>
    %c0_179 = arith.constant 0 : index
    %c0_180 = arith.constant 0 : index
    %606 = vector.load %arg9[%c0_179, %c0_180] : memref<1x64xf32, #tpu.memory_space<vmem>>, vector<1x64xf32>
    %cst_181 = arith.constant 9.99999974E-6 : f32
    %607 = vector.broadcast %cst_181 : f32 to vector<1x64xf32>
    %608 = arith.addf %605, %607 : vector<1x64xf32>
    %609 = math.rsqrt %608 : vector<1x64xf32>
    %610 = arith.mulf %606, %609 : vector<1x64xf32>
    %c0_182 = arith.constant 0 : index
    %c0_183 = arith.constant 0 : index
    %611 = vector.load %arg10[%c0_182, %c0_183] : memref<1x64xf32, #tpu.memory_space<vmem>>, vector<1x64xf32>
    %612 = arith.mulf %599, %610 : vector<1x64xf32>
    %613 = arith.subf %611, %612 : vector<1x64xf32>
    %614 = vector.broadcast %610 : vector<1x64xf32> to vector<32x64xf32>
    %615 = arith.mulf %590, %614 : vector<32x64xf32>
    %616 = vector.broadcast %613 : vector<1x64xf32> to vector<32x64xf32>
    %617 = arith.addf %615, %616 : vector<32x64xf32>
    %c0_184 = arith.constant 0 : index
    %c0_185 = arith.constant 0 : index
    %618 = vector.load %arg1[%c0_184, %c0_185] : memref<32x64xf32, #tpu.memory_space<vmem>>, vector<32x64xf32>
    %619 = arith.addf %617, %618 : vector<32x64xf32>
    %c0_186 = arith.constant 0 : index
    %c0_187 = arith.constant 0 : index
    %620 = vector.load %arg11[%c0_186, %c0_187] : memref<32x64xf32, #tpu.memory_space<vmem>>, vector<32x64xf32>
    tpu.vector_store %arg11[%c0_186, %c0_187], %619 {strides = array<i32>} : memref<32x64xf32, #tpu.memory_space<vmem>>, vector<32x64xf32>,
    return
  }
}

</mosaic_0001>

<llo_original>
// kernel: tile.734
$region0: #{tile.734}
  #allocation0 [shape = 's32[1]{0}', space=sflag, size = 0x4, scoped, tag = 'scoped memory for tile.734']
  %s0 = inlined_call_operand.vmem [shape: f32[4], index: 0, kind: input, shape index: {}]
  %s1 = inlined_call_operand.vmem [shape: f32[16,4], index: 1, kind: output, shape index: {}]
  // Predicated region
  $region2: #{tile.734} parent=0 // pred_check
    _
  $region3: #{tile.734} parent=0 // pred_check_branch
    %3 = sbr.rel (0) target = $region5
  $region4: #{tile.734} parent=0 // pred_region
    _
  $region5: #{tile.734} parent=0 // pred_fallthru
    _
  %v4 = vld [vmem:[%s0] ss:$0 sm:$0xff]
  %5 = vst [vmem:[%s1] sm:$0xff] %v4
  %s6 = scalar_lea.vmem %s1, 8
  %7 = vst [vmem:[%s6] sm:$0xff] %v4

// kernel: tile.899
$region0: #{tile.899}
  %s0 = inlined_call_operand.vmem [shape: f32[16,4], index: 0, kind: input, shape index: {}]
  %s1 = inlined_call_operand.vmem [shape: f32[1,64], index: 1, kind: output, shape index: {}]
  $region1: #{tile.899} parent=0
    #allocation0 [shape = 'u8[4096]{0}', space=vmem, size = 0x1000, scoped, tag = 'scoped mem for output reshape']
    %v2 = vld [vmem:[%s0] sm:$0x1]
    %vm3 = vcmask 31744
    %4 = vst.msk [vmem:[#allocation0] sm:$0x1] %vm3, %v2
    %s5 = scalar_lea.vmem %s0, 15
    %v6 = vld [vmem:[%s5] sm:$0x1]
    %7 = vrot.lane.b32.xlu0 %v6, 60
    %v8 = vpop.permute.xlu0 %7
    %vm9 = vcmask 523744
    %10 = vst.msk [vmem:[#allocation0] sm:$0x1] %vm9, %v8
    %s11 = scalar_lea.vmem %s0, 14
    %v12 = vld [vmem:[%s11] sm:$0x1]
    %13 = vrot.lane.b32.xlu0 %v12, 56
    %v14 = vpop.permute.xlu0 %13
    %vm15 = vcmask 490944
    %16 = vst.msk [vmem:[#allocation0] sm:$0x1] %vm15, %v14
    %s17 = scalar_lea.vmem %s0, 13
    %v18 = vld [vmem:[%s17] sm:$0x1]
    %19 = vrot.lane.b32.xlu0 %v18, 52
    %v20 = vpop.permute.xlu0 %19
    %vm21 = vcmask 458144
    %22 = vst.msk [vmem:[#allocation0] sm:$0x1] %vm21, %v20
    %s23 = scalar_lea.vmem %s0, 12
    %v24 = vld [vmem:[%s23] sm:$0x1]
    %25 = vrot.lane.b32.xlu0 %v24, 48
    %v26 = vpop.permute.xlu0 %25
    %vm27 = vcmask 425344
    %28 = vst.msk [vmem:[#allocation0] sm:$0x1] %vm27, %v26
    %s29 = scalar_lea.vmem %s0, 11
    %v30 = vld [vmem:[%s29] sm:$0x1]
    %31 = vrot.lane.b32.xlu0 %v30, 44
    %v32 = vpop.permute.xlu0 %31
    %vm33 = vcmask 392544
    %34 = vst.msk [vmem:[#allocation0] sm:$0x1] %vm33, %v32
    %s35 = scalar_lea.vmem %s0, 10
    %v36 = vld [vmem:[%s35] sm:$0x1]
    %37 = vrot.lane.b32.xlu0 %v36, 40
    %v38 = vpop.permute.xlu0 %37
    %vm39 = vcmask 359744
    %40 = vst.msk [vmem:[#allocation0] sm:$0x1] %vm39, %v38
    %s41 = scalar_lea.vmem %s0, 9
    %v42 = vld [vmem:[%s41] sm:$0x1]
    %43 = vrot.lane.b32.xlu0 %v42, 36
    %v44 = vpop.permute.xlu0 %43
    %vm45 = vcmask 326944
    %46 = vst.msk [vmem:[#allocation0] sm:$0x1] %vm45, %v44
    %s47 = scalar_lea.vmem %s0, 8
    %v48 = vld [vmem:[%s47] sm:$0x1]
    %49 = vrot.lane.b32.xlu0 %v48, 32
    %v50 = vpop.permute.xlu0 %49
    %vm51 = vcmask 294144
    %52 = vst.msk [vmem:[#allocation0] sm:$0x1] %vm51, %v50
    %s53 = scalar_lea.vmem %s0, 7
    %v54 = vld [vmem:[%s53] sm:$0x1]
    %55 = vrot.lane.b32.xlu0 %v54, 28
    %v56 = vpop.permute.xlu0 %55
    %vm57 = vcmask 261344
    %58 = vst.msk [vmem:[#allocation0] sm:$0x1] %vm57, %v56
    %s59 = scalar_lea.vmem %s0, 6
    %v60 = vld [vmem:[%s59] sm:$0x1]
    %61 = vrot.lane.b32.xlu0 %v60, 24
    %v62 = vpop.permute.xlu0 %61
    %vm63 = vcmask 228544
    %64 = vst.msk [vmem:[#allocation0] sm:$0x1] %vm63, %v62
    %s65 = scalar_lea.vmem %s0, 5
    %v66 = vld [vmem:[%s65] sm:$0x1]
    %67 = vrot.lane.b32.xlu0 %v66, 20
    %v68 = vpop.permute.xlu0 %67
    %vm69 = vcmask 195744
    %70 = vst.msk [vmem:[#allocation0] sm:$0x1] %vm69, %v68
    %s71 = scalar_lea.vmem %s0, 4
    %v72 = vld [vmem:[%s71] sm:$0x1]
    %73 = vrot.lane.b32.xlu0 %v72, 16
    %v74 = vpop.permute.xlu0 %73
    %vm75 = vcmask 162944
    %76 = vst.msk [vmem:[#allocation0] sm:$0x1] %vm75, %v74
    %s77 = scalar_lea.vmem %s0, 3
    %v78 = vld [vmem:[%s77] sm:$0x1]
    %79 = vrot.lane.b32.xlu0 %v78, 12
    %v80 = vpop.permute.xlu0 %79
    %vm81 = vcmask 130144
    %82 = vst.msk [vmem:[#allocation0] sm:$0x1] %vm81, %v80
    %s83 = scalar_lea.vmem %s0, 2
    %v84 = vld [vmem:[%s83] sm:$0x1]
    %85 = vrot.lane.b32.xlu0 %v84, 8
    %v86 = vpop.permute.xlu0 %85
    %vm87 = vcmask 97344
    %88 = vst.msk [vmem:[#allocation0] sm:$0x1] %vm87, %v86
    %s89 = scalar_lea.vmem %s0, 1
    %v90 = vld [vmem:[%s89] sm:$0x1]
    %91 = vrot.lane.b32.xlu0 %v90, 4
    %v92 = vpop.permute.xlu0 %91
    %vm93 = vcmask 64544
    %94 = vst.msk [vmem:[#allocation0] sm:$0x1] %vm93, %v92
    %s96 = sshllo.u32 0, 1
    %v98 = vld [vmem:[#allocation0] sm:%s96]
    %s99 = sshllo.u32 0, 1
    %100 = vst [vmem:[%s1] sm:%s99] %v98

// kernel: tile.488
$region0: #{tile.488}
  #allocation0 [shape = 's32[1]{0}', space=sflag, size = 0x4, scoped, tag = 'scoped memory for tile.488']
  %s0 = inlined_call_operand.vmem [shape: f32[4,4], index: 0, kind: input, shape index: {}]
  %s1 = inlined_call_operand.vmem [shape: f32[16,4,16,4], index: 1, kind: output, shape index: {}]
  // Predicated region
  $region2: #{tile.488} parent=0 // pred_check
    _
  $region3: #{tile.488} parent=0 // pred_check_branch
    %3 = sbr.rel (0) target = $region5
  $region4: #{tile.488} parent=0 // pred_region
    _
  $region5: #{tile.488} parent=0 // pred_fallthru
    _
  %v4 = vld [vmem:[%s0] ss:$0 sm:$0xff]
  %5 = vst [vmem:[%s1] sm:$0xff] %v4
  %s6 = scalar_lea.vmem %s1, 64
  %7 = vst [vmem:[%s6] sm:$0xff] %v4
  %s8 = scalar_lea.vmem %s1, 128
  %9 = vst [vmem:[%s8] sm:$0xff] %v4
  %s10 = scalar_lea.vmem %s1, 192
  %11 = vst [vmem:[%s10] sm:$0xff] %v4
  %s12 = scalar_lea.vmem %s1, 256
  %13 = vst [vmem:[%s12] sm:$0xff] %v4
  %s14 = scalar_lea.vmem %s1, 320
  %15 = vst [vmem:[%s14] sm:$0xff] %v4
  %s16 = scalar_lea.vmem %s1, 384
  %17 = vst [vmem:[%s16] sm:$0xff] %v4
  %s18 = scalar_lea.vmem %s1, 448
  %19 = vst [vmem:[%s18] sm:$0xff] %v4
  %s20 = scalar_lea.vmem %s1, 512
  %21 = vst [vmem:[%s20] sm:$0xff] %v4
  %s22 = scalar_lea.vmem %s1, 576
  %23 = vst [vmem:[%s22] sm:$0xff] %v4
  %s24 = scalar_lea.vmem %s1, 640
  %25 = vst [vmem:[%s24] sm:$0xff] %v4
  %s26 = scalar_lea.vmem %s1, 704
  %27 = vst [vmem:[%s26] sm:$0xff] %v4
  %s28 = scalar_lea.vmem %s1, 768
  %29 = vst [vmem:[%s28] sm:$0xff] %v4
  %s30 = scalar_lea.vmem %s1, 832
  %31 = vst [vmem:[%s30] sm:$0xff] %v4
  %s32 = scalar_lea.vmem %s1, 896
  %33 = vst [vmem:[%s32] sm:$0xff] %v4
  %s34 = scalar_lea.vmem %s1, 960
  %35 = vst [vmem:[%s34] sm:$0xff] %v4
  %s36 = scalar_lea.vmem %s0, 1
  %v37 = vld [vmem:[%s36] ss:$0 sm:$0xff]
  %s38 = scalar_lea.vmem %s1, 16
  %39 = vst [vmem:[%s38] sm:$0xff] %v37
  %s40 = scalar_lea.vmem %s1, 80
  %41 = vst [vmem:[%s40] sm:$0xff] %v37
  %s42 = scalar_lea.vmem %s1, 144
  %43 = vst [vmem:[%s42] sm:$0xff] %v37
  %s44 = scalar_lea.vmem %s1, 208
  %45 = vst [vmem:[%s44] sm:$0xff] %v37
  %s46 = scalar_lea.vmem %s1, 272
  %47 = vst [vmem:[%s46] sm:$0xff] %v37
  %s48 = scalar_lea.vmem %s1, 336
  %49 = vst [vmem:[%s48] sm:$0xff] %v37
  %s50 = scalar_lea.vmem %s1, 400
  %51 = vst [vmem:[%s50] sm:$0xff] %v37
  %s52 = scalar_lea.vmem %s1, 464
  %53 = vst [vmem:[%s52] sm:$0xff] %v37
  %s54 = scalar_lea.vmem %s1, 528
  %55 = vst [vmem:[%s54] sm:$0xff] %v37
  %s56 = scalar_lea.vmem %s1, 592
  %57 = vst [vmem:[%s56] sm:$0xff] %v37
  %s58 = scalar_lea.vmem %s1, 656
  %59 = vst [vmem:[%s58] sm:$0xff] %v37
  %s60 = scalar_lea.vmem %s1, 720
  %61 = vst [vmem:[%s60] sm:$0xff] %v37
  %s62 = scalar_lea.vmem %s1, 784
  %63 = vst [vmem:[%s62] sm:$0xff] %v37
  %s64 = scalar_lea.vmem %s1, 848
  %65 = vst [vmem:[%s64] sm:$0xff] %v37
  %s66 = scalar_lea.vmem %s1, 912
  %67 = vst [vmem:[%s66] sm:$0xff] %v37
  %s68 = scalar_lea.vmem %s1, 976
  %69 = vst [vmem:[%s68] sm:$0xff] %v37
  %s70 = scalar_lea.vmem %s0, 2
  %v71 = vld [vmem:[%s70] ss:$0 sm:$0xff]
  %s72 = scalar_lea.vmem %s1, 32
  %73 = vst [vmem:[%s72] sm:$0xff] %v71
  %s74 = scalar_lea.vmem %s1, 96
  %75 = vst [vmem:[%s74] sm:$0xff] %v71
  %s76 = scalar_lea.vmem %s1, 160
  %77 = vst [vmem:[%s76] sm:$0xff] %v71
  %s78 = scalar_lea.vmem %s1, 224
  %79 = vst [vmem:[%s78] sm:$0xff] %v71
  %s80 = scalar_lea.vmem %s1, 288
  %81 = vst [vmem:[%s80] sm:$0xff] %v71
  %s82 = scalar_lea.vmem %s1, 352
  %83 = vst [vmem:[%s82] sm:$0xff] %v71
  %s84 = scalar_lea.vmem %s1, 416
  %85 = vst [vmem:[%s84] sm:$0xff] %v71
  %s86 = scalar_lea.vmem %s1, 480
  %87 = vst [vmem:[%s86] sm:$0xff] %v71
  %s88 = scalar_lea.vmem %s1, 544
  %89 = vst [vmem:[%s88] sm:$0xff] %v71
  %s90 = scalar_lea.vmem %s1, 608
  %91 = vst [vmem:[%s90] sm:$0xff] %v71
  %s92 = scalar_lea.vmem %s1, 672
  %93 = vst [vmem:[%s92] sm:$0xff] %v71
  %s94 = scalar_lea.vmem %s1, 736
  %95 = vst [vmem:[%s94] sm:$0xff] %v71
  %s96 = scalar_lea.vmem %s1, 800
  %97 = vst [vmem:[%s96] sm:$0xff] %v71
  %s98 = scalar_lea.vmem %s1, 864
  %99 = vst [vmem:[%s98] sm:$0xff] %v71
  %s100 = scalar_lea.vmem %s1, 928
  %101 = vst [vmem:[%s100] sm:$0xff] %v71
  %s102 = scalar_lea.vmem %s1, 992
  %103 = vst [vmem:[%s102] sm:$0xff] %v71
  %s104 = scalar_lea.vmem %s0, 3
  %v105 = vld [vmem:[%s104] ss:$0 sm:$0xff]
  %s106 = scalar_lea.vmem %s1, 48
  %107 = vst [vmem:[%s106] sm:$0xff] %v105
  %s108 = scalar_lea.vmem %s1, 112
  %109 = vst [vmem:[%s108] sm:$0xff] %v105
  %s110 = scalar_lea.vmem %s1, 176
  %111 = vst [vmem:[%s110] sm:$0xff] %v105
  %s112 = scalar_lea.vmem %s1, 240
  %113 = vst [vmem:[%s112] sm:$0xff] %v105
  %s114 = scalar_lea.vmem %s1, 304
  %115 = vst [vmem:[%s114] sm:$0xff] %v105
  %s116 = scalar_lea.vmem %s1, 368
  %117 = vst [vmem:[%s116] sm:$0xff] %v105
  %s118 = scalar_lea.vmem %s1, 432
  %119 = vst [vmem:[%s118] sm:$0xff] %v105
  %s120 = scalar_lea.vmem %s1, 496
  %121 = vst [vmem:[%s120] sm:$0xff] %v105
  %s122 = scalar_lea.vmem %s1, 560
  %123 = vst [vmem:[%s122] sm:$0xff] %v105
  %s124 = scalar_lea.vmem %s1, 624
  %125 = vst [vmem:[%s124] sm:$0xff] %v105
  %s126 = scalar_lea.vmem %s1, 688
  %127 = vst [vmem:[%s126] sm:$0xff] %v105
  %s128 = scalar_lea.vmem %s1, 752
  %129 = vst [vmem:[%s128] sm:$0xff] %v105
  %s130 = scalar_lea.vmem %s1, 816
  %131 = vst [vmem:[%s130] sm:$0xff] %v105
  %s132 = scalar_lea.vmem %s1, 880
  %133 = vst [vmem:[%s132] sm:$0xff] %v105
  %s134 = scalar_lea.vmem %s1, 944
  %135 = vst [vmem:[%s134] sm:$0xff] %v105
  %s136 = scalar_lea.vmem %s1, 1008
  %137 = vst [vmem:[%s136] sm:$0xff] %v105
  %s138 = scalar_lea.vmem %s1, 8
  %139 = vst [vmem:[%s138] sm:$0xff] %v4
  %s140 = scalar_lea.vmem %s1, 72
  %141 = vst [vmem:[%s140] sm:$0xff] %v4
  %s142 = scalar_lea.vmem %s1, 136
  %143 = vst [vmem:[%s142] sm:$0xff] %v4
  %s144 = scalar_lea.vmem %s1, 200
  %145 = vst [vmem:[%s144] sm:$0xff] %v4
  %s146 = scalar_lea.vmem %s1, 264
  %147 = vst [vmem:[%s146] sm:$0xff] %v4
  %s148 = scalar_lea.vmem %s1, 328
  %149 = vst [vmem:[%s148] sm:$0xff] %v4
  %s150 = scalar_lea.vmem %s1, 392
  %151 = vst [vmem:[%s150] sm:$0xff] %v4
  %s152 = scalar_lea.vmem %s1, 456
  %153 = vst [vmem:[%s152] sm:$0xff] %v4
  %s154 = scalar_lea.vmem %s1, 520
  %155 = vst [vmem:[%s154] sm:$0xff] %v4
  %s156 = scalar_lea.vmem %s1, 584
  %157 = vst [vmem:[%s156] sm:$0xff] %v4
  %s158 = scalar_lea.vmem %s1, 648
  %159 = vst [vmem:[%s158] sm:$0xff] %v4
  %s160 = scalar_lea.vmem %s1, 712
  %161 = vst [vmem:[%s160] sm:$0xff] %v4
  %s162 = scalar_lea.vmem %s1, 776
  %163 = vst [vmem:[%s162] sm:$0xff] %v4
  %s164 = scalar_lea.vmem %s1, 840
  %165 = vst [vmem:[%s164] sm:$0xff] %v4
  %s166 = scalar_lea.vmem %s1, 904
  %167 = vst [vmem:[%s166] sm:$0xff] %v4
  %s168 = scalar_lea.vmem %s1, 968
  %169 = vst [vmem:[%s168] sm:$0xff] %v4
  %s170 = scalar_lea.vmem %s1, 24
  %171 = vst [vmem:[%s170] sm:$0xff] %v37
  %s172 = scalar_lea.vmem %s1, 88
  %173 = vst [vmem:[%s172] sm:$0xff] %v37
  %s174 = scalar_lea.vmem %s1, 152
  %175 = vst [vmem:[%s174] sm:$0xff] %v37
  %s176 = scalar_lea.vmem %s1, 216
  %177 = vst [vmem:[%s176] sm:$0xff] %v37
  %s178 = scalar_lea.vmem %s1, 280
  %179 = vst [vmem:[%s178] sm:$0xff] %v37
  %s180 = scalar_lea.vmem %s1, 344
  %181 = vst [vmem:[%s180] sm:$0xff] %v37
  %s182 = scalar_lea.vmem %s1, 408
  %183 = vst [vmem:[%s182] sm:$0xff] %v37
  %s184 = scalar_lea.vmem %s1, 472
  %185 = vst [vmem:[%s184] sm:$0xff] %v37
  %s186 = scalar_lea.vmem %s1, 536
  %187 = vst [vmem:[%s186] sm:$0xff] %v37
  %s188 = scalar_lea.vmem %s1, 600
  %189 = vst [vmem:[%s188] sm:$0xff] %v37
  %s190 = scalar_lea.vmem %s1, 664
  %191 = vst [vmem:[%s190] sm:$0xff] %v37
  %s192 = scalar_lea.vmem %s1, 728
  %193 = vst [vmem:[%s192] sm:$0xff] %v37
  %s194 = scalar_lea.vmem %s1, 792
  %195 = vst [vmem:[%s194] sm:$0xff] %v37
  %s196 = scalar_lea.vmem %s1, 856
  %197 = vst [vmem:[%s196] sm:$0xff] %v37
  %s198 = scalar_lea.vmem %s1, 920
  %199 = vst [vmem:[%s198] sm:$0xff] %v37
  %s200 = scalar_lea.vmem %s1, 984
  %201 = vst [vmem:[%s200] sm:$0xff] %v37
  %s202 = scalar_lea.vmem %s1, 40
  %203 = vst [vmem:[%s202] sm:$0xff] %v71
  %s204 = scalar_lea.vmem %s1, 104
  %205 = vst [vmem:[%s204] sm:$0xff] %v71
  %s206 = scalar_lea.vmem %s1, 168
  %207 = vst [vmem:[%s206] sm:$0xff] %v71
  %s208 = scalar_lea.vmem %s1, 232
  %209 = vst [vmem:[%s208] sm:$0xff] %v71
  %s210 = scalar_lea.vmem %s1, 296
  %211 = vst [vmem:[%s210] sm:$0xff] %v71
  %s212 = scalar_lea.vmem %s1, 360
  %213 = vst [vmem:[%s212] sm:$0xff] %v71
  %s214 = scalar_lea.vmem %s1, 424
  %215 = vst [vmem:[%s214] sm:$0xff] %v71
  %s216 = scalar_lea.vmem %s1, 488
  %217 = vst [vmem:[%s216] sm:$0xff] %v71
  %s218 = scalar_lea.vmem %s1, 552
  %219 = vst [vmem:[%s218] sm:$0xff] %v71
  %s220 = scalar_lea.vmem %s1, 616
  %221 = vst [vmem:[%s220] sm:$0xff] %v71
  %s222 = scalar_lea.vmem %s1, 680
  %223 = vst [vmem:[%s222] sm:$0xff] %v71
  %s224 = scalar_lea.vmem %s1, 744
  %225 = vst [vmem:[%s224] sm:$0xff] %v71
  %s226 = scalar_lea.vmem %s1, 808
  %227 = vst [vmem:[%s226] sm:$0xff] %v71
  %s228 = scalar_lea.vmem %s1, 872
  %229 = vst [vmem:[%s228] sm:$0xff] %v71
  %s230 = scalar_lea.vmem %s1, 936
  %231 = vst [vmem:[%s230] sm:$0xff] %v71
  %s232 = scalar_lea.vmem %s1, 1000
  %233 = vst [vmem:[%s232] sm:$0xff] %v71
  %s234 = scalar_lea.vmem %s1, 56
  %235 = vst [vmem:[%s234] sm:$0xff] %v105
  %s236 = scalar_lea.vmem %s1, 120
  %237 = vst [vmem:[%s236] sm:$0xff] %v105
  %s238 = scalar_lea.vmem %s1, 184
  %239 = vst [vmem:[%s238] sm:$0xff] %v105
  %s240 = scalar_lea.vmem %s1, 248
  %241 = vst [vmem:[%s240] sm:$0xff] %v105
  %s242 = scalar_lea.vmem %s1, 312
  %243 = vst [vmem:[%s242] sm:$0xff] %v105
  %s244 = scalar_lea.vmem %s1, 376
  %245 = vst [vmem:[%s244] sm:$0xff] %v105
  %s246 = scalar_lea.vmem %s1, 440
  %247 = vst [vmem:[%s246] sm:$0xff] %v105
  %s248 = scalar_lea.vmem %s1, 504
  %249 = vst [vmem:[%s248] sm:$0xff] %v105
  %s250 = scalar_lea.vmem %s1, 568
  %251 = vst [vmem:[%s250] sm:$0xff] %v105
  %s252 = scalar_lea.vmem %s1, 632
  %253 = vst [vmem:[%s252] sm:$0xff] %v105
  %s254 = scalar_lea.vmem %s1, 696
  %255 = vst [vmem:[%s254] sm:$0xff] %v105
  %s256 = scalar_lea.vmem %s1, 760
  %257 = vst [vmem:[%s256] sm:$0xff] %v105
  %s258 = scalar_lea.vmem %s1, 824
  %259 = vst [vmem:[%s258] sm:$0xff] %v105
  %s260 = scalar_lea.vmem %s1, 888
  %261 = vst [vmem:[%s260] sm:$0xff] %v105
  %s262 = scalar_lea.vmem %s1, 952
  %263 = vst [vmem:[%s262] sm:$0xff] %v105
  %s264 = scalar_lea.vmem %s1, 1016
  %265 = vst [vmem:[%s264] sm:$0xff] %v105

// kernel: tile.489
$region0: #{tile.489}
  %s0 = inlined_call_operand.vmem [shape: f32[16,4,16,4], index: 0, kind: input, shape index: {}]
  %s1 = inlined_call_operand.vmem [shape: f32[64,64], index: 1, kind: output, shape index: {}]
  %s2 = smov 3
  %v3 = vld [vmem:[%s0] ss:$16 sm:%s2]
  %s4 = smov 12
  %v5 = vld [vmem:[%s0] ss:$16 sm:%s4]
  %vm6 = vcmask 1043458
  %v7 = vsel %vm6, %v5, %v3
  %s8 = smov 48
  %v9 = vld [vmem:[%s0] ss:$16 sm:%s8]
  %vm10 = vcmask 1045508
  %v11 = vsel %vm10, %v9, %v7
  %s12 = smov 192
  %v13 = vld [vmem:[%s0] ss:$16 sm:%s12]
  %vm14 = vcmask 1047558
  %v15 = vsel %vm14, %v13, %v11
  %vm16 = vcmask 31744
  %17 = vst.msk [vmem:[%s1] sm:$0xff] %vm16, %v15
  %s18 = scalar_lea.vmem %s0, 128
  %s19 = smov 3
  %v20 = vld [vmem:[%s18] ss:$16 sm:%s19]
  %s21 = scalar_lea.vmem %s0, 128
  %s22 = smov 12
  %v23 = vld [vmem:[%s21] ss:$16 sm:%s22]
  %vm24 = vcmask 1043458
  %v25 = vsel %vm24, %v23, %v20
  %s26 = scalar_lea.vmem %s0, 128
  %s27 = smov 48
  %v28 = vld [vmem:[%s26] ss:$16 sm:%s27]
  %vm29 = vcmask 1045508
  %v30 = vsel %vm29, %v28, %v25
  %s31 = scalar_lea.vmem %s0, 128
  %s32 = smov 192
  %v33 = vld [vmem:[%s31] ss:$16 sm:%s32]
  %vm34 = vcmask 1047558
  %v35 = vsel %vm34, %v33, %v30
  %vm36 = vcmask 31744
  %s37 = scalar_lea.vmem %s1, 8
  %38 = vst.msk [vmem:[%s37] sm:$0xff] %vm36, %v35
  %s39 = scalar_lea.vmem %s0, 256
  %s40 = smov 3
  %v41 = vld [vmem:[%s39] ss:$16 sm:%s40]
  %s42 = scalar_lea.vmem %s0, 256
  %s43 = smov 12
  %v44 = vld [vmem:[%s42] ss:$16 sm:%s43]
  %vm45 = vcmask 1043458
  %v46 = vsel %vm45, %v44, %v41
  %s47 = scalar_lea.vmem %s0, 256
  %s48 = smov 48
  %v49 = vld [vmem:[%s47] ss:$16 sm:%s48]
  %vm50 = vcmask 1045508
  %v51 = vsel %vm50, %v49, %v46
  %s52 = scalar_lea.vmem %s0, 256
  %s53 = smov 192
  %v54 = vld [vmem:[%s52] ss:$16 sm:%s53]
  %vm55 = vcmask 1047558
  %v56 = vsel %vm55, %v54, %v51
  %vm57 = vcmask 31744
  %s58 = scalar_lea.vmem %s1, 16
  %59 = vst.msk [vmem:[%s58] sm:$0xff] %vm57, %v56
  %s60 = scalar_lea.vmem %s0, 384
  %s61 = smov 3
  %v62 = vld [vmem:[%s60] ss:$16 sm:%s61]
  %s63 = scalar_lea.vmem %s0, 384
  %s64 = smov 12
  %v65 = vld [vmem:[%s63] ss:$16 sm:%s64]
  %vm66 = vcmask 1043458
  %v67 = vsel %vm66, %v65, %v62
  %s68 = scalar_lea.vmem %s0, 384
  %s69 = smov 48
  %v70 = vld [vmem:[%s68] ss:$16 sm:%s69]
  %vm71 = vcmask 1045508
  %v72 = vsel %vm71, %v70, %v67
  %s73 = scalar_lea.vmem %s0, 384
  %s74 = smov 192
  %v75 = vld [vmem:[%s73] ss:$16 sm:%s74]
  %vm76 = vcmask 1047558
  %v77 = vsel %vm76, %v75, %v72
  %vm78 = vcmask 31744
  %s79 = scalar_lea.vmem %s1, 24
  %80 = vst.msk [vmem:[%s79] sm:$0xff] %vm78, %v77
  %s81 = scalar_lea.vmem %s0, 512
  %s82 = smov 3
  %v83 = vld [vmem:[%s81] ss:$16 sm:%s82]
  %s84 = scalar_lea.vmem %s0, 512
  %s85 = smov 12
  %v86 = vld [vmem:[%s84] ss:$16 sm:%s85]
  %vm87 = vcmask 1043458
  %v88 = vsel %vm87, %v86, %v83
  %s89 = scalar_lea.vmem %s0, 512
  %s90 = smov 48
  %v91 = vld [vmem:[%s89] ss:$16 sm:%s90]
  %vm92 = vcmask 1045508
  %v93 = vsel %vm92, %v91, %v88
  %s94 = scalar_lea.vmem %s0, 512
  %s95 = smov 192
  %v96 = vld [vmem:[%s94] ss:$16 sm:%s95]
  %vm97 = vcmask 1047558
  %v98 = vsel %vm97, %v96, %v93
  %vm99 = vcmask 31744
  %s100 = scalar_lea.vmem %s1, 32
  %101 = vst.msk [vmem:[%s100] sm:$0xff] %vm99, %v98
  %s102 = scalar_lea.vmem %s0, 640
  %s103 = smov 3
  %v104 = vld [vmem:[%s102] ss:$16 sm:%s103]
  %s105 = scalar_lea.vmem %s0, 640
  %s106 = smov 12
  %v107 = vld [vmem:[%s105] ss:$16 sm:%s106]
  %vm108 = vcmask 1043458
  %v109 = vsel %vm108, %v107, %v104
  %s110 = scalar_lea.vmem %s0, 640
  %s111 = smov 48
  %v112 = vld [vmem:[%s110] ss:$16 sm:%s111]
  %vm113 = vcmask 1045508
  %v114 = vsel %vm113, %v112, %v109
  %s115 = scalar_lea.vmem %s0, 640
  %s116 = smov 192
  %v117 = vld [vmem:[%s115] ss:$16 sm:%s116]
  %vm118 = vcmask 1047558
  %v119 = vsel %vm118, %v117, %v114
  %vm120 = vcmask 31744
  %s121 = scalar_lea.vmem %s1, 40
  %122 = vst.msk [vmem:[%s121] sm:$0xff] %vm120, %v119
  %s123 = scalar_lea.vmem %s0, 768
  %s124 = smov 3
  %v125 = vld [vmem:[%s123] ss:$16 sm:%s124]
  %s126 = scalar_lea.vmem %s0, 768
  %s127 = smov 12
  %v128 = vld [vmem:[%s126] ss:$16 sm:%s127]
  %vm129 = vcmask 1043458
  %v130 = vsel %vm129, %v128, %v125
  %s131 = scalar_lea.vmem %s0, 768
  %s132 = smov 48
  %v133 = vld [vmem:[%s131] ss:$16 sm:%s132]
  %vm134 = vcmask 1045508
  %v135 = vsel %vm134, %v133, %v130
  %s136 = scalar_lea.vmem %s0, 768
  %s137 = smov 192
  %v138 = vld [vmem:[%s136] ss:$16 sm:%s137]
  %vm139 = vcmask 1047558
  %v140 = vsel %vm139, %v138, %v135
  %vm141 = vcmask 31744
  %s142 = scalar_lea.vmem %s1, 48
  %143 = vst.msk [vmem:[%s142] sm:$0xff] %vm141, %v140
  %s144 = scalar_lea.vmem %s0, 896
  %s145 = smov 3
  %v146 = vld [vmem:[%s144] ss:$16 sm:%s145]
  %s147 = scalar_lea.vmem %s0, 896
  %s148 = smov 12
  %v149 = vld [vmem:[%s147] ss:$16 sm:%s148]
  %vm150 = vcmask 1043458
  %v151 = vsel %vm150, %v149, %v146
  %s152 = scalar_lea.vmem %s0, 896
  %s153 = smov 48
  %v154 = vld [vmem:[%s152] ss:$16 sm:%s153]
  %vm155 = vcmask 1045508
  %v156 = vsel %vm155, %v154, %v151
  %s157 = scalar_lea.vmem %s0, 896
  %s158 = smov 192
  %v159 = vld [vmem:[%s157] ss:$16 sm:%s158]
  %vm160 = vcmask 1047558
  %v161 = vsel %vm160, %v159, %v156
  %vm162 = vcmask 31744
  %s163 = scalar_lea.vmem %s1, 56
  %164 = vst.msk [vmem:[%s163] sm:$0xff] %vm162, %v161
  %s165 = scalar_lea.vmem %s0, 15
  %s166 = smov 3
  %v167 = vld [vmem:[%s165] ss:$16 sm:%s166]
  %s168 = scalar_lea.vmem %s0, 15
  %s169 = smov 12
  %v170 = vld [vmem:[%s168] ss:$16 sm:%s169]
  %vm171 = vcmask 1043458
  %v172 = vsel %vm171, %v170, %v167
  %s173 = scalar_lea.vmem %s0, 15
  %s174 = smov 48
  %v175 = vld [vmem:[%s173] ss:$16 sm:%s174]
  %vm176 = vcmask 1045508
  %v177 = vsel %vm176, %v175, %v172
  %s178 = scalar_lea.vmem %s0, 15
  %s179 = smov 192
  %v180 = vld [vmem:[%s178] ss:$16 sm:%s179]
  %vm181 = vcmask 1047558
  %v182 = vsel %vm181, %v180, %v177
  %183 = vrot.lane.b32.xlu0 %v182, 60
  %v184 = vpop.permute.xlu0 %183
  %vm185 = vcmask 523744
  %186 = vst.msk [vmem:[%s1] sm:$0xff] %vm185, %v184
  %s187 = scalar_lea.vmem %s0, 527
  %s188 = smov 3
  %v189 = vld [vmem:[%s187] ss:$16 sm:%s188]
  %s190 = scalar_lea.vmem %s0, 527
  %s191 = smov 12
  %v192 = vld [vmem:[%s190] ss:$16 sm:%s191]
  %vm193 = vcmask 1043458
  %v194 = vsel %vm193, %v192, %v189
  %s195 = scalar_lea.vmem %s0, 527
  %s196 = smov 48
  %v197 = vld [vmem:[%s195] ss:$16 sm:%s196]
  %vm198 = vcmask 1045508
  %v199 = vsel %vm198, %v197, %v194
  %s200 = scalar_lea.vmem %s0, 527
  %s201 = smov 192
  %v202 = vld [vmem:[%s200] ss:$16 sm:%s201]
  %vm203 = vcmask 1047558
  %v204 = vsel %vm203, %v202, %v199
  %205 = vrot.lane.b32.xlu0 %v204, 60
  %v206 = vpop.permute.xlu0 %205
  %vm207 = vcmask 523744
  %s208 = scalar_lea.vmem %s1, 32
  %209 = vst.msk [vmem:[%s208] sm:$0xff] %vm207, %v206
  %s210 = scalar_lea.vmem %s0, 143
  %s211 = smov 3
  %v212 = vld [vmem:[%s210] ss:$16 sm:%s211]
  %s213 = scalar_lea.vmem %s0, 143
  %s214 = smov 12
  %v215 = vld [vmem:[%s213] ss:$16 sm:%s214]
  %vm216 = vcmask 1043458
  %v217 = vsel %vm216, %v215, %v212
  %s218 = scalar_lea.vmem %s0, 143
  %s219 = smov 48
  %v220 = vld [vmem:[%s218] ss:$16 sm:%s219]
  %vm221 = vcmask 1045508
  %v222 = vsel %vm221, %v220, %v217
  %s223 = scalar_lea.vmem %s0, 143
  %s224 = smov 192
  %v225 = vld [vmem:[%s223] ss:$16 sm:%s224]
  %vm226 = vcmask 1047558
  %v227 = vsel %vm226, %v225, %v222
  %228 = vrot.lane.b32.xlu0 %v227, 60
  %v229 = vpop.permute.xlu0 %228
  %vm230 = vcmask 523744
  %s231 = scalar_lea.vmem %s1, 8
  %232 = vst.msk [vmem:[%s231] sm:$0xff] %vm230, %v229
  %s233 = scalar_lea.vmem %s0, 655
  %s234 = smov 3
  %v235 = vld [vmem:[%s233] ss:$16 sm:%s234]
  %s236 = scalar_lea.vmem %s0, 655
  %s237 = smov 12
  %v238 = vld [vmem:[%s236] ss:$16 sm:%s237]
  %vm239 = vcmask 1043458
  %v240 = vsel %vm239, %v238, %v235
  %s241 = scalar_lea.vmem %s0, 655
  %s242 = smov 48
  %v243 = vld [vmem:[%s241] ss:$16 sm:%s242]
  %vm244 = vcmask 1045508
  %v245 = vsel %vm244, %v243, %v240
  %s246 = scalar_lea.vmem %s0, 655
  %s247 = smov 192
  %v248 = vld [vmem:[%s246] ss:$16 sm:%s247]
  %vm249 = vcmask 1047558
  %v250 = vsel %vm249, %v248, %v245
  %251 = vrot.lane.b32.xlu0 %v250, 60
  %v252 = vpop.permute.xlu0 %251
  %vm253 = vcmask 523744
  %s254 = scalar_lea.vmem %s1, 40
  %255 = vst.msk [vmem:[%s254] sm:$0xff] %vm253, %v252
  %s256 = scalar_lea.vmem %s0, 271
  %s257 = smov 3
  %v258 = vld [vmem:[%s256] ss:$16 sm:%s257]
  %s259 = scalar_lea.vmem %s0, 271
  %s260 = smov 12
  %v261 = vld [vmem:[%s259] ss:$16 sm:%s260]
  %vm262 = vcmask 1043458
  %v263 = vsel %vm262, %v261, %v258
  %s264 = scalar_lea.vmem %s0, 271
  %s265 = smov 48
  %v266 = vld [vmem:[%s264] ss:$16 sm:%s265]
  %vm267 = vcmask 1045508
  %v268 = vsel %vm267, %v266, %v263
  %s269 = scalar_lea.vmem %s0, 271
  %s270 = smov 192
  %v271 = vld [vmem:[%s269] ss:$16 sm:%s270]
  %vm272 = vcmask 1047558
  %v273 = vsel %vm272, %v271, %v268
  %274 = vrot.lane.b32.xlu0 %v273, 60
  %v275 = vpop.permute.xlu0 %274
  %vm276 = vcmask 523744
  %s277 = scalar_lea.vmem %s1, 16
  %278 = vst.msk [vmem:[%s277] sm:$0xff] %vm276, %v275
  %s279 = scalar_lea.vmem %s0, 783
  %s280 = smov 3
  %v281 = vld [vmem:[%s279] ss:$16 sm:%s280]
  %s282 = scalar_lea.vmem %s0, 783
  %s283 = smov 12
  %v284 = vld [vmem:[%s282] ss:$16 sm:%s283]
  %vm285 = vcmask 1043458
  %v286 = vsel %vm285, %v284, %v281
  %s287 = scalar_lea.vmem %s0, 783
  %s288 = smov 48
  %v289 = vld [vmem:[%s287] ss:$16 sm:%s288]
  %vm290 = vcmask 1045508
  %v291 = vsel %vm290, %v289, %v286
  %s292 = scalar_lea.vmem %s0, 783
  %s293 = smov 192
  %v294 = vld [vmem:[%s292] ss:$16 sm:%s293]
  %vm295 = vcmask 1047558
  %v296 = vsel %vm295, %v294, %v291
  %297 = vrot.lane.b32.xlu0 %v296, 60
  %v298 = vpop.permute.xlu0 %297
  %vm299 = vcmask 523744
  %s300 = scalar_lea.vmem %s1, 48
  %301 = vst.msk [vmem:[%s300] sm:$0xff] %vm299, %v298
  %s302 = scalar_lea.vmem %s0, 399
  %s303 = smov 3
  %v304 = vld [vmem:[%s302] ss:$16 sm:%s303]
  %s305 = scalar_lea.vmem %s0, 399
  %s306 = smov 12
  %v307 = vld [vmem:[%s305] ss:$16 sm:%s306]
  %vm308 = vcmask 1043458
  %v309 = vsel %vm308, %v307, %v304
  %s310 = scalar_lea.vmem %s0, 399
  %s311 = smov 48
  %v312 = vld [vmem:[%s310] ss:$16 sm:%s311]
  %vm313 = vcmask 1045508
  %v314 = vsel %vm313, %v312, %v309
  %s315 = scalar_lea.vmem %s0, 399
  %s316 = smov 192
  %v317 = vld [vmem:[%s315] ss:$16 sm:%s316]
  %vm318 = vcmask 1047558
  %v319 = vsel %vm318, %v317, %v314
  %320 = vrot.lane.b32.xlu0 %v319, 60
  %v321 = vpop.permute.xlu0 %320
  %vm322 = vcmask 523744
  %s323 = scalar_lea.vmem %s1, 24
  %324 = vst.msk [vmem:[%s323] sm:$0xff] %vm322, %v321
  %s325 = scalar_lea.vmem %s0, 911
  %s326 = smov 3
  %v327 = vld [vmem:[%s325] ss:$16 sm:%s326]
  %s328 = scalar_lea.vmem %s0, 911
  %s329 = smov 12
  %v330 = vld [vmem:[%s328] ss:$16 sm:%s329]
  %vm331 = vcmask 1043458
  %v332 = vsel %vm331, %v330, %v327
  %s333 = scalar_lea.vmem %s0, 911
  %s334 = smov 48
  %v335 = vld [vmem:[%s333] ss:$16 sm:%s334]
  %vm336 = vcmask 1045508
  %v337 = vsel %vm336, %v335, %v332
  %s338 = scalar_lea.vmem %s0, 911
  %s339 = smov 192
  %v340 = vld [vmem:[%s338] ss:$16 sm:%s339]
  %vm341 = vcmask 1047558
  %v342 = vsel %vm341, %v340, %v337
  %343 = vrot.lane.b32.xlu0 %v342, 60
  %v344 = vpop.permute.xlu0 %343
  %vm345 = vcmask 523744
  %s346 = scalar_lea.vmem %s1, 56
  %347 = vst.msk [vmem:[%s346] sm:$0xff] %vm345, %v344
  %s348 = scalar_lea.vmem %s0, 14
  %s349 = smov 3
  %v350 = vld [vmem:[%s348] ss:$16 sm:%s349]
  %s351 = scalar_lea.vmem %s0, 14
  %s352 = smov 12
  %v353 = vld [vmem:[%s351] ss:$16 sm:%s352]
  %vm354 = vcmask 1043458
  %v355 = vsel %vm354, %v353, %v350
  %s356 = scalar_lea.vmem %s0, 14
  %s357 = smov 48
  %v358 = vld [vmem:[%s356] ss:$16 sm:%s357]
  %vm359 = vcmask 1045508
  %v360 = vsel %vm359, %v358, %v355
  %s361 = scalar_lea.vmem %s0, 14
  %s362 = smov 192
  %v363 = vld [vmem:[%s361] ss:$16 sm:%s362]
  %vm364 = vcmask 1047558
  %v365 = vsel %vm364, %v363, %v360
  %366 = vrot.lane.b32.xlu0 %v365, 56
  %v367 = vpop.permute.xlu0 %366
  %vm368 = vcmask 490944
  %369 = vst.msk [vmem:[%s1] sm:$0xff] %vm368, %v367
  %s370 = scalar_lea.vmem %s0, 526
  %s371 = smov 3
  %v372 = vld [vmem:[%s370] ss:$16 sm:%s371]
  %s373 = scalar_lea.vmem %s0, 526
  %s374 = smov 12
  %v375 = vld [vmem:[%s373] ss:$16 sm:%s374]
  %vm376 = vcmask 1043458
  %v377 = vsel %vm376, %v375, %v372
  %s378 = scalar_lea.vmem %s0, 526
  %s379 = smov 48
  %v380 = vld [vmem:[%s378] ss:$16 sm:%s379]
  %vm381 = vcmask 1045508
  %v382 = vsel %vm381, %v380, %v377
  %s383 = scalar_lea.vmem %s0, 526
  %s384 = smov 192
  %v385 = vld [vmem:[%s383] ss:$16 sm:%s384]
  %vm386 = vcmask 1047558
  %v387 = vsel %vm386, %v385, %v382
  %388 = vrot.lane.b32.xlu0 %v387, 56
  %v389 = vpop.permute.xlu0 %388
  %vm390 = vcmask 490944
  %s391 = scalar_lea.vmem %s1, 32
  %392 = vst.msk [vmem:[%s391] sm:$0xff] %vm390, %v389
  %s393 = scalar_lea.vmem %s0, 142
  %s394 = smov 3
  %v395 = vld [vmem:[%s393] ss:$16 sm:%s394]
  %s396 = scalar_lea.vmem %s0, 142
  %s397 = smov 12
  %v398 = vld [vmem:[%s396] ss:$16 sm:%s397]
  %vm399 = vcmask 1043458
  %v400 = vsel %vm399, %v398, %v395
  %s401 = scalar_lea.vmem %s0, 142
  %s402 = smov 48
  %v403 = vld [vmem:[%s401] ss:$16 sm:%s402]
  %vm404 = vcmask 1045508
  %v405 = vsel %vm404, %v403, %v400
  %s406 = scalar_lea.vmem %s0, 142
  %s407 = smov 192
  %v408 = vld [vmem:[%s406] ss:$16 sm:%s407]
  %vm409 = vcmask 1047558
  %v410 = vsel %vm409, %v408, %v405
  %411 = vrot.lane.b32.xlu0 %v410, 56
  %v412 = vpop.permute.xlu0 %411
  %vm413 = vcmask 490944
  %s414 = scalar_lea.vmem %s1, 8
  %415 = vst.msk [vmem:[%s414] sm:$0xff] %vm413, %v412
  %s416 = scalar_lea.vmem %s0, 654
  %s417 = smov 3
  %v418 = vld [vmem:[%s416] ss:$16 sm:%s417]
  %s419 = scalar_lea.vmem %s0, 654
  %s420 = smov 12
  %v421 = vld [vmem:[%s419] ss:$16 sm:%s420]
  %vm422 = vcmask 1043458
  %v423 = vsel %vm422, %v421, %v418
  %s424 = scalar_lea.vmem %s0, 654
  %s425 = smov 48
  %v426 = vld [vmem:[%s424] ss:$16 sm:%s425]
  %vm427 = vcmask 1045508
  %v428 = vsel %vm427, %v426, %v423
  %s429 = scalar_lea.vmem %s0, 654
  %s430 = smov 192
  %v431 = vld [vmem:[%s429] ss:$16 sm:%s430]
  %vm432 = vcmask 1047558
  %v433 = vsel %vm432, %v431, %v428
  %434 = vrot.lane.b32.xlu0 %v433, 56
  %v435 = vpop.permute.xlu0 %434
  %vm436 = vcmask 490944
  %s437 = scalar_lea.vmem %s1, 40
  %438 = vst.msk [vmem:[%s437] sm:$0xff] %vm436, %v435
  %s439 = scalar_lea.vmem %s0, 270
  %s440 = smov 3
  %v441 = vld [vmem:[%s439] ss:$16 sm:%s440]
  %s442 = scalar_lea.vmem %s0, 270
  %s443 = smov 12
  %v444 = vld [vmem:[%s442] ss:$16 sm:%s443]
  %vm445 = vcmask 1043458
  %v446 = vsel %vm445, %v444, %v441
  %s447 = scalar_lea.vmem %s0, 270
  %s448 = smov 48
  %v449 = vld [vmem:[%s447] ss:$16 sm:%s448]
  %vm450 = vcmask 1045508
  %v451 = vsel %vm450, %v449, %v446
  %s452 = scalar_lea.vmem %s0, 270
  %s453 = smov 192
  %v454 = vld [vmem:[%s452] ss:$16 sm:%s453]
  %vm455 = vcmask 1047558
  %v456 = vsel %vm455, %v454, %v451
  %457 = vrot.lane.b32.xlu0 %v456, 56
  %v458 = vpop.permute.xlu0 %457
  %vm459 = vcmask 490944
  %s460 = scalar_lea.vmem %s1, 16
  %461 = vst.msk [vmem:[%s460] sm:$0xff] %vm459, %v458
  %s462 = scalar_lea.vmem %s0, 782
  %s463 = smov 3
  %v464 = vld [vmem:[%s462] ss:$16 sm:%s463]
  %s465 = scalar_lea.vmem %s0, 782
  %s466 = smov 12
  %v467 = vld [vmem:[%s465] ss:$16 sm:%s466]
  %vm468 = vcmask 1043458
  %v469 = vsel %vm468, %v467, %v464
  %s470 = scalar_lea.vmem %s0, 782
  %s471 = smov 48
  %v472 = vld [vmem:[%s470] ss:$16 sm:%s471]
  %vm473 = vcmask 1045508
  %v474 = vsel %vm473, %v472, %v469
  %s475 = scalar_lea.vmem %s0, 782
  %s476 = smov 192
  %v477 = vld [vmem:[%s475] ss:$16 sm:%s476]
  %vm478 = vcmask 1047558
  %v479 = vsel %vm478, %v477, %v474
  %480 = vrot.lane.b32.xlu0 %v479, 56
  %v481 = vpop.permute.xlu0 %480
  %vm482 = vcmask 490944
  %s483 = scalar_lea.vmem %s1, 48
  %484 = vst.msk [vmem:[%s483] sm:$0xff] %vm482, %v481
  %s485 = scalar_lea.vmem %s0, 398
  %s486 = smov 3
  %v487 = vld [vmem:[%s485] ss:$16 sm:%s486]
  %s488 = scalar_lea.vmem %s0, 398
  %s489 = smov 12
  %v490 = vld [vmem:[%s488] ss:$16 sm:%s489]
  %vm491 = vcmask 1043458
  %v492 = vsel %vm491, %v490, %v487
  %s493 = scalar_lea.vmem %s0, 398
  %s494 = smov 48
  %v495 = vld [vmem:[%s493] ss:$16 sm:%s494]
  %vm496 = vcmask 1045508
  %v497 = vsel %vm496, %v495, %v492
  %s498 = scalar_lea.vmem %s0, 398
  %s499 = smov 192
  %v500 = vld [vmem:[%s498] ss:$16 sm:%s499]
  %vm501 = vcmask 1047558
  %v502 = vsel %vm501, %v500, %v497
  %503 = vrot.lane.b32.xlu0 %v502, 56
  %v504 = vpop.permute.xlu0 %503
  %vm505 = vcmask 490944
  %s506 = scalar_lea.vmem %s1, 24
  %507 = vst.msk [vmem:[%s506] sm:$0xff] %vm505, %v504
  %s508 = scalar_lea.vmem %s0, 910
  %s509 = smov 3
  %v510 = vld [vmem:[%s508] ss:$16 sm:%s509]
  %s511 = scalar_lea.vmem %s0, 910
  %s512 = smov 12
  %v513 = vld [vmem:[%s511] ss:$16 sm:%s512]
  %vm514 = vcmask 1043458
  %v515 = vsel %vm514, %v513, %v510
  %s516 = scalar_lea.vmem %s0, 910
  %s517 = smov 48
  %v518 = vld [vmem:[%s516] ss:$16 sm:%s517]
  %vm519 = vcmask 1045508
  %v520 = vsel %vm519, %v518, %v515
  %s521 = scalar_lea.vmem %s0, 910
  %s522 = smov 192
  %v523 = vld [vmem:[%s521] ss:$16 sm:%s522]
  %vm524 = vcmask 1047558
  %v525 = vsel %vm524, %v523, %v520
  %526 = vrot.lane.b32.xlu0 %v525, 56
  %v527 = vpop.permute.xlu0 %526
  %vm528 = vcmask 490944
  %s529 = scalar_lea.vmem %s1, 56
  %530 = vst.msk [vmem:[%s529] sm:$0xff] %vm528, %v527
  %s531 = scalar_lea.vmem %s0, 13
  %s532 = smov 3
  %v533 = vld [vmem:[%s531] ss:$16 sm:%s532]
  %s534 = scalar_lea.vmem %s0, 13
  %s535 = smov 12
  %v536 = vld [vmem:[%s534] ss:$16 sm:%s535]
  %vm537 = vcmask 1043458
  %v538 = vsel %vm537, %v536, %v533
  %s539 = scalar_lea.vmem %s0, 13
  %s540 = smov 48
  %v541 = vld [vmem:[%s539] ss:$16 sm:%s540]
  %vm542 = vcmask 1045508
  %v543 = vsel %vm542, %v541, %v538
  %s544 = scalar_lea.vmem %s0, 13
  %s545 = smov 192
  %v546 = vld [vmem:[%s544] ss:$16 sm:%s545]
  %vm547 = vcmask 1047558
  %v548 = vsel %vm547, %v546, %v543
  %549 = vrot.lane.b32.xlu0 %v548, 52
  %v550 = vpop.permute.xlu0 %549
  %vm551 = vcmask 458144
  %552 = vst.msk [vmem:[%s1] sm:$0xff] %vm551, %v550
  %s553 = scalar_lea.vmem %s0, 525
  %s554 = smov 3
  %v555 = vld [vmem:[%s553] ss:$16 sm:%s554]
  %s556 = scalar_lea.vmem %s0, 525
  %s557 = smov 12
  %v558 = vld [vmem:[%s556] ss:$16 sm:%s557]
  %vm559 = vcmask 1043458
  %v560 = vsel %vm559, %v558, %v555
  %s561 = scalar_lea.vmem %s0, 525
  %s562 = smov 48
  %v563 = vld [vmem:[%s561] ss:$16 sm:%s562]
  %vm564 = vcmask 1045508
  %v565 = vsel %vm564, %v563, %v560
  %s566 = scalar_lea.vmem %s0, 525
  %s567 = smov 192
  %v568 = vld [vmem:[%s566] ss:$16 sm:%s567]
  %vm569 = vcmask 1047558
  %v570 = vsel %vm569, %v568, %v565
  %571 = vrot.lane.b32.xlu0 %v570, 52
  %v572 = vpop.permute.xlu0 %571
  %vm573 = vcmask 458144
  %s574 = scalar_lea.vmem %s1, 32
  %575 = vst.msk [vmem:[%s574] sm:$0xff] %vm573, %v572
  %s576 = scalar_lea.vmem %s0, 141
  %s577 = smov 3
  %v578 = vld [vmem:[%s576] ss:$16 sm:%s577]
  %s579 = scalar_lea.vmem %s0, 141
  %s580 = smov 12
  %v581 = vld [vmem:[%s579] ss:$16 sm:%s580]
  %vm582 = vcmask 1043458
  %v583 = vsel %vm582, %v581, %v578
  %s584 = scalar_lea.vmem %s0, 141
  %s585 = smov 48
  %v586 = vld [vmem:[%s584] ss:$16 sm:%s585]
  %vm587 = vcmask 1045508
  %v588 = vsel %vm587, %v586, %v583
  %s589 = scalar_lea.vmem %s0, 141
  %s590 = smov 192
  %v591 = vld [vmem:[%s589] ss:$16 sm:%s590]
  %vm592 = vcmask 1047558
  %v593 = vsel %vm592, %v591, %v588
  %594 = vrot.lane.b32.xlu0 %v593, 52
  %v595 = vpop.permute.xlu0 %594
  %vm596 = vcmask 458144
  %s597 = scalar_lea.vmem %s1, 8
  %598 = vst.msk [vmem:[%s597] sm:$0xff] %vm596, %v595
  %s599 = scalar_lea.vmem %s0, 653
  %s600 = smov 3
  %v601 = vld [vmem:[%s599] ss:$16 sm:%s600]
  %s602 = scalar_lea.vmem %s0, 653
  %s603 = smov 12
  %v604 = vld [vmem:[%s602] ss:$16 sm:%s603]
  %vm605 = vcmask 1043458
  %v606 = vsel %vm605, %v604, %v601
  %s607 = scalar_lea.vmem %s0, 653
  %s608 = smov 48
  %v609 = vld [vmem:[%s607] ss:$16 sm:%s608]
  %vm610 = vcmask 1045508
  %v611 = vsel %vm610, %v609, %v606
  %s612 = scalar_lea.vmem %s0, 653
  %s613 = smov 192
  %v614 = vld [vmem:[%s612] ss:$16 sm:%s613]
  %vm615 = vcmask 1047558
  %v616 = vsel %vm615, %v614, %v611
  %617 = vrot.lane.b32.xlu0 %v616, 52
  %v618 = vpop.permute.xlu0 %617
  %vm619 = vcmask 458144
  %s620 = scalar_lea.vmem %s1, 40
  %621 = vst.msk [vmem:[%s620] sm:$0xff] %vm619, %v618
  %s622 = scalar_lea.vmem %s0, 269
  %s623 = smov 3
  %v624 = vld [vmem:[%s622] ss:$16 sm:%s623]
  %s625 = scalar_lea.vmem %s0, 269
  %s626 = smov 12
  %v627 = vld [vmem:[%s625] ss:$16 sm:%s626]
  %vm628 = vcmask 1043458
  %v629 = vsel %vm628, %v627, %v624
  %s630 = scalar_lea.vmem %s0, 269
  %s631 = smov 48
  %v632 = vld [vmem:[%s630] ss:$16 sm:%s631]
  %vm633 = vcmask 1045508
  %v634 = vsel %vm633, %v632, %v629
  %s635 = scalar_lea.vmem %s0, 269
  %s636 = smov 192
  %v637 = vld [vmem:[%s635] ss:$16 sm:%s636]
  %vm638 = vcmask 1047558
  %v639 = vsel %vm638, %v637, %v634
  %640 = vrot.lane.b32.xlu0 %v639, 52
  %v641 = vpop.permute.xlu0 %640
  %vm642 = vcmask 458144
  %s643 = scalar_lea.vmem %s1, 16
  %644 = vst.msk [vmem:[%s643] sm:$0xff] %vm642, %v641
  %s645 = scalar_lea.vmem %s0, 781
  %s646 = smov 3
  %v647 = vld [vmem:[%s645] ss:$16 sm:%s646]
  %s648 = scalar_lea.vmem %s0, 781
  %s649 = smov 12
  %v650 = vld [vmem:[%s648] ss:$16 sm:%s649]
  %vm651 = vcmask 1043458
  %v652 = vsel %vm651, %v650, %v647
  %s653 = scalar_lea.vmem %s0, 781
  %s654 = smov 48
  %v655 = vld [vmem:[%s653] ss:$16 sm:%s654]
  %vm656 = vcmask 1045508
  %v657 = vsel %vm656, %v655, %v652
  %s658 = scalar_lea.vmem %s0, 781
  %s659 = smov 192
  %v660 = vld [vmem:[%s658] ss:$16 sm:%s659]
  %vm661 = vcmask 1047558
  %v662 = vsel %vm661, %v660, %v657
  %663 = vrot.lane.b32.xlu0 %v662, 52
  %v664 = vpop.permute.xlu0 %663
  %vm665 = vcmask 458144
  %s666 = scalar_lea.vmem %s1, 48
  %667 = vst.msk [vmem:[%s666] sm:$0xff] %vm665, %v664
  %s668 = scalar_lea.vmem %s0, 397
  %s669 = smov 3
  %v670 = vld [vmem:[%s668] ss:$16 sm:%s669]
  %s671 = scalar_lea.vmem %s0, 397
  %s672 = smov 12
  %v673 = vld [vmem:[%s671] ss:$16 sm:%s672]
  %vm674 = vcmask 1043458
  %v675 = vsel %vm674, %v673, %v670
  %s676 = scalar_lea.vmem %s0, 397
  %s677 = smov 48
  %v678 = vld [vmem:[%s676] ss:$16 sm:%s677]
  %vm679 = vcmask 1045508
  %v680 = vsel %vm679, %v678, %v675
  %s681 = scalar_lea.vmem %s0, 397
  %s682 = smov 192
  %v683 = vld [vmem:[%s681] ss:$16 sm:%s682]
  %vm684 = vcmask 1047558
  %v685 = vsel %vm684, %v683, %v680
  %686 = vrot.lane.b32.xlu0 %v685, 52
  %v687 = vpop.permute.xlu0 %686
  %vm688 = vcmask 458144
  %s689 = scalar_lea.vmem %s1, 24
  %690 = vst.msk [vmem:[%s689] sm:$0xff] %vm688, %v687
  %s691 = scalar_lea.vmem %s0, 909
  %s692 = smov 3
  %v693 = vld [vmem:[%s691] ss:$16 sm:%s692]
  %s694 = scalar_lea.vmem %s0, 909
  %s695 = smov 12
  %v696 = vld [vmem:[%s694] ss:$16 sm:%s695]
  %vm697 = vcmask 1043458
  %v698 = vsel %vm697, %v696, %v693
  %s699 = scalar_lea.vmem %s0, 909
  %s700 = smov 48
  %v701 = vld [vmem:[%s699] ss:$16 sm:%s700]
  %vm702 = vcmask 1045508
  %v703 = vsel %vm702, %v701, %v698
  %s704 = scalar_lea.vmem %s0, 909
  %s705 = smov 192
  %v706 = vld [vmem:[%s704] ss:$16 sm:%s705]
  %vm707 = vcmask 1047558
  %v708 = vsel %vm707, %v706, %v703
  %709 = vrot.lane.b32.xlu0 %v708, 52
  %v710 = vpop.permute.xlu0 %709
  %vm711 = vcmask 458144
  %s712 = scalar_lea.vmem %s1, 56
  %713 = vst.msk [vmem:[%s712] sm:$0xff] %vm711, %v710
  %s714 = scalar_lea.vmem %s0, 12
  %s715 = smov 3
  %v716 = vld [vmem:[%s714] ss:$16 sm:%s715]
  %s717 = scalar_lea.vmem %s0, 12
  %s718 = smov 12
  %v719 = vld [vmem:[%s717] ss:$16 sm:%s718]
  %vm720 = vcmask 1043458
  %v721 = vsel %vm720, %v719, %v716
  %s722 = scalar_lea.vmem %s0, 12
  %s723 = smov 48
  %v724 = vld [vmem:[%s722] ss:$16 sm:%s723]
  %vm725 = vcmask 1045508
  %v726 = vsel %vm725, %v724, %v721
  %s727 = scalar_lea.vmem %s0, 12
  %s728 = smov 192
  %v729 = vld [vmem:[%s727] ss:$16 sm:%s728]
  %vm730 = vcmask 1047558
  %v731 = vsel %vm730, %v729, %v726
  %732 = vrot.lane.b32.xlu0 %v731, 48
  %v733 = vpop.permute.xlu0 %732
  %vm734 = vcmask 425344
  %735 = vst.msk [vmem:[%s1] sm:$0xff] %vm734, %v733
  %s736 = scalar_lea.vmem %s0, 524
  %s737 = smov 3
  %v738 = vld [vmem:[%s736] ss:$16 sm:%s737]
  %s739 = scalar_lea.vmem %s0, 524
  %s740 = smov 12
  %v741 = vld [vmem:[%s739] ss:$16 sm:%s740]
  %vm742 = vcmask 1043458
  %v743 = vsel %vm742, %v741, %v738
  %s744 = scalar_lea.vmem %s0, 524
  %s745 = smov 48
  %v746 = vld [vmem:[%s744] ss:$16 sm:%s745]
  %vm747 = vcmask 1045508
  %v748 = vsel %vm747, %v746, %v743
  %s749 = scalar_lea.vmem %s0, 524
  %s750 = smov 192
  %v751 = vld [vmem:[%s749] ss:$16 sm:%s750]
  %vm752 = vcmask 1047558
  %v753 = vsel %vm752, %v751, %v748
  %754 = vrot.lane.b32.xlu0 %v753, 48
  %v755 = vpop.permute.xlu0 %754
  %vm756 = vcmask 425344
  %s757 = scalar_lea.vmem %s1, 32
  %758 = vst.msk [vmem:[%s757] sm:$0xff] %vm756, %v755
  %s759 = scalar_lea.vmem %s0, 140
  %s760 = smov 3
  %v761 = vld [vmem:[%s759] ss:$16 sm:%s760]
  %s762 = scalar_lea.vmem %s0, 140
  %s763 = smov 12
  %v764 = vld [vmem:[%s762] ss:$16 sm:%s763]
  %vm765 = vcmask 1043458
  %v766 = vsel %vm765, %v764, %v761
  %s767 = scalar_lea.vmem %s0, 140
  %s768 = smov 48
  %v769 = vld [vmem:[%s767] ss:$16 sm:%s768]
  %vm770 = vcmask 1045508
  %v771 = vsel %vm770, %v769, %v766
  %s772 = scalar_lea.vmem %s0, 140
  %s773 = smov 192
  %v774 = vld [vmem:[%s772] ss:$16 sm:%s773]
  %vm775 = vcmask 1047558
  %v776 = vsel %vm775, %v774, %v771
  %777 = vrot.lane.b32.xlu0 %v776, 48
  %v778 = vpop.permute.xlu0 %777
  %vm779 = vcmask 425344
  %s780 = scalar_lea.vmem %s1, 8
  %781 = vst.msk [vmem:[%s780] sm:$0xff] %vm779, %v778
  %s782 = scalar_lea.vmem %s0, 652
  %s783 = smov 3
  %v784 = vld [vmem:[%s782] ss:$16 sm:%s783]
  %s785 = scalar_lea.vmem %s0, 652
  %s786 = smov 12
  %v787 = vld [vmem:[%s785] ss:$16 sm:%s786]
  %vm788 = vcmask 1043458
  %v789 = vsel %vm788, %v787, %v784
  %s790 = scalar_lea.vmem %s0, 652
  %s791 = smov 48
  %v792 = vld [vmem:[%s790] ss:$16 sm:%s791]
  %vm793 = vcmask 1045508
  %v794 = vsel %vm793, %v792, %v789
  %s795 = scalar_lea.vmem %s0, 652
  %s796 = smov 192
  %v797 = vld [vmem:[%s795] ss:$16 sm:%s796]
  %vm798 = vcmask 1047558
  %v799 = vsel %vm798, %v797, %v794
  %800 = vrot.lane.b32.xlu0 %v799, 48
  %v801 = vpop.permute.xlu0 %800
  %vm802 = vcmask 425344
  %s803 = scalar_lea.vmem %s1, 40
  %804 = vst.msk [vmem:[%s803] sm:$0xff] %vm802, %v801
  %s805 = scalar_lea.vmem %s0, 268
  %s806 = smov 3
  %v807 = vld [vmem:[%s805] ss:$16 sm:%s806]
  %s808 = scalar_lea.vmem %s0, 268
  %s809 = smov 12
  %v810 = vld [vmem:[%s808] ss:$16 sm:%s809]
  %vm811 = vcmask 1043458
  %v812 = vsel %vm811, %v810, %v807
  %s813 = scalar_lea.vmem %s0, 268
  %s814 = smov 48
  %v815 = vld [vmem:[%s813] ss:$16 sm:%s814]
  %vm816 = vcmask 1045508
  %v817 = vsel %vm816, %v815, %v812
  %s818 = scalar_lea.vmem %s0, 268
  %s819 = smov 192
  %v820 = vld [vmem:[%s818] ss:$16 sm:%s819]
  %vm821 = vcmask 1047558
  %v822 = vsel %vm821, %v820, %v817
  %823 = vrot.lane.b32.xlu0 %v822, 48
  %v824 = vpop.permute.xlu0 %823
  %vm825 = vcmask 425344
  %s826 = scalar_lea.vmem %s1, 16
  %827 = vst.msk [vmem:[%s826] sm:$0xff] %vm825, %v824
  %s828 = scalar_lea.vmem %s0, 780
  %s829 = smov 3
  %v830 = vld [vmem:[%s828] ss:$16 sm:%s829]
  %s831 = scalar_lea.vmem %s0, 780
  %s832 = smov 12
  %v833 = vld [vmem:[%s831] ss:$16 sm:%s832]
  %vm834 = vcmask 1043458
  %v835 = vsel %vm834, %v833, %v830
  %s836 = scalar_lea.vmem %s0, 780
  %s837 = smov 48
  %v838 = vld [vmem:[%s836] ss:$16 sm:%s837]
  %vm839 = vcmask 1045508
  %v840 = vsel %vm839, %v838, %v835
  %s841 = scalar_lea.vmem %s0, 780
  %s842 = smov 192
  %v843 = vld [vmem:[%s841] ss:$16 sm:%s842]
  %vm844 = vcmask 1047558
  %v845 = vsel %vm844, %v843, %v840
  %846 = vrot.lane.b32.xlu0 %v845, 48
  %v847 = vpop.permute.xlu0 %846
  %vm848 = vcmask 425344
  %s849 = scalar_lea.vmem %s1, 48
  %850 = vst.msk [vmem:[%s849] sm:$0xff] %vm848, %v847
  %s851 = scalar_lea.vmem %s0, 396
  %s852 = smov 3
  %v853 = vld [vmem:[%s851] ss:$16 sm:%s852]
  %s854 = scalar_lea.vmem %s0, 396
  %s855 = smov 12
  %v856 = vld [vmem:[%s854] ss:$16 sm:%s855]
  %vm857 = vcmask 1043458
  %v858 = vsel %vm857, %v856, %v853
  %s859 = scalar_lea.vmem %s0, 396
  %s860 = smov 48
  %v861 = vld [vmem:[%s859] ss:$16 sm:%s860]
  %vm862 = vcmask 1045508
  %v863 = vsel %vm862, %v861, %v858
  %s864 = scalar_lea.vmem %s0, 396
  %s865 = smov 192
  %v866 = vld [vmem:[%s864] ss:$16 sm:%s865]
  %vm867 = vcmask 1047558
  %v868 = vsel %vm867, %v866, %v863
  %869 = vrot.lane.b32.xlu0 %v868, 48
  %v870 = vpop.permute.xlu0 %869
  %vm871 = vcmask 425344
  %s872 = scalar_lea.vmem %s1, 24
  %873 = vst.msk [vmem:[%s872] sm:$0xff] %vm871, %v870
  %s874 = scalar_lea.vmem %s0, 908
  %s875 = smov 3
  %v876 = vld [vmem:[%s874] ss:$16 sm:%s875]
  %s877 = scalar_lea.vmem %s0, 908
  %s878 = smov 12
  %v879 = vld [vmem:[%s877] ss:$16 sm:%s878]
  %vm880 = vcmask 1043458
  %v881 = vsel %vm880, %v879, %v876
  %s882 = scalar_lea.vmem %s0, 908
  %s883 = smov 48
  %v884 = vld [vmem:[%s882] ss:$16 sm:%s883]
  %vm885 = vcmask 1045508
  %v886 = vsel %vm885, %v884, %v881
  %s887 = scalar_lea.vmem %s0, 908
  %s888 = smov 192
  %v889 = vld [vmem:[%s887] ss:$16 sm:%s888]
  %vm890 = vcmask 1047558
  %v891 = vsel %vm890, %v889, %v886
  %892 = vrot.lane.b32.xlu0 %v891, 48
  %v893 = vpop.permute.xlu0 %892
  %vm894 = vcmask 425344
  %s895 = scalar_lea.vmem %s1, 56
  %896 = vst.msk [vmem:[%s895] sm:$0xff] %vm894, %v893
  %s897 = scalar_lea.vmem %s0, 11
  %s898 = smov 3
  %v899 = vld [vmem:[%s897] ss:$16 sm:%s898]
  %s900 = scalar_lea.vmem %s0, 11
  %s901 = smov 12
  %v902 = vld [vmem:[%s900] ss:$16 sm:%s901]
  %vm903 = vcmask 1043458
  %v904 = vsel %vm903, %v902, %v899
  %s905 = scalar_lea.vmem %s0, 11
  %s906 = smov 48
  %v907 = vld [vmem:[%s905] ss:$16 sm:%s906]
  %vm908 = vcmask 1045508
  %v909 = vsel %vm908, %v907, %v904
  %s910 = scalar_lea.vmem %s0, 11
  %s911 = smov 192
  %v912 = vld [vmem:[%s910] ss:$16 sm:%s911]
  %vm913 = vcmask 1047558
  %v914 = vsel %vm913, %v912, %v909
  %915 = vrot.lane.b32.xlu0 %v914, 44
  %v916 = vpop.permute.xlu0 %915
  %vm917 = vcmask 392544
  %918 = vst.msk [vmem:[%s1] sm:$0xff] %vm917, %v916
  %s919 = scalar_lea.vmem %s0, 523
  %s920 = smov 3
  %v921 = vld [vmem:[%s919] ss:$16 sm:%s920]
  %s922 = scalar_lea.vmem %s0, 523
  %s923 = smov 12
  %v924 = vld [vmem:[%s922] ss:$16 sm:%s923]
  %vm925 = vcmask 1043458
  %v926 = vsel %vm925, %v924, %v921
  %s927 = scalar_lea.vmem %s0, 523
  %s928 = smov 48
  %v929 = vld [vmem:[%s927] ss:$16 sm:%s928]
  %vm930 = vcmask 1045508
  %v931 = vsel %vm930, %v929, %v926
  %s932 = scalar_lea.vmem %s0, 523
  %s933 = smov 192
  %v934 = vld [vmem:[%s932] ss:$16 sm:%s933]
  %vm935 = vcmask 1047558
  %v936 = vsel %vm935, %v934, %v931
  %937 = vrot.lane.b32.xlu0 %v936, 44
  %v938 = vpop.permute.xlu0 %937
  %vm939 = vcmask 392544
  %s940 = scalar_lea.vmem %s1, 32
  %941 = vst.msk [vmem:[%s940] sm:$0xff] %vm939, %v938
  %s942 = scalar_lea.vmem %s0, 139
  %s943 = smov 3
  %v944 = vld [vmem:[%s942] ss:$16 sm:%s943]
  %s945 = scalar_lea.vmem %s0, 139
  %s946 = smov 12
  %v947 = vld [vmem:[%s945] ss:$16 sm:%s946]
  %vm948 = vcmask 1043458
  %v949 = vsel %vm948, %v947, %v944
  %s950 = scalar_lea.vmem %s0, 139
  %s951 = smov 48
  %v952 = vld [vmem:[%s950] ss:$16 sm:%s951]
  %vm953 = vcmask 1045508
  %v954 = vsel %vm953, %v952, %v949
  %s955 = scalar_lea.vmem %s0, 139
  %s956 = smov 192
  %v957 = vld [vmem:[%s955] ss:$16 sm:%s956]
  %vm958 = vcmask 1047558
  %v959 = vsel %vm958, %v957, %v954
  %960 = vrot.lane.b32.xlu0 %v959, 44
  %v961 = vpop.permute.xlu0 %960
  %vm962 = vcmask 392544
  %s963 = scalar_lea.vmem %s1, 8
  %964 = vst.msk [vmem:[%s963] sm:$0xff] %vm962, %v961
  %s965 = scalar_lea.vmem %s0, 651
  %s966 = smov 3
  %v967 = vld [vmem:[%s965] ss:$16 sm:%s966]
  %s968 = scalar_lea.vmem %s0, 651
  %s969 = smov 12
  %v970 = vld [vmem:[%s968] ss:$16 sm:%s969]
  %vm971 = vcmask 1043458
  %v972 = vsel %vm971, %v970, %v967
  %s973 = scalar_lea.vmem %s0, 651
  %s974 = smov 48
  %v975 = vld [vmem:[%s973] ss:$16 sm:%s974]
  %vm976 = vcmask 1045508
  %v977 = vsel %vm976, %v975, %v972
  %s978 = scalar_lea.vmem %s0, 651
  %s979 = smov 192
  %v980 = vld [vmem:[%s978] ss:$16 sm:%s979]
  %vm981 = vcmask 1047558
  %v982 = vsel %vm981, %v980, %v977
  %983 = vrot.lane.b32.xlu0 %v982, 44
  %v984 = vpop.permute.xlu0 %983
  %vm985 = vcmask 392544
  %s986 = scalar_lea.vmem %s1, 40
  %987 = vst.msk [vmem:[%s986] sm:$0xff] %vm985, %v984
  %s988 = scalar_lea.vmem %s0, 267
  %s989 = smov 3
  %v990 = vld [vmem:[%s988] ss:$16 sm:%s989]
  %s991 = scalar_lea.vmem %s0, 267
  %s992 = smov 12
  %v993 = vld [vmem:[%s991] ss:$16 sm:%s992]
  %vm994 = vcmask 1043458
  %v995 = vsel %vm994, %v993, %v990
  %s996 = scalar_lea.vmem %s0, 267
  %s997 = smov 48
  %v998 = vld [vmem:[%s996] ss:$16 sm:%s997]
  %vm999 = vcmask 1045508
  %v1000 = vsel %vm999, %v998, %v995
  %s1001 = scalar_lea.vmem %s0, 267
  %s1002 = smov 192
  %v1003 = vld [vmem:[%s1001] ss:$16 sm:%s1002]
  %vm1004 = vcmask 1047558
  %v1005 = vsel %vm1004, %v1003, %v1000
  %1006 = vrot.lane.b32.xlu0 %v1005, 44
  %v1007 = vpop.permute.xlu0 %1006
  %vm1008 = vcmask 392544
  %s1009 = scalar_lea.vmem %s1, 16
  %1010 = vst.msk [vmem:[%s1009] sm:$0xff] %vm1008, %v1007
  %s1011 = scalar_lea.vmem %s0, 779
  %s1012 = smov 3
  %v1013 = vld [vmem:[%s1011] ss:$16 sm:%s1012]
  %s1014 = scalar_lea.vmem %s0, 779
  %s1015 = smov 12
  %v1016 = vld [vmem:[%s1014] ss:$16 sm:%s1015]
  %vm1017 = vcmask 1043458
  %v1018 = vsel %vm1017, %v1016, %v1013
  %s1019 = scalar_lea.vmem %s0, 779
  %s1020 = smov 48
  %v1021 = vld [vmem:[%s1019] ss:$16 sm:%s1020]
  %vm1022 = vcmask 1045508
  %v1023 = vsel %vm1022, %v1021, %v1018
  %s1024 = scalar_lea.vmem %s0, 779
  %s1025 = smov 192
  %v1026 = vld [vmem:[%s1024] ss:$16 sm:%s1025]
  %vm1027 = vcmask 1047558
  %v1028 = vsel %vm1027, %v1026, %v1023
  %1029 = vrot.lane.b32.xlu0 %v1028, 44
  %v1030 = vpop.permute.xlu0 %1029
  %vm1031 = vcmask 392544
  %s1032 = scalar_lea.vmem %s1, 48
  %1033 = vst.msk [vmem:[%s1032] sm:$0xff] %vm1031, %v1030
  %s1034 = scalar_lea.vmem %s0, 395
  %s1035 = smov 3
  %v1036 = vld [vmem:[%s1034] ss:$16 sm:%s1035]
  %s1037 = scalar_lea.vmem %s0, 395
  %s1038 = smov 12
  %v1039 = vld [vmem:[%s1037] ss:$16 sm:%s1038]
  %vm1040 = vcmask 1043458
  %v1041 = vsel %vm1040, %v1039, %v1036
  %s1042 = scalar_lea.vmem %s0, 395
  %s1043 = smov 48
  %v1044 = vld [vmem:[%s1042] ss:$16 sm:%s1043]
  %vm1045 = vcmask 1045508
  %v1046 = vsel %vm1045, %v1044, %v1041
  %s1047 = scalar_lea.vmem %s0, 395
  %s1048 = smov 192
  %v1049 = vld [vmem:[%s1047] ss:$16 sm:%s1048]
  %vm1050 = vcmask 1047558
  %v1051 = vsel %vm1050, %v1049, %v1046
  %1052 = vrot.lane.b32.xlu0 %v1051, 44
  %v1053 = vpop.permute.xlu0 %1052
  %vm1054 = vcmask 392544
  %s1055 = scalar_lea.vmem %s1, 24
  %1056 = vst.msk [vmem:[%s1055] sm:$0xff] %vm1054, %v1053
  %s1057 = scalar_lea.vmem %s0, 907
  %s1058 = smov 3
  %v1059 = vld [vmem:[%s1057] ss:$16 sm:%s1058]
  %s1060 = scalar_lea.vmem %s0, 907
  %s1061 = smov 12
  %v1062 = vld [vmem:[%s1060] ss:$16 sm:%s1061]
  %vm1063 = vcmask 1043458
  %v1064 = vsel %vm1063, %v1062, %v1059
  %s1065 = scalar_lea.vmem %s0, 907
  %s1066 = smov 48
  %v1067 = vld [vmem:[%s1065] ss:$16 sm:%s1066]
  %vm1068 = vcmask 1045508
  %v1069 = vsel %vm1068, %v1067, %v1064
  %s1070 = scalar_lea.vmem %s0, 907
  %s1071 = smov 192
  %v1072 = vld [vmem:[%s1070] ss:$16 sm:%s1071]
  %vm1073 = vcmask 1047558
  %v1074 = vsel %vm1073, %v1072, %v1069
  %1075 = vrot.lane.b32.xlu0 %v1074, 44
  %v1076 = vpop.permute.xlu0 %1075
  %vm1077 = vcmask 392544
  %s1078 = scalar_lea.vmem %s1, 56
  %1079 = vst.msk [vmem:[%s1078] sm:$0xff] %vm1077, %v1076
  %s1080 = scalar_lea.vmem %s0, 10
  %s1081 = smov 3
  %v1082 = vld [vmem:[%s1080] ss:$16 sm:%s1081]
  %s1083 = scalar_lea.vmem %s0, 10
  %s1084 = smov 12
  %v1085 = vld [vmem:[%s1083] ss:$16 sm:%s1084]
  %vm1086 = vcmask 1043458
  %v1087 = vsel %vm1086, %v1085, %v1082
  %s1088 = scalar_lea.vmem %s0, 10
  %s1089 = smov 48
  %v1090 = vld [vmem:[%s1088] ss:$16 sm:%s1089]
  %vm1091 = vcmask 1045508
  %v1092 = vsel %vm1091, %v1090, %v1087
  %s1093 = scalar_lea.vmem %s0, 10
  %s1094 = smov 192
  %v1095 = vld [vmem:[%s1093] ss:$16 sm:%s1094]
  %vm1096 = vcmask 1047558
  %v1097 = vsel %vm1096, %v1095, %v1092
  %1098 = vrot.lane.b32.xlu0 %v1097, 40
  %v1099 = vpop.permute.xlu0 %1098
  %vm1100 = vcmask 359744
  %1101 = vst.msk [vmem:[%s1] sm:$0xff] %vm1100, %v1099
  %s1102 = scalar_lea.vmem %s0, 522
  %s1103 = smov 3
  %v1104 = vld [vmem:[%s1102] ss:$16 sm:%s1103]
  %s1105 = scalar_lea.vmem %s0, 522
  %s1106 = smov 12
  %v1107 = vld [vmem:[%s1105] ss:$16 sm:%s1106]
  %vm1108 = vcmask 1043458
  %v1109 = vsel %vm1108, %v1107, %v1104
  %s1110 = scalar_lea.vmem %s0, 522
  %s1111 = smov 48
  %v1112 = vld [vmem:[%s1110] ss:$16 sm:%s1111]
  %vm1113 = vcmask 1045508
  %v1114 = vsel %vm1113, %v1112, %v1109
  %s1115 = scalar_lea.vmem %s0, 522
  %s1116 = smov 192
  %v1117 = vld [vmem:[%s1115] ss:$16 sm:%s1116]
  %vm1118 = vcmask 1047558
  %v1119 = vsel %vm1118, %v1117, %v1114
  %1120 = vrot.lane.b32.xlu0 %v1119, 40
  %v1121 = vpop.permute.xlu0 %1120
  %vm1122 = vcmask 359744
  %s1123 = scalar_lea.vmem %s1, 32
  %1124 = vst.msk [vmem:[%s1123] sm:$0xff] %vm1122, %v1121
  %s1125 = scalar_lea.vmem %s0, 138
  %s1126 = smov 3
  %v1127 = vld [vmem:[%s1125] ss:$16 sm:%s1126]
  %s1128 = scalar_lea.vmem %s0, 138
  %s1129 = smov 12
  %v1130 = vld [vmem:[%s1128] ss:$16 sm:%s1129]
  %vm1131 = vcmask 1043458
  %v1132 = vsel %vm1131, %v1130, %v1127
  %s1133 = scalar_lea.vmem %s0, 138
  %s1134 = smov 48
  %v1135 = vld [vmem:[%s1133] ss:$16 sm:%s1134]
  %vm1136 = vcmask 1045508
  %v1137 = vsel %vm1136, %v1135, %v1132
  %s1138 = scalar_lea.vmem %s0, 138
  %s1139 = smov 192
  %v1140 = vld [vmem:[%s1138] ss:$16 sm:%s1139]
  %vm1141 = vcmask 1047558
  %v1142 = vsel %vm1141, %v1140, %v1137
  %1143 = vrot.lane.b32.xlu0 %v1142, 40
  %v1144 = vpop.permute.xlu0 %1143
  %vm1145 = vcmask 359744
  %s1146 = scalar_lea.vmem %s1, 8
  %1147 = vst.msk [vmem:[%s1146] sm:$0xff] %vm1145, %v1144
  %s1148 = scalar_lea.vmem %s0, 650
  %s1149 = smov 3
  %v1150 = vld [vmem:[%s1148] ss:$16 sm:%s1149]
  %s1151 = scalar_lea.vmem %s0, 650
  %s1152 = smov 12
  %v1153 = vld [vmem:[%s1151] ss:$16 sm:%s1152]
  %vm1154 = vcmask 1043458
  %v1155 = vsel %vm1154, %v1153, %v1150
  %s1156 = scalar_lea.vmem %s0, 650
  %s1157 = smov 48
  %v1158 = vld [vmem:[%s1156] ss:$16 sm:%s1157]
  %vm1159 = vcmask 1045508
  %v1160 = vsel %vm1159, %v1158, %v1155
  %s1161 = scalar_lea.vmem %s0, 650
  %s1162 = smov 192
  %v1163 = vld [vmem:[%s1161] ss:$16 sm:%s1162]
  %vm1164 = vcmask 1047558
  %v1165 = vsel %vm1164, %v1163, %v1160
  %1166 = vrot.lane.b32.xlu0 %v1165, 40
  %v1167 = vpop.permute.xlu0 %1166
  %vm1168 = vcmask 359744
  %s1169 = scalar_lea.vmem %s1, 40
  %1170 = vst.msk [vmem:[%s1169] sm:$0xff] %vm1168, %v1167
  %s1171 = scalar_lea.vmem %s0, 266
  %s1172 = smov 3
  %v1173 = vld [vmem:[%s1171] ss:$16 sm:%s1172]
  %s1174 = scalar_lea.vmem %s0, 266
  %s1175 = smov 12
  %v1176 = vld [vmem:[%s1174] ss:$16 sm:%s1175]
  %vm1177 = vcmask 1043458
  %v1178 = vsel %vm1177, %v1176, %v1173
  %s1179 = scalar_lea.vmem %s0, 266
  %s1180 = smov 48
  %v1181 = vld [vmem:[%s1179] ss:$16 sm:%s1180]
  %vm1182 = vcmask 1045508
  %v1183 = vsel %vm1182, %v1181, %v1178
  %s1184 = scalar_lea.vmem %s0, 266
  %s1185 = smov 192
  %v1186 = vld [vmem:[%s1184] ss:$16 sm:%s1185]
  %vm1187 = vcmask 1047558
  %v1188 = vsel %vm1187, %v1186, %v1183
  %1189 = vrot.lane.b32.xlu0 %v1188, 40
  %v1190 = vpop.permute.xlu0 %1189
  %vm1191 = vcmask 359744
  %s1192 = scalar_lea.vmem %s1, 16
  %1193 = vst.msk [vmem:[%s1192] sm:$0xff] %vm1191, %v1190
  %s1194 = scalar_lea.vmem %s0, 778
  %s1195 = smov 3
  %v1196 = vld [vmem:[%s1194] ss:$16 sm:%s1195]
  %s1197 = scalar_lea.vmem %s0, 778
  %s1198 = smov 12
  %v1199 = vld [vmem:[%s1197] ss:$16 sm:%s1198]
  %vm1200 = vcmask 1043458
  %v1201 = vsel %vm1200, %v1199, %v1196
  %s1202 = scalar_lea.vmem %s0, 778
  %s1203 = smov 48
  %v1204 = vld [vmem:[%s1202] ss:$16 sm:%s1203]
  %vm1205 = vcmask 1045508
  %v1206 = vsel %vm1205, %v1204, %v1201
  %s1207 = scalar_lea.vmem %s0, 778
  %s1208 = smov 192
  %v1209 = vld [vmem:[%s1207] ss:$16 sm:%s1208]
  %vm1210 = vcmask 1047558
  %v1211 = vsel %vm1210, %v1209, %v1206
  %1212 = vrot.lane.b32.xlu0 %v1211, 40
  %v1213 = vpop.permute.xlu0 %1212
  %vm1214 = vcmask 359744
  %s1215 = scalar_lea.vmem %s1, 48
  %1216 = vst.msk [vmem:[%s1215] sm:$0xff] %vm1214, %v1213
  %s1217 = scalar_lea.vmem %s0, 394
  %s1218 = smov 3
  %v1219 = vld [vmem:[%s1217] ss:$16 sm:%s1218]
  %s1220 = scalar_lea.vmem %s0, 394
  %s1221 = smov 12
  %v1222 = vld [vmem:[%s1220] ss:$16 sm:%s1221]
  %vm1223 = vcmask 1043458
  %v1224 = vsel %vm1223, %v1222, %v1219
  %s1225 = scalar_lea.vmem %s0, 394
  %s1226 = smov 48
  %v1227 = vld [vmem:[%s1225] ss:$16 sm:%s1226]
  %vm1228 = vcmask 1045508
  %v1229 = vsel %vm1228, %v1227, %v1224
  %s1230 = scalar_lea.vmem %s0, 394
  %s1231 = smov 192
  %v1232 = vld [vmem:[%s1230] ss:$16 sm:%s1231]
  %vm1233 = vcmask 1047558
  %v1234 = vsel %vm1233, %v1232, %v1229
  %1235 = vrot.lane.b32.xlu0 %v1234, 40
  %v1236 = vpop.permute.xlu0 %1235
  %vm1237 = vcmask 359744
  %s1238 = scalar_lea.vmem %s1, 24
  %1239 = vst.msk [vmem:[%s1238] sm:$0xff] %vm1237, %v1236
  %s1240 = scalar_lea.vmem %s0, 906
  %s1241 = smov 3
  %v1242 = vld [vmem:[%s1240] ss:$16 sm:%s1241]
  %s1243 = scalar_lea.vmem %s0, 906
  %s1244 = smov 12
  %v1245 = vld [vmem:[%s1243] ss:$16 sm:%s1244]
  %vm1246 = vcmask 1043458
  %v1247 = vsel %vm1246, %v1245, %v1242
  %s1248 = scalar_lea.vmem %s0, 906
  %s1249 = smov 48
  %v1250 = vld [vmem:[%s1248] ss:$16 sm:%s1249]
  %vm1251 = vcmask 1045508
  %v1252 = vsel %vm1251, %v1250, %v1247
  %s1253 = scalar_lea.vmem %s0, 906
  %s1254 = smov 192
  %v1255 = vld [vmem:[%s1253] ss:$16 sm:%s1254]
  %vm1256 = vcmask 1047558
  %v1257 = vsel %vm1256, %v1255, %v1252
  %1258 = vrot.lane.b32.xlu0 %v1257, 40
  %v1259 = vpop.permute.xlu0 %1258
  %vm1260 = vcmask 359744
  %s1261 = scalar_lea.vmem %s1, 56
  %1262 = vst.msk [vmem:[%s1261] sm:$0xff] %vm1260, %v1259
  %s1263 = scalar_lea.vmem %s0, 9
  %s1264 = smov 3
  %v1265 = vld [vmem:[%s1263] ss:$16 sm:%s1264]
  %s1266 = scalar_lea.vmem %s0, 9
  %s1267 = smov 12
  %v1268 = vld [vmem:[%s1266] ss:$16 sm:%s1267]
  %vm1269 = vcmask 1043458
  %v1270 = vsel %vm1269, %v1268, %v1265
  %s1271 = scalar_lea.vmem %s0, 9
  %s1272 = smov 48
  %v1273 = vld [vmem:[%s1271] ss:$16 sm:%s1272]
  %vm1274 = vcmask 1045508
  %v1275 = vsel %vm1274, %v1273, %v1270
  %s1276 = scalar_lea.vmem %s0, 9
  %s1277 = smov 192
  %v1278 = vld [vmem:[%s1276] ss:$16 sm:%s1277]
  %vm1279 = vcmask 1047558
  %v1280 = vsel %vm1279, %v1278, %v1275
  %1281 = vrot.lane.b32.xlu0 %v1280, 36
  %v1282 = vpop.permute.xlu0 %1281
  %vm1283 = vcmask 326944
  %1284 = vst.msk [vmem:[%s1] sm:$0xff] %vm1283, %v1282
  %s1285 = scalar_lea.vmem %s0, 521
  %s1286 = smov 3
  %v1287 = vld [vmem:[%s1285] ss:$16 sm:%s1286]
  %s1288 = scalar_lea.vmem %s0, 521
  %s1289 = smov 12
  %v1290 = vld [vmem:[%s1288] ss:$16 sm:%s1289]
  %vm1291 = vcmask 1043458
  %v1292 = vsel %vm1291, %v1290, %v1287
  %s1293 = scalar_lea.vmem %s0, 521
  %s1294 = smov 48
  %v1295 = vld [vmem:[%s1293] ss:$16 sm:%s1294]
  %vm1296 = vcmask 1045508
  %v1297 = vsel %vm1296, %v1295, %v1292
  %s1298 = scalar_lea.vmem %s0, 521
  %s1299 = smov 192
  %v1300 = vld [vmem:[%s1298] ss:$16 sm:%s1299]
  %vm1301 = vcmask 1047558
  %v1302 = vsel %vm1301, %v1300, %v1297
  %1303 = vrot.lane.b32.xlu0 %v1302, 36
  %v1304 = vpop.permute.xlu0 %1303
  %vm1305 = vcmask 326944
  %s1306 = scalar_lea.vmem %s1, 32
  %1307 = vst.msk [vmem:[%s1306] sm:$0xff] %vm1305, %v1304
  %s1308 = scalar_lea.vmem %s0, 137
  %s1309 = smov 3
  %v1310 = vld [vmem:[%s1308] ss:$16 sm:%s1309]
  %s1311 = scalar_lea.vmem %s0, 137
  %s1312 = smov 12
  %v1313 = vld [vmem:[%s1311] ss:$16 sm:%s1312]
  %vm1314 = vcmask 1043458
  %v1315 = vsel %vm1314, %v1313, %v1310
  %s1316 = scalar_lea.vmem %s0, 137
  %s1317 = smov 48
  %v1318 = vld [vmem:[%s1316] ss:$16 sm:%s1317]
  %vm1319 = vcmask 1045508
  %v1320 = vsel %vm1319, %v1318, %v1315
  %s1321 = scalar_lea.vmem %s0, 137
  %s1322 = smov 192
  %v1323 = vld [vmem:[%s1321] ss:$16 sm:%s1322]
  %vm1324 = vcmask 1047558
  %v1325 = vsel %vm1324, %v1323, %v1320
  %1326 = vrot.lane.b32.xlu0 %v1325, 36
  %v1327 = vpop.permute.xlu0 %1326
  %vm1328 = vcmask 326944
  %s1329 = scalar_lea.vmem %s1, 8
  %1330 = vst.msk [vmem:[%s1329] sm:$0xff] %vm1328, %v1327
  %s1331 = scalar_lea.vmem %s0, 649
  %s1332 = smov 3
  %v1333 = vld [vmem:[%s1331] ss:$16 sm:%s1332]
  %s1334 = scalar_lea.vmem %s0, 649
  %s1335 = smov 12
  %v1336 = vld [vmem:[%s1334] ss:$16 sm:%s1335]
  %vm1337 = vcmask 1043458
  %v1338 = vsel %vm1337, %v1336, %v1333
  %s1339 = scalar_lea.vmem %s0, 649
  %s1340 = smov 48
  %v1341 = vld [vmem:[%s1339] ss:$16 sm:%s1340]
  %vm1342 = vcmask 1045508
  %v1343 = vsel %vm1342, %v1341, %v1338
  %s1344 = scalar_lea.vmem %s0, 649
  %s1345 = smov 192
  %v1346 = vld [vmem:[%s1344] ss:$16 sm:%s1345]
  %vm1347 = vcmask 1047558
  %v1348 = vsel %vm1347, %v1346, %v1343
  %1349 = vrot.lane.b32.xlu0 %v1348, 36
  %v1350 = vpop.permute.xlu0 %1349
  %vm1351 = vcmask 326944
  %s1352 = scalar_lea.vmem %s1, 40
  %1353 = vst.msk [vmem:[%s1352] sm:$0xff] %vm1351, %v1350
  %s1354 = scalar_lea.vmem %s0, 265
  %s1355 = smov 3
  %v1356 = vld [vmem:[%s1354] ss:$16 sm:%s1355]
  %s1357 = scalar_lea.vmem %s0, 265
  %s1358 = smov 12
  %v1359 = vld [vmem:[%s1357] ss:$16 sm:%s1358]
  %vm1360 = vcmask 1043458
  %v1361 = vsel %vm1360, %v1359, %v1356
  %s1362 = scalar_lea.vmem %s0, 265
  %s1363 = smov 48
  %v1364 = vld [vmem:[%s1362] ss:$16 sm:%s1363]
  %vm1365 = vcmask 1045508
  %v1366 = vsel %vm1365, %v1364, %v1361
  %s1367 = scalar_lea.vmem %s0, 265
  %s1368 = smov 192
  %v1369 = vld [vmem:[%s1367] ss:$16 sm:%s1368]
  %vm1370 = vcmask 1047558
  %v1371 = vsel %vm1370, %v1369, %v1366
  %1372 = vrot.lane.b32.xlu0 %v1371, 36
  %v1373 = vpop.permute.xlu0 %1372
  %vm1374 = vcmask 326944
  %s1375 = scalar_lea.vmem %s1, 16
  %1376 = vst.msk [vmem:[%s1375] sm:$0xff] %vm1374, %v1373
  %s1377 = scalar_lea.vmem %s0, 777
  %s1378 = smov 3
  %v1379 = vld [vmem:[%s1377] ss:$16 sm:%s1378]
  %s1380 = scalar_lea.vmem %s0, 777
  %s1381 = smov 12
  %v1382 = vld [vmem:[%s1380] ss:$16 sm:%s1381]
  %vm1383 = vcmask 1043458
  %v1384 = vsel %vm1383, %v1382, %v1379
  %s1385 = scalar_lea.vmem %s0, 777
  %s1386 = smov 48
  %v1387 = vld [vmem:[%s1385] ss:$16 sm:%s1386]
  %vm1388 = vcmask 1045508
  %v1389 = vsel %vm1388, %v1387, %v1384
  %s1390 = scalar_lea.vmem %s0, 777
  %s1391 = smov 192
  %v1392 = vld [vmem:[%s1390] ss:$16 sm:%s1391]
  %vm1393 = vcmask 1047558
  %v1394 = vsel %vm1393, %v1392, %v1389
  %1395 = vrot.lane.b32.xlu0 %v1394, 36
  %v1396 = vpop.permute.xlu0 %1395
  %vm1397 = vcmask 326944
  %s1398 = scalar_lea.vmem %s1, 48
  %1399 = vst.msk [vmem:[%s1398] sm:$0xff] %vm1397, %v1396
  %s1400 = scalar_lea.vmem %s0, 393
  %s1401 = smov 3
  %v1402 = vld [vmem:[%s1400] ss:$16 sm:%s1401]
  %s1403 = scalar_lea.vmem %s0, 393
  %s1404 = smov 12
  %v1405 = vld [vmem:[%s1403] ss:$16 sm:%s1404]
  %vm1406 = vcmask 1043458
  %v1407 = vsel %vm1406, %v1405, %v1402
  %s1408 = scalar_lea.vmem %s0, 393
  %s1409 = smov 48
  %v1410 = vld [vmem:[%s1408] ss:$16 sm:%s1409]
  %vm1411 = vcmask 1045508
  %v1412 = vsel %vm1411, %v1410, %v1407
  %s1413 = scalar_lea.vmem %s0, 393
  %s1414 = smov 192
  %v1415 = vld [vmem:[%s1413] ss:$16 sm:%s1414]
  %vm1416 = vcmask 1047558
  %v1417 = vsel %vm1416, %v1415, %v1412
  %1418 = vrot.lane.b32.xlu0 %v1417, 36
  %v1419 = vpop.permute.xlu0 %1418
  %vm1420 = vcmask 326944
  %s1421 = scalar_lea.vmem %s1, 24
  %1422 = vst.msk [vmem:[%s1421] sm:$0xff] %vm1420, %v1419
  %s1423 = scalar_lea.vmem %s0, 905
  %s1424 = smov 3
  %v1425 = vld [vmem:[%s1423] ss:$16 sm:%s1424]
  %s1426 = scalar_lea.vmem %s0, 905
  %s1427 = smov 12
  %v1428 = vld [vmem:[%s1426] ss:$16 sm:%s1427]
  %vm1429 = vcmask 1043458
  %v1430 = vsel %vm1429, %v1428, %v1425
  %s1431 = scalar_lea.vmem %s0, 905
  %s1432 = smov 48
  %v1433 = vld [vmem:[%s1431] ss:$16 sm:%s1432]
  %vm1434 = vcmask 1045508
  %v1435 = vsel %vm1434, %v1433, %v1430
  %s1436 = scalar_lea.vmem %s0, 905
  %s1437 = smov 192
  %v1438 = vld [vmem:[%s1436] ss:$16 sm:%s1437]
  %vm1439 = vcmask 1047558
  %v1440 = vsel %vm1439, %v1438, %v1435
  %1441 = vrot.lane.b32.xlu0 %v1440, 36
  %v1442 = vpop.permute.xlu0 %1441
  %vm1443 = vcmask 326944
  %s1444 = scalar_lea.vmem %s1, 56
  %1445 = vst.msk [vmem:[%s1444] sm:$0xff] %vm1443, %v1442
  %s1446 = scalar_lea.vmem %s0, 8
  %s1447 = smov 3
  %v1448 = vld [vmem:[%s1446] ss:$16 sm:%s1447]
  %s1449 = scalar_lea.vmem %s0, 8
  %s1450 = smov 12
  %v1451 = vld [vmem:[%s1449] ss:$16 sm:%s1450]
  %vm1452 = vcmask 1043458
  %v1453 = vsel %vm1452, %v1451, %v1448
  %s1454 = scalar_lea.vmem %s0, 8
  %s1455 = smov 48
  %v1456 = vld [vmem:[%s1454] ss:$16 sm:%s1455]
  %vm1457 = vcmask 1045508
  %v1458 = vsel %vm1457, %v1456, %v1453
  %s1459 = scalar_lea.vmem %s0, 8
  %s1460 = smov 192
  %v1461 = vld [vmem:[%s1459] ss:$16 sm:%s1460]
  %vm1462 = vcmask 1047558
  %v1463 = vsel %vm1462, %v1461, %v1458
  %1464 = vrot.lane.b32.xlu0 %v1463, 32
  %v1465 = vpop.permute.xlu0 %1464
  %vm1466 = vcmask 294144
  %1467 = vst.msk [vmem:[%s1] sm:$0xff] %vm1466, %v1465
  %s1468 = scalar_lea.vmem %s0, 520
  %s1469 = smov 3
  %v1470 = vld [vmem:[%s1468] ss:$16 sm:%s1469]
  %s1471 = scalar_lea.vmem %s0, 520
  %s1472 = smov 12
  %v1473 = vld [vmem:[%s1471] ss:$16 sm:%s1472]
  %vm1474 = vcmask 1043458
  %v1475 = vsel %vm1474, %v1473, %v1470
  %s1476 = scalar_lea.vmem %s0, 520
  %s1477 = smov 48
  %v1478 = vld [vmem:[%s1476] ss:$16 sm:%s1477]
  %vm1479 = vcmask 1045508
  %v1480 = vsel %vm1479, %v1478, %v1475
  %s1481 = scalar_lea.vmem %s0, 520
  %s1482 = smov 192
  %v1483 = vld [vmem:[%s1481] ss:$16 sm:%s1482]
  %vm1484 = vcmask 1047558
  %v1485 = vsel %vm1484, %v1483, %v1480
  %1486 = vrot.lane.b32.xlu0 %v1485, 32
  %v1487 = vpop.permute.xlu0 %1486
  %vm1488 = vcmask 294144
  %s1489 = scalar_lea.vmem %s1, 32
  %1490 = vst.msk [vmem:[%s1489] sm:$0xff] %vm1488, %v1487
  %s1491 = scalar_lea.vmem %s0, 136
  %s1492 = smov 3
  %v1493 = vld [vmem:[%s1491] ss:$16 sm:%s1492]
  %s1494 = scalar_lea.vmem %s0, 136
  %s1495 = smov 12
  %v1496 = vld [vmem:[%s1494] ss:$16 sm:%s1495]
  %vm1497 = vcmask 1043458
  %v1498 = vsel %vm1497, %v1496, %v1493
  %s1499 = scalar_lea.vmem %s0, 136
  %s1500 = smov 48
  %v1501 = vld [vmem:[%s1499] ss:$16 sm:%s1500]
  %vm1502 = vcmask 1045508
  %v1503 = vsel %vm1502, %v1501, %v1498
  %s1504 = scalar_lea.vmem %s0, 136
  %s1505 = smov 192
  %v1506 = vld [vmem:[%s1504] ss:$16 sm:%s1505]
  %vm1507 = vcmask 1047558
  %v1508 = vsel %vm1507, %v1506, %v1503
  %1509 = vrot.lane.b32.xlu0 %v1508, 32
  %v1510 = vpop.permute.xlu0 %1509
  %vm1511 = vcmask 294144
  %s1512 = scalar_lea.vmem %s1, 8
  %1513 = vst.msk [vmem:[%s1512] sm:$0xff] %vm1511, %v1510
  %s1514 = scalar_lea.vmem %s0, 648
  %s1515 = smov 3
  %v1516 = vld [vmem:[%s1514] ss:$16 sm:%s1515]
  %s1517 = scalar_lea.vmem %s0, 648
  %s1518 = smov 12
  %v1519 = vld [vmem:[%s1517] ss:$16 sm:%s1518]
  %vm1520 = vcmask 1043458
  %v1521 = vsel %vm1520, %v1519, %v1516
  %s1522 = scalar_lea.vmem %s0, 648
  %s1523 = smov 48
  %v1524 = vld [vmem:[%s1522] ss:$16 sm:%s1523]
  %vm1525 = vcmask 1045508
  %v1526 = vsel %vm1525, %v1524, %v1521
  %s1527 = scalar_lea.vmem %s0, 648
  %s1528 = smov 192
  %v1529 = vld [vmem:[%s1527] ss:$16 sm:%s1528]
  %vm1530 = vcmask 1047558
  %v1531 = vsel %vm1530, %v1529, %v1526
  %1532 = vrot.lane.b32.xlu0 %v1531, 32
  %v1533 = vpop.permute.xlu0 %1532
  %vm1534 = vcmask 294144
  %s1535 = scalar_lea.vmem %s1, 40
  %1536 = vst.msk [vmem:[%s1535] sm:$0xff] %vm1534, %v1533
  %s1537 = scalar_lea.vmem %s0, 264
  %s1538 = smov 3
  %v1539 = vld [vmem:[%s1537] ss:$16 sm:%s1538]
  %s1540 = scalar_lea.vmem %s0, 264
  %s1541 = smov 12
  %v1542 = vld [vmem:[%s1540] ss:$16 sm:%s1541]
  %vm1543 = vcmask 1043458
  %v1544 = vsel %vm1543, %v1542, %v1539
  %s1545 = scalar_lea.vmem %s0, 264
  %s1546 = smov 48
  %v1547 = vld [vmem:[%s1545] ss:$16 sm:%s1546]
  %vm1548 = vcmask 1045508
  %v1549 = vsel %vm1548, %v1547, %v1544
  %s1550 = scalar_lea.vmem %s0, 264
  %s1551 = smov 192
  %v1552 = vld [vmem:[%s1550] ss:$16 sm:%s1551]
  %vm1553 = vcmask 1047558
  %v1554 = vsel %vm1553, %v1552, %v1549
  %1555 = vrot.lane.b32.xlu0 %v1554, 32
  %v1556 = vpop.permute.xlu0 %1555
  %vm1557 = vcmask 294144
  %s1558 = scalar_lea.vmem %s1, 16
  %1559 = vst.msk [vmem:[%s1558] sm:$0xff] %vm1557, %v1556
  %s1560 = scalar_lea.vmem %s0, 776
  %s1561 = smov 3
  %v1562 = vld [vmem:[%s1560] ss:$16 sm:%s1561]
  %s1563 = scalar_lea.vmem %s0, 776
  %s1564 = smov 12
  %v1565 = vld [vmem:[%s1563] ss:$16 sm:%s1564]
  %vm1566 = vcmask 1043458
  %v1567 = vsel %vm1566, %v1565, %v1562
  %s1568 = scalar_lea.vmem %s0, 776
  %s1569 = smov 48
  %v1570 = vld [vmem:[%s1568] ss:$16 sm:%s1569]
  %vm1571 = vcmask 1045508
  %v1572 = vsel %vm1571, %v1570, %v1567
  %s1573 = scalar_lea.vmem %s0, 776
  %s1574 = smov 192
  %v1575 = vld [vmem:[%s1573] ss:$16 sm:%s1574]
  %vm1576 = vcmask 1047558
  %v1577 = vsel %vm1576, %v1575, %v1572
  %1578 = vrot.lane.b32.xlu0 %v1577, 32
  %v1579 = vpop.permute.xlu0 %1578
  %vm1580 = vcmask 294144
  %s1581 = scalar_lea.vmem %s1, 48
  %1582 = vst.msk [vmem:[%s1581] sm:$0xff] %vm1580, %v1579
  %s1583 = scalar_lea.vmem %s0, 392
  %s1584 = smov 3
  %v1585 = vld [vmem:[%s1583] ss:$16 sm:%s1584]
  %s1586 = scalar_lea.vmem %s0, 392
  %s1587 = smov 12
  %v1588 = vld [vmem:[%s1586] ss:$16 sm:%s1587]
  %vm1589 = vcmask 1043458
  %v1590 = vsel %vm1589, %v1588, %v1585
  %s1591 = scalar_lea.vmem %s0, 392
  %s1592 = smov 48
  %v1593 = vld [vmem:[%s1591] ss:$16 sm:%s1592]
  %vm1594 = vcmask 1045508
  %v1595 = vsel %vm1594, %v1593, %v1590
  %s1596 = scalar_lea.vmem %s0, 392
  %s1597 = smov 192
  %v1598 = vld [vmem:[%s1596] ss:$16 sm:%s1597]
  %vm1599 = vcmask 1047558
  %v1600 = vsel %vm1599, %v1598, %v1595
  %1601 = vrot.lane.b32.xlu0 %v1600, 32
  %v1602 = vpop.permute.xlu0 %1601
  %vm1603 = vcmask 294144
  %s1604 = scalar_lea.vmem %s1, 24
  %1605 = vst.msk [vmem:[%s1604] sm:$0xff] %vm1603, %v1602
  %s1606 = scalar_lea.vmem %s0, 904
  %s1607 = smov 3
  %v1608 = vld [vmem:[%s1606] ss:$16 sm:%s1607]
  %s1609 = scalar_lea.vmem %s0, 904
  %s1610 = smov 12
  %v1611 = vld [vmem:[%s1609] ss:$16 sm:%s1610]
  %vm1612 = vcmask 1043458
  %v1613 = vsel %vm1612, %v1611, %v1608
  %s1614 = scalar_lea.vmem %s0, 904
  %s1615 = smov 48
  %v1616 = vld [vmem:[%s1614] ss:$16 sm:%s1615]
  %vm1617 = vcmask 1045508
  %v1618 = vsel %vm1617, %v1616, %v1613
  %s1619 = scalar_lea.vmem %s0, 904
  %s1620 = smov 192
  %v1621 = vld [vmem:[%s1619] ss:$16 sm:%s1620]
  %vm1622 = vcmask 1047558
  %v1623 = vsel %vm1622, %v1621, %v1618
  %1624 = vrot.lane.b32.xlu0 %v1623, 32
  %v1625 = vpop.permute.xlu0 %1624
  %vm1626 = vcmask 294144
  %s1627 = scalar_lea.vmem %s1, 56
  %1628 = vst.msk [vmem:[%s1627] sm:$0xff] %vm1626, %v1625
  %s1629 = scalar_lea.vmem %s0, 7
  %s1630 = smov 3
  %v1631 = vld [vmem:[%s1629] ss:$16 sm:%s1630]
  %s1632 = scalar_lea.vmem %s0, 7
  %s1633 = smov 12
  %v1634 = vld [vmem:[%s1632] ss:$16 sm:%s1633]
  %vm1635 = vcmask 1043458
  %v1636 = vsel %vm1635, %v1634, %v1631
  %s1637 = scalar_lea.vmem %s0, 7
  %s1638 = smov 48
  %v1639 = vld [vmem:[%s1637] ss:$16 sm:%s1638]
  %vm1640 = vcmask 1045508
  %v1641 = vsel %vm1640, %v1639, %v1636
  %s1642 = scalar_lea.vmem %s0, 7
  %s1643 = smov 192
  %v1644 = vld [vmem:[%s1642] ss:$16 sm:%s1643]
  %vm1645 = vcmask 1047558
  %v1646 = vsel %vm1645, %v1644, %v1641
  %1647 = vrot.lane.b32.xlu0 %v1646, 28
  %v1648 = vpop.permute.xlu0 %1647
  %vm1649 = vcmask 261344
  %1650 = vst.msk [vmem:[%s1] sm:$0xff] %vm1649, %v1648
  %s1651 = scalar_lea.vmem %s0, 519
  %s1652 = smov 3
  %v1653 = vld [vmem:[%s1651] ss:$16 sm:%s1652]
  %s1654 = scalar_lea.vmem %s0, 519
  %s1655 = smov 12
  %v1656 = vld [vmem:[%s1654] ss:$16 sm:%s1655]
  %vm1657 = vcmask 1043458
  %v1658 = vsel %vm1657, %v1656, %v1653
  %s1659 = scalar_lea.vmem %s0, 519
  %s1660 = smov 48
  %v1661 = vld [vmem:[%s1659] ss:$16 sm:%s1660]
  %vm1662 = vcmask 1045508
  %v1663 = vsel %vm1662, %v1661, %v1658
  %s1664 = scalar_lea.vmem %s0, 519
  %s1665 = smov 192
  %v1666 = vld [vmem:[%s1664] ss:$16 sm:%s1665]
  %vm1667 = vcmask 1047558
  %v1668 = vsel %vm1667, %v1666, %v1663
  %1669 = vrot.lane.b32.xlu0 %v1668, 28
  %v1670 = vpop.permute.xlu0 %1669
  %vm1671 = vcmask 261344
  %s1672 = scalar_lea.vmem %s1, 32
  %1673 = vst.msk [vmem:[%s1672] sm:$0xff] %vm1671, %v1670
  %s1674 = scalar_lea.vmem %s0, 135
  %s1675 = smov 3
  %v1676 = vld [vmem:[%s1674] ss:$16 sm:%s1675]
  %s1677 = scalar_lea.vmem %s0, 135
  %s1678 = smov 12
  %v1679 = vld [vmem:[%s1677] ss:$16 sm:%s1678]
  %vm1680 = vcmask 1043458
  %v1681 = vsel %vm1680, %v1679, %v1676
  %s1682 = scalar_lea.vmem %s0, 135
  %s1683 = smov 48
  %v1684 = vld [vmem:[%s1682] ss:$16 sm:%s1683]
  %vm1685 = vcmask 1045508
  %v1686 = vsel %vm1685, %v1684, %v1681
  %s1687 = scalar_lea.vmem %s0, 135
  %s1688 = smov 192
  %v1689 = vld [vmem:[%s1687] ss:$16 sm:%s1688]
  %vm1690 = vcmask 1047558
  %v1691 = vsel %vm1690, %v1689, %v1686
  %1692 = vrot.lane.b32.xlu0 %v1691, 28
  %v1693 = vpop.permute.xlu0 %1692
  %vm1694 = vcmask 261344
  %s1695 = scalar_lea.vmem %s1, 8
  %1696 = vst.msk [vmem:[%s1695] sm:$0xff] %vm1694, %v1693
  %s1697 = scalar_lea.vmem %s0, 647
  %s1698 = smov 3
  %v1699 = vld [vmem:[%s1697] ss:$16 sm:%s1698]
  %s1700 = scalar_lea.vmem %s0, 647
  %s1701 = smov 12
  %v1702 = vld [vmem:[%s1700] ss:$16 sm:%s1701]
  %vm1703 = vcmask 1043458
  %v1704 = vsel %vm1703, %v1702, %v1699
  %s1705 = scalar_lea.vmem %s0, 647
  %s1706 = smov 48
  %v1707 = vld [vmem:[%s1705] ss:$16 sm:%s1706]
  %vm1708 = vcmask 1045508
  %v1709 = vsel %vm1708, %v1707, %v1704
  %s1710 = scalar_lea.vmem %s0, 647
  %s1711 = smov 192
  %v1712 = vld [vmem:[%s1710] ss:$16 sm:%s1711]
  %vm1713 = vcmask 1047558
  %v1714 = vsel %vm1713, %v1712, %v1709
  %1715 = vrot.lane.b32.xlu0 %v1714, 28
  %v1716 = vpop.permute.xlu0 %1715
  %vm1717 = vcmask 261344
  %s1718 = scalar_lea.vmem %s1, 40
  %1719 = vst.msk [vmem:[%s1718] sm:$0xff] %vm1717, %v1716
  %s1720 = scalar_lea.vmem %s0, 263
  %s1721 = smov 3
  %v1722 = vld [vmem:[%s1720] ss:$16 sm:%s1721]
  %s1723 = scalar_lea.vmem %s0, 263
  %s1724 = smov 12
  %v1725 = vld [vmem:[%s1723] ss:$16 sm:%s1724]
  %vm1726 = vcmask 1043458
  %v1727 = vsel %vm1726, %v1725, %v1722
  %s1728 = scalar_lea.vmem %s0, 263
  %s1729 = smov 48
  %v1730 = vld [vmem:[%s1728] ss:$16 sm:%s1729]
  %vm1731 = vcmask 1045508
  %v1732 = vsel %vm1731, %v1730, %v1727
  %s1733 = scalar_lea.vmem %s0, 263
  %s1734 = smov 192
  %v1735 = vld [vmem:[%s1733] ss:$16 sm:%s1734]
  %vm1736 = vcmask 1047558
  %v1737 = vsel %vm1736, %v1735, %v1732
  %1738 = vrot.lane.b32.xlu0 %v1737, 28
  %v1739 = vpop.permute.xlu0 %1738
  %vm1740 = vcmask 261344
  %s1741 = scalar_lea.vmem %s1, 16
  %1742 = vst.msk [vmem:[%s1741] sm:$0xff] %vm1740, %v1739
  %s1743 = scalar_lea.vmem %s0, 775
  %s1744 = smov 3
  %v1745 = vld [vmem:[%s1743] ss:$16 sm:%s1744]
  %s1746 = scalar_lea.vmem %s0, 775
  %s1747 = smov 12
  %v1748 = vld [vmem:[%s1746] ss:$16 sm:%s1747]
  %vm1749 = vcmask 1043458
  %v1750 = vsel %vm1749, %v1748, %v1745
  %s1751 = scalar_lea.vmem %s0, 775
  %s1752 = smov 48
  %v1753 = vld [vmem:[%s1751] ss:$16 sm:%s1752]
  %vm1754 = vcmask 1045508
  %v1755 = vsel %vm1754, %v1753, %v1750
  %s1756 = scalar_lea.vmem %s0, 775
  %s1757 = smov 192
  %v1758 = vld [vmem:[%s1756] ss:$16 sm:%s1757]
  %vm1759 = vcmask 1047558
  %v1760 = vsel %vm1759, %v1758, %v1755
  %1761 = vrot.lane.b32.xlu0 %v1760, 28
  %v1762 = vpop.permute.xlu0 %1761
  %vm1763 = vcmask 261344
  %s1764 = scalar_lea.vmem %s1, 48
  %1765 = vst.msk [vmem:[%s1764] sm:$0xff] %vm1763, %v1762
  %s1766 = scalar_lea.vmem %s0, 391
  %s1767 = smov 3
  %v1768 = vld [vmem:[%s1766] ss:$16 sm:%s1767]
  %s1769 = scalar_lea.vmem %s0, 391
  %s1770 = smov 12
  %v1771 = vld [vmem:[%s1769] ss:$16 sm:%s1770]
  %vm1772 = vcmask 1043458
  %v1773 = vsel %vm1772, %v1771, %v1768
  %s1774 = scalar_lea.vmem %s0, 391
  %s1775 = smov 48
  %v1776 = vld [vmem:[%s1774] ss:$16 sm:%s1775]
  %vm1777 = vcmask 1045508
  %v1778 = vsel %vm1777, %v1776, %v1773
  %s1779 = scalar_lea.vmem %s0, 391
  %s1780 = smov 192
  %v1781 = vld [vmem:[%s1779] ss:$16 sm:%s1780]
  %vm1782 = vcmask 1047558
  %v1783 = vsel %vm1782, %v1781, %v1778
  %1784 = vrot.lane.b32.xlu0 %v1783, 28
  %v1785 = vpop.permute.xlu0 %1784
  %vm1786 = vcmask 261344
  %s1787 = scalar_lea.vmem %s1, 24
  %1788 = vst.msk [vmem:[%s1787] sm:$0xff] %vm1786, %v1785
  %s1789 = scalar_lea.vmem %s0, 903
  %s1790 = smov 3
  %v1791 = vld [vmem:[%s1789] ss:$16 sm:%s1790]
  %s1792 = scalar_lea.vmem %s0, 903
  %s1793 = smov 12
  %v1794 = vld [vmem:[%s1792] ss:$16 sm:%s1793]
  %vm1795 = vcmask 1043458
  %v1796 = vsel %vm1795, %v1794, %v1791
  %s1797 = scalar_lea.vmem %s0, 903
  %s1798 = smov 48
  %v1799 = vld [vmem:[%s1797] ss:$16 sm:%s1798]
  %vm1800 = vcmask 1045508
  %v1801 = vsel %vm1800, %v1799, %v1796
  %s1802 = scalar_lea.vmem %s0, 903
  %s1803 = smov 192
  %v1804 = vld [vmem:[%s1802] ss:$16 sm:%s1803]
  %vm1805 = vcmask 1047558
  %v1806 = vsel %vm1805, %v1804, %v1801
  %1807 = vrot.lane.b32.xlu0 %v1806, 28
  %v1808 = vpop.permute.xlu0 %1807
  %vm1809 = vcmask 261344
  %s1810 = scalar_lea.vmem %s1, 56
  %1811 = vst.msk [vmem:[%s1810] sm:$0xff] %vm1809, %v1808
  %s1812 = scalar_lea.vmem %s0, 6
  %s1813 = smov 3
  %v1814 = vld [vmem:[%s1812] ss:$16 sm:%s1813]
  %s1815 = scalar_lea.vmem %s0, 6
  %s1816 = smov 12
  %v1817 = vld [vmem:[%s1815] ss:$16 sm:%s1816]
  %vm1818 = vcmask 1043458
  %v1819 = vsel %vm1818, %v1817, %v1814
  %s1820 = scalar_lea.vmem %s0, 6
  %s1821 = smov 48
  %v1822 = vld [vmem:[%s1820] ss:$16 sm:%s1821]
  %vm1823 = vcmask 1045508
  %v1824 = vsel %vm1823, %v1822, %v1819
  %s1825 = scalar_lea.vmem %s0, 6
  %s1826 = smov 192
  %v1827 = vld [vmem:[%s1825] ss:$16 sm:%s1826]
  %vm1828 = vcmask 1047558
  %v1829 = vsel %vm1828, %v1827, %v1824
  %1830 = vrot.lane.b32.xlu0 %v1829, 24
  %v1831 = vpop.permute.xlu0 %1830
  %vm1832 = vcmask 228544
  %1833 = vst.msk [vmem:[%s1] sm:$0xff] %vm1832, %v1831
  %s1834 = scalar_lea.vmem %s0, 518
  %s1835 = smov 3
  %v1836 = vld [vmem:[%s1834] ss:$16 sm:%s1835]
  %s1837 = scalar_lea.vmem %s0, 518
  %s1838 = smov 12
  %v1839 = vld [vmem:[%s1837] ss:$16 sm:%s1838]
  %vm1840 = vcmask 1043458
  %v1841 = vsel %vm1840, %v1839, %v1836
  %s1842 = scalar_lea.vmem %s0, 518
  %s1843 = smov 48
  %v1844 = vld [vmem:[%s1842] ss:$16 sm:%s1843]
  %vm1845 = vcmask 1045508
  %v1846 = vsel %vm1845, %v1844, %v1841
  %s1847 = scalar_lea.vmem %s0, 518
  %s1848 = smov 192
  %v1849 = vld [vmem:[%s1847] ss:$16 sm:%s1848]
  %vm1850 = vcmask 1047558
  %v1851 = vsel %vm1850, %v1849, %v1846
  %1852 = vrot.lane.b32.xlu0 %v1851, 24
  %v1853 = vpop.permute.xlu0 %1852
  %vm1854 = vcmask 228544
  %s1855 = scalar_lea.vmem %s1, 32
  %1856 = vst.msk [vmem:[%s1855] sm:$0xff] %vm1854, %v1853
  %s1857 = scalar_lea.vmem %s0, 134
  %s1858 = smov 3
  %v1859 = vld [vmem:[%s1857] ss:$16 sm:%s1858]
  %s1860 = scalar_lea.vmem %s0, 134
  %s1861 = smov 12
  %v1862 = vld [vmem:[%s1860] ss:$16 sm:%s1861]
  %vm1863 = vcmask 1043458
  %v1864 = vsel %vm1863, %v1862, %v1859
  %s1865 = scalar_lea.vmem %s0, 134
  %s1866 = smov 48
  %v1867 = vld [vmem:[%s1865] ss:$16 sm:%s1866]
  %vm1868 = vcmask 1045508
  %v1869 = vsel %vm1868, %v1867, %v1864
  %s1870 = scalar_lea.vmem %s0, 134
  %s1871 = smov 192
  %v1872 = vld [vmem:[%s1870] ss:$16 sm:%s1871]
  %vm1873 = vcmask 1047558
  %v1874 = vsel %vm1873, %v1872, %v1869
  %1875 = vrot.lane.b32.xlu0 %v1874, 24
  %v1876 = vpop.permute.xlu0 %1875
  %vm1877 = vcmask 228544
  %s1878 = scalar_lea.vmem %s1, 8
  %1879 = vst.msk [vmem:[%s1878] sm:$0xff] %vm1877, %v1876
  %s1880 = scalar_lea.vmem %s0, 646
  %s1881 = smov 3
  %v1882 = vld [vmem:[%s1880] ss:$16 sm:%s1881]
  %s1883 = scalar_lea.vmem %s0, 646
  %s1884 = smov 12
  %v1885 = vld [vmem:[%s1883] ss:$16 sm:%s1884]
  %vm1886 = vcmask 1043458
  %v1887 = vsel %vm1886, %v1885, %v1882
  %s1888 = scalar_lea.vmem %s0, 646
  %s1889 = smov 48
  %v1890 = vld [vmem:[%s1888] ss:$16 sm:%s1889]
  %vm1891 = vcmask 1045508
  %v1892 = vsel %vm1891, %v1890, %v1887
  %s1893 = scalar_lea.vmem %s0, 646
  %s1894 = smov 192
  %v1895 = vld [vmem:[%s1893] ss:$16 sm:%s1894]
  %vm1896 = vcmask 1047558
  %v1897 = vsel %vm1896, %v1895, %v1892
  %1898 = vrot.lane.b32.xlu0 %v1897, 24
  %v1899 = vpop.permute.xlu0 %1898
  %vm1900 = vcmask 228544
  %s1901 = scalar_lea.vmem %s1, 40
  %1902 = vst.msk [vmem:[%s1901] sm:$0xff] %vm1900, %v1899
  %s1903 = scalar_lea.vmem %s0, 262
  %s1904 = smov 3
  %v1905 = vld [vmem:[%s1903] ss:$16 sm:%s1904]
  %s1906 = scalar_lea.vmem %s0, 262
  %s1907 = smov 12
  %v1908 = vld [vmem:[%s1906] ss:$16 sm:%s1907]
  %vm1909 = vcmask 1043458
  %v1910 = vsel %vm1909, %v1908, %v1905
  %s1911 = scalar_lea.vmem %s0, 262
  %s1912 = smov 48
  %v1913 = vld [vmem:[%s1911] ss:$16 sm:%s1912]
  %vm1914 = vcmask 1045508
  %v1915 = vsel %vm1914, %v1913, %v1910
  %s1916 = scalar_lea.vmem %s0, 262
  %s1917 = smov 192
  %v1918 = vld [vmem:[%s1916] ss:$16 sm:%s1917]
  %vm1919 = vcmask 1047558
  %v1920 = vsel %vm1919, %v1918, %v1915
  %1921 = vrot.lane.b32.xlu0 %v1920, 24
  %v1922 = vpop.permute.xlu0 %1921
  %vm1923 = vcmask 228544
  %s1924 = scalar_lea.vmem %s1, 16
  %1925 = vst.msk [vmem:[%s1924] sm:$0xff] %vm1923, %v1922
  %s1926 = scalar_lea.vmem %s0, 774
  %s1927 = smov 3
  %v1928 = vld [vmem:[%s1926] ss:$16 sm:%s1927]
  %s1929 = scalar_lea.vmem %s0, 774
  %s1930 = smov 12
  %v1931 = vld [vmem:[%s1929] ss:$16 sm:%s1930]
  %vm1932 = vcmask 1043458
  %v1933 = vsel %vm1932, %v1931, %v1928
  %s1934 = scalar_lea.vmem %s0, 774
  %s1935 = smov 48
  %v1936 = vld [vmem:[%s1934] ss:$16 sm:%s1935]
  %vm1937 = vcmask 1045508
  %v1938 = vsel %vm1937, %v1936, %v1933
  %s1939 = scalar_lea.vmem %s0, 774
  %s1940 = smov 192
  %v1941 = vld [vmem:[%s1939] ss:$16 sm:%s1940]
  %vm1942 = vcmask 1047558
  %v1943 = vsel %vm1942, %v1941, %v1938
  %1944 = vrot.lane.b32.xlu0 %v1943, 24
  %v1945 = vpop.permute.xlu0 %1944
  %vm1946 = vcmask 228544
  %s1947 = scalar_lea.vmem %s1, 48
  %1948 = vst.msk [vmem:[%s1947] sm:$0xff] %vm1946, %v1945
  %s1949 = scalar_lea.vmem %s0, 390
  %s1950 = smov 3
  %v1951 = vld [vmem:[%s1949] ss:$16 sm:%s1950]
  %s1952 = scalar_lea.vmem %s0, 390
  %s1953 = smov 12
  %v1954 = vld [vmem:[%s1952] ss:$16 sm:%s1953]
  %vm1955 = vcmask 1043458
  %v1956 = vsel %vm1955, %v1954, %v1951
  %s1957 = scalar_lea.vmem %s0, 390
  %s1958 = smov 48
  %v1959 = vld [vmem:[%s1957] ss:$16 sm:%s1958]
  %vm1960 = vcmask 1045508
  %v1961 = vsel %vm1960, %v1959, %v1956
  %s1962 = scalar_lea.vmem %s0, 390
  %s1963 = smov 192
  %v1964 = vld [vmem:[%s1962] ss:$16 sm:%s1963]
  %vm1965 = vcmask 1047558
  %v1966 = vsel %vm1965, %v1964, %v1961
  %1967 = vrot.lane.b32.xlu0 %v1966, 24
  %v1968 = vpop.permute.xlu0 %1967
  %vm1969 = vcmask 228544
  %s1970 = scalar_lea.vmem %s1, 24
  %1971 = vst.msk [vmem:[%s1970] sm:$0xff] %vm1969, %v1968
  %s1972 = scalar_lea.vmem %s0, 902
  %s1973 = smov 3
  %v1974 = vld [vmem:[%s1972] ss:$16 sm:%s1973]
  %s1975 = scalar_lea.vmem %s0, 902
  %s1976 = smov 12
  %v1977 = vld [vmem:[%s1975] ss:$16 sm:%s1976]
  %vm1978 = vcmask 1043458
  %v1979 = vsel %vm1978, %v1977, %v1974
  %s1980 = scalar_lea.vmem %s0, 902
  %s1981 = smov 48
  %v1982 = vld [vmem:[%s1980] ss:$16 sm:%s1981]
  %vm1983 = vcmask 1045508
  %v1984 = vsel %vm1983, %v1982, %v1979
  %s1985 = scalar_lea.vmem %s0, 902
  %s1986 = smov 192
  %v1987 = vld [vmem:[%s1985] ss:$16 sm:%s1986]
  %vm1988 = vcmask 1047558
  %v1989 = vsel %vm1988, %v1987, %v1984
  %1990 = vrot.lane.b32.xlu0 %v1989, 24
  %v1991 = vpop.permute.xlu0 %1990
  %vm1992 = vcmask 228544
  %s1993 = scalar_lea.vmem %s1, 56
  %1994 = vst.msk [vmem:[%s1993] sm:$0xff] %vm1992, %v1991
  %s1995 = scalar_lea.vmem %s0, 5
  %s1996 = smov 3
  %v1997 = vld [vmem:[%s1995] ss:$16 sm:%s1996]
  %s1998 = scalar_lea.vmem %s0, 5
  %s1999 = smov 12
  %v2000 = vld [vmem:[%s1998] ss:$16 sm:%s1999]
  %vm2001 = vcmask 1043458
  %v2002 = vsel %vm2001, %v2000, %v1997
  %s2003 = scalar_lea.vmem %s0, 5
  %s2004 = smov 48
  %v2005 = vld [vmem:[%s2003] ss:$16 sm:%s2004]
  %vm2006 = vcmask 1045508
  %v2007 = vsel %vm2006, %v2005, %v2002
  %s2008 = scalar_lea.vmem %s0, 5
  %s2009 = smov 192
  %v2010 = vld [vmem:[%s2008] ss:$16 sm:%s2009]
  %vm2011 = vcmask 1047558
  %v2012 = vsel %vm2011, %v2010, %v2007
  %2013 = vrot.lane.b32.xlu0 %v2012, 20
  %v2014 = vpop.permute.xlu0 %2013
  %vm2015 = vcmask 195744
  %2016 = vst.msk [vmem:[%s1] sm:$0xff] %vm2015, %v2014
  %s2017 = scalar_lea.vmem %s0, 517
  %s2018 = smov 3
  %v2019 = vld [vmem:[%s2017] ss:$16 sm:%s2018]
  %s2020 = scalar_lea.vmem %s0, 517
  %s2021 = smov 12
  %v2022 = vld [vmem:[%s2020] ss:$16 sm:%s2021]
  %vm2023 = vcmask 1043458
  %v2024 = vsel %vm2023, %v2022, %v2019
  %s2025 = scalar_lea.vmem %s0, 517
  %s2026 = smov 48
  %v2027 = vld [vmem:[%s2025] ss:$16 sm:%s2026]
  %vm2028 = vcmask 1045508
  %v2029 = vsel %vm2028, %v2027, %v2024
  %s2030 = scalar_lea.vmem %s0, 517
  %s2031 = smov 192
  %v2032 = vld [vmem:[%s2030] ss:$16 sm:%s2031]
  %vm2033 = vcmask 1047558
  %v2034 = vsel %vm2033, %v2032, %v2029
  %2035 = vrot.lane.b32.xlu0 %v2034, 20
  %v2036 = vpop.permute.xlu0 %2035
  %vm2037 = vcmask 195744
  %s2038 = scalar_lea.vmem %s1, 32
  %2039 = vst.msk [vmem:[%s2038] sm:$0xff] %vm2037, %v2036
  %s2040 = scalar_lea.vmem %s0, 133
  %s2041 = smov 3
  %v2042 = vld [vmem:[%s2040] ss:$16 sm:%s2041]
  %s2043 = scalar_lea.vmem %s0, 133
  %s2044 = smov 12
  %v2045 = vld [vmem:[%s2043] ss:$16 sm:%s2044]
  %vm2046 = vcmask 1043458
  %v2047 = vsel %vm2046, %v2045, %v2042
  %s2048 = scalar_lea.vmem %s0, 133
  %s2049 = smov 48
  %v2050 = vld [vmem:[%s2048] ss:$16 sm:%s2049]
  %vm2051 = vcmask 1045508
  %v2052 = vsel %vm2051, %v2050, %v2047
  %s2053 = scalar_lea.vmem %s0, 133
  %s2054 = smov 192
  %v2055 = vld [vmem:[%s2053] ss:$16 sm:%s2054]
  %vm2056 = vcmask 1047558
  %v2057 = vsel %vm2056, %v2055, %v2052
  %2058 = vrot.lane.b32.xlu0 %v2057, 20
  %v2059 = vpop.permute.xlu0 %2058
  %vm2060 = vcmask 195744
  %s2061 = scalar_lea.vmem %s1, 8
  %2062 = vst.msk [vmem:[%s2061] sm:$0xff] %vm2060, %v2059
  %s2063 = scalar_lea.vmem %s0, 645
  %s2064 = smov 3
  %v2065 = vld [vmem:[%s2063] ss:$16 sm:%s2064]
  %s2066 = scalar_lea.vmem %s0, 645
  %s2067 = smov 12
  %v2068 = vld [vmem:[%s2066] ss:$16 sm:%s2067]
  %vm2069 = vcmask 1043458
  %v2070 = vsel %vm2069, %v2068, %v2065
  %s2071 = scalar_lea.vmem %s0, 645
  %s2072 = smov 48
  %v2073 = vld [vmem:[%s2071] ss:$16 sm:%s2072]
  %vm2074 = vcmask 1045508
  %v2075 = vsel %vm2074, %v2073, %v2070
  %s2076 = scalar_lea.vmem %s0, 645
  %s2077 = smov 192
  %v2078 = vld [vmem:[%s2076] ss:$16 sm:%s2077]
  %vm2079 = vcmask 1047558
  %v2080 = vsel %vm2079, %v2078, %v2075
  %2081 = vrot.lane.b32.xlu0 %v2080, 20
  %v2082 = vpop.permute.xlu0 %2081
  %vm2083 = vcmask 195744
  %s2084 = scalar_lea.vmem %s1, 40
  %2085 = vst.msk [vmem:[%s2084] sm:$0xff] %vm2083, %v2082
  %s2086 = scalar_lea.vmem %s0, 261
  %s2087 = smov 3
  %v2088 = vld [vmem:[%s2086] ss:$16 sm:%s2087]
  %s2089 = scalar_lea.vmem %s0, 261
  %s2090 = smov 12
  %v2091 = vld [vmem:[%s2089] ss:$16 sm:%s2090]
  %vm2092 = vcmask 1043458
  %v2093 = vsel %vm2092, %v2091, %v2088
  %s2094 = scalar_lea.vmem %s0, 261
  %s2095 = smov 48
  %v2096 = vld [vmem:[%s2094] ss:$16 sm:%s2095]
  %vm2097 = vcmask 1045508
  %v2098 = vsel %vm2097, %v2096, %v2093
  %s2099 = scalar_lea.vmem %s0, 261
  %s2100 = smov 192
  %v2101 = vld [vmem:[%s2099] ss:$16 sm:%s2100]
  %vm2102 = vcmask 1047558
  %v2103 = vsel %vm2102, %v2101, %v2098
  %2104 = vrot.lane.b32.xlu0 %v2103, 20
  %v2105 = vpop.permute.xlu0 %2104
  %vm2106 = vcmask 195744
  %s2107 = scalar_lea.vmem %s1, 16
  %2108 = vst.msk [vmem:[%s2107] sm:$0xff] %vm2106, %v2105
  %s2109 = scalar_lea.vmem %s0, 773
  %s2110 = smov 3
  %v2111 = vld [vmem:[%s2109] ss:$16 sm:%s2110]
  %s2112 = scalar_lea.vmem %s0, 773
  %s2113 = smov 12
  %v2114 = vld [vmem:[%s2112] ss:$16 sm:%s2113]
  %vm2115 = vcmask 1043458
  %v2116 = vsel %vm2115, %v2114, %v2111
  %s2117 = scalar_lea.vmem %s0, 773
  %s2118 = smov 48
  %v2119 = vld [vmem:[%s2117] ss:$16 sm:%s2118]
  %vm2120 = vcmask 1045508
  %v2121 = vsel %vm2120, %v2119, %v2116
  %s2122 = scalar_lea.vmem %s0, 773
  %s2123 = smov 192
  %v2124 = vld [vmem:[%s2122] ss:$16 sm:%s2123]
  %vm2125 = vcmask 1047558
  %v2126 = vsel %vm2125, %v2124, %v2121
  %2127 = vrot.lane.b32.xlu0 %v2126, 20
  %v2128 = vpop.permute.xlu0 %2127
  %vm2129 = vcmask 195744
  %s2130 = scalar_lea.vmem %s1, 48
  %2131 = vst.msk [vmem:[%s2130] sm:$0xff] %vm2129, %v2128
  %s2132 = scalar_lea.vmem %s0, 389
  %s2133 = smov 3
  %v2134 = vld [vmem:[%s2132] ss:$16 sm:%s2133]
  %s2135 = scalar_lea.vmem %s0, 389
  %s2136 = smov 12
  %v2137 = vld [vmem:[%s2135] ss:$16 sm:%s2136]
  %vm2138 = vcmask 1043458
  %v2139 = vsel %vm2138, %v2137, %v2134
  %s2140 = scalar_lea.vmem %s0, 389
  %s2141 = smov 48
  %v2142 = vld [vmem:[%s2140] ss:$16 sm:%s2141]
  %vm2143 = vcmask 1045508
  %v2144 = vsel %vm2143, %v2142, %v2139
  %s2145 = scalar_lea.vmem %s0, 389
  %s2146 = smov 192
  %v2147 = vld [vmem:[%s2145] ss:$16 sm:%s2146]
  %vm2148 = vcmask 1047558
  %v2149 = vsel %vm2148, %v2147, %v2144
  %2150 = vrot.lane.b32.xlu0 %v2149, 20
  %v2151 = vpop.permute.xlu0 %2150
  %vm2152 = vcmask 195744
  %s2153 = scalar_lea.vmem %s1, 24
  %2154 = vst.msk [vmem:[%s2153] sm:$0xff] %vm2152, %v2151
  %s2155 = scalar_lea.vmem %s0, 901
  %s2156 = smov 3
  %v2157 = vld [vmem:[%s2155] ss:$16 sm:%s2156]
  %s2158 = scalar_lea.vmem %s0, 901
  %s2159 = smov 12
  %v2160 = vld [vmem:[%s2158] ss:$16 sm:%s2159]
  %vm2161 = vcmask 1043458
  %v2162 = vsel %vm2161, %v2160, %v2157
  %s2163 = scalar_lea.vmem %s0, 901
  %s2164 = smov 48
  %v2165 = vld [vmem:[%s2163] ss:$16 sm:%s2164]
  %vm2166 = vcmask 1045508
  %v2167 = vsel %vm2166, %v2165, %v2162
  %s2168 = scalar_lea.vmem %s0, 901
  %s2169 = smov 192
  %v2170 = vld [vmem:[%s2168] ss:$16 sm:%s2169]
  %vm2171 = vcmask 1047558
  %v2172 = vsel %vm2171, %v2170, %v2167
  %2173 = vrot.lane.b32.xlu0 %v2172, 20
  %v2174 = vpop.permute.xlu0 %2173
  %vm2175 = vcmask 195744
  %s2176 = scalar_lea.vmem %s1, 56
  %2177 = vst.msk [vmem:[%s2176] sm:$0xff] %vm2175, %v2174
  %s2178 = scalar_lea.vmem %s0, 4
  %s2179 = smov 3
  %v2180 = vld [vmem:[%s2178] ss:$16 sm:%s2179]
  %s2181 = scalar_lea.vmem %s0, 4
  %s2182 = smov 12
  %v2183 = vld [vmem:[%s2181] ss:$16 sm:%s2182]
  %vm2184 = vcmask 1043458
  %v2185 = vsel %vm2184, %v2183, %v2180
  %s2186 = scalar_lea.vmem %s0, 4
  %s2187 = smov 48
  %v2188 = vld [vmem:[%s2186] ss:$16 sm:%s2187]
  %vm2189 = vcmask 1045508
  %v2190 = vsel %vm2189, %v2188, %v2185
  %s2191 = scalar_lea.vmem %s0, 4
  %s2192 = smov 192
  %v2193 = vld [vmem:[%s2191] ss:$16 sm:%s2192]
  %vm2194 = vcmask 1047558
  %v2195 = vsel %vm2194, %v2193, %v2190
  %2196 = vrot.lane.b32.xlu0 %v2195, 16
  %v2197 = vpop.permute.xlu0 %2196
  %vm2198 = vcmask 162944
  %2199 = vst.msk [vmem:[%s1] sm:$0xff] %vm2198, %v2197
  %s2200 = scalar_lea.vmem %s0, 516
  %s2201 = smov 3
  %v2202 = vld [vmem:[%s2200] ss:$16 sm:%s2201]
  %s2203 = scalar_lea.vmem %s0, 516
  %s2204 = smov 12
  %v2205 = vld [vmem:[%s2203] ss:$16 sm:%s2204]
  %vm2206 = vcmask 1043458
  %v2207 = vsel %vm2206, %v2205, %v2202
  %s2208 = scalar_lea.vmem %s0, 516
  %s2209 = smov 48
  %v2210 = vld [vmem:[%s2208] ss:$16 sm:%s2209]
  %vm2211 = vcmask 1045508
  %v2212 = vsel %vm2211, %v2210, %v2207
  %s2213 = scalar_lea.vmem %s0, 516
  %s2214 = smov 192
  %v2215 = vld [vmem:[%s2213] ss:$16 sm:%s2214]
  %vm2216 = vcmask 1047558
  %v2217 = vsel %vm2216, %v2215, %v2212
  %2218 = vrot.lane.b32.xlu0 %v2217, 16
  %v2219 = vpop.permute.xlu0 %2218
  %vm2220 = vcmask 162944
  %s2221 = scalar_lea.vmem %s1, 32
  %2222 = vst.msk [vmem:[%s2221] sm:$0xff] %vm2220, %v2219
  %s2223 = scalar_lea.vmem %s0, 132
  %s2224 = smov 3
  %v2225 = vld [vmem:[%s2223] ss:$16 sm:%s2224]
  %s2226 = scalar_lea.vmem %s0, 132
  %s2227 = smov 12
  %v2228 = vld [vmem:[%s2226] ss:$16 sm:%s2227]
  %vm2229 = vcmask 1043458
  %v2230 = vsel %vm2229, %v2228, %v2225
  %s2231 = scalar_lea.vmem %s0, 132
  %s2232 = smov 48
  %v2233 = vld [vmem:[%s2231] ss:$16 sm:%s2232]
  %vm2234 = vcmask 1045508
  %v2235 = vsel %vm2234, %v2233, %v2230
  %s2236 = scalar_lea.vmem %s0, 132
  %s2237 = smov 192
  %v2238 = vld [vmem:[%s2236] ss:$16 sm:%s2237]
  %vm2239 = vcmask 1047558
  %v2240 = vsel %vm2239, %v2238, %v2235
  %2241 = vrot.lane.b32.xlu0 %v2240, 16
  %v2242 = vpop.permute.xlu0 %2241
  %vm2243 = vcmask 162944
  %s2244 = scalar_lea.vmem %s1, 8
  %2245 = vst.msk [vmem:[%s2244] sm:$0xff] %vm2243, %v2242
  %s2246 = scalar_lea.vmem %s0, 644
  %s2247 = smov 3
  %v2248 = vld [vmem:[%s2246] ss:$16 sm:%s2247]
  %s2249 = scalar_lea.vmem %s0, 644
  %s2250 = smov 12
  %v2251 = vld [vmem:[%s2249] ss:$16 sm:%s2250]
  %vm2252 = vcmask 1043458
  %v2253 = vsel %vm2252, %v2251, %v2248
  %s2254 = scalar_lea.vmem %s0, 644
  %s2255 = smov 48
  %v2256 = vld [vmem:[%s2254] ss:$16 sm:%s2255]
  %vm2257 = vcmask 1045508
  %v2258 = vsel %vm2257, %v2256, %v2253
  %s2259 = scalar_lea.vmem %s0, 644
  %s2260 = smov 192
  %v2261 = vld [vmem:[%s2259] ss:$16 sm:%s2260]
  %vm2262 = vcmask 1047558
  %v2263 = vsel %vm2262, %v2261, %v2258
  %2264 = vrot.lane.b32.xlu0 %v2263, 16
  %v2265 = vpop.permute.xlu0 %2264
  %vm2266 = vcmask 162944
  %s2267 = scalar_lea.vmem %s1, 40
  %2268 = vst.msk [vmem:[%s2267] sm:$0xff] %vm2266, %v2265
  %s2269 = scalar_lea.vmem %s0, 260
  %s2270 = smov 3
  %v2271 = vld [vmem:[%s2269] ss:$16 sm:%s2270]
  %s2272 = scalar_lea.vmem %s0, 260
  %s2273 = smov 12
  %v2274 = vld [vmem:[%s2272] ss:$16 sm:%s2273]
  %vm2275 = vcmask 1043458
  %v2276 = vsel %vm2275, %v2274, %v2271
  %s2277 = scalar_lea.vmem %s0, 260
  %s2278 = smov 48
  %v2279 = vld [vmem:[%s2277] ss:$16 sm:%s2278]
  %vm2280 = vcmask 1045508
  %v2281 = vsel %vm2280, %v2279, %v2276
  %s2282 = scalar_lea.vmem %s0, 260
  %s2283 = smov 192
  %v2284 = vld [vmem:[%s2282] ss:$16 sm:%s2283]
  %vm2285 = vcmask 1047558
  %v2286 = vsel %vm2285, %v2284, %v2281
  %2287 = vrot.lane.b32.xlu0 %v2286, 16
  %v2288 = vpop.permute.xlu0 %2287
  %vm2289 = vcmask 162944
  %s2290 = scalar_lea.vmem %s1, 16
  %2291 = vst.msk [vmem:[%s2290] sm:$0xff] %vm2289, %v2288
  %s2292 = scalar_lea.vmem %s0, 772
  %s2293 = smov 3
  %v2294 = vld [vmem:[%s2292] ss:$16 sm:%s2293]
  %s2295 = scalar_lea.vmem %s0, 772
  %s2296 = smov 12
  %v2297 = vld [vmem:[%s2295] ss:$16 sm:%s2296]
  %vm2298 = vcmask 1043458
  %v2299 = vsel %vm2298, %v2297, %v2294
  %s2300 = scalar_lea.vmem %s0, 772
  %s2301 = smov 48
  %v2302 = vld [vmem:[%s2300] ss:$16 sm:%s2301]
  %vm2303 = vcmask 1045508
  %v2304 = vsel %vm2303, %v2302, %v2299
  %s2305 = scalar_lea.vmem %s0, 772
  %s2306 = smov 192
  %v2307 = vld [vmem:[%s2305] ss:$16 sm:%s2306]
  %vm2308 = vcmask 1047558
  %v2309 = vsel %vm2308, %v2307, %v2304
  %2310 = vrot.lane.b32.xlu0 %v2309, 16
  %v2311 = vpop.permute.xlu0 %2310
  %vm2312 = vcmask 162944
  %s2313 = scalar_lea.vmem %s1, 48
  %2314 = vst.msk [vmem:[%s2313] sm:$0xff] %vm2312, %v2311
  %s2315 = scalar_lea.vmem %s0, 388
  %s2316 = smov 3
  %v2317 = vld [vmem:[%s2315] ss:$16 sm:%s2316]
  %s2318 = scalar_lea.vmem %s0, 388
  %s2319 = smov 12
  %v2320 = vld [vmem:[%s2318] ss:$16 sm:%s2319]
  %vm2321 = vcmask 1043458
  %v2322 = vsel %vm2321, %v2320, %v2317
  %s2323 = scalar_lea.vmem %s0, 388
  %s2324 = smov 48
  %v2325 = vld [vmem:[%s2323] ss:$16 sm:%s2324]
  %vm2326 = vcmask 1045508
  %v2327 = vsel %vm2326, %v2325, %v2322
  %s2328 = scalar_lea.vmem %s0, 388
  %s2329 = smov 192
  %v2330 = vld [vmem:[%s2328] ss:$16 sm:%s2329]
  %vm2331 = vcmask 1047558
  %v2332 = vsel %vm2331, %v2330, %v2327
  %2333 = vrot.lane.b32.xlu0 %v2332, 16
  %v2334 = vpop.permute.xlu0 %2333
  %vm2335 = vcmask 162944
  %s2336 = scalar_lea.vmem %s1, 24
  %2337 = vst.msk [vmem:[%s2336] sm:$0xff] %vm2335, %v2334
  %s2338 = scalar_lea.vmem %s0, 900
  %s2339 = smov 3
  %v2340 = vld [vmem:[%s2338] ss:$16 sm:%s2339]
  %s2341 = scalar_lea.vmem %s0, 900
  %s2342 = smov 12
  %v2343 = vld [vmem:[%s2341] ss:$16 sm:%s2342]
  %vm2344 = vcmask 1043458
  %v2345 = vsel %vm2344, %v2343, %v2340
  %s2346 = scalar_lea.vmem %s0, 900
  %s2347 = smov 48
  %v2348 = vld [vmem:[%s2346] ss:$16 sm:%s2347]
  %vm2349 = vcmask 1045508
  %v2350 = vsel %vm2349, %v2348, %v2345
  %s2351 = scalar_lea.vmem %s0, 900
  %s2352 = smov 192
  %v2353 = vld [vmem:[%s2351] ss:$16 sm:%s2352]
  %vm2354 = vcmask 1047558
  %v2355 = vsel %vm2354, %v2353, %v2350
  %2356 = vrot.lane.b32.xlu0 %v2355, 16
  %v2357 = vpop.permute.xlu0 %2356
  %vm2358 = vcmask 162944
  %s2359 = scalar_lea.vmem %s1, 56
  %2360 = vst.msk [vmem:[%s2359] sm:$0xff] %vm2358, %v2357
  %s2361 = scalar_lea.vmem %s0, 3
  %s2362 = smov 3
  %v2363 = vld [vmem:[%s2361] ss:$16 sm:%s2362]
  %s2364 = scalar_lea.vmem %s0, 3
  %s2365 = smov 12
  %v2366 = vld [vmem:[%s2364] ss:$16 sm:%s2365]
  %vm2367 = vcmask 1043458
  %v2368 = vsel %vm2367, %v2366, %v2363
  %s2369 = scalar_lea.vmem %s0, 3
  %s2370 = smov 48
  %v2371 = vld [vmem:[%s2369] ss:$16 sm:%s2370]
  %vm2372 = vcmask 1045508
  %v2373 = vsel %vm2372, %v2371, %v2368
  %s2374 = scalar_lea.vmem %s0, 3
  %s2375 = smov 192
  %v2376 = vld [vmem:[%s2374] ss:$16 sm:%s2375]
  %vm2377 = vcmask 1047558
  %v2378 = vsel %vm2377, %v2376, %v2373
  %2379 = vrot.lane.b32.xlu0 %v2378, 12
  %v2380 = vpop.permute.xlu0 %2379
  %vm2381 = vcmask 130144
  %2382 = vst.msk [vmem:[%s1] sm:$0xff] %vm2381, %v2380
  %s2383 = scalar_lea.vmem %s0, 515
  %s2384 = smov 3
  %v2385 = vld [vmem:[%s2383] ss:$16 sm:%s2384]
  %s2386 = scalar_lea.vmem %s0, 515
  %s2387 = smov 12
  %v2388 = vld [vmem:[%s2386] ss:$16 sm:%s2387]
  %vm2389 = vcmask 1043458
  %v2390 = vsel %vm2389, %v2388, %v2385
  %s2391 = scalar_lea.vmem %s0, 515
  %s2392 = smov 48
  %v2393 = vld [vmem:[%s2391] ss:$16 sm:%s2392]
  %vm2394 = vcmask 1045508
  %v2395 = vsel %vm2394, %v2393, %v2390
  %s2396 = scalar_lea.vmem %s0, 515
  %s2397 = smov 192
  %v2398 = vld [vmem:[%s2396] ss:$16 sm:%s2397]
  %vm2399 = vcmask 1047558
  %v2400 = vsel %vm2399, %v2398, %v2395
  %2401 = vrot.lane.b32.xlu0 %v2400, 12
  %v2402 = vpop.permute.xlu0 %2401
  %vm2403 = vcmask 130144
  %s2404 = scalar_lea.vmem %s1, 32
  %2405 = vst.msk [vmem:[%s2404] sm:$0xff] %vm2403, %v2402
  %s2406 = scalar_lea.vmem %s0, 131
  %s2407 = smov 3
  %v2408 = vld [vmem:[%s2406] ss:$16 sm:%s2407]
  %s2409 = scalar_lea.vmem %s0, 131
  %s2410 = smov 12
  %v2411 = vld [vmem:[%s2409] ss:$16 sm:%s2410]
  %vm2412 = vcmask 1043458
  %v2413 = vsel %vm2412, %v2411, %v2408
  %s2414 = scalar_lea.vmem %s0, 131
  %s2415 = smov 48
  %v2416 = vld [vmem:[%s2414] ss:$16 sm:%s2415]
  %vm2417 = vcmask 1045508
  %v2418 = vsel %vm2417, %v2416, %v2413
  %s2419 = scalar_lea.vmem %s0, 131
  %s2420 = smov 192
  %v2421 = vld [vmem:[%s2419] ss:$16 sm:%s2420]
  %vm2422 = vcmask 1047558
  %v2423 = vsel %vm2422, %v2421, %v2418
  %2424 = vrot.lane.b32.xlu0 %v2423, 12
  %v2425 = vpop.permute.xlu0 %2424
  %vm2426 = vcmask 130144
  %s2427 = scalar_lea.vmem %s1, 8
  %2428 = vst.msk [vmem:[%s2427] sm:$0xff] %vm2426, %v2425
  %s2429 = scalar_lea.vmem %s0, 643
  %s2430 = smov 3
  %v2431 = vld [vmem:[%s2429] ss:$16 sm:%s2430]
  %s2432 = scalar_lea.vmem %s0, 643
  %s2433 = smov 12
  %v2434 = vld [vmem:[%s2432] ss:$16 sm:%s2433]
  %vm2435 = vcmask 1043458
  %v2436 = vsel %vm2435, %v2434, %v2431
  %s2437 = scalar_lea.vmem %s0, 643
  %s2438 = smov 48
  %v2439 = vld [vmem:[%s2437] ss:$16 sm:%s2438]
  %vm2440 = vcmask 1045508
  %v2441 = vsel %vm2440, %v2439, %v2436
  %s2442 = scalar_lea.vmem %s0, 643
  %s2443 = smov 192
  %v2444 = vld [vmem:[%s2442] ss:$16 sm:%s2443]
  %vm2445 = vcmask 1047558
  %v2446 = vsel %vm2445, %v2444, %v2441
  %2447 = vrot.lane.b32.xlu0 %v2446, 12
  %v2448 = vpop.permute.xlu0 %2447
  %vm2449 = vcmask 130144
  %s2450 = scalar_lea.vmem %s1, 40
  %2451 = vst.msk [vmem:[%s2450] sm:$0xff] %vm2449, %v2448
  %s2452 = scalar_lea.vmem %s0, 259
  %s2453 = smov 3
  %v2454 = vld [vmem:[%s2452] ss:$16 sm:%s2453]
  %s2455 = scalar_lea.vmem %s0, 259
  %s2456 = smov 12
  %v2457 = vld [vmem:[%s2455] ss:$16 sm:%s2456]
  %vm2458 = vcmask 1043458
  %v2459 = vsel %vm2458, %v2457, %v2454
  %s2460 = scalar_lea.vmem %s0, 259
  %s2461 = smov 48
  %v2462 = vld [vmem:[%s2460] ss:$16 sm:%s2461]
  %vm2463 = vcmask 1045508
  %v2464 = vsel %vm2463, %v2462, %v2459
  %s2465 = scalar_lea.vmem %s0, 259
  %s2466 = smov 192
  %v2467 = vld [vmem:[%s2465] ss:$16 sm:%s2466]
  %vm2468 = vcmask 1047558
  %v2469 = vsel %vm2468, %v2467, %v2464
  %2470 = vrot.lane.b32.xlu0 %v2469, 12
  %v2471 = vpop.permute.xlu0 %2470
  %vm2472 = vcmask 130144
  %s2473 = scalar_lea.vmem %s1, 16
  %2474 = vst.msk [vmem:[%s2473] sm:$0xff] %vm2472, %v2471
  %s2475 = scalar_lea.vmem %s0, 771
  %s2476 = smov 3
  %v2477 = vld [vmem:[%s2475] ss:$16 sm:%s2476]
  %s2478 = scalar_lea.vmem %s0, 771
  %s2479 = smov 12
  %v2480 = vld [vmem:[%s2478] ss:$16 sm:%s2479]
  %vm2481 = vcmask 1043458
  %v2482 = vsel %vm2481, %v2480, %v2477
  %s2483 = scalar_lea.vmem %s0, 771
  %s2484 = smov 48
  %v2485 = vld [vmem:[%s2483] ss:$16 sm:%s2484]
  %vm2486 = vcmask 1045508
  %v2487 = vsel %vm2486, %v2485, %v2482
  %s2488 = scalar_lea.vmem %s0, 771
  %s2489 = smov 192
  %v2490 = vld [vmem:[%s2488] ss:$16 sm:%s2489]
  %vm2491 = vcmask 1047558
  %v2492 = vsel %vm2491, %v2490, %v2487
  %2493 = vrot.lane.b32.xlu0 %v2492, 12
  %v2494 = vpop.permute.xlu0 %2493
  %vm2495 = vcmask 130144
  %s2496 = scalar_lea.vmem %s1, 48
  %2497 = vst.msk [vmem:[%s2496] sm:$0xff] %vm2495, %v2494
  %s2498 = scalar_lea.vmem %s0, 387
  %s2499 = smov 3
  %v2500 = vld [vmem:[%s2498] ss:$16 sm:%s2499]
  %s2501 = scalar_lea.vmem %s0, 387
  %s2502 = smov 12
  %v2503 = vld [vmem:[%s2501] ss:$16 sm:%s2502]
  %vm2504 = vcmask 1043458
  %v2505 = vsel %vm2504, %v2503, %v2500
  %s2506 = scalar_lea.vmem %s0, 387
  %s2507 = smov 48
  %v2508 = vld [vmem:[%s2506] ss:$16 sm:%s2507]
  %vm2509 = vcmask 1045508
  %v2510 = vsel %vm2509, %v2508, %v2505
  %s2511 = scalar_lea.vmem %s0, 387
  %s2512 = smov 192
  %v2513 = vld [vmem:[%s2511] ss:$16 sm:%s2512]
  %vm2514 = vcmask 1047558
  %v2515 = vsel %vm2514, %v2513, %v2510
  %2516 = vrot.lane.b32.xlu0 %v2515, 12
  %v2517 = vpop.permute.xlu0 %2516
  %vm2518 = vcmask 130144
  %s2519 = scalar_lea.vmem %s1, 24
  %2520 = vst.msk [vmem:[%s2519] sm:$0xff] %vm2518, %v2517
  %s2521 = scalar_lea.vmem %s0, 899
  %s2522 = smov 3
  %v2523 = vld [vmem:[%s2521] ss:$16 sm:%s2522]
  %s2524 = scalar_lea.vmem %s0, 899
  %s2525 = smov 12
  %v2526 = vld [vmem:[%s2524] ss:$16 sm:%s2525]
  %vm2527 = vcmask 1043458
  %v2528 = vsel %vm2527, %v2526, %v2523
  %s2529 = scalar_lea.vmem %s0, 899
  %s2530 = smov 48
  %v2531 = vld [vmem:[%s2529] ss:$16 sm:%s2530]
  %vm2532 = vcmask 1045508
  %v2533 = vsel %vm2532, %v2531, %v2528
  %s2534 = scalar_lea.vmem %s0, 899
  %s2535 = smov 192
  %v2536 = vld [vmem:[%s2534] ss:$16 sm:%s2535]
  %vm2537 = vcmask 1047558
  %v2538 = vsel %vm2537, %v2536, %v2533
  %2539 = vrot.lane.b32.xlu0 %v2538, 12
  %v2540 = vpop.permute.xlu0 %2539
  %vm2541 = vcmask 130144
  %s2542 = scalar_lea.vmem %s1, 56
  %2543 = vst.msk [vmem:[%s2542] sm:$0xff] %vm2541, %v2540
  %s2544 = scalar_lea.vmem %s0, 2
  %s2545 = smov 3
  %v2546 = vld [vmem:[%s2544] ss:$16 sm:%s2545]
  %s2547 = scalar_lea.vmem %s0, 2
  %s2548 = smov 12
  %v2549 = vld [vmem:[%s2547] ss:$16 sm:%s2548]
  %vm2550 = vcmask 1043458
  %v2551 = vsel %vm2550, %v2549, %v2546
  %s2552 = scalar_lea.vmem %s0, 2
  %s2553 = smov 48
  %v2554 = vld [vmem:[%s2552] ss:$16 sm:%s2553]
  %vm2555 = vcmask 1045508
  %v2556 = vsel %vm2555, %v2554, %v2551
  %s2557 = scalar_lea.vmem %s0, 2
  %s2558 = smov 192
  %v2559 = vld [vmem:[%s2557] ss:$16 sm:%s2558]
  %vm2560 = vcmask 1047558
  %v2561 = vsel %vm2560, %v2559, %v2556
  %2562 = vrot.lane.b32.xlu0 %v2561, 8
  %v2563 = vpop.permute.xlu0 %2562
  %vm2564 = vcmask 97344
  %2565 = vst.msk [vmem:[%s1] sm:$0xff] %vm2564, %v2563
  %s2566 = scalar_lea.vmem %s0, 514
  %s2567 = smov 3
  %v2568 = vld [vmem:[%s2566] ss:$16 sm:%s2567]
  %s2569 = scalar_lea.vmem %s0, 514
  %s2570 = smov 12
  %v2571 = vld [vmem:[%s2569] ss:$16 sm:%s2570]
  %vm2572 = vcmask 1043458
  %v2573 = vsel %vm2572, %v2571, %v2568
  %s2574 = scalar_lea.vmem %s0, 514
  %s2575 = smov 48
  %v2576 = vld [vmem:[%s2574] ss:$16 sm:%s2575]
  %vm2577 = vcmask 1045508
  %v2578 = vsel %vm2577, %v2576, %v2573
  %s2579 = scalar_lea.vmem %s0, 514
  %s2580 = smov 192
  %v2581 = vld [vmem:[%s2579] ss:$16 sm:%s2580]
  %vm2582 = vcmask 1047558
  %v2583 = vsel %vm2582, %v2581, %v2578
  %2584 = vrot.lane.b32.xlu0 %v2583, 8
  %v2585 = vpop.permute.xlu0 %2584
  %vm2586 = vcmask 97344
  %s2587 = scalar_lea.vmem %s1, 32
  %2588 = vst.msk [vmem:[%s2587] sm:$0xff] %vm2586, %v2585
  %s2589 = scalar_lea.vmem %s0, 130
  %s2590 = smov 3
  %v2591 = vld [vmem:[%s2589] ss:$16 sm:%s2590]
  %s2592 = scalar_lea.vmem %s0, 130
  %s2593 = smov 12
  %v2594 = vld [vmem:[%s2592] ss:$16 sm:%s2593]
  %vm2595 = vcmask 1043458
  %v2596 = vsel %vm2595, %v2594, %v2591
  %s2597 = scalar_lea.vmem %s0, 130
  %s2598 = smov 48
  %v2599 = vld [vmem:[%s2597] ss:$16 sm:%s2598]
  %vm2600 = vcmask 1045508
  %v2601 = vsel %vm2600, %v2599, %v2596
  %s2602 = scalar_lea.vmem %s0, 130
  %s2603 = smov 192
  %v2604 = vld [vmem:[%s2602] ss:$16 sm:%s2603]
  %vm2605 = vcmask 1047558
  %v2606 = vsel %vm2605, %v2604, %v2601
  %2607 = vrot.lane.b32.xlu0 %v2606, 8
  %v2608 = vpop.permute.xlu0 %2607
  %vm2609 = vcmask 97344
  %s2610 = scalar_lea.vmem %s1, 8
  %2611 = vst.msk [vmem:[%s2610] sm:$0xff] %vm2609, %v2608
  %s2612 = scalar_lea.vmem %s0, 642
  %s2613 = smov 3
  %v2614 = vld [vmem:[%s2612] ss:$16 sm:%s2613]
  %s2615 = scalar_lea.vmem %s0, 642
  %s2616 = smov 12
  %v2617 = vld [vmem:[%s2615] ss:$16 sm:%s2616]
  %vm2618 = vcmask 1043458
  %v2619 = vsel %vm2618, %v2617, %v2614
  %s2620 = scalar_lea.vmem %s0, 642
  %s2621 = smov 48
  %v2622 = vld [vmem:[%s2620] ss:$16 sm:%s2621]
  %vm2623 = vcmask 1045508
  %v2624 = vsel %vm2623, %v2622, %v2619
  %s2625 = scalar_lea.vmem %s0, 642
  %s2626 = smov 192
  %v2627 = vld [vmem:[%s2625] ss:$16 sm:%s2626]
  %vm2628 = vcmask 1047558
  %v2629 = vsel %vm2628, %v2627, %v2624
  %2630 = vrot.lane.b32.xlu0 %v2629, 8
  %v2631 = vpop.permute.xlu0 %2630
  %vm2632 = vcmask 97344
  %s2633 = scalar_lea.vmem %s1, 40
  %2634 = vst.msk [vmem:[%s2633] sm:$0xff] %vm2632, %v2631
  %s2635 = scalar_lea.vmem %s0, 258
  %s2636 = smov 3
  %v2637 = vld [vmem:[%s2635] ss:$16 sm:%s2636]
  %s2638 = scalar_lea.vmem %s0, 258
  %s2639 = smov 12
  %v2640 = vld [vmem:[%s2638] ss:$16 sm:%s2639]
  %vm2641 = vcmask 1043458
  %v2642 = vsel %vm2641, %v2640, %v2637
  %s2643 = scalar_lea.vmem %s0, 258
  %s2644 = smov 48
  %v2645 = vld [vmem:[%s2643] ss:$16 sm:%s2644]
  %vm2646 = vcmask 1045508
  %v2647 = vsel %vm2646, %v2645, %v2642
  %s2648 = scalar_lea.vmem %s0, 258
  %s2649 = smov 192
  %v2650 = vld [vmem:[%s2648] ss:$16 sm:%s2649]
  %vm2651 = vcmask 1047558
  %v2652 = vsel %vm2651, %v2650, %v2647
  %2653 = vrot.lane.b32.xlu0 %v2652, 8
  %v2654 = vpop.permute.xlu0 %2653
  %vm2655 = vcmask 97344
  %s2656 = scalar_lea.vmem %s1, 16
  %2657 = vst.msk [vmem:[%s2656] sm:$0xff] %vm2655, %v2654
  %s2658 = scalar_lea.vmem %s0, 770
  %s2659 = smov 3
  %v2660 = vld [vmem:[%s2658] ss:$16 sm:%s2659]
  %s2661 = scalar_lea.vmem %s0, 770
  %s2662 = smov 12
  %v2663 = vld [vmem:[%s2661] ss:$16 sm:%s2662]
  %vm2664 = vcmask 1043458
  %v2665 = vsel %vm2664, %v2663, %v2660
  %s2666 = scalar_lea.vmem %s0, 770
  %s2667 = smov 48
  %v2668 = vld [vmem:[%s2666] ss:$16 sm:%s2667]
  %vm2669 = vcmask 1045508
  %v2670 = vsel %vm2669, %v2668, %v2665
  %s2671 = scalar_lea.vmem %s0, 770
  %s2672 = smov 192
  %v2673 = vld [vmem:[%s2671] ss:$16 sm:%s2672]
  %vm2674 = vcmask 1047558
  %v2675 = vsel %vm2674, %v2673, %v2670
  %2676 = vrot.lane.b32.xlu0 %v2675, 8
  %v2677 = vpop.permute.xlu0 %2676
  %vm2678 = vcmask 97344
  %s2679 = scalar_lea.vmem %s1, 48
  %2680 = vst.msk [vmem:[%s2679] sm:$0xff] %vm2678, %v2677
  %s2681 = scalar_lea.vmem %s0, 386
  %s2682 = smov 3
  %v2683 = vld [vmem:[%s2681] ss:$16 sm:%s2682]
  %s2684 = scalar_lea.vmem %s0, 386
  %s2685 = smov 12
  %v2686 = vld [vmem:[%s2684] ss:$16 sm:%s2685]
  %vm2687 = vcmask 1043458
  %v2688 = vsel %vm2687, %v2686, %v2683
  %s2689 = scalar_lea.vmem %s0, 386
  %s2690 = smov 48
  %v2691 = vld [vmem:[%s2689] ss:$16 sm:%s2690]
  %vm2692 = vcmask 1045508
  %v2693 = vsel %vm2692, %v2691, %v2688
  %s2694 = scalar_lea.vmem %s0, 386
  %s2695 = smov 192
  %v2696 = vld [vmem:[%s2694] ss:$16 sm:%s2695]
  %vm2697 = vcmask 1047558
  %v2698 = vsel %vm2697, %v2696, %v2693
  %2699 = vrot.lane.b32.xlu0 %v2698, 8
  %v2700 = vpop.permute.xlu0 %2699
  %vm2701 = vcmask 97344
  %s2702 = scalar_lea.vmem %s1, 24
  %2703 = vst.msk [vmem:[%s2702] sm:$0xff] %vm2701, %v2700
  %s2704 = scalar_lea.vmem %s0, 898
  %s2705 = smov 3
  %v2706 = vld [vmem:[%s2704] ss:$16 sm:%s2705]
  %s2707 = scalar_lea.vmem %s0, 898
  %s2708 = smov 12
  %v2709 = vld [vmem:[%s2707] ss:$16 sm:%s2708]
  %vm2710 = vcmask 1043458
  %v2711 = vsel %vm2710, %v2709, %v2706
  %s2712 = scalar_lea.vmem %s0, 898
  %s2713 = smov 48
  %v2714 = vld [vmem:[%s2712] ss:$16 sm:%s2713]
  %vm2715 = vcmask 1045508
  %v2716 = vsel %vm2715, %v2714, %v2711
  %s2717 = scalar_lea.vmem %s0, 898
  %s2718 = smov 192
  %v2719 = vld [vmem:[%s2717] ss:$16 sm:%s2718]
  %vm2720 = vcmask 1047558
  %v2721 = vsel %vm2720, %v2719, %v2716
  %2722 = vrot.lane.b32.xlu0 %v2721, 8
  %v2723 = vpop.permute.xlu0 %2722
  %vm2724 = vcmask 97344
  %s2725 = scalar_lea.vmem %s1, 56
  %2726 = vst.msk [vmem:[%s2725] sm:$0xff] %vm2724, %v2723
  %s2727 = scalar_lea.vmem %s0, 1
  %s2728 = smov 3
  %v2729 = vld [vmem:[%s2727] ss:$16 sm:%s2728]
  %s2730 = scalar_lea.vmem %s0, 1
  %s2731 = smov 12
  %v2732 = vld [vmem:[%s2730] ss:$16 sm:%s2731]
  %vm2733 = vcmask 1043458
  %v2734 = vsel %vm2733, %v2732, %v2729
  %s2735 = scalar_lea.vmem %s0, 1
  %s2736 = smov 48
  %v2737 = vld [vmem:[%s2735] ss:$16 sm:%s2736]
  %vm2738 = vcmask 1045508
  %v2739 = vsel %vm2738, %v2737, %v2734
  %s2740 = scalar_lea.vmem %s0, 1
  %s2741 = smov 192
  %v2742 = vld [vmem:[%s2740] ss:$16 sm:%s2741]
  %vm2743 = vcmask 1047558
  %v2744 = vsel %vm2743, %v2742, %v2739
  %2745 = vrot.lane.b32.xlu0 %v2744, 4
  %v2746 = vpop.permute.xlu0 %2745
  %vm2747 = vcmask 64544
  %2748 = vst.msk [vmem:[%s1] sm:$0xff] %vm2747, %v2746
  %s2749 = scalar_lea.vmem %s0, 513
  %s2750 = smov 3
  %v2751 = vld [vmem:[%s2749] ss:$16 sm:%s2750]
  %s2752 = scalar_lea.vmem %s0, 513
  %s2753 = smov 12
  %v2754 = vld [vmem:[%s2752] ss:$16 sm:%s2753]
  %vm2755 = vcmask 1043458
  %v2756 = vsel %vm2755, %v2754, %v2751
  %s2757 = scalar_lea.vmem %s0, 513
  %s2758 = smov 48
  %v2759 = vld [vmem:[%s2757] ss:$16 sm:%s2758]
  %vm2760 = vcmask 1045508
  %v2761 = vsel %vm2760, %v2759, %v2756
  %s2762 = scalar_lea.vmem %s0, 513
  %s2763 = smov 192
  %v2764 = vld [vmem:[%s2762] ss:$16 sm:%s2763]
  %vm2765 = vcmask 1047558
  %v2766 = vsel %vm2765, %v2764, %v2761
  %2767 = vrot.lane.b32.xlu0 %v2766, 4
  %v2768 = vpop.permute.xlu0 %2767
  %vm2769 = vcmask 64544
  %s2770 = scalar_lea.vmem %s1, 32
  %2771 = vst.msk [vmem:[%s2770] sm:$0xff] %vm2769, %v2768
  %s2772 = scalar_lea.vmem %s0, 129
  %s2773 = smov 3
  %v2774 = vld [vmem:[%s2772] ss:$16 sm:%s2773]
  %s2775 = scalar_lea.vmem %s0, 129
  %s2776 = smov 12
  %v2777 = vld [vmem:[%s2775] ss:$16 sm:%s2776]
  %vm2778 = vcmask 1043458
  %v2779 = vsel %vm2778, %v2777, %v2774
  %s2780 = scalar_lea.vmem %s0, 129
  %s2781 = smov 48
  %v2782 = vld [vmem:[%s2780] ss:$16 sm:%s2781]
  %vm2783 = vcmask 1045508
  %v2784 = vsel %vm2783, %v2782, %v2779
  %s2785 = scalar_lea.vmem %s0, 129
  %s2786 = smov 192
  %v2787 = vld [vmem:[%s2785] ss:$16 sm:%s2786]
  %vm2788 = vcmask 1047558
  %v2789 = vsel %vm2788, %v2787, %v2784
  %2790 = vrot.lane.b32.xlu0 %v2789, 4
  %v2791 = vpop.permute.xlu0 %2790
  %vm2792 = vcmask 64544
  %s2793 = scalar_lea.vmem %s1, 8
  %2794 = vst.msk [vmem:[%s2793] sm:$0xff] %vm2792, %v2791
  %s2795 = scalar_lea.vmem %s0, 641
  %s2796 = smov 3
  %v2797 = vld [vmem:[%s2795] ss:$16 sm:%s2796]
  %s2798 = scalar_lea.vmem %s0, 641
  %s2799 = smov 12
  %v2800 = vld [vmem:[%s2798] ss:$16 sm:%s2799]
  %vm2801 = vcmask 1043458
  %v2802 = vsel %vm2801, %v2800, %v2797
  %s2803 = scalar_lea.vmem %s0, 641
  %s2804 = smov 48
  %v2805 = vld [vmem:[%s2803] ss:$16 sm:%s2804]
  %vm2806 = vcmask 1045508
  %v2807 = vsel %vm2806, %v2805, %v2802
  %s2808 = scalar_lea.vmem %s0, 641
  %s2809 = smov 192
  %v2810 = vld [vmem:[%s2808] ss:$16 sm:%s2809]
  %vm2811 = vcmask 1047558
  %v2812 = vsel %vm2811, %v2810, %v2807
  %2813 = vrot.lane.b32.xlu0 %v2812, 4
  %v2814 = vpop.permute.xlu0 %2813
  %vm2815 = vcmask 64544
  %s2816 = scalar_lea.vmem %s1, 40
  %2817 = vst.msk [vmem:[%s2816] sm:$0xff] %vm2815, %v2814
  %s2818 = scalar_lea.vmem %s0, 257
  %s2819 = smov 3
  %v2820 = vld [vmem:[%s2818] ss:$16 sm:%s2819]
  %s2821 = scalar_lea.vmem %s0, 257
  %s2822 = smov 12
  %v2823 = vld [vmem:[%s2821] ss:$16 sm:%s2822]
  %vm2824 = vcmask 1043458
  %v2825 = vsel %vm2824, %v2823, %v2820
  %s2826 = scalar_lea.vmem %s0, 257
  %s2827 = smov 48
  %v2828 = vld [vmem:[%s2826] ss:$16 sm:%s2827]
  %vm2829 = vcmask 1045508
  %v2830 = vsel %vm2829, %v2828, %v2825
  %s2831 = scalar_lea.vmem %s0, 257
  %s2832 = smov 192
  %v2833 = vld [vmem:[%s2831] ss:$16 sm:%s2832]
  %vm2834 = vcmask 1047558
  %v2835 = vsel %vm2834, %v2833, %v2830
  %2836 = vrot.lane.b32.xlu0 %v2835, 4
  %v2837 = vpop.permute.xlu0 %2836
  %vm2838 = vcmask 64544
  %s2839 = scalar_lea.vmem %s1, 16
  %2840 = vst.msk [vmem:[%s2839] sm:$0xff] %vm2838, %v2837
  %s2841 = scalar_lea.vmem %s0, 769
  %s2842 = smov 3
  %v2843 = vld [vmem:[%s2841] ss:$16 sm:%s2842]
  %s2844 = scalar_lea.vmem %s0, 769
  %s2845 = smov 12
  %v2846 = vld [vmem:[%s2844] ss:$16 sm:%s2845]
  %vm2847 = vcmask 1043458
  %v2848 = vsel %vm2847, %v2846, %v2843
  %s2849 = scalar_lea.vmem %s0, 769
  %s2850 = smov 48
  %v2851 = vld [vmem:[%s2849] ss:$16 sm:%s2850]
  %vm2852 = vcmask 1045508
  %v2853 = vsel %vm2852, %v2851, %v2848
  %s2854 = scalar_lea.vmem %s0, 769
  %s2855 = smov 192
  %v2856 = vld [vmem:[%s2854] ss:$16 sm:%s2855]
  %vm2857 = vcmask 1047558
  %v2858 = vsel %vm2857, %v2856, %v2853
  %2859 = vrot.lane.b32.xlu0 %v2858, 4
  %v2860 = vpop.permute.xlu0 %2859
  %vm2861 = vcmask 64544
  %s2862 = scalar_lea.vmem %s1, 48
  %2863 = vst.msk [vmem:[%s2862] sm:$0xff] %vm2861, %v2860
  %s2864 = scalar_lea.vmem %s0, 385
  %s2865 = smov 3
  %v2866 = vld [vmem:[%s2864] ss:$16 sm:%s2865]
  %s2867 = scalar_lea.vmem %s0, 385
  %s2868 = smov 12
  %v2869 = vld [vmem:[%s2867] ss:$16 sm:%s2868]
  %vm2870 = vcmask 1043458
  %v2871 = vsel %vm2870, %v2869, %v2866
  %s2872 = scalar_lea.vmem %s0, 385
  %s2873 = smov 48
  %v2874 = vld [vmem:[%s2872] ss:$16 sm:%s2873]
  %vm2875 = vcmask 1045508
  %v2876 = vsel %vm2875, %v2874, %v2871
  %s2877 = scalar_lea.vmem %s0, 385
  %s2878 = smov 192
  %v2879 = vld [vmem:[%s2877] ss:$16 sm:%s2878]
  %vm2880 = vcmask 1047558
  %v2881 = vsel %vm2880, %v2879, %v2876
  %2882 = vrot.lane.b32.xlu0 %v2881, 4
  %v2883 = vpop.permute.xlu0 %2882
  %vm2884 = vcmask 64544
  %s2885 = scalar_lea.vmem %s1, 24
  %2886 = vst.msk [vmem:[%s2885] sm:$0xff] %vm2884, %v2883
  %s2887 = scalar_lea.vmem %s0, 897
  %s2888 = smov 3
  %v2889 = vld [vmem:[%s2887] ss:$16 sm:%s2888]
  %s2890 = scalar_lea.vmem %s0, 897
  %s2891 = smov 12
  %v2892 = vld [vmem:[%s2890] ss:$16 sm:%s2891]
  %vm2893 = vcmask 1043458
  %v2894 = vsel %vm2893, %v2892, %v2889
  %s2895 = scalar_lea.vmem %s0, 897
  %s2896 = smov 48
  %v2897 = vld [vmem:[%s2895] ss:$16 sm:%s2896]
  %vm2898 = vcmask 1045508
  %v2899 = vsel %vm2898, %v2897, %v2894
  %s2900 = scalar_lea.vmem %s0, 897
  %s2901 = smov 192
  %v2902 = vld [vmem:[%s2900] ss:$16 sm:%s2901]
  %vm2903 = vcmask 1047558
  %v2904 = vsel %vm2903, %v2902, %v2899
  %2905 = vrot.lane.b32.xlu0 %v2904, 4
  %v2906 = vpop.permute.xlu0 %2905
  %vm2907 = vcmask 64544
  %s2908 = scalar_lea.vmem %s1, 56
  %2909 = vst.msk [vmem:[%s2908] sm:$0xff] %vm2907, %v2906

// kernel: residual_block.1
$region0: #{residual_block.1}
  #allocation0 [shape = 'u32[]', space=smem, size = 0x4, offset = 0x4, fixed_abs, tag = 'smem constant byte address 0x4 - core index']
  #allocation1 [shape = 'u32[144,128]{1,0:T(1,128)}', space=vmem, size = 0x12000, scoped, tag = 'internal scratch']
  #allocation2 [shape = 'f32[2,18,80]{2,1,0:T(8,128)}', space=vmem, size = 0x6000, scoped, tag = 'scratch operand']
  %s0 = inlined_call_operand.vmem [shape: f32[2,18,80], index: 0, kind: input, shape index: {}]
  %s1 = inlined_call_operand.vmem [shape: f32[32,64], index: 1, kind: input, shape index: {}]
  %s2 = inlined_call_operand.vmem [shape: f32[45,64], index: 2, kind: input, shape index: {}]
  %s3 = inlined_call_operand.vmem [shape: f32[45,64], index: 3, kind: input, shape index: {}]
  %s4 = inlined_call_operand.vmem [shape: f32[64,64], index: 4, kind: input, shape index: {}]
  %s5 = inlined_call_operand.vmem [shape: f32[1,64], index: 5, kind: input, shape index: {}]
  %s6 = inlined_call_operand.vmem [shape: f32[1,64], index: 6, kind: input, shape index: {}]
  %s7 = inlined_call_operand.vmem [shape: f32[1,64], index: 7, kind: input, shape index: {}]
  %s8 = inlined_call_operand.vmem [shape: f32[1,64], index: 8, kind: input, shape index: {}]
  %s9 = inlined_call_operand.vmem [shape: f32[1,64], index: 9, kind: input, shape index: {}]
  %s10 = inlined_call_operand.vmem [shape: f32[1,64], index: 10, kind: input, shape index: {}]
  %s11 = inlined_call_operand.vmem [shape: f32[32,64], index: 11, kind: output, shape index: {}]
  %s12 = sld [smem:[#allocation0]]
  $region54: #{residual_block.1} parent=0
    _
  %s14 = ssub.s32 1, %s12
  %s15 = scalar_select 0, %s14, %s12
  // Predicated region
  $region2: #{residual_block.1} parent=0 // pred_check
    _
  $region3: #{residual_block.1} parent=0 // pred_check_branch
    %17 = sbr.rel (0) target = $region5
  $region4: #{residual_block.1} parent=0 // pred_region
    _
  $region5: #{residual_block.1} parent=0 // pred_fallthru
    _
  // Predicated region
  $region6: #{residual_block.1} parent=0 // pred_check
    _
  $region7: #{residual_block.1} parent=0 // pred_check_branch
    %19 = sbr.rel (0) target = $region9
  $region8: #{residual_block.1} parent=0 // pred_region
    _
  $region9: #{residual_block.1} parent=0 // pred_fallthru
    _
  // Predicated region
  $region10: #{residual_block.1} parent=0 // pred_check
    _
  $region11: #{residual_block.1} parent=0 // pred_check_branch
    %21 = sbr.rel (0) target = $region13
  $region12: #{residual_block.1} parent=0 // pred_region
    _
  $region13: #{residual_block.1} parent=0 // pred_fallthru
    _
  // Predicated region
  $region14: #{residual_block.1} parent=0 // pred_check
    _
  $region15: #{residual_block.1} parent=0 // pred_check_branch
    %23 = sbr.rel (0) target = $region17
  $region16: #{residual_block.1} parent=0 // pred_region
    _
  $region17: #{residual_block.1} parent=0 // pred_fallthru
    _
  // Predicated region
  $region18: #{residual_block.1} parent=0 // pred_check
    _
  $region19: #{residual_block.1} parent=0 // pred_check_branch
    %25 = sbr.rel (0) target = $region21
  $region20: #{residual_block.1} parent=0 // pred_region
    _
  $region21: #{residual_block.1} parent=0 // pred_fallthru
    _
  // Predicated region
  $region22: #{residual_block.1} parent=0 // pred_check
    _
  $region23: #{residual_block.1} parent=0 // pred_check_branch
    %27 = sbr.rel (0) target = $region25
  $region24: #{residual_block.1} parent=0 // pred_region
    _
  $region25: #{residual_block.1} parent=0 // pred_fallthru
    _
  // Predicated region
  $region26: #{residual_block.1} parent=0 // pred_check
    _
  $region27: #{residual_block.1} parent=0 // pred_check_branch
    %29 = sbr.rel (0) target = $region29
  $region28: #{residual_block.1} parent=0 // pred_region
    _
  $region29: #{residual_block.1} parent=0 // pred_fallthru
    _
  // Predicated region
  $region30: #{residual_block.1} parent=0 // pred_check
    _
  $region31: #{residual_block.1} parent=0 // pred_check_branch
    %31 = sbr.rel (0) target = $region33
  $region32: #{residual_block.1} parent=0 // pred_region
    _
  $region33: #{residual_block.1} parent=0 // pred_fallthru
    _
  // Predicated region
  $region34: #{residual_block.1} parent=0 // pred_check
    _
  $region35: #{residual_block.1} parent=0 // pred_check_branch
    %33 = sbr.rel (0) target = $region37
  $region36: #{residual_block.1} parent=0 // pred_region
    _
  $region37: #{residual_block.1} parent=0 // pred_fallthru
    _
  // Predicated region
  $region38: #{residual_block.1} parent=0 // pred_check
    _
  $region39: #{residual_block.1} parent=0 // pred_check_branch
    %35 = sbr.rel (0) target = $region41
  $region40: #{residual_block.1} parent=0 // pred_region
    _
  $region41: #{residual_block.1} parent=0 // pred_fallthru
    _
  // Predicated region
  $region42: #{residual_block.1} parent=0 // pred_check
    _
  $region43: #{residual_block.1} parent=0 // pred_check_branch
    %37 = sbr.rel (0) target = $region45
  $region44: #{residual_block.1} parent=0 // pred_region
    _
  $region45: #{residual_block.1} parent=0 // pred_fallthru
    _
  %v38 = vld [vmem:[%s0] sm:$0xff]
  %v39 = vld [vmem:[%s0 + $0x8] sm:$0xff]
  %v40 = vld [vmem:[%s0 + $0x10] sm:$0x3]
  %v41 = vld [vmem:[%s0 + $0x18] sm:$0xff]
  %v42 = vld [vmem:[%s0 + $0x20] sm:$0xff]
  %v43 = vld [vmem:[%s0 + $0x28] sm:$0x3]
  %v44 = vld [vmem:[%s2] sm:$0x1]
  %v45 = vlaneseq
  %v46 = vshrl.u32 %v45, 7
  %v47 = vsub.s32 0, %v46
  %v48 = vrot.slane %v44, %v47
  %50 = vrot.lane.b32.xlu0 %v48, 1
  %v51 = vpop.permute.xlu0 %50
  %v53 = vmul.f32 %v38, %v51
  %v54 = vmul.f32 %v39, %v51
  %v55 = vmul.f32 %v41, %v51
  %v56 = vmul.f32 %v42, %v51
  %v57 = vadd.f32 %v53, 0.0
  %v58 = vadd.f32 %v54, 0.0
  %v59 = vadd.f32 %v55, 0.0
  %v60 = vadd.f32 %v56, 0.0
  %v61 = vld [vmem:[%s2 + $0x1] sm:$0x1]
  %v62 = vlaneseq
  %v63 = vshrl.u32 %v62, 7
  %v64 = vsub.s32 0, %v63
  %v65 = vrot.slane %v61, %v64
  %67 = vrot.lane.b32.xlu0 %v65, 2
  %v68 = vpop.permute.xlu0 %67
  %v70 = vmul.f32 %v38, %v68
  %v71 = vmul.f32 %v39, %v68
  %v72 = vmul.f32 %v41, %v68
  %v73 = vmul.f32 %v42, %v68
  %78 = vrot.lane.b32.xlu0 %v70, 127
  %v79 = vpop.permute.xlu0 %78
  %80 = vrot.lane.b32.xlu0 %v71, 127
  %v81 = vpop.permute.xlu0 %80
  %82 = vrot.lane.b32.xlu0 %v72, 127
  %v83 = vpop.permute.xlu0 %82
  %84 = vrot.lane.b32.xlu0 %v73, 127
  %v85 = vpop.permute.xlu0 %84
  %v90 = vadd.f32 %v57, %v79
  %v91 = vadd.f32 %v58, %v81
  %v92 = vadd.f32 %v59, %v83
  %v93 = vadd.f32 %v60, %v85
  %v94 = vld [vmem:[%s2 + $0x2] sm:$0x1]
  %v95 = vlaneseq
  %v96 = vshrl.u32 %v95, 7
  %v97 = vsub.s32 0, %v96
  %v98 = vrot.slane %v94, %v97
  %100 = vrot.lane.b32.xlu0 %v98, 3
  %v101 = vpop.permute.xlu0 %100
  %v103 = vmul.f32 %v38, %v101
  %v104 = vmul.f32 %v39, %v101
  %v105 = vmul.f32 %v41, %v101
  %v106 = vmul.f32 %v42, %v101
  %111 = vrot.lane.b32.xlu0 %v103, 126
  %v112 = vpop.permute.xlu0 %111
  %113 = vrot.lane.b32.xlu0 %v104, 126
  %v114 = vpop.permute.xlu0 %113
  %115 = vrot.lane.b32.xlu0 %v105, 126
  %v116 = vpop.permute.xlu0 %115
  %117 = vrot.lane.b32.xlu0 %v106, 126
  %v118 = vpop.permute.xlu0 %117
  %v123 = vadd.f32 %v90, %v112
  %v124 = vadd.f32 %v91, %v114
  %v125 = vadd.f32 %v92, %v116
  %v126 = vadd.f32 %v93, %v118
  %v127 = vld [vmem:[%s2 + $0x3] sm:$0x1]
  %v128 = vlaneseq
  %v129 = vshrl.u32 %v128, 7
  %v130 = vsub.s32 0, %v129
  %v131 = vrot.slane %v127, %v130
  %133 = vrot.lane.b32.xlu0 %v131, 4
  %v134 = vpop.permute.xlu0 %133
  %v136 = vmul.f32 %v38, %v134
  %v137 = vmul.f32 %v39, %v134
  %v138 = vmul.f32 %v41, %v134
  %v139 = vmul.f32 %v42, %v134
  %144 = vrot.lane.b32.xlu0 %v136, 125
  %v145 = vpop.permute.xlu0 %144
  %146 = vrot.lane.b32.xlu0 %v137, 125
  %v147 = vpop.permute.xlu0 %146
  %148 = vrot.lane.b32.xlu0 %v138, 125
  %v149 = vpop.permute.xlu0 %148
  %150 = vrot.lane.b32.xlu0 %v139, 125
  %v151 = vpop.permute.xlu0 %150
  %v156 = vadd.f32 %v123, %v145
  %v157 = vadd.f32 %v124, %v147
  %v158 = vadd.f32 %v125, %v149
  %v159 = vadd.f32 %v126, %v151
  %v160 = vld [vmem:[%s2 + $0x4] sm:$0x1]
  %v161 = vlaneseq
  %v162 = vshrl.u32 %v161, 7
  %v163 = vsub.s32 0, %v162
  %v164 = vrot.slane %v160, %v163
  %166 = vrot.lane.b32.xlu0 %v164, 5
  %v167 = vpop.permute.xlu0 %166
  %v169 = vmul.f32 %v38, %v167
  %v170 = vmul.f32 %v39, %v167
  %v171 = vmul.f32 %v41, %v167
  %v172 = vmul.f32 %v42, %v167
  %177 = vrot.lane.b32.xlu0 %v169, 124
  %v178 = vpop.permute.xlu0 %177
  %179 = vrot.lane.b32.xlu0 %v170, 124
  %v180 = vpop.permute.xlu0 %179
  %181 = vrot.lane.b32.xlu0 %v171, 124
  %v182 = vpop.permute.xlu0 %181
  %183 = vrot.lane.b32.xlu0 %v172, 124
  %v184 = vpop.permute.xlu0 %183
  %v189 = vadd.f32 %v156, %v178
  %v190 = vadd.f32 %v157, %v180
  %v191 = vadd.f32 %v158, %v182
  %v192 = vadd.f32 %v159, %v184
  %v193 = vld [vmem:[%s2 + $0x5] sm:$0x1]
  %v194 = vlaneseq
  %v195 = vshrl.u32 %v194, 7
  %v196 = vsub.s32 0, %v195
  %v197 = vrot.slane %v193, %v196
  %199 = vrot.lane.b32.xlu0 %v197, 6
  %v200 = vpop.permute.xlu0 %199
  %v202 = vmul.f32 %v38, %v200
  %v203 = vmul.f32 %v39, %v200
  %v204 = vmul.f32 %v41, %v200
  %v205 = vmul.f32 %v42, %v200
  %210 = vrot.lane.b32.xlu0 %v202, 123
  %v211 = vpop.permute.xlu0 %210
  %212 = vrot.lane.b32.xlu0 %v203, 123
  %v213 = vpop.permute.xlu0 %212
  %214 = vrot.lane.b32.xlu0 %v204, 123
  %v215 = vpop.permute.xlu0 %214
  %216 = vrot.lane.b32.xlu0 %v205, 123
  %v217 = vpop.permute.xlu0 %216
  %v222 = vadd.f32 %v189, %v211
  %v223 = vadd.f32 %v190, %v213
  %v224 = vadd.f32 %v191, %v215
  %v225 = vadd.f32 %v192, %v217
  %v226 = vld [vmem:[%s2 + $0x6] sm:$0x1]
  %v227 = vlaneseq
  %v228 = vshrl.u32 %v227, 7
  %v229 = vsub.s32 0, %v228
  %v230 = vrot.slane %v226, %v229
  %232 = vrot.lane.b32.xlu0 %v230, 7
  %v233 = vpop.permute.xlu0 %232
  %v235 = vmul.f32 %v38, %v233
  %v236 = vmul.f32 %v39, %v233
  %v237 = vmul.f32 %v41, %v233
  %v238 = vmul.f32 %v42, %v233
  %243 = vrot.lane.b32.xlu0 %v235, 122
  %v244 = vpop.permute.xlu0 %243
  %245 = vrot.lane.b32.xlu0 %v236, 122
  %v246 = vpop.permute.xlu0 %245
  %247 = vrot.lane.b32.xlu0 %v237, 122
  %v248 = vpop.permute.xlu0 %247
  %249 = vrot.lane.b32.xlu0 %v238, 122
  %v250 = vpop.permute.xlu0 %249
  %v255 = vadd.f32 %v222, %v244
  %v256 = vadd.f32 %v223, %v246
  %v257 = vadd.f32 %v224, %v248
  %v258 = vadd.f32 %v225, %v250
  %v259 = vld [vmem:[%s2 + $0x7] sm:$0x1]
  %v260 = vlaneseq
  %v261 = vshrl.u32 %v260, 7
  %v262 = vsub.s32 0, %v261
  %v263 = vrot.slane %v259, %v262
  %265 = vrot.lane.b32.xlu0 %v263, 8
  %v266 = vpop.permute.xlu0 %265
  %v268 = vmul.f32 %v38, %v266
  %v269 = vmul.f32 %v39, %v266
  %v270 = vmul.f32 %v41, %v266
  %v271 = vmul.f32 %v42, %v266
  %276 = vrot.lane.b32.xlu0 %v268, 121
  %v277 = vpop.permute.xlu0 %276
  %278 = vrot.lane.b32.xlu0 %v269, 121
  %v279 = vpop.permute.xlu0 %278
  %280 = vrot.lane.b32.xlu0 %v270, 121
  %v281 = vpop.permute.xlu0 %280
  %282 = vrot.lane.b32.xlu0 %v271, 121
  %v283 = vpop.permute.xlu0 %282
  %v288 = vadd.f32 %v255, %v277
  %v289 = vadd.f32 %v256, %v279
  %v290 = vadd.f32 %v257, %v281
  %v291 = vadd.f32 %v258, %v283
  %v292 = vld [vmem:[%s2 + $0x8] sm:$0x1]
  %v293 = vlaneseq
  %v294 = vshrl.u32 %v293, 7
  %v295 = vsub.s32 0, %v294
  %v296 = vrot.slane %v292, %v295
  %298 = vrot.lane.b32.xlu0 %v296, 9
  %v299 = vpop.permute.xlu0 %298
  %v301 = vmul.f32 %v38, %v299
  %v302 = vmul.f32 %v39, %v299
  %v303 = vmul.f32 %v41, %v299
  %v304 = vmul.f32 %v42, %v299
  %309 = vrot.lane.b32.xlu0 %v301, 120
  %v310 = vpop.permute.xlu0 %309
  %311 = vrot.lane.b32.xlu0 %v302, 120
  %v312 = vpop.permute.xlu0 %311
  %313 = vrot.lane.b32.xlu0 %v303, 120
  %v314 = vpop.permute.xlu0 %313
  %315 = vrot.lane.b32.xlu0 %v304, 120
  %v316 = vpop.permute.xlu0 %315
  %v321 = vadd.f32 %v288, %v310
  %v322 = vadd.f32 %v289, %v312
  %v323 = vadd.f32 %v290, %v314
  %v324 = vadd.f32 %v291, %v316
  %v325 = vld [vmem:[%s2 + $0x9] sm:$0x1]
  %v326 = vlaneseq
  %v327 = vshrl.u32 %v326, 7
  %v328 = vsub.s32 0, %v327
  %v329 = vrot.slane %v325, %v328
  %331 = vrot.lane.b32.xlu0 %v329, 10
  %v332 = vpop.permute.xlu0 %331
  %v334 = vmul.f32 %v38, %v332
  %v335 = vmul.f32 %v39, %v332
  %v336 = vmul.f32 %v41, %v332
  %v337 = vmul.f32 %v42, %v332
  %342 = vrot.lane.b32.xlu0 %v334, 119
  %v343 = vpop.permute.xlu0 %342
  %344 = vrot.lane.b32.xlu0 %v335, 119
  %v345 = vpop.permute.xlu0 %344
  %346 = vrot.lane.b32.xlu0 %v336, 119
  %v347 = vpop.permute.xlu0 %346
  %348 = vrot.lane.b32.xlu0 %v337, 119
  %v349 = vpop.permute.xlu0 %348
  %v354 = vadd.f32 %v321, %v343
  %v355 = vadd.f32 %v322, %v345
  %v356 = vadd.f32 %v323, %v347
  %v357 = vadd.f32 %v324, %v349
  %v358 = vld [vmem:[%s2 + $0xa] sm:$0x1]
  %v359 = vlaneseq
  %v360 = vshrl.u32 %v359, 7
  %v361 = vsub.s32 0, %v360
  %v362 = vrot.slane %v358, %v361
  %364 = vrot.lane.b32.xlu0 %v362, 11
  %v365 = vpop.permute.xlu0 %364
  %v367 = vmul.f32 %v38, %v365
  %v368 = vmul.f32 %v39, %v365
  %v369 = vmul.f32 %v41, %v365
  %v370 = vmul.f32 %v42, %v365
  %375 = vrot.lane.b32.xlu0 %v367, 118
  %v376 = vpop.permute.xlu0 %375
  %377 = vrot.lane.b32.xlu0 %v368, 118
  %v378 = vpop.permute.xlu0 %377
  %379 = vrot.lane.b32.xlu0 %v369, 118
  %v380 = vpop.permute.xlu0 %379
  %381 = vrot.lane.b32.xlu0 %v370, 118
  %v382 = vpop.permute.xlu0 %381
  %v387 = vadd.f32 %v354, %v376
  %v388 = vadd.f32 %v355, %v378
  %v389 = vadd.f32 %v356, %v380
  %v390 = vadd.f32 %v357, %v382
  %v391 = vld [vmem:[%s2 + $0xb] sm:$0x1]
  %v392 = vlaneseq
  %v393 = vshrl.u32 %v392, 7
  %v394 = vsub.s32 0, %v393
  %v395 = vrot.slane %v391, %v394
  %397 = vrot.lane.b32.xlu0 %v395, 12
  %v398 = vpop.permute.xlu0 %397
  %v400 = vmul.f32 %v38, %v398
  %v401 = vmul.f32 %v39, %v398
  %v402 = vmul.f32 %v41, %v398
  %v403 = vmul.f32 %v42, %v398
  %408 = vrot.lane.b32.xlu0 %v400, 117
  %v409 = vpop.permute.xlu0 %408
  %410 = vrot.lane.b32.xlu0 %v401, 117
  %v411 = vpop.permute.xlu0 %410
  %412 = vrot.lane.b32.xlu0 %v402, 117
  %v413 = vpop.permute.xlu0 %412
  %414 = vrot.lane.b32.xlu0 %v403, 117
  %v415 = vpop.permute.xlu0 %414
  %v420 = vadd.f32 %v387, %v409
  %v421 = vadd.f32 %v388, %v411
  %v422 = vadd.f32 %v389, %v413
  %v423 = vadd.f32 %v390, %v415
  %v424 = vld [vmem:[%s2 + $0xc] sm:$0x1]
  %v425 = vlaneseq
  %v426 = vshrl.u32 %v425, 7
  %v427 = vsub.s32 0, %v426
  %v428 = vrot.slane %v424, %v427
  %430 = vrot.lane.b32.xlu0 %v428, 13
  %v431 = vpop.permute.xlu0 %430
  %v433 = vmul.f32 %v38, %v431
  %v434 = vmul.f32 %v39, %v431
  %v435 = vmul.f32 %v41, %v431
  %v436 = vmul.f32 %v42, %v431
  %441 = vrot.lane.b32.xlu0 %v433, 116
  %v442 = vpop.permute.xlu0 %441
  %443 = vrot.lane.b32.xlu0 %v434, 116
  %v444 = vpop.permute.xlu0 %443
  %445 = vrot.lane.b32.xlu0 %v435, 116
  %v446 = vpop.permute.xlu0 %445
  %447 = vrot.lane.b32.xlu0 %v436, 116
  %v448 = vpop.permute.xlu0 %447
  %v453 = vadd.f32 %v420, %v442
  %v454 = vadd.f32 %v421, %v444
  %v455 = vadd.f32 %v422, %v446
  %v456 = vadd.f32 %v423, %v448
  %v457 = vld [vmem:[%s2 + $0xd] sm:$0x1]
  %v458 = vlaneseq
  %v459 = vshrl.u32 %v458, 7
  %v460 = vsub.s32 0, %v459
  %v461 = vrot.slane %v457, %v460
  %463 = vrot.lane.b32.xlu0 %v461, 14
  %v464 = vpop.permute.xlu0 %463
  %v466 = vmul.f32 %v38, %v464
  %v467 = vmul.f32 %v39, %v464
  %v468 = vmul.f32 %v41, %v464
  %v469 = vmul.f32 %v42, %v464
  %474 = vrot.lane.b32.xlu0 %v466, 115
  %v475 = vpop.permute.xlu0 %474
  %476 = vrot.lane.b32.xlu0 %v467, 115
  %v477 = vpop.permute.xlu0 %476
  %478 = vrot.lane.b32.xlu0 %v468, 115
  %v479 = vpop.permute.xlu0 %478
  %480 = vrot.lane.b32.xlu0 %v469, 115
  %v481 = vpop.permute.xlu0 %480
  %v486 = vadd.f32 %v453, %v475
  %v487 = vadd.f32 %v454, %v477
  %v488 = vadd.f32 %v455, %v479
  %v489 = vadd.f32 %v456, %v481
  %v490 = vld [vmem:[%s2 + $0xe] sm:$0x1]
  %v491 = vlaneseq
  %v492 = vshrl.u32 %v491, 7
  %v493 = vsub.s32 0, %v492
  %v494 = vrot.slane %v490, %v493
  %496 = vrot.lane.b32.xlu0 %v494, 15
  %v497 = vpop.permute.xlu0 %496
  %v499 = vmul.f32 %v38, %v497
  %v500 = vmul.f32 %v39, %v497
  %v501 = vmul.f32 %v41, %v497
  %v502 = vmul.f32 %v42, %v497
  %507 = vrot.lane.b32.xlu0 %v499, 114
  %v508 = vpop.permute.xlu0 %507
  %509 = vrot.lane.b32.xlu0 %v500, 114
  %v510 = vpop.permute.xlu0 %509
  %511 = vrot.lane.b32.xlu0 %v501, 114
  %v512 = vpop.permute.xlu0 %511
  %513 = vrot.lane.b32.xlu0 %v502, 114
  %v514 = vpop.permute.xlu0 %513
  %v519 = vadd.f32 %v486, %v508
  %v520 = vadd.f32 %v487, %v510
  %v521 = vadd.f32 %v488, %v512
  %v522 = vadd.f32 %v489, %v514
  %v523 = vld [vmem:[%s2 + $0xf] sm:$0x1]
  %v524 = vlaneseq
  %v525 = vshrl.u32 %v524, 7
  %v526 = vsub.s32 0, %v525
  %v527 = vrot.slane %v523, %v526
  %529 = vrot.lane.b32.xlu0 %v527, 1
  %v530 = vpop.permute.xlu0 %529
  %v532 = vmul.f32 %v38, %v530
  %v533 = vmul.f32 %v39, %v530
  %v534 = vmul.f32 %v40, %v530
  %v535 = vmul.f32 %v41, %v530
  %v536 = vmul.f32 %v42, %v530
  %v537 = vmul.f32 %v43, %v530
  %vm544 = vcmask 1046528
  %v545 = vrot.slane %v532, 1
  %v546 = vrot.slane %v533, 1
  %v547 = vsel %vm544, %v545, %v546
  %v548 = vrot.slane %v534, 1
  %v549 = vsel %vm544, %v546, %v548
  %v550 = vrot.slane %v535, 1
  %v551 = vrot.slane %v536, 1
  %v552 = vsel %vm544, %v550, %v551
  %v553 = vrot.slane %v537, 1
  %v554 = vsel %vm544, %v551, %v553
  %v559 = vadd.f32 %v519, %v547
  %v560 = vadd.f32 %v520, %v549
  %v561 = vadd.f32 %v521, %v552
  %v562 = vadd.f32 %v522, %v554
  %v563 = vld [vmem:[%s2 + $0x10] sm:$0x1]
  %v564 = vlaneseq
  %v565 = vshrl.u32 %v564, 7
  %v566 = vsub.s32 0, %v565
  %v567 = vrot.slane %v563, %v566
  %569 = vrot.lane.b32.xlu0 %v567, 2
  %v570 = vpop.permute.xlu0 %569
  %v572 = vmul.f32 %v38, %v570
  %v573 = vmul.f32 %v39, %v570
  %v574 = vmul.f32 %v40, %v570
  %v575 = vmul.f32 %v41, %v570
  %v576 = vmul.f32 %v42, %v570
  %v577 = vmul.f32 %v43, %v570
  %v584 = vrot.slane %v572, 1
  %v585 = vrot.slane %v573, 1
  %v586 = vsel %vm544, %v584, %v585
  %v587 = vrot.slane %v574, 1
  %v588 = vsel %vm544, %v585, %v587
  %v589 = vrot.slane %v575, 1
  %v590 = vrot.slane %v576, 1
  %v591 = vsel %vm544, %v589, %v590
  %v592 = vrot.slane %v577, 1
  %v593 = vsel %vm544, %v590, %v592
  %594 = vrot.lane.b32.xlu0 %v586, 127
  %v595 = vpop.permute.xlu0 %594
  %596 = vrot.lane.b32.xlu0 %v588, 127
  %v597 = vpop.permute.xlu0 %596
  %598 = vrot.lane.b32.xlu0 %v591, 127
  %v599 = vpop.permute.xlu0 %598
  %600 = vrot.lane.b32.xlu0 %v593, 127
  %v601 = vpop.permute.xlu0 %600
  %v606 = vadd.f32 %v559, %v595
  %v607 = vadd.f32 %v560, %v597
  %v608 = vadd.f32 %v561, %v599
  %v609 = vadd.f32 %v562, %v601
  %v610 = vld [vmem:[%s2 + $0x11] sm:$0x1]
  %v611 = vlaneseq
  %v612 = vshrl.u32 %v611, 7
  %v613 = vsub.s32 0, %v612
  %v614 = vrot.slane %v610, %v613
  %616 = vrot.lane.b32.xlu0 %v614, 3
  %v617 = vpop.permute.xlu0 %616
  %v619 = vmul.f32 %v38, %v617
  %v620 = vmul.f32 %v39, %v617
  %v621 = vmul.f32 %v40, %v617
  %v622 = vmul.f32 %v41, %v617
  %v623 = vmul.f32 %v42, %v617
  %v624 = vmul.f32 %v43, %v617
  %v631 = vrot.slane %v619, 1
  %v632 = vrot.slane %v620, 1
  %v633 = vsel %vm544, %v631, %v632
  %v634 = vrot.slane %v621, 1
  %v635 = vsel %vm544, %v632, %v634
  %v636 = vrot.slane %v622, 1
  %v637 = vrot.slane %v623, 1
  %v638 = vsel %vm544, %v636, %v637
  %v639 = vrot.slane %v624, 1
  %v640 = vsel %vm544, %v637, %v639
  %641 = vrot.lane.b32.xlu0 %v633, 126
  %v642 = vpop.permute.xlu0 %641
  %643 = vrot.lane.b32.xlu0 %v635, 126
  %v644 = vpop.permute.xlu0 %643
  %645 = vrot.lane.b32.xlu0 %v638, 126
  %v646 = vpop.permute.xlu0 %645
  %647 = vrot.lane.b32.xlu0 %v640, 126
  %v648 = vpop.permute.xlu0 %647
  %v653 = vadd.f32 %v606, %v642
  %v654 = vadd.f32 %v607, %v644
  %v655 = vadd.f32 %v608, %v646
  %v656 = vadd.f32 %v609, %v648
  %v657 = vld [vmem:[%s2 + $0x12] sm:$0x1]
  %v658 = vlaneseq
  %v659 = vshrl.u32 %v658, 7
  %v660 = vsub.s32 0, %v659
  %v661 = vrot.slane %v657, %v660
  %663 = vrot.lane.b32.xlu0 %v661, 4
  %v664 = vpop.permute.xlu0 %663
  %v666 = vmul.f32 %v38, %v664
  %v667 = vmul.f32 %v39, %v664
  %v668 = vmul.f32 %v40, %v664
  %v669 = vmul.f32 %v41, %v664
  %v670 = vmul.f32 %v42, %v664
  %v671 = vmul.f32 %v43, %v664
  %v678 = vrot.slane %v666, 1
  %v679 = vrot.slane %v667, 1
  %v680 = vsel %vm544, %v678, %v679
  %v681 = vrot.slane %v668, 1
  %v682 = vsel %vm544, %v679, %v681
  %v683 = vrot.slane %v669, 1
  %v684 = vrot.slane %v670, 1
  %v685 = vsel %vm544, %v683, %v684
  %v686 = vrot.slane %v671, 1
  %v687 = vsel %vm544, %v684, %v686
  %688 = vrot.lane.b32.xlu0 %v680, 125
  %v689 = vpop.permute.xlu0 %688
  %690 = vrot.lane.b32.xlu0 %v682, 125
  %v691 = vpop.permute.xlu0 %690
  %692 = vrot.lane.b32.xlu0 %v685, 125
  %v693 = vpop.permute.xlu0 %692
  %694 = vrot.lane.b32.xlu0 %v687, 125
  %v695 = vpop.permute.xlu0 %694
  %v700 = vadd.f32 %v653, %v689
  %v701 = vadd.f32 %v654, %v691
  %v702 = vadd.f32 %v655, %v693
  %v703 = vadd.f32 %v656, %v695
  %v704 = vld [vmem:[%s2 + $0x13] sm:$0x1]
  %v705 = vlaneseq
  %v706 = vshrl.u32 %v705, 7
  %v707 = vsub.s32 0, %v706
  %v708 = vrot.slane %v704, %v707
  %710 = vrot.lane.b32.xlu0 %v708, 5
  %v711 = vpop.permute.xlu0 %710
  %v713 = vmul.f32 %v38, %v711
  %v714 = vmul.f32 %v39, %v711
  %v715 = vmul.f32 %v40, %v711
  %v716 = vmul.f32 %v41, %v711
  %v717 = vmul.f32 %v42, %v711
  %v718 = vmul.f32 %v43, %v711
  %v725 = vrot.slane %v713, 1
  %v726 = vrot.slane %v714, 1
  %v727 = vsel %vm544, %v725, %v726
  %v728 = vrot.slane %v715, 1
  %v729 = vsel %vm544, %v726, %v728
  %v730 = vrot.slane %v716, 1
  %v731 = vrot.slane %v717, 1
  %v732 = vsel %vm544, %v730, %v731
  %v733 = vrot.slane %v718, 1
  %v734 = vsel %vm544, %v731, %v733
  %735 = vrot.lane.b32.xlu0 %v727, 124
  %v736 = vpop.permute.xlu0 %735
  %737 = vrot.lane.b32.xlu0 %v729, 124
  %v738 = vpop.permute.xlu0 %737
  %739 = vrot.lane.b32.xlu0 %v732, 124
  %v740 = vpop.permute.xlu0 %739
  %741 = vrot.lane.b32.xlu0 %v734, 124
  %v742 = vpop.permute.xlu0 %741
  %v747 = vadd.f32 %v700, %v736
  %v748 = vadd.f32 %v701, %v738
  %v749 = vadd.f32 %v702, %v740
  %v750 = vadd.f32 %v703, %v742
  %v751 = vld [vmem:[%s2 + $0x14] sm:$0x1]
  %v752 = vlaneseq
  %v753 = vshrl.u32 %v752, 7
  %v754 = vsub.s32 0, %v753
  %v755 = vrot.slane %v751, %v754
  %757 = vrot.lane.b32.xlu0 %v755, 6
  %v758 = vpop.permute.xlu0 %757
  %v760 = vmul.f32 %v38, %v758
  %v761 = vmul.f32 %v39, %v758
  %v762 = vmul.f32 %v40, %v758
  %v763 = vmul.f32 %v41, %v758
  %v764 = vmul.f32 %v42, %v758
  %v765 = vmul.f32 %v43, %v758
  %v772 = vrot.slane %v760, 1
  %v773 = vrot.slane %v761, 1
  %v774 = vsel %vm544, %v772, %v773
  %v775 = vrot.slane %v762, 1
  %v776 = vsel %vm544, %v773, %v775
  %v777 = vrot.slane %v763, 1
  %v778 = vrot.slane %v764, 1
  %v779 = vsel %vm544, %v777, %v778
  %v780 = vrot.slane %v765, 1
  %v781 = vsel %vm544, %v778, %v780
  %782 = vrot.lane.b32.xlu0 %v774, 123
  %v783 = vpop.permute.xlu0 %782
  %784 = vrot.lane.b32.xlu0 %v776, 123
  %v785 = vpop.permute.xlu0 %784
  %786 = vrot.lane.b32.xlu0 %v779, 123
  %v787 = vpop.permute.xlu0 %786
  %788 = vrot.lane.b32.xlu0 %v781, 123
  %v789 = vpop.permute.xlu0 %788
  %v794 = vadd.f32 %v747, %v783
  %v795 = vadd.f32 %v748, %v785
  %v796 = vadd.f32 %v749, %v787
  %v797 = vadd.f32 %v750, %v789
  %v798 = vld [vmem:[%s2 + $0x15] sm:$0x1]
  %v799 = vlaneseq
  %v800 = vshrl.u32 %v799, 7
  %v801 = vsub.s32 0, %v800
  %v802 = vrot.slane %v798, %v801
  %804 = vrot.lane.b32.xlu0 %v802, 7
  %v805 = vpop.permute.xlu0 %804
  %v807 = vmul.f32 %v38, %v805
  %v808 = vmul.f32 %v39, %v805
  %v809 = vmul.f32 %v40, %v805
  %v810 = vmul.f32 %v41, %v805
  %v811 = vmul.f32 %v42, %v805
  %v812 = vmul.f32 %v43, %v805
  %v819 = vrot.slane %v807, 1
  %v820 = vrot.slane %v808, 1
  %v821 = vsel %vm544, %v819, %v820
  %v822 = vrot.slane %v809, 1
  %v823 = vsel %vm544, %v820, %v822
  %v824 = vrot.slane %v810, 1
  %v825 = vrot.slane %v811, 1
  %v826 = vsel %vm544, %v824, %v825
  %v827 = vrot.slane %v812, 1
  %v828 = vsel %vm544, %v825, %v827
  %829 = vrot.lane.b32.xlu0 %v821, 122
  %v830 = vpop.permute.xlu0 %829
  %831 = vrot.lane.b32.xlu0 %v823, 122
  %v832 = vpop.permute.xlu0 %831
  %833 = vrot.lane.b32.xlu0 %v826, 122
  %v834 = vpop.permute.xlu0 %833
  %835 = vrot.lane.b32.xlu0 %v828, 122
  %v836 = vpop.permute.xlu0 %835
  %v841 = vadd.f32 %v794, %v830
  %v842 = vadd.f32 %v795, %v832
  %v843 = vadd.f32 %v796, %v834
  %v844 = vadd.f32 %v797, %v836
  %v845 = vld [vmem:[%s2 + $0x16] sm:$0x1]
  %v846 = vlaneseq
  %v847 = vshrl.u32 %v846, 7
  %v848 = vsub.s32 0, %v847
  %v849 = vrot.slane %v845, %v848
  %851 = vrot.lane.b32.xlu0 %v849, 8
  %v852 = vpop.permute.xlu0 %851
  %v854 = vmul.f32 %v38, %v852
  %v855 = vmul.f32 %v39, %v852
  %v856 = vmul.f32 %v40, %v852
  %v857 = vmul.f32 %v41, %v852
  %v858 = vmul.f32 %v42, %v852
  %v859 = vmul.f32 %v43, %v852
  %v866 = vrot.slane %v854, 1
  %v867 = vrot.slane %v855, 1
  %v868 = vsel %vm544, %v866, %v867
  %v869 = vrot.slane %v856, 1
  %v870 = vsel %vm544, %v867, %v869
  %v871 = vrot.slane %v857, 1
  %v872 = vrot.slane %v858, 1
  %v873 = vsel %vm544, %v871, %v872
  %v874 = vrot.slane %v859, 1
  %v875 = vsel %vm544, %v872, %v874
  %876 = vrot.lane.b32.xlu0 %v868, 121
  %v877 = vpop.permute.xlu0 %876
  %878 = vrot.lane.b32.xlu0 %v870, 121
  %v879 = vpop.permute.xlu0 %878
  %880 = vrot.lane.b32.xlu0 %v873, 121
  %v881 = vpop.permute.xlu0 %880
  %882 = vrot.lane.b32.xlu0 %v875, 121
  %v883 = vpop.permute.xlu0 %882
  %v888 = vadd.f32 %v841, %v877
  %v889 = vadd.f32 %v842, %v879
  %v890 = vadd.f32 %v843, %v881
  %v891 = vadd.f32 %v844, %v883
  %v892 = vld [vmem:[%s2 + $0x17] sm:$0x1]
  %v893 = vlaneseq
  %v894 = vshrl.u32 %v893, 7
  %v895 = vsub.s32 0, %v894
  %v896 = vrot.slane %v892, %v895
  %898 = vrot.lane.b32.xlu0 %v896, 9
  %v899 = vpop.permute.xlu0 %898
  %v901 = vmul.f32 %v38, %v899
  %v902 = vmul.f32 %v39, %v899
  %v903 = vmul.f32 %v40, %v899
  %v904 = vmul.f32 %v41, %v899
  %v905 = vmul.f32 %v42, %v899
  %v906 = vmul.f32 %v43, %v899
  %v913 = vrot.slane %v901, 1
  %v914 = vrot.slane %v902, 1
  %v915 = vsel %vm544, %v913, %v914
  %v916 = vrot.slane %v903, 1
  %v917 = vsel %vm544, %v914, %v916
  %v918 = vrot.slane %v904, 1
  %v919 = vrot.slane %v905, 1
  %v920 = vsel %vm544, %v918, %v919
  %v921 = vrot.slane %v906, 1
  %v922 = vsel %vm544, %v919, %v921
  %923 = vrot.lane.b32.xlu0 %v915, 120
  %v924 = vpop.permute.xlu0 %923
  %925 = vrot.lane.b32.xlu0 %v917, 120
  %v926 = vpop.permute.xlu0 %925
  %927 = vrot.lane.b32.xlu0 %v920, 120
  %v928 = vpop.permute.xlu0 %927
  %929 = vrot.lane.b32.xlu0 %v922, 120
  %v930 = vpop.permute.xlu0 %929
  %v935 = vadd.f32 %v888, %v924
  %v936 = vadd.f32 %v889, %v926
  %v937 = vadd.f32 %v890, %v928
  %v938 = vadd.f32 %v891, %v930
  %v939 = vld [vmem:[%s2 + $0x18] sm:$0x1]
  %v940 = vlaneseq
  %v941 = vshrl.u32 %v940, 7
  %v942 = vsub.s32 0, %v941
  %v943 = vrot.slane %v939, %v942
  %945 = vrot.lane.b32.xlu0 %v943, 10
  %v946 = vpop.permute.xlu0 %945
  %v948 = vmul.f32 %v38, %v946
  %v949 = vmul.f32 %v39, %v946
  %v950 = vmul.f32 %v40, %v946
  %v951 = vmul.f32 %v41, %v946
  %v952 = vmul.f32 %v42, %v946
  %v953 = vmul.f32 %v43, %v946
  %v960 = vrot.slane %v948, 1
  %v961 = vrot.slane %v949, 1
  %v962 = vsel %vm544, %v960, %v961
  %v963 = vrot.slane %v950, 1
  %v964 = vsel %vm544, %v961, %v963
  %v965 = vrot.slane %v951, 1
  %v966 = vrot.slane %v952, 1
  %v967 = vsel %vm544, %v965, %v966
  %v968 = vrot.slane %v953, 1
  %v969 = vsel %vm544, %v966, %v968
  %970 = vrot.lane.b32.xlu0 %v962, 119
  %v971 = vpop.permute.xlu0 %970
  %972 = vrot.lane.b32.xlu0 %v964, 119
  %v973 = vpop.permute.xlu0 %972
  %974 = vrot.lane.b32.xlu0 %v967, 119
  %v975 = vpop.permute.xlu0 %974
  %976 = vrot.lane.b32.xlu0 %v969, 119
  %v977 = vpop.permute.xlu0 %976
  %v982 = vadd.f32 %v935, %v971
  %v983 = vadd.f32 %v936, %v973
  %v984 = vadd.f32 %v937, %v975
  %v985 = vadd.f32 %v938, %v977
  %v986 = vld [vmem:[%s2 + $0x19] sm:$0x1]
  %v987 = vlaneseq
  %v988 = vshrl.u32 %v987, 7
  %v989 = vsub.s32 0, %v988
  %v990 = vrot.slane %v986, %v989
  %992 = vrot.lane.b32.xlu0 %v990, 11
  %v993 = vpop.permute.xlu0 %992
  %v995 = vmul.f32 %v38, %v993
  %v996 = vmul.f32 %v39, %v993
  %v997 = vmul.f32 %v40, %v993
  %v998 = vmul.f32 %v41, %v993
  %v999 = vmul.f32 %v42, %v993
  %v1000 = vmul.f32 %v43, %v993
  %v1007 = vrot.slane %v995, 1
  %v1008 = vrot.slane %v996, 1
  %v1009 = vsel %vm544, %v1007, %v1008
  %v1010 = vrot.slane %v997, 1
  %v1011 = vsel %vm544, %v1008, %v1010
  %v1012 = vrot.slane %v998, 1
  %v1013 = vrot.slane %v999, 1
  %v1014 = vsel %vm544, %v1012, %v1013
  %v1015 = vrot.slane %v1000, 1
  %v1016 = vsel %vm544, %v1013, %v1015
  %1017 = vrot.lane.b32.xlu0 %v1009, 118
  %v1018 = vpop.permute.xlu0 %1017
  %1019 = vrot.lane.b32.xlu0 %v1011, 118
  %v1020 = vpop.permute.xlu0 %1019
  %1021 = vrot.lane.b32.xlu0 %v1014, 118
  %v1022 = vpop.permute.xlu0 %1021
  %1023 = vrot.lane.b32.xlu0 %v1016, 118
  %v1024 = vpop.permute.xlu0 %1023
  %v1029 = vadd.f32 %v982, %v1018
  %v1030 = vadd.f32 %v983, %v1020
  %v1031 = vadd.f32 %v984, %v1022
  %v1032 = vadd.f32 %v985, %v1024
  %v1033 = vld [vmem:[%s2 + $0x1a] sm:$0x1]
  %v1034 = vlaneseq
  %v1035 = vshrl.u32 %v1034, 7
  %v1036 = vsub.s32 0, %v1035
  %v1037 = vrot.slane %v1033, %v1036
  %1039 = vrot.lane.b32.xlu0 %v1037, 12
  %v1040 = vpop.permute.xlu0 %1039
  %v1042 = vmul.f32 %v38, %v1040
  %v1043 = vmul.f32 %v39, %v1040
  %v1044 = vmul.f32 %v40, %v1040
  %v1045 = vmul.f32 %v41, %v1040
  %v1046 = vmul.f32 %v42, %v1040
  %v1047 = vmul.f32 %v43, %v1040
  %v1054 = vrot.slane %v1042, 1
  %v1055 = vrot.slane %v1043, 1
  %v1056 = vsel %vm544, %v1054, %v1055
  %v1057 = vrot.slane %v1044, 1
  %v1058 = vsel %vm544, %v1055, %v1057
  %v1059 = vrot.slane %v1045, 1
  %v1060 = vrot.slane %v1046, 1
  %v1061 = vsel %vm544, %v1059, %v1060
  %v1062 = vrot.slane %v1047, 1
  %v1063 = vsel %vm544, %v1060, %v1062
  %1064 = vrot.lane.b32.xlu0 %v1056, 117
  %v1065 = vpop.permute.xlu0 %1064
  %1066 = vrot.lane.b32.xlu0 %v1058, 117
  %v1067 = vpop.permute.xlu0 %1066
  %1068 = vrot.lane.b32.xlu0 %v1061, 117
  %v1069 = vpop.permute.xlu0 %1068
  %1070 = vrot.lane.b32.xlu0 %v1063, 117
  %v1071 = vpop.permute.xlu0 %1070
  %v1076 = vadd.f32 %v1029, %v1065
  %v1077 = vadd.f32 %v1030, %v1067
  %v1078 = vadd.f32 %v1031, %v1069
  %v1079 = vadd.f32 %v1032, %v1071
  %v1080 = vld [vmem:[%s2 + $0x1b] sm:$0x1]
  %v1081 = vlaneseq
  %v1082 = vshrl.u32 %v1081, 7
  %v1083 = vsub.s32 0, %v1082
  %v1084 = vrot.slane %v1080, %v1083
  %1086 = vrot.lane.b32.xlu0 %v1084, 13
  %v1087 = vpop.permute.xlu0 %1086
  %v1089 = vmul.f32 %v38, %v1087
  %v1090 = vmul.f32 %v39, %v1087
  %v1091 = vmul.f32 %v40, %v1087
  %v1092 = vmul.f32 %v41, %v1087
  %v1093 = vmul.f32 %v42, %v1087
  %v1094 = vmul.f32 %v43, %v1087
  %v1101 = vrot.slane %v1089, 1
  %v1102 = vrot.slane %v1090, 1
  %v1103 = vsel %vm544, %v1101, %v1102
  %v1104 = vrot.slane %v1091, 1
  %v1105 = vsel %vm544, %v1102, %v1104
  %v1106 = vrot.slane %v1092, 1
  %v1107 = vrot.slane %v1093, 1
  %v1108 = vsel %vm544, %v1106, %v1107
  %v1109 = vrot.slane %v1094, 1
  %v1110 = vsel %vm544, %v1107, %v1109
  %1111 = vrot.lane.b32.xlu0 %v1103, 116
  %v1112 = vpop.permute.xlu0 %1111
  %1113 = vrot.lane.b32.xlu0 %v1105, 116
  %v1114 = vpop.permute.xlu0 %1113
  %1115 = vrot.lane.b32.xlu0 %v1108, 116
  %v1116 = vpop.permute.xlu0 %1115
  %1117 = vrot.lane.b32.xlu0 %v1110, 116
  %v1118 = vpop.permute.xlu0 %1117
  %v1123 = vadd.f32 %v1076, %v1112
  %v1124 = vadd.f32 %v1077, %v1114
  %v1125 = vadd.f32 %v1078, %v1116
  %v1126 = vadd.f32 %v1079, %v1118
  %v1127 = vld [vmem:[%s2 + $0x1c] sm:$0x1]
  %v1128 = vlaneseq
  %v1129 = vshrl.u32 %v1128, 7
  %v1130 = vsub.s32 0, %v1129
  %v1131 = vrot.slane %v1127, %v1130
  %1133 = vrot.lane.b32.xlu0 %v1131, 14
  %v1134 = vpop.permute.xlu0 %1133
  %v1136 = vmul.f32 %v38, %v1134
  %v1137 = vmul.f32 %v39, %v1134
  %v1138 = vmul.f32 %v40, %v1134
  %v1139 = vmul.f32 %v41, %v1134
  %v1140 = vmul.f32 %v42, %v1134
  %v1141 = vmul.f32 %v43, %v1134
  %v1148 = vrot.slane %v1136, 1
  %v1149 = vrot.slane %v1137, 1
  %v1150 = vsel %vm544, %v1148, %v1149
  %v1151 = vrot.slane %v1138, 1
  %v1152 = vsel %vm544, %v1149, %v1151
  %v1153 = vrot.slane %v1139, 1
  %v1154 = vrot.slane %v1140, 1
  %v1155 = vsel %vm544, %v1153, %v1154
  %v1156 = vrot.slane %v1141, 1
  %v1157 = vsel %vm544, %v1154, %v1156
  %1158 = vrot.lane.b32.xlu0 %v1150, 115
  %v1159 = vpop.permute.xlu0 %1158
  %1160 = vrot.lane.b32.xlu0 %v1152, 115
  %v1161 = vpop.permute.xlu0 %1160
  %1162 = vrot.lane.b32.xlu0 %v1155, 115
  %v1163 = vpop.permute.xlu0 %1162
  %1164 = vrot.lane.b32.xlu0 %v1157, 115
  %v1165 = vpop.permute.xlu0 %1164
  %v1170 = vadd.f32 %v1123, %v1159
  %v1171 = vadd.f32 %v1124, %v1161
  %v1172 = vadd.f32 %v1125, %v1163
  %v1173 = vadd.f32 %v1126, %v1165
  %v1174 = vld [vmem:[%s2 + $0x1d] sm:$0x1]
  %v1175 = vlaneseq
  %v1176 = vshrl.u32 %v1175, 7
  %v1177 = vsub.s32 0, %v1176
  %v1178 = vrot.slane %v1174, %v1177
  %1180 = vrot.lane.b32.xlu0 %v1178, 15
  %v1181 = vpop.permute.xlu0 %1180
  %v1183 = vmul.f32 %v38, %v1181
  %v1184 = vmul.f32 %v39, %v1181
  %v1185 = vmul.f32 %v40, %v1181
  %v1186 = vmul.f32 %v41, %v1181
  %v1187 = vmul.f32 %v42, %v1181
  %v1188 = vmul.f32 %v43, %v1181
  %v1195 = vrot.slane %v1183, 1
  %v1196 = vrot.slane %v1184, 1
  %v1197 = vsel %vm544, %v1195, %v1196
  %v1198 = vrot.slane %v1185, 1
  %v1199 = vsel %vm544, %v1196, %v1198
  %v1200 = vrot.slane %v1186, 1
  %v1201 = vrot.slane %v1187, 1
  %v1202 = vsel %vm544, %v1200, %v1201
  %v1203 = vrot.slane %v1188, 1
  %v1204 = vsel %vm544, %v1201, %v1203
  %1205 = vrot.lane.b32.xlu0 %v1197, 114
  %v1206 = vpop.permute.xlu0 %1205
  %1207 = vrot.lane.b32.xlu0 %v1199, 114
  %v1208 = vpop.permute.xlu0 %1207
  %1209 = vrot.lane.b32.xlu0 %v1202, 114
  %v1210 = vpop.permute.xlu0 %1209
  %1211 = vrot.lane.b32.xlu0 %v1204, 114
  %v1212 = vpop.permute.xlu0 %1211
  %v1217 = vadd.f32 %v1170, %v1206
  %v1218 = vadd.f32 %v1171, %v1208
  %v1219 = vadd.f32 %v1172, %v1210
  %v1220 = vadd.f32 %v1173, %v1212
  %v1221 = vld [vmem:[%s2 + $0x1e] sm:$0x1]
  %v1222 = vlaneseq
  %v1223 = vshrl.u32 %v1222, 7
  %v1224 = vsub.s32 0, %v1223
  %v1225 = vrot.slane %v1221, %v1224
  %1227 = vrot.lane.b32.xlu0 %v1225, 1
  %v1228 = vpop.permute.xlu0 %1227
  %v1230 = vmul.f32 %v38, %v1228
  %v1231 = vmul.f32 %v39, %v1228
  %v1232 = vmul.f32 %v40, %v1228
  %v1233 = vmul.f32 %v41, %v1228
  %v1234 = vmul.f32 %v42, %v1228
  %v1235 = vmul.f32 %v43, %v1228
  %vm1242 = vcmask 1045504
  %v1243 = vrot.slane %v1230, 2
  %v1244 = vrot.slane %v1231, 2
  %v1245 = vsel %vm1242, %v1243, %v1244
  %v1246 = vrot.slane %v1232, 2
  %v1247 = vsel %vm1242, %v1244, %v1246
  %v1248 = vrot.slane %v1233, 2
  %v1249 = vrot.slane %v1234, 2
  %v1250 = vsel %vm1242, %v1248, %v1249
  %v1251 = vrot.slane %v1235, 2
  %v1252 = vsel %vm1242, %v1249, %v1251
  %v1257 = vadd.f32 %v1217, %v1245
  %v1258 = vadd.f32 %v1218, %v1247
  %v1259 = vadd.f32 %v1219, %v1250
  %v1260 = vadd.f32 %v1220, %v1252
  %v1261 = vld [vmem:[%s2 + $0x1f] sm:$0x1]
  %v1262 = vlaneseq
  %v1263 = vshrl.u32 %v1262, 7
  %v1264 = vsub.s32 0, %v1263
  %v1265 = vrot.slane %v1261, %v1264
  %1267 = vrot.lane.b32.xlu0 %v1265, 2
  %v1268 = vpop.permute.xlu0 %1267
  %v1270 = vmul.f32 %v38, %v1268
  %v1271 = vmul.f32 %v39, %v1268
  %v1272 = vmul.f32 %v40, %v1268
  %v1273 = vmul.f32 %v41, %v1268
  %v1274 = vmul.f32 %v42, %v1268
  %v1275 = vmul.f32 %v43, %v1268
  %v1282 = vrot.slane %v1270, 2
  %v1283 = vrot.slane %v1271, 2
  %v1284 = vsel %vm1242, %v1282, %v1283
  %v1285 = vrot.slane %v1272, 2
  %v1286 = vsel %vm1242, %v1283, %v1285
  %v1287 = vrot.slane %v1273, 2
  %v1288 = vrot.slane %v1274, 2
  %v1289 = vsel %vm1242, %v1287, %v1288
  %v1290 = vrot.slane %v1275, 2
  %v1291 = vsel %vm1242, %v1288, %v1290
  %1292 = vrot.lane.b32.xlu0 %v1284, 127
  %v1293 = vpop.permute.xlu0 %1292
  %1294 = vrot.lane.b32.xlu0 %v1286, 127
  %v1295 = vpop.permute.xlu0 %1294
  %1296 = vrot.lane.b32.xlu0 %v1289, 127
  %v1297 = vpop.permute.xlu0 %1296
  %1298 = vrot.lane.b32.xlu0 %v1291, 127
  %v1299 = vpop.permute.xlu0 %1298
  %v1304 = vadd.f32 %v1257, %v1293
  %v1305 = vadd.f32 %v1258, %v1295
  %v1306 = vadd.f32 %v1259, %v1297
  %v1307 = vadd.f32 %v1260, %v1299
  %v1308 = vld [vmem:[%s2 + $0x20] sm:$0x1]
  %v1309 = vlaneseq
  %v1310 = vshrl.u32 %v1309, 7
  %v1311 = vsub.s32 0, %v1310
  %v1312 = vrot.slane %v1308, %v1311
  %1314 = vrot.lane.b32.xlu0 %v1312, 3
  %v1315 = vpop.permute.xlu0 %1314
  %v1317 = vmul.f32 %v38, %v1315
  %v1318 = vmul.f32 %v39, %v1315
  %v1319 = vmul.f32 %v40, %v1315
  %v1320 = vmul.f32 %v41, %v1315
  %v1321 = vmul.f32 %v42, %v1315
  %v1322 = vmul.f32 %v43, %v1315
  %v1329 = vrot.slane %v1317, 2
  %v1330 = vrot.slane %v1318, 2
  %v1331 = vsel %vm1242, %v1329, %v1330
  %v1332 = vrot.slane %v1319, 2
  %v1333 = vsel %vm1242, %v1330, %v1332
  %v1334 = vrot.slane %v1320, 2
  %v1335 = vrot.slane %v1321, 2
  %v1336 = vsel %vm1242, %v1334, %v1335
  %v1337 = vrot.slane %v1322, 2
  %v1338 = vsel %vm1242, %v1335, %v1337
  %1339 = vrot.lane.b32.xlu0 %v1331, 126
  %v1340 = vpop.permute.xlu0 %1339
  %1341 = vrot.lane.b32.xlu0 %v1333, 126
  %v1342 = vpop.permute.xlu0 %1341
  %1343 = vrot.lane.b32.xlu0 %v1336, 126
  %v1344 = vpop.permute.xlu0 %1343
  %1345 = vrot.lane.b32.xlu0 %v1338, 126
  %v1346 = vpop.permute.xlu0 %1345
  %v1351 = vadd.f32 %v1304, %v1340
  %v1352 = vadd.f32 %v1305, %v1342
  %v1353 = vadd.f32 %v1306, %v1344
  %v1354 = vadd.f32 %v1307, %v1346
  %v1355 = vld [vmem:[%s2 + $0x21] sm:$0x1]
  %v1356 = vlaneseq
  %v1357 = vshrl.u32 %v1356, 7
  %v1358 = vsub.s32 0, %v1357
  %v1359 = vrot.slane %v1355, %v1358
  %1361 = vrot.lane.b32.xlu0 %v1359, 4
  %v1362 = vpop.permute.xlu0 %1361
  %v1364 = vmul.f32 %v38, %v1362
  %v1365 = vmul.f32 %v39, %v1362
  %v1366 = vmul.f32 %v40, %v1362
  %v1367 = vmul.f32 %v41, %v1362
  %v1368 = vmul.f32 %v42, %v1362
  %v1369 = vmul.f32 %v43, %v1362
  %v1376 = vrot.slane %v1364, 2
  %v1377 = vrot.slane %v1365, 2
  %v1378 = vsel %vm1242, %v1376, %v1377
  %v1379 = vrot.slane %v1366, 2
  %v1380 = vsel %vm1242, %v1377, %v1379
  %v1381 = vrot.slane %v1367, 2
  %v1382 = vrot.slane %v1368, 2
  %v1383 = vsel %vm1242, %v1381, %v1382
  %v1384 = vrot.slane %v1369, 2
  %v1385 = vsel %vm1242, %v1382, %v1384
  %1386 = vrot.lane.b32.xlu0 %v1378, 125
  %v1387 = vpop.permute.xlu0 %1386
  %1388 = vrot.lane.b32.xlu0 %v1380, 125
  %v1389 = vpop.permute.xlu0 %1388
  %1390 = vrot.lane.b32.xlu0 %v1383, 125
  %v1391 = vpop.permute.xlu0 %1390
  %1392 = vrot.lane.b32.xlu0 %v1385, 125
  %v1393 = vpop.permute.xlu0 %1392
  %v1398 = vadd.f32 %v1351, %v1387
  %v1399 = vadd.f32 %v1352, %v1389
  %v1400 = vadd.f32 %v1353, %v1391
  %v1401 = vadd.f32 %v1354, %v1393
  %v1402 = vld [vmem:[%s2 + $0x22] sm:$0x1]
  %v1403 = vlaneseq
  %v1404 = vshrl.u32 %v1403, 7
  %v1405 = vsub.s32 0, %v1404
  %v1406 = vrot.slane %v1402, %v1405
  %1408 = vrot.lane.b32.xlu0 %v1406, 5
  %v1409 = vpop.permute.xlu0 %1408
  %v1411 = vmul.f32 %v38, %v1409
  %v1412 = vmul.f32 %v39, %v1409
  %v1413 = vmul.f32 %v40, %v1409
  %v1414 = vmul.f32 %v41, %v1409
  %v1415 = vmul.f32 %v42, %v1409
  %v1416 = vmul.f32 %v43, %v1409
  %v1423 = vrot.slane %v1411, 2
  %v1424 = vrot.slane %v1412, 2
  %v1425 = vsel %vm1242, %v1423, %v1424
  %v1426 = vrot.slane %v1413, 2
  %v1427 = vsel %vm1242, %v1424, %v1426
  %v1428 = vrot.slane %v1414, 2
  %v1429 = vrot.slane %v1415, 2
  %v1430 = vsel %vm1242, %v1428, %v1429
  %v1431 = vrot.slane %v1416, 2
  %v1432 = vsel %vm1242, %v1429, %v1431
  %1433 = vrot.lane.b32.xlu0 %v1425, 124
  %v1434 = vpop.permute.xlu0 %1433
  %1435 = vrot.lane.b32.xlu0 %v1427, 124
  %v1436 = vpop.permute.xlu0 %1435
  %1437 = vrot.lane.b32.xlu0 %v1430, 124
  %v1438 = vpop.permute.xlu0 %1437
  %1439 = vrot.lane.b32.xlu0 %v1432, 124
  %v1440 = vpop.permute.xlu0 %1439
  %v1445 = vadd.f32 %v1398, %v1434
  %v1446 = vadd.f32 %v1399, %v1436
  %v1447 = vadd.f32 %v1400, %v1438
  %v1448 = vadd.f32 %v1401, %v1440
  %v1449 = vld [vmem:[%s2 + $0x23] sm:$0x1]
  %v1450 = vlaneseq
  %v1451 = vshrl.u32 %v1450, 7
  %v1452 = vsub.s32 0, %v1451
  %v1453 = vrot.slane %v1449, %v1452
  %1455 = vrot.lane.b32.xlu0 %v1453, 6
  %v1456 = vpop.permute.xlu0 %1455
  %v1458 = vmul.f32 %v38, %v1456
  %v1459 = vmul.f32 %v39, %v1456
  %v1460 = vmul.f32 %v40, %v1456
  %v1461 = vmul.f32 %v41, %v1456
  %v1462 = vmul.f32 %v42, %v1456
  %v1463 = vmul.f32 %v43, %v1456
  %v1470 = vrot.slane %v1458, 2
  %v1471 = vrot.slane %v1459, 2
  %v1472 = vsel %vm1242, %v1470, %v1471
  %v1473 = vrot.slane %v1460, 2
  %v1474 = vsel %vm1242, %v1471, %v1473
  %v1475 = vrot.slane %v1461, 2
  %v1476 = vrot.slane %v1462, 2
  %v1477 = vsel %vm1242, %v1475, %v1476
  %v1478 = vrot.slane %v1463, 2
  %v1479 = vsel %vm1242, %v1476, %v1478
  %1480 = vrot.lane.b32.xlu0 %v1472, 123
  %v1481 = vpop.permute.xlu0 %1480
  %1482 = vrot.lane.b32.xlu0 %v1474, 123
  %v1483 = vpop.permute.xlu0 %1482
  %1484 = vrot.lane.b32.xlu0 %v1477, 123
  %v1485 = vpop.permute.xlu0 %1484
  %1486 = vrot.lane.b32.xlu0 %v1479, 123
  %v1487 = vpop.permute.xlu0 %1486
  %v1492 = vadd.f32 %v1445, %v1481
  %v1493 = vadd.f32 %v1446, %v1483
  %v1494 = vadd.f32 %v1447, %v1485
  %v1495 = vadd.f32 %v1448, %v1487
  %v1496 = vld [vmem:[%s2 + $0x24] sm:$0x1]
  %v1497 = vlaneseq
  %v1498 = vshrl.u32 %v1497, 7
  %v1499 = vsub.s32 0, %v1498
  %v1500 = vrot.slane %v1496, %v1499
  %1502 = vrot.lane.b32.xlu0 %v1500, 7
  %v1503 = vpop.permute.xlu0 %1502
  %v1505 = vmul.f32 %v38, %v1503
  %v1506 = vmul.f32 %v39, %v1503
  %v1507 = vmul.f32 %v40, %v1503
  %v1508 = vmul.f32 %v41, %v1503
  %v1509 = vmul.f32 %v42, %v1503
  %v1510 = vmul.f32 %v43, %v1503
  %v1517 = vrot.slane %v1505, 2
  %v1518 = vrot.slane %v1506, 2
  %v1519 = vsel %vm1242, %v1517, %v1518
  %v1520 = vrot.slane %v1507, 2
  %v1521 = vsel %vm1242, %v1518, %v1520
  %v1522 = vrot.slane %v1508, 2
  %v1523 = vrot.slane %v1509, 2
  %v1524 = vsel %vm1242, %v1522, %v1523
  %v1525 = vrot.slane %v1510, 2
  %v1526 = vsel %vm1242, %v1523, %v1525
  %1527 = vrot.lane.b32.xlu0 %v1519, 122
  %v1528 = vpop.permute.xlu0 %1527
  %1529 = vrot.lane.b32.xlu0 %v1521, 122
  %v1530 = vpop.permute.xlu0 %1529
  %1531 = vrot.lane.b32.xlu0 %v1524, 122
  %v1532 = vpop.permute.xlu0 %1531
  %1533 = vrot.lane.b32.xlu0 %v1526, 122
  %v1534 = vpop.permute.xlu0 %1533
  %v1539 = vadd.f32 %v1492, %v1528
  %v1540 = vadd.f32 %v1493, %v1530
  %v1541 = vadd.f32 %v1494, %v1532
  %v1542 = vadd.f32 %v1495, %v1534
  %v1543 = vld [vmem:[%s2 + $0x25] sm:$0x1]
  %v1544 = vlaneseq
  %v1545 = vshrl.u32 %v1544, 7
  %v1546 = vsub.s32 0, %v1545
  %v1547 = vrot.slane %v1543, %v1546
  %1549 = vrot.lane.b32.xlu0 %v1547, 8
  %v1550 = vpop.permute.xlu0 %1549
  %v1552 = vmul.f32 %v38, %v1550
  %v1553 = vmul.f32 %v39, %v1550
  %v1554 = vmul.f32 %v40, %v1550
  %v1555 = vmul.f32 %v41, %v1550
  %v1556 = vmul.f32 %v42, %v1550
  %v1557 = vmul.f32 %v43, %v1550
  %v1564 = vrot.slane %v1552, 2
  %v1565 = vrot.slane %v1553, 2
  %v1566 = vsel %vm1242, %v1564, %v1565
  %v1567 = vrot.slane %v1554, 2
  %v1568 = vsel %vm1242, %v1565, %v1567
  %v1569 = vrot.slane %v1555, 2
  %v1570 = vrot.slane %v1556, 2
  %v1571 = vsel %vm1242, %v1569, %v1570
  %v1572 = vrot.slane %v1557, 2
  %v1573 = vsel %vm1242, %v1570, %v1572
  %1574 = vrot.lane.b32.xlu0 %v1566, 121
  %v1575 = vpop.permute.xlu0 %1574
  %1576 = vrot.lane.b32.xlu0 %v1568, 121
  %v1577 = vpop.permute.xlu0 %1576
  %1578 = vrot.lane.b32.xlu0 %v1571, 121
  %v1579 = vpop.permute.xlu0 %1578
  %1580 = vrot.lane.b32.xlu0 %v1573, 121
  %v1581 = vpop.permute.xlu0 %1580
  %v1586 = vadd.f32 %v1539, %v1575
  %v1587 = vadd.f32 %v1540, %v1577
  %v1588 = vadd.f32 %v1541, %v1579
  %v1589 = vadd.f32 %v1542, %v1581
  %v1590 = vld [vmem:[%s2 + $0x26] sm:$0x1]
  %v1591 = vlaneseq
  %v1592 = vshrl.u32 %v1591, 7
  %v1593 = vsub.s32 0, %v1592
  %v1594 = vrot.slane %v1590, %v1593
  %1596 = vrot.lane.b32.xlu0 %v1594, 9
  %v1597 = vpop.permute.xlu0 %1596
  %v1599 = vmul.f32 %v38, %v1597
  %v1600 = vmul.f32 %v39, %v1597
  %v1601 = vmul.f32 %v40, %v1597
  %v1602 = vmul.f32 %v41, %v1597
  %v1603 = vmul.f32 %v42, %v1597
  %v1604 = vmul.f32 %v43, %v1597
  %v1611 = vrot.slane %v1599, 2
  %v1612 = vrot.slane %v1600, 2
  %v1613 = vsel %vm1242, %v1611, %v1612
  %v1614 = vrot.slane %v1601, 2
  %v1615 = vsel %vm1242, %v1612, %v1614
  %v1616 = vrot.slane %v1602, 2
  %v1617 = vrot.slane %v1603, 2
  %v1618 = vsel %vm1242, %v1616, %v1617
  %v1619 = vrot.slane %v1604, 2
  %v1620 = vsel %vm1242, %v1617, %v1619
  %1621 = vrot.lane.b32.xlu0 %v1613, 120
  %v1622 = vpop.permute.xlu0 %1621
  %1623 = vrot.lane.b32.xlu0 %v1615, 120
  %v1624 = vpop.permute.xlu0 %1623
  %1625 = vrot.lane.b32.xlu0 %v1618, 120
  %v1626 = vpop.permute.xlu0 %1625
  %1627 = vrot.lane.b32.xlu0 %v1620, 120
  %v1628 = vpop.permute.xlu0 %1627
  %v1633 = vadd.f32 %v1586, %v1622
  %v1634 = vadd.f32 %v1587, %v1624
  %v1635 = vadd.f32 %v1588, %v1626
  %v1636 = vadd.f32 %v1589, %v1628
  %v1637 = vld [vmem:[%s2 + $0x27] sm:$0x1]
  %v1638 = vlaneseq
  %v1639 = vshrl.u32 %v1638, 7
  %v1640 = vsub.s32 0, %v1639
  %v1641 = vrot.slane %v1637, %v1640
  %1643 = vrot.lane.b32.xlu0 %v1641, 10
  %v1644 = vpop.permute.xlu0 %1643
  %v1646 = vmul.f32 %v38, %v1644
  %v1647 = vmul.f32 %v39, %v1644
  %v1648 = vmul.f32 %v40, %v1644
  %v1649 = vmul.f32 %v41, %v1644
  %v1650 = vmul.f32 %v42, %v1644
  %v1651 = vmul.f32 %v43, %v1644
  %v1658 = vrot.slane %v1646, 2
  %v1659 = vrot.slane %v1647, 2
  %v1660 = vsel %vm1242, %v1658, %v1659
  %v1661 = vrot.slane %v1648, 2
  %v1662 = vsel %vm1242, %v1659, %v1661
  %v1663 = vrot.slane %v1649, 2
  %v1664 = vrot.slane %v1650, 2
  %v1665 = vsel %vm1242, %v1663, %v1664
  %v1666 = vrot.slane %v1651, 2
  %v1667 = vsel %vm1242, %v1664, %v1666
  %1668 = vrot.lane.b32.xlu0 %v1660, 119
  %v1669 = vpop.permute.xlu0 %1668
  %1670 = vrot.lane.b32.xlu0 %v1662, 119
  %v1671 = vpop.permute.xlu0 %1670
  %1672 = vrot.lane.b32.xlu0 %v1665, 119
  %v1673 = vpop.permute.xlu0 %1672
  %1674 = vrot.lane.b32.xlu0 %v1667, 119
  %v1675 = vpop.permute.xlu0 %1674
  %v1680 = vadd.f32 %v1633, %v1669
  %v1681 = vadd.f32 %v1634, %v1671
  %v1682 = vadd.f32 %v1635, %v1673
  %v1683 = vadd.f32 %v1636, %v1675
  %v1684 = vld [vmem:[%s2 + $0x28] sm:$0x1]
  %v1685 = vlaneseq
  %v1686 = vshrl.u32 %v1685, 7
  %v1687 = vsub.s32 0, %v1686
  %v1688 = vrot.slane %v1684, %v1687
  %1690 = vrot.lane.b32.xlu0 %v1688, 11
  %v1691 = vpop.permute.xlu0 %1690
  %v1693 = vmul.f32 %v38, %v1691
  %v1694 = vmul.f32 %v39, %v1691
  %v1695 = vmul.f32 %v40, %v1691
  %v1696 = vmul.f32 %v41, %v1691
  %v1697 = vmul.f32 %v42, %v1691
  %v1698 = vmul.f32 %v43, %v1691
  %v1705 = vrot.slane %v1693, 2
  %v1706 = vrot.slane %v1694, 2
  %v1707 = vsel %vm1242, %v1705, %v1706
  %v1708 = vrot.slane %v1695, 2
  %v1709 = vsel %vm1242, %v1706, %v1708
  %v1710 = vrot.slane %v1696, 2
  %v1711 = vrot.slane %v1697, 2
  %v1712 = vsel %vm1242, %v1710, %v1711
  %v1713 = vrot.slane %v1698, 2
  %v1714 = vsel %vm1242, %v1711, %v1713
  %1715 = vrot.lane.b32.xlu0 %v1707, 118
  %v1716 = vpop.permute.xlu0 %1715
  %1717 = vrot.lane.b32.xlu0 %v1709, 118
  %v1718 = vpop.permute.xlu0 %1717
  %1719 = vrot.lane.b32.xlu0 %v1712, 118
  %v1720 = vpop.permute.xlu0 %1719
  %1721 = vrot.lane.b32.xlu0 %v1714, 118
  %v1722 = vpop.permute.xlu0 %1721
  %v1727 = vadd.f32 %v1680, %v1716
  %v1728 = vadd.f32 %v1681, %v1718
  %v1729 = vadd.f32 %v1682, %v1720
  %v1730 = vadd.f32 %v1683, %v1722
  %v1731 = vld [vmem:[%s2 + $0x29] sm:$0x1]
  %v1732 = vlaneseq
  %v1733 = vshrl.u32 %v1732, 7
  %v1734 = vsub.s32 0, %v1733
  %v1735 = vrot.slane %v1731, %v1734
  %1737 = vrot.lane.b32.xlu0 %v1735, 12
  %v1738 = vpop.permute.xlu0 %1737
  %v1740 = vmul.f32 %v38, %v1738
  %v1741 = vmul.f32 %v39, %v1738
  %v1742 = vmul.f32 %v40, %v1738
  %v1743 = vmul.f32 %v41, %v1738
  %v1744 = vmul.f32 %v42, %v1738
  %v1745 = vmul.f32 %v43, %v1738
  %v1752 = vrot.slane %v1740, 2
  %v1753 = vrot.slane %v1741, 2
  %v1754 = vsel %vm1242, %v1752, %v1753
  %v1755 = vrot.slane %v1742, 2
  %v1756 = vsel %vm1242, %v1753, %v1755
  %v1757 = vrot.slane %v1743, 2
  %v1758 = vrot.slane %v1744, 2
  %v1759 = vsel %vm1242, %v1757, %v1758
  %v1760 = vrot.slane %v1745, 2
  %v1761 = vsel %vm1242, %v1758, %v1760
  %1762 = vrot.lane.b32.xlu0 %v1754, 117
  %v1763 = vpop.permute.xlu0 %1762
  %1764 = vrot.lane.b32.xlu0 %v1756, 117
  %v1765 = vpop.permute.xlu0 %1764
  %1766 = vrot.lane.b32.xlu0 %v1759, 117
  %v1767 = vpop.permute.xlu0 %1766
  %1768 = vrot.lane.b32.xlu0 %v1761, 117
  %v1769 = vpop.permute.xlu0 %1768
  %v1774 = vadd.f32 %v1727, %v1763
  %v1775 = vadd.f32 %v1728, %v1765
  %v1776 = vadd.f32 %v1729, %v1767
  %v1777 = vadd.f32 %v1730, %v1769
  %v1778 = vld [vmem:[%s2 + $0x2a] sm:$0x1]
  %v1779 = vlaneseq
  %v1780 = vshrl.u32 %v1779, 7
  %v1781 = vsub.s32 0, %v1780
  %v1782 = vrot.slane %v1778, %v1781
  %1784 = vrot.lane.b32.xlu0 %v1782, 13
  %v1785 = vpop.permute.xlu0 %1784
  %v1787 = vmul.f32 %v38, %v1785
  %v1788 = vmul.f32 %v39, %v1785
  %v1789 = vmul.f32 %v40, %v1785
  %v1790 = vmul.f32 %v41, %v1785
  %v1791 = vmul.f32 %v42, %v1785
  %v1792 = vmul.f32 %v43, %v1785
  %v1799 = vrot.slane %v1787, 2
  %v1800 = vrot.slane %v1788, 2
  %v1801 = vsel %vm1242, %v1799, %v1800
  %v1802 = vrot.slane %v1789, 2
  %v1803 = vsel %vm1242, %v1800, %v1802
  %v1804 = vrot.slane %v1790, 2
  %v1805 = vrot.slane %v1791, 2
  %v1806 = vsel %vm1242, %v1804, %v1805
  %v1807 = vrot.slane %v1792, 2
  %v1808 = vsel %vm1242, %v1805, %v1807
  %1809 = vrot.lane.b32.xlu0 %v1801, 116
  %v1810 = vpop.permute.xlu0 %1809
  %1811 = vrot.lane.b32.xlu0 %v1803, 116
  %v1812 = vpop.permute.xlu0 %1811
  %1813 = vrot.lane.b32.xlu0 %v1806, 116
  %v1814 = vpop.permute.xlu0 %1813
  %1815 = vrot.lane.b32.xlu0 %v1808, 116
  %v1816 = vpop.permute.xlu0 %1815
  %v1821 = vadd.f32 %v1774, %v1810
  %v1822 = vadd.f32 %v1775, %v1812
  %v1823 = vadd.f32 %v1776, %v1814
  %v1824 = vadd.f32 %v1777, %v1816
  %v1825 = vld [vmem:[%s2 + $0x2b] sm:$0x1]
  %v1826 = vlaneseq
  %v1827 = vshrl.u32 %v1826, 7
  %v1828 = vsub.s32 0, %v1827
  %v1829 = vrot.slane %v1825, %v1828
  %1831 = vrot.lane.b32.xlu0 %v1829, 14
  %v1832 = vpop.permute.xlu0 %1831
  %v1834 = vmul.f32 %v38, %v1832
  %v1835 = vmul.f32 %v39, %v1832
  %v1836 = vmul.f32 %v40, %v1832
  %v1837 = vmul.f32 %v41, %v1832
  %v1838 = vmul.f32 %v42, %v1832
  %v1839 = vmul.f32 %v43, %v1832
  %v1846 = vrot.slane %v1834, 2
  %v1847 = vrot.slane %v1835, 2
  %v1848 = vsel %vm1242, %v1846, %v1847
  %v1849 = vrot.slane %v1836, 2
  %v1850 = vsel %vm1242, %v1847, %v1849
  %v1851 = vrot.slane %v1837, 2
  %v1852 = vrot.slane %v1838, 2
  %v1853 = vsel %vm1242, %v1851, %v1852
  %v1854 = vrot.slane %v1839, 2
  %v1855 = vsel %vm1242, %v1852, %v1854
  %1856 = vrot.lane.b32.xlu0 %v1848, 115
  %v1857 = vpop.permute.xlu0 %1856
  %1858 = vrot.lane.b32.xlu0 %v1850, 115
  %v1859 = vpop.permute.xlu0 %1858
  %1860 = vrot.lane.b32.xlu0 %v1853, 115
  %v1861 = vpop.permute.xlu0 %1860
  %1862 = vrot.lane.b32.xlu0 %v1855, 115
  %v1863 = vpop.permute.xlu0 %1862
  %v1868 = vadd.f32 %v1821, %v1857
  %v1869 = vadd.f32 %v1822, %v1859
  %v1870 = vadd.f32 %v1823, %v1861
  %v1871 = vadd.f32 %v1824, %v1863
  %v1872 = vld [vmem:[%s2 + $0x2c] sm:$0x1]
  %v1873 = vlaneseq
  %v1874 = vshrl.u32 %v1873, 7
  %v1875 = vsub.s32 0, %v1874
  %v1876 = vrot.slane %v1872, %v1875
  %1878 = vrot.lane.b32.xlu0 %v1876, 15
  %v1879 = vpop.permute.xlu0 %1878
  %v1881 = vmul.f32 %v38, %v1879
  %v1882 = vmul.f32 %v39, %v1879
  %v1883 = vmul.f32 %v40, %v1879
  %v1884 = vmul.f32 %v41, %v1879
  %v1885 = vmul.f32 %v42, %v1879
  %v1886 = vmul.f32 %v43, %v1879
  %v1893 = vrot.slane %v1881, 2
  %v1894 = vrot.slane %v1882, 2
  %v1895 = vsel %vm1242, %v1893, %v1894
  %v1896 = vrot.slane %v1883, 2
  %v1897 = vsel %vm1242, %v1894, %v1896
  %v1898 = vrot.slane %v1884, 2
  %v1899 = vrot.slane %v1885, 2
  %v1900 = vsel %vm1242, %v1898, %v1899
  %v1901 = vrot.slane %v1886, 2
  %v1902 = vsel %vm1242, %v1899, %v1901
  %1903 = vrot.lane.b32.xlu0 %v1895, 114
  %v1904 = vpop.permute.xlu0 %1903
  %1905 = vrot.lane.b32.xlu0 %v1897, 114
  %v1906 = vpop.permute.xlu0 %1905
  %1907 = vrot.lane.b32.xlu0 %v1900, 114
  %v1908 = vpop.permute.xlu0 %1907
  %1909 = vrot.lane.b32.xlu0 %v1902, 114
  %v1910 = vpop.permute.xlu0 %1909
  %v1915 = vadd.f32 %v1868, %v1904
  %v1916 = vadd.f32 %v1869, %v1906
  %v1917 = vadd.f32 %v1870, %v1908
  %v1918 = vadd.f32 %v1871, %v1910
  %v1919 = vld [vmem:[%s5] sm:$0x1]
  %v1921 = vlaneseq
  %v1922 = vshrl.u32 %v1921, 7
  %v1923 = vsub.s32 0, %v1922
  %v1924 = vrot.slane %v1919, %v1923
  %1925 = vrot.lane.b32.xlu0 %v1924, 1
  %v1926 = vpop.permute.xlu0 %1925
  %v1928 = vadd.f32 %v1915, %v1926
  %v1929 = vadd.f32 %v1916, %v1926
  %v1930 = vadd.f32 %v1917, %v1926
  %v1931 = vadd.f32 %v1918, %v1926
  %vm1932 = vcmask 531464
  %v1933 = vsel %vm1932, %v1928, 0.0
  %v1934 = vsel %vm1932, %v1929, 0.0
  %v1935 = vadd.f32 %v1933, %v1934
  %v1936 = vsel %vm1932, %v1930, 0.0
  %v1937 = vadd.f32 %v1935, %v1936
  %v1938 = vsel %vm1932, %v1931, 0.0
  %v1939 = vadd.f32 %v1937, %v1938
  %v1940 = vrot.slane %v1939, 4
  %v1941 = vadd.f32 %v1939, %v1940
  %v1942 = vrot.slane %v1941, 2
  %v1943 = vadd.f32 %v1941, %v1942
  %v1944 = vrot.slane %v1943, 1
  %v1945 = vadd.f32 %v1943, %v1944
  %v1946 = vmul.f32 %v1928, %v1928
  %v1947 = vmul.f32 %v1929, %v1929
  %v1948 = vmul.f32 %v1930, %v1930
  %v1949 = vmul.f32 %v1931, %v1931
  %v1950 = vsel %vm1932, %v1946, 0.0
  %v1951 = vsel %vm1932, %v1947, 0.0
  %v1952 = vadd.f32 %v1950, %v1951
  %v1953 = vsel %vm1932, %v1948, 0.0
  %v1954 = vadd.f32 %v1952, %v1953
  %v1955 = vsel %vm1932, %v1949, 0.0
  %v1956 = vadd.f32 %v1954, %v1955
  %v1957 = vrot.slane %v1956, 4
  %v1958 = vadd.f32 %v1956, %v1957
  %v1959 = vrot.slane %v1958, 2
  %v1960 = vadd.f32 %v1958, %v1959
  %v1961 = vrot.slane %v1960, 1
  %v1962 = vadd.f32 %v1960, %v1961
  %v1963 = vld [vmem:[%s4] sm:$0xff]
  %v1964 = vld [vmem:[%s4 + $0x8] sm:$0xff]
  %v1965 = vld [vmem:[%s4 + $0x10] sm:$0xff]
  %v1966 = vld [vmem:[%s4 + $0x18] sm:$0xff]
  %v1967 = vld [vmem:[%s4 + $0x20] sm:$0xff]
  %v1968 = vld [vmem:[%s4 + $0x28] sm:$0xff]
  %v1969 = vld [vmem:[%s4 + $0x30] sm:$0xff]
  %v1970 = vld [vmem:[%s4 + $0x38] sm:$0xff]
  %1972 = vrot.lane.b32.xlu0 %v1945, 127
  %v1973 = vpop.permute.xlu0 %1972
  %vm1974 = vcmask 523264
  %v1975 = vsel %vm1974, %v1973, 0
  %1977 = vmatprep.subr.mxu0 0.0
  %1978 = vmatpush1.msra.mxu0 %v1963
  %1979 = vmatprep.subr.mxu0 0.0
  %1980 = vmatpush1.msra.mxu0 %v1964
  %1981 = vmatprep.subr.mxu0 0.0
  %1982 = vmatpush1.msra.mxu0 %v1965
  %1983 = vmatprep.subr.mxu0 0.0
  %1984 = vmatpush1.msra.mxu0 %v1966
  %1985 = vmatprep.subr.mxu0 0.0
  %1986 = vmatpush1.msra.mxu0 %v1967
  %1987 = vmatprep.subr.mxu0 0.0
  %1988 = vmatpush1.msra.mxu0 %v1968
  %1989 = vmatprep.subr.mxu0 0.0
  %1990 = vmatpush1.msra.mxu0 %v1969
  %1991 = vmatprep.subr.mxu0 0.0
  %1992 = vmatpush1.msra.mxu0 %v1970
  %1993 = vmatprep.subr.mxu0 0.0
  %1994 = vmatpush1.msra.mxu0 0.0
  %1995 = vmatprep.subr.mxu0 0.0
  %1996 = vmatpush1.msra.mxu0 0.0
  %1997 = vmatprep.subr.mxu0 0.0
  %1998 = vmatpush1.msra.mxu0 0.0
  %1999 = vmatprep.subr.mxu0 0.0
  %2000 = vmatpush1.msra.mxu0 0.0
  %2001 = vmatprep.subr.mxu0 0.0
  %2002 = vmatpush1.msra.mxu0 0.0
  %2003 = vmatprep.subr.mxu0 0.0
  %2004 = vmatpush1.msra.mxu0 0.0
  %2005 = vmatprep.subr.mxu0 0.0
  %2006 = vmatpush1.msra.mxu0 0.0
  %2007 = vmatprep.subr.mxu0 0.0
  %2008 = vmatpush1.msra.mxu0 0.0
  %2009 = vmatprep.subr.mxu0 0.0
  %2010 = vmatpush1.msra.mxu0 0.0
  %2011 = vmatprep.subr.mxu0 0.0
  %2012 = vmatpush1.msra.mxu0 0.0
  %2013 = vmatprep.subr.mxu0 0.0
  %2014 = vmatpush1.msra.mxu0 0.0
  %2015 = vmatprep.subr.mxu0 0.0
  %2016 = vmatpush1.msra.mxu0 0.0
  %2017 = vmatprep.subr.mxu0 0.0
  %2018 = vmatpush1.msra.mxu0 0.0
  %2019 = vmatprep.subr.mxu0 0.0
  %2020 = vmatpush1.msra.mxu0 0.0
  %2021 = vmatprep.subr.mxu0 0.0
  %2022 = vmatpush1.msra.mxu0 0.0
  %2023 = vmatprep.subr.mxu0 0.0
  %2024 = vmatpush1.msra.mxu0 0.0
  %2025 = vmatprep.subr.mxu0 0.0
  %2026 = vmatpush1.msra.mxu0 0.0
  %2027 = vmatprep.subr.mxu0 0.0
  %2028 = vmatpush1.msra.mxu0 0.0
  %2029 = vmatprep.subr.mxu0 0.0
  %2030 = vmatpush1.msra.mxu0 0.0
  %2031 = vmatprep.subr.mxu0 0.0
  %2032 = vmatpush1.msra.mxu0 0.0
  %2033 = vmatprep.subr.mxu0 0.0
  %2034 = vmatpush1.msra.mxu0 0.0
  %2035 = vmatprep.subr.mxu0 0.0
  %2036 = vmatpush1.msra.mxu0 0.0
  %2037 = vmatprep.subr.mxu0 0.0
  %2038 = vmatpush1.msra.mxu0 0.0
  %2039 = vmatprep.subr.mxu0 0.0
  %2040 = vmatpush1.msra.mxu0 0.0
  %2041 = vmatprep.mubr.f32.mxu0 0.0
  %2042 = vmatmul.mubr.f32.gmra.mrb[0].mxu0 %v1975
  %v2043 = vpop.f32.mrb[0].mxu0
  %v2044 = vadd.f32 0.0, %v2043
  %v2045 = vpop.f32.mrb[0].mxu0
  %2046 = vdwg.mxu0
  %v2047 = vmul.f32 %v2044, 0.001953125
  %2049 = vrot.lane.b32.xlu0 %v1962, 127
  %v2050 = vpop.permute.xlu0 %2049
  %v2051 = vsel %vm1974, %v2050, 0
  %2053 = vmatprep.subr.mxu0 0.0
  %2054 = vmatpush1.msra.mxu0 %v1963
  %2055 = vmatprep.subr.mxu0 0.0
  %2056 = vmatpush1.msra.mxu0 %v1964
  %2057 = vmatprep.subr.mxu0 0.0
  %2058 = vmatpush1.msra.mxu0 %v1965
  %2059 = vmatprep.subr.mxu0 0.0
  %2060 = vmatpush1.msra.mxu0 %v1966
  %2061 = vmatprep.subr.mxu0 0.0
  %2062 = vmatpush1.msra.mxu0 %v1967
  %2063 = vmatprep.subr.mxu0 0.0
  %2064 = vmatpush1.msra.mxu0 %v1968
  %2065 = vmatprep.subr.mxu0 0.0
  %2066 = vmatpush1.msra.mxu0 %v1969
  %2067 = vmatprep.subr.mxu0 0.0
  %2068 = vmatpush1.msra.mxu0 %v1970
  %2069 = vmatprep.subr.mxu0 0.0
  %2070 = vmatpush1.msra.mxu0 0.0
  %2071 = vmatprep.subr.mxu0 0.0
  %2072 = vmatpush1.msra.mxu0 0.0
  %2073 = vmatprep.subr.mxu0 0.0
  %2074 = vmatpush1.msra.mxu0 0.0
  %2075 = vmatprep.subr.mxu0 0.0
  %2076 = vmatpush1.msra.mxu0 0.0
  %2077 = vmatprep.subr.mxu0 0.0
  %2078 = vmatpush1.msra.mxu0 0.0
  %2079 = vmatprep.subr.mxu0 0.0
  %2080 = vmatpush1.msra.mxu0 0.0
  %2081 = vmatprep.subr.mxu0 0.0
  %2082 = vmatpush1.msra.mxu0 0.0
  %2083 = vmatprep.subr.mxu0 0.0
  %2084 = vmatpush1.msra.mxu0 0.0
  %2085 = vmatprep.subr.mxu0 0.0
  %2086 = vmatpush1.msra.mxu0 0.0
  %2087 = vmatprep.subr.mxu0 0.0
  %2088 = vmatpush1.msra.mxu0 0.0
  %2089 = vmatprep.subr.mxu0 0.0
  %2090 = vmatpush1.msra.mxu0 0.0
  %2091 = vmatprep.subr.mxu0 0.0
  %2092 = vmatpush1.msra.mxu0 0.0
  %2093 = vmatprep.subr.mxu0 0.0
  %2094 = vmatpush1.msra.mxu0 0.0
  %2095 = vmatprep.subr.mxu0 0.0
  %2096 = vmatpush1.msra.mxu0 0.0
  %2097 = vmatprep.subr.mxu0 0.0
  %2098 = vmatpush1.msra.mxu0 0.0
  %2099 = vmatprep.subr.mxu0 0.0
  %2100 = vmatpush1.msra.mxu0 0.0
  %2101 = vmatprep.subr.mxu0 0.0
  %2102 = vmatpush1.msra.mxu0 0.0
  %2103 = vmatprep.subr.mxu0 0.0
  %2104 = vmatpush1.msra.mxu0 0.0
  %2105 = vmatprep.subr.mxu0 0.0
  %2106 = vmatpush1.msra.mxu0 0.0
  %2107 = vmatprep.subr.mxu0 0.0
  %2108 = vmatpush1.msra.mxu0 0.0
  %2109 = vmatprep.subr.mxu0 0.0
  %2110 = vmatpush1.msra.mxu0 0.0
  %2111 = vmatprep.subr.mxu0 0.0
  %2112 = vmatpush1.msra.mxu0 0.0
  %2113 = vmatprep.subr.mxu0 0.0
  %2114 = vmatpush1.msra.mxu0 0.0
  %2115 = vmatprep.subr.mxu0 0.0
  %2116 = vmatpush1.msra.mxu0 0.0
  %2117 = vmatprep.mubr.f32.mxu0 0.0
  %2118 = vmatmul.mubr.f32.gmra.mrb[0].mxu0 %v2051
  %v2119 = vpop.f32.mrb[0].mxu0
  %v2120 = vadd.f32 0.0, %v2119
  %v2121 = vpop.f32.mrb[0].mxu0
  %2122 = vdwg.mxu0
  %v2123 = vmul.f32 %v2120, 0.001953125
  %v2124 = vmul.f32 %v2047, %v2047
  %v2125 = vsub.f32 %v2123, %v2124
  %v2126 = vld [vmem:[%s6] sm:$0x1]
  %v2127 = vadd.f32 %v2125, 1e-05
  %v2128 = vrsqrt.pop %v2127
  %v2129 = vmul.f32 %v2126, %v2128
  %v2130 = vld [vmem:[%s7] sm:$0x1]
  %v2131 = vmul.f32 %v2047, %v2129
  %v2132 = vsub.f32 %v2130, %v2131
  %v2134 = vlaneseq
  %v2135 = vshrl.u32 %v2134, 7
  %v2136 = vsub.s32 0, %v2135
  %v2137 = vrot.slane %v2129, %v2136
  %2138 = vrot.lane.b32.xlu0 %v2137, 1
  %v2139 = vpop.permute.xlu0 %2138
  %v2141 = vmul.f32 %v1928, %v2139
  %v2142 = vmul.f32 %v1929, %v2139
  %v2143 = vmul.f32 %v1930, %v2139
  %v2144 = vmul.f32 %v1931, %v2139
  %v2146 = vlaneseq
  %v2147 = vshrl.u32 %v2146, 7
  %v2148 = vsub.s32 0, %v2147
  %v2149 = vrot.slane %v2132, %v2148
  %2150 = vrot.lane.b32.xlu0 %v2149, 1
  %v2151 = vpop.permute.xlu0 %2150
  %v2153 = vadd.f32 %v2141, %v2151
  %v2154 = vadd.f32 %v2142, %v2151
  %v2155 = vadd.f32 %v2143, %v2151
  %v2156 = vadd.f32 %v2144, %v2151
  %v2157 = vmax.f32 %v2153, 0.0
  %v2158 = vmax.f32 %v2154, 0.0
  %v2159 = vmax.f32 %v2155, 0.0
  %v2160 = vmax.f32 %v2156, 0.0
  %vm2161 = vcmask 654336
  %2162 = vst.msk [vmem:[#allocation2] sm:$0xff] %vm2161, 0.0
  %2163 = vst.msk [vmem:[#allocation2 + $0x8] sm:$0xff] %vm2161, 0.0
  %vm2164 = vcmask 648192
  %2165 = vst.msk [vmem:[#allocation2 + $0x10] sm:$0x3] %vm2164, 0.0
  %2166 = vst.msk [vmem:[#allocation2 + $0x18] sm:$0xff] %vm2161, 0.0
  %2167 = vst.msk [vmem:[#allocation2 + $0x20] sm:$0xff] %vm2161, 0.0
  %2168 = vst.msk [vmem:[#allocation2 + $0x28] sm:$0x3] %vm2164, 0.0
  %2173 = vrot.lane.b32.xlu0 %v2157, 7
  %v2174 = vpop.permute.xlu0 %2173
  %2175 = vrot.lane.b32.xlu0 %v2158, 7
  %v2176 = vpop.permute.xlu0 %2175
  %2177 = vrot.lane.b32.xlu0 %v2159, 7
  %v2178 = vpop.permute.xlu0 %2177
  %2179 = vrot.lane.b32.xlu0 %v2160, 7
  %v2180 = vpop.permute.xlu0 %2179
  %vm2185 = vcmask 588864
  %2186 = vst.msk [vmem:[#allocation2 + $0x1] sm:$0xff] %vm2185, %v2174
  %2187 = vst.msk [vmem:[#allocation2 + $0x9] sm:$0xff] %vm2185, %v2176
  %2188 = vst.msk [vmem:[#allocation2 + $0x19] sm:$0xff] %vm2185, %v2178
  %2189 = vst.msk [vmem:[#allocation2 + $0x21] sm:$0xff] %vm2185, %v2180
  %v2190 = vld [vmem:[#allocation2] sm:$0xff]
  %v2191 = vld [vmem:[#allocation2 + $0x8] sm:$0xff]
  %v2192 = vld [vmem:[#allocation2 + $0x10] sm:$0x3]
  %v2193 = vld [vmem:[#allocation2 + $0x18] sm:$0xff]
  %v2194 = vld [vmem:[#allocation2 + $0x20] sm:$0xff]
  %v2195 = vld [vmem:[#allocation2 + $0x28] sm:$0x3]
  %v2196 = vld [vmem:[%s3] sm:$0x1]
  %v2197 = vlaneseq
  %v2198 = vshrl.u32 %v2197, 7
  %v2199 = vsub.s32 0, %v2198
  %v2200 = vrot.slane %v2196, %v2199
  %2202 = vrot.lane.b32.xlu0 %v2200, 1
  %v2203 = vpop.permute.xlu0 %2202
  %v2205 = vmul.f32 %v2190, %v2203
  %v2206 = vmul.f32 %v2191, %v2203
  %v2207 = vmul.f32 %v2193, %v2203
  %v2208 = vmul.f32 %v2194, %v2203
  %v2209 = vadd.f32 %v2205, 0.0
  %v2210 = vadd.f32 %v2206, 0.0
  %v2211 = vadd.f32 %v2207, 0.0
  %v2212 = vadd.f32 %v2208, 0.0
  %v2213 = vld [vmem:[%s3 + $0x1] sm:$0x1]
  %v2214 = vlaneseq
  %v2215 = vshrl.u32 %v2214, 7
  %v2216 = vsub.s32 0, %v2215
  %v2217 = vrot.slane %v2213, %v2216
  %2219 = vrot.lane.b32.xlu0 %v2217, 2
  %v2220 = vpop.permute.xlu0 %2219
  %v2222 = vmul.f32 %v2190, %v2220
  %v2223 = vmul.f32 %v2191, %v2220
  %v2224 = vmul.f32 %v2193, %v2220
  %v2225 = vmul.f32 %v2194, %v2220
  %2230 = vrot.lane.b32.xlu0 %v2222, 127
  %v2231 = vpop.permute.xlu0 %2230
  %2232 = vrot.lane.b32.xlu0 %v2223, 127
  %v2233 = vpop.permute.xlu0 %2232
  %2234 = vrot.lane.b32.xlu0 %v2224, 127
  %v2235 = vpop.permute.xlu0 %2234
  %2236 = vrot.lane.b32.xlu0 %v2225, 127
  %v2237 = vpop.permute.xlu0 %2236
  %v2242 = vadd.f32 %v2209, %v2231
  %v2243 = vadd.f32 %v2210, %v2233
  %v2244 = vadd.f32 %v2211, %v2235
  %v2245 = vadd.f32 %v2212, %v2237
  %v2246 = vld [vmem:[%s3 + $0x2] sm:$0x1]
  %v2247 = vlaneseq
  %v2248 = vshrl.u32 %v2247, 7
  %v2249 = vsub.s32 0, %v2248
  %v2250 = vrot.slane %v2246, %v2249
  %2252 = vrot.lane.b32.xlu0 %v2250, 3
  %v2253 = vpop.permute.xlu0 %2252
  %v2255 = vmul.f32 %v2190, %v2253
  %v2256 = vmul.f32 %v2191, %v2253
  %v2257 = vmul.f32 %v2193, %v2253
  %v2258 = vmul.f32 %v2194, %v2253
  %2263 = vrot.lane.b32.xlu0 %v2255, 126
  %v2264 = vpop.permute.xlu0 %2263
  %2265 = vrot.lane.b32.xlu0 %v2256, 126
  %v2266 = vpop.permute.xlu0 %2265
  %2267 = vrot.lane.b32.xlu0 %v2257, 126
  %v2268 = vpop.permute.xlu0 %2267
  %2269 = vrot.lane.b32.xlu0 %v2258, 126
  %v2270 = vpop.permute.xlu0 %2269
  %v2275 = vadd.f32 %v2242, %v2264
  %v2276 = vadd.f32 %v2243, %v2266
  %v2277 = vadd.f32 %v2244, %v2268
  %v2278 = vadd.f32 %v2245, %v2270
  %v2279 = vld [vmem:[%s3 + $0x3] sm:$0x1]
  %v2280 = vlaneseq
  %v2281 = vshrl.u32 %v2280, 7
  %v2282 = vsub.s32 0, %v2281
  %v2283 = vrot.slane %v2279, %v2282
  %2285 = vrot.lane.b32.xlu0 %v2283, 4
  %v2286 = vpop.permute.xlu0 %2285
  %v2288 = vmul.f32 %v2190, %v2286
  %v2289 = vmul.f32 %v2191, %v2286
  %v2290 = vmul.f32 %v2193, %v2286
  %v2291 = vmul.f32 %v2194, %v2286
  %2296 = vrot.lane.b32.xlu0 %v2288, 125
  %v2297 = vpop.permute.xlu0 %2296
  %2298 = vrot.lane.b32.xlu0 %v2289, 125
  %v2299 = vpop.permute.xlu0 %2298
  %2300 = vrot.lane.b32.xlu0 %v2290, 125
  %v2301 = vpop.permute.xlu0 %2300
  %2302 = vrot.lane.b32.xlu0 %v2291, 125
  %v2303 = vpop.permute.xlu0 %2302
  %v2308 = vadd.f32 %v2275, %v2297
  %v2309 = vadd.f32 %v2276, %v2299
  %v2310 = vadd.f32 %v2277, %v2301
  %v2311 = vadd.f32 %v2278, %v2303
  %v2312 = vld [vmem:[%s3 + $0x4] sm:$0x1]
  %v2313 = vlaneseq
  %v2314 = vshrl.u32 %v2313, 7
  %v2315 = vsub.s32 0, %v2314
  %v2316 = vrot.slane %v2312, %v2315
  %2318 = vrot.lane.b32.xlu0 %v2316, 5
  %v2319 = vpop.permute.xlu0 %2318
  %v2321 = vmul.f32 %v2190, %v2319
  %v2322 = vmul.f32 %v2191, %v2319
  %v2323 = vmul.f32 %v2193, %v2319
  %v2324 = vmul.f32 %v2194, %v2319
  %2329 = vrot.lane.b32.xlu0 %v2321, 124
  %v2330 = vpop.permute.xlu0 %2329
  %2331 = vrot.lane.b32.xlu0 %v2322, 124
  %v2332 = vpop.permute.xlu0 %2331
  %2333 = vrot.lane.b32.xlu0 %v2323, 124
  %v2334 = vpop.permute.xlu0 %2333
  %2335 = vrot.lane.b32.xlu0 %v2324, 124
  %v2336 = vpop.permute.xlu0 %2335
  %v2341 = vadd.f32 %v2308, %v2330
  %v2342 = vadd.f32 %v2309, %v2332
  %v2343 = vadd.f32 %v2310, %v2334
  %v2344 = vadd.f32 %v2311, %v2336
  %v2345 = vld [vmem:[%s3 + $0x5] sm:$0x1]
  %v2346 = vlaneseq
  %v2347 = vshrl.u32 %v2346, 7
  %v2348 = vsub.s32 0, %v2347
  %v2349 = vrot.slane %v2345, %v2348
  %2351 = vrot.lane.b32.xlu0 %v2349, 6
  %v2352 = vpop.permute.xlu0 %2351
  %v2354 = vmul.f32 %v2190, %v2352
  %v2355 = vmul.f32 %v2191, %v2352
  %v2356 = vmul.f32 %v2193, %v2352
  %v2357 = vmul.f32 %v2194, %v2352
  %2362 = vrot.lane.b32.xlu0 %v2354, 123
  %v2363 = vpop.permute.xlu0 %2362
  %2364 = vrot.lane.b32.xlu0 %v2355, 123
  %v2365 = vpop.permute.xlu0 %2364
  %2366 = vrot.lane.b32.xlu0 %v2356, 123
  %v2367 = vpop.permute.xlu0 %2366
  %2368 = vrot.lane.b32.xlu0 %v2357, 123
  %v2369 = vpop.permute.xlu0 %2368
  %v2374 = vadd.f32 %v2341, %v2363
  %v2375 = vadd.f32 %v2342, %v2365
  %v2376 = vadd.f32 %v2343, %v2367
  %v2377 = vadd.f32 %v2344, %v2369
  %v2378 = vld [vmem:[%s3 + $0x6] sm:$0x1]
  %v2379 = vlaneseq
  %v2380 = vshrl.u32 %v2379, 7
  %v2381 = vsub.s32 0, %v2380
  %v2382 = vrot.slane %v2378, %v2381
  %2384 = vrot.lane.b32.xlu0 %v2382, 7
  %v2385 = vpop.permute.xlu0 %2384
  %v2387 = vmul.f32 %v2190, %v2385
  %v2388 = vmul.f32 %v2191, %v2385
  %v2389 = vmul.f32 %v2193, %v2385
  %v2390 = vmul.f32 %v2194, %v2385
  %2395 = vrot.lane.b32.xlu0 %v2387, 122
  %v2396 = vpop.permute.xlu0 %2395
  %2397 = vrot.lane.b32.xlu0 %v2388, 122
  %v2398 = vpop.permute.xlu0 %2397
  %2399 = vrot.lane.b32.xlu0 %v2389, 122
  %v2400 = vpop.permute.xlu0 %2399
  %2401 = vrot.lane.b32.xlu0 %v2390, 122
  %v2402 = vpop.permute.xlu0 %2401
  %v2407 = vadd.f32 %v2374, %v2396
  %v2408 = vadd.f32 %v2375, %v2398
  %v2409 = vadd.f32 %v2376, %v2400
  %v2410 = vadd.f32 %v2377, %v2402
  %v2411 = vld [vmem:[%s3 + $0x7] sm:$0x1]
  %v2412 = vlaneseq
  %v2413 = vshrl.u32 %v2412, 7
  %v2414 = vsub.s32 0, %v2413
  %v2415 = vrot.slane %v2411, %v2414
  %2417 = vrot.lane.b32.xlu0 %v2415, 8
  %v2418 = vpop.permute.xlu0 %2417
  %v2420 = vmul.f32 %v2190, %v2418
  %v2421 = vmul.f32 %v2191, %v2418
  %v2422 = vmul.f32 %v2193, %v2418
  %v2423 = vmul.f32 %v2194, %v2418
  %2428 = vrot.lane.b32.xlu0 %v2420, 121
  %v2429 = vpop.permute.xlu0 %2428
  %2430 = vrot.lane.b32.xlu0 %v2421, 121
  %v2431 = vpop.permute.xlu0 %2430
  %2432 = vrot.lane.b32.xlu0 %v2422, 121
  %v2433 = vpop.permute.xlu0 %2432
  %2434 = vrot.lane.b32.xlu0 %v2423, 121
  %v2435 = vpop.permute.xlu0 %2434
  %v2440 = vadd.f32 %v2407, %v2429
  %v2441 = vadd.f32 %v2408, %v2431
  %v2442 = vadd.f32 %v2409, %v2433
  %v2443 = vadd.f32 %v2410, %v2435
  %v2444 = vld [vmem:[%s3 + $0x8] sm:$0x1]
  %v2445 = vlaneseq
  %v2446 = vshrl.u32 %v2445, 7
  %v2447 = vsub.s32 0, %v2446
  %v2448 = vrot.slane %v2444, %v2447
  %2450 = vrot.lane.b32.xlu0 %v2448, 9
  %v2451 = vpop.permute.xlu0 %2450
  %v2453 = vmul.f32 %v2190, %v2451
  %v2454 = vmul.f32 %v2191, %v2451
  %v2455 = vmul.f32 %v2193, %v2451
  %v2456 = vmul.f32 %v2194, %v2451
  %2461 = vrot.lane.b32.xlu0 %v2453, 120
  %v2462 = vpop.permute.xlu0 %2461
  %2463 = vrot.lane.b32.xlu0 %v2454, 120
  %v2464 = vpop.permute.xlu0 %2463
  %2465 = vrot.lane.b32.xlu0 %v2455, 120
  %v2466 = vpop.permute.xlu0 %2465
  %2467 = vrot.lane.b32.xlu0 %v2456, 120
  %v2468 = vpop.permute.xlu0 %2467
  %v2473 = vadd.f32 %v2440, %v2462
  %v2474 = vadd.f32 %v2441, %v2464
  %v2475 = vadd.f32 %v2442, %v2466
  %v2476 = vadd.f32 %v2443, %v2468
  %v2477 = vld [vmem:[%s3 + $0x9] sm:$0x1]
  %v2478 = vlaneseq
  %v2479 = vshrl.u32 %v2478, 7
  %v2480 = vsub.s32 0, %v2479
  %v2481 = vrot.slane %v2477, %v2480
  %2483 = vrot.lane.b32.xlu0 %v2481, 10
  %v2484 = vpop.permute.xlu0 %2483
  %v2486 = vmul.f32 %v2190, %v2484
  %v2487 = vmul.f32 %v2191, %v2484
  %v2488 = vmul.f32 %v2193, %v2484
  %v2489 = vmul.f32 %v2194, %v2484
  %2494 = vrot.lane.b32.xlu0 %v2486, 119
  %v2495 = vpop.permute.xlu0 %2494
  %2496 = vrot.lane.b32.xlu0 %v2487, 119
  %v2497 = vpop.permute.xlu0 %2496
  %2498 = vrot.lane.b32.xlu0 %v2488, 119
  %v2499 = vpop.permute.xlu0 %2498
  %2500 = vrot.lane.b32.xlu0 %v2489, 119
  %v2501 = vpop.permute.xlu0 %2500
  %v2506 = vadd.f32 %v2473, %v2495
  %v2507 = vadd.f32 %v2474, %v2497
  %v2508 = vadd.f32 %v2475, %v2499
  %v2509 = vadd.f32 %v2476, %v2501
  %v2510 = vld [vmem:[%s3 + $0xa] sm:$0x1]
  %v2511 = vlaneseq
  %v2512 = vshrl.u32 %v2511, 7
  %v2513 = vsub.s32 0, %v2512
  %v2514 = vrot.slane %v2510, %v2513
  %2516 = vrot.lane.b32.xlu0 %v2514, 11
  %v2517 = vpop.permute.xlu0 %2516
  %v2519 = vmul.f32 %v2190, %v2517
  %v2520 = vmul.f32 %v2191, %v2517
  %v2521 = vmul.f32 %v2193, %v2517
  %v2522 = vmul.f32 %v2194, %v2517
  %2527 = vrot.lane.b32.xlu0 %v2519, 118
  %v2528 = vpop.permute.xlu0 %2527
  %2529 = vrot.lane.b32.xlu0 %v2520, 118
  %v2530 = vpop.permute.xlu0 %2529
  %2531 = vrot.lane.b32.xlu0 %v2521, 118
  %v2532 = vpop.permute.xlu0 %2531
  %2533 = vrot.lane.b32.xlu0 %v2522, 118
  %v2534 = vpop.permute.xlu0 %2533
  %v2539 = vadd.f32 %v2506, %v2528
  %v2540 = vadd.f32 %v2507, %v2530
  %v2541 = vadd.f32 %v2508, %v2532
  %v2542 = vadd.f32 %v2509, %v2534
  %v2543 = vld [vmem:[%s3 + $0xb] sm:$0x1]
  %v2544 = vlaneseq
  %v2545 = vshrl.u32 %v2544, 7
  %v2546 = vsub.s32 0, %v2545
  %v2547 = vrot.slane %v2543, %v2546
  %2549 = vrot.lane.b32.xlu0 %v2547, 12
  %v2550 = vpop.permute.xlu0 %2549
  %v2552 = vmul.f32 %v2190, %v2550
  %v2553 = vmul.f32 %v2191, %v2550
  %v2554 = vmul.f32 %v2193, %v2550
  %v2555 = vmul.f32 %v2194, %v2550
  %2560 = vrot.lane.b32.xlu0 %v2552, 117
  %v2561 = vpop.permute.xlu0 %2560
  %2562 = vrot.lane.b32.xlu0 %v2553, 117
  %v2563 = vpop.permute.xlu0 %2562
  %2564 = vrot.lane.b32.xlu0 %v2554, 117
  %v2565 = vpop.permute.xlu0 %2564
  %2566 = vrot.lane.b32.xlu0 %v2555, 117
  %v2567 = vpop.permute.xlu0 %2566
  %v2572 = vadd.f32 %v2539, %v2561
  %v2573 = vadd.f32 %v2540, %v2563
  %v2574 = vadd.f32 %v2541, %v2565
  %v2575 = vadd.f32 %v2542, %v2567
  %v2576 = vld [vmem:[%s3 + $0xc] sm:$0x1]
  %v2577 = vlaneseq
  %v2578 = vshrl.u32 %v2577, 7
  %v2579 = vsub.s32 0, %v2578
  %v2580 = vrot.slane %v2576, %v2579
  %2582 = vrot.lane.b32.xlu0 %v2580, 13
  %v2583 = vpop.permute.xlu0 %2582
  %v2585 = vmul.f32 %v2190, %v2583
  %v2586 = vmul.f32 %v2191, %v2583
  %v2587 = vmul.f32 %v2193, %v2583
  %v2588 = vmul.f32 %v2194, %v2583
  %2593 = vrot.lane.b32.xlu0 %v2585, 116
  %v2594 = vpop.permute.xlu0 %2593
  %2595 = vrot.lane.b32.xlu0 %v2586, 116
  %v2596 = vpop.permute.xlu0 %2595
  %2597 = vrot.lane.b32.xlu0 %v2587, 116
  %v2598 = vpop.permute.xlu0 %2597
  %2599 = vrot.lane.b32.xlu0 %v2588, 116
  %v2600 = vpop.permute.xlu0 %2599
  %v2605 = vadd.f32 %v2572, %v2594
  %v2606 = vadd.f32 %v2573, %v2596
  %v2607 = vadd.f32 %v2574, %v2598
  %v2608 = vadd.f32 %v2575, %v2600
  %v2609 = vld [vmem:[%s3 + $0xd] sm:$0x1]
  %v2610 = vlaneseq
  %v2611 = vshrl.u32 %v2610, 7
  %v2612 = vsub.s32 0, %v2611
  %v2613 = vrot.slane %v2609, %v2612
  %2615 = vrot.lane.b32.xlu0 %v2613, 14
  %v2616 = vpop.permute.xlu0 %2615
  %v2618 = vmul.f32 %v2190, %v2616
  %v2619 = vmul.f32 %v2191, %v2616
  %v2620 = vmul.f32 %v2193, %v2616
  %v2621 = vmul.f32 %v2194, %v2616
  %2626 = vrot.lane.b32.xlu0 %v2618, 115
  %v2627 = vpop.permute.xlu0 %2626
  %2628 = vrot.lane.b32.xlu0 %v2619, 115
  %v2629 = vpop.permute.xlu0 %2628
  %2630 = vrot.lane.b32.xlu0 %v2620, 115
  %v2631 = vpop.permute.xlu0 %2630
  %2632 = vrot.lane.b32.xlu0 %v2621, 115
  %v2633 = vpop.permute.xlu0 %2632
  %v2638 = vadd.f32 %v2605, %v2627
  %v2639 = vadd.f32 %v2606, %v2629
  %v2640 = vadd.f32 %v2607, %v2631
  %v2641 = vadd.f32 %v2608, %v2633
  %v2642 = vld [vmem:[%s3 + $0xe] sm:$0x1]
  %v2643 = vlaneseq
  %v2644 = vshrl.u32 %v2643, 7
  %v2645 = vsub.s32 0, %v2644
  %v2646 = vrot.slane %v2642, %v2645
  %2648 = vrot.lane.b32.xlu0 %v2646, 15
  %v2649 = vpop.permute.xlu0 %2648
  %v2651 = vmul.f32 %v2190, %v2649
  %v2652 = vmul.f32 %v2191, %v2649
  %v2653 = vmul.f32 %v2193, %v2649
  %v2654 = vmul.f32 %v2194, %v2649
  %2659 = vrot.lane.b32.xlu0 %v2651, 114
  %v2660 = vpop.permute.xlu0 %2659
  %2661 = vrot.lane.b32.xlu0 %v2652, 114
  %v2662 = vpop.permute.xlu0 %2661
  %2663 = vrot.lane.b32.xlu0 %v2653, 114
  %v2664 = vpop.permute.xlu0 %2663
  %2665 = vrot.lane.b32.xlu0 %v2654, 114
  %v2666 = vpop.permute.xlu0 %2665
  %v2671 = vadd.f32 %v2638, %v2660
  %v2672 = vadd.f32 %v2639, %v2662
  %v2673 = vadd.f32 %v2640, %v2664
  %v2674 = vadd.f32 %v2641, %v2666
  %v2675 = vld [vmem:[%s3 + $0xf] sm:$0x1]
  %v2676 = vlaneseq
  %v2677 = vshrl.u32 %v2676, 7
  %v2678 = vsub.s32 0, %v2677
  %v2679 = vrot.slane %v2675, %v2678
  %2681 = vrot.lane.b32.xlu0 %v2679, 1
  %v2682 = vpop.permute.xlu0 %2681
  %v2684 = vmul.f32 %v2190, %v2682
  %v2685 = vmul.f32 %v2191, %v2682
  %v2686 = vmul.f32 %v2192, %v2682
  %v2687 = vmul.f32 %v2193, %v2682
  %v2688 = vmul.f32 %v2194, %v2682
  %v2689 = vmul.f32 %v2195, %v2682
  %v2696 = vrot.slane %v2684, 1
  %v2697 = vrot.slane %v2685, 1
  %v2698 = vsel %vm544, %v2696, %v2697
  %v2699 = vrot.slane %v2686, 1
  %v2700 = vsel %vm544, %v2697, %v2699
  %v2701 = vrot.slane %v2687, 1
  %v2702 = vrot.slane %v2688, 1
  %v2703 = vsel %vm544, %v2701, %v2702
  %v2704 = vrot.slane %v2689, 1
  %v2705 = vsel %vm544, %v2702, %v2704
  %v2710 = vadd.f32 %v2671, %v2698
  %v2711 = vadd.f32 %v2672, %v2700
  %v2712 = vadd.f32 %v2673, %v2703
  %v2713 = vadd.f32 %v2674, %v2705
  %v2714 = vld [vmem:[%s3 + $0x10] sm:$0x1]
  %v2715 = vlaneseq
  %v2716 = vshrl.u32 %v2715, 7
  %v2717 = vsub.s32 0, %v2716
  %v2718 = vrot.slane %v2714, %v2717
  %2720 = vrot.lane.b32.xlu0 %v2718, 2
  %v2721 = vpop.permute.xlu0 %2720
  %v2723 = vmul.f32 %v2190, %v2721
  %v2724 = vmul.f32 %v2191, %v2721
  %v2725 = vmul.f32 %v2192, %v2721
  %v2726 = vmul.f32 %v2193, %v2721
  %v2727 = vmul.f32 %v2194, %v2721
  %v2728 = vmul.f32 %v2195, %v2721
  %v2735 = vrot.slane %v2723, 1
  %v2736 = vrot.slane %v2724, 1
  %v2737 = vsel %vm544, %v2735, %v2736
  %v2738 = vrot.slane %v2725, 1
  %v2739 = vsel %vm544, %v2736, %v2738
  %v2740 = vrot.slane %v2726, 1
  %v2741 = vrot.slane %v2727, 1
  %v2742 = vsel %vm544, %v2740, %v2741
  %v2743 = vrot.slane %v2728, 1
  %v2744 = vsel %vm544, %v2741, %v2743
  %2745 = vrot.lane.b32.xlu0 %v2737, 127
  %v2746 = vpop.permute.xlu0 %2745
  %2747 = vrot.lane.b32.xlu0 %v2739, 127
  %v2748 = vpop.permute.xlu0 %2747
  %2749 = vrot.lane.b32.xlu0 %v2742, 127
  %v2750 = vpop.permute.xlu0 %2749
  %2751 = vrot.lane.b32.xlu0 %v2744, 127
  %v2752 = vpop.permute.xlu0 %2751
  %v2757 = vadd.f32 %v2710, %v2746
  %v2758 = vadd.f32 %v2711, %v2748
  %v2759 = vadd.f32 %v2712, %v2750
  %v2760 = vadd.f32 %v2713, %v2752
  %v2761 = vld [vmem:[%s3 + $0x11] sm:$0x1]
  %v2762 = vlaneseq
  %v2763 = vshrl.u32 %v2762, 7
  %v2764 = vsub.s32 0, %v2763
  %v2765 = vrot.slane %v2761, %v2764
  %2767 = vrot.lane.b32.xlu0 %v2765, 3
  %v2768 = vpop.permute.xlu0 %2767
  %v2770 = vmul.f32 %v2190, %v2768
  %v2771 = vmul.f32 %v2191, %v2768
  %v2772 = vmul.f32 %v2192, %v2768
  %v2773 = vmul.f32 %v2193, %v2768
  %v2774 = vmul.f32 %v2194, %v2768
  %v2775 = vmul.f32 %v2195, %v2768
  %v2782 = vrot.slane %v2770, 1
  %v2783 = vrot.slane %v2771, 1
  %v2784 = vsel %vm544, %v2782, %v2783
  %v2785 = vrot.slane %v2772, 1
  %v2786 = vsel %vm544, %v2783, %v2785
  %v2787 = vrot.slane %v2773, 1
  %v2788 = vrot.slane %v2774, 1
  %v2789 = vsel %vm544, %v2787, %v2788
  %v2790 = vrot.slane %v2775, 1
  %v2791 = vsel %vm544, %v2788, %v2790
  %2792 = vrot.lane.b32.xlu0 %v2784, 126
  %v2793 = vpop.permute.xlu0 %2792
  %2794 = vrot.lane.b32.xlu0 %v2786, 126
  %v2795 = vpop.permute.xlu0 %2794
  %2796 = vrot.lane.b32.xlu0 %v2789, 126
  %v2797 = vpop.permute.xlu0 %2796
  %2798 = vrot.lane.b32.xlu0 %v2791, 126
  %v2799 = vpop.permute.xlu0 %2798
  %v2804 = vadd.f32 %v2757, %v2793
  %v2805 = vadd.f32 %v2758, %v2795
  %v2806 = vadd.f32 %v2759, %v2797
  %v2807 = vadd.f32 %v2760, %v2799
  %v2808 = vld [vmem:[%s3 + $0x12] sm:$0x1]
  %v2809 = vlaneseq
  %v2810 = vshrl.u32 %v2809, 7
  %v2811 = vsub.s32 0, %v2810
  %v2812 = vrot.slane %v2808, %v2811
  %2814 = vrot.lane.b32.xlu0 %v2812, 4
  %v2815 = vpop.permute.xlu0 %2814
  %v2817 = vmul.f32 %v2190, %v2815
  %v2818 = vmul.f32 %v2191, %v2815
  %v2819 = vmul.f32 %v2192, %v2815
  %v2820 = vmul.f32 %v2193, %v2815
  %v2821 = vmul.f32 %v2194, %v2815
  %v2822 = vmul.f32 %v2195, %v2815
  %v2829 = vrot.slane %v2817, 1
  %v2830 = vrot.slane %v2818, 1
  %v2831 = vsel %vm544, %v2829, %v2830
  %v2832 = vrot.slane %v2819, 1
  %v2833 = vsel %vm544, %v2830, %v2832
  %v2834 = vrot.slane %v2820, 1
  %v2835 = vrot.slane %v2821, 1
  %v2836 = vsel %vm544, %v2834, %v2835
  %v2837 = vrot.slane %v2822, 1
  %v2838 = vsel %vm544, %v2835, %v2837
  %2839 = vrot.lane.b32.xlu0 %v2831, 125
  %v2840 = vpop.permute.xlu0 %2839
  %2841 = vrot.lane.b32.xlu0 %v2833, 125
  %v2842 = vpop.permute.xlu0 %2841
  %2843 = vrot.lane.b32.xlu0 %v2836, 125
  %v2844 = vpop.permute.xlu0 %2843
  %2845 = vrot.lane.b32.xlu0 %v2838, 125
  %v2846 = vpop.permute.xlu0 %2845
  %v2851 = vadd.f32 %v2804, %v2840
  %v2852 = vadd.f32 %v2805, %v2842
  %v2853 = vadd.f32 %v2806, %v2844
  %v2854 = vadd.f32 %v2807, %v2846
  %v2855 = vld [vmem:[%s3 + $0x13] sm:$0x1]
  %v2856 = vlaneseq
  %v2857 = vshrl.u32 %v2856, 7
  %v2858 = vsub.s32 0, %v2857
  %v2859 = vrot.slane %v2855, %v2858
  %2861 = vrot.lane.b32.xlu0 %v2859, 5
  %v2862 = vpop.permute.xlu0 %2861
  %v2864 = vmul.f32 %v2190, %v2862
  %v2865 = vmul.f32 %v2191, %v2862
  %v2866 = vmul.f32 %v2192, %v2862
  %v2867 = vmul.f32 %v2193, %v2862
  %v2868 = vmul.f32 %v2194, %v2862
  %v2869 = vmul.f32 %v2195, %v2862
  %v2876 = vrot.slane %v2864, 1
  %v2877 = vrot.slane %v2865, 1
  %v2878 = vsel %vm544, %v2876, %v2877
  %v2879 = vrot.slane %v2866, 1
  %v2880 = vsel %vm544, %v2877, %v2879
  %v2881 = vrot.slane %v2867, 1
  %v2882 = vrot.slane %v2868, 1
  %v2883 = vsel %vm544, %v2881, %v2882
  %v2884 = vrot.slane %v2869, 1
  %v2885 = vsel %vm544, %v2882, %v2884
  %2886 = vrot.lane.b32.xlu0 %v2878, 124
  %v2887 = vpop.permute.xlu0 %2886
  %2888 = vrot.lane.b32.xlu0 %v2880, 124
  %v2889 = vpop.permute.xlu0 %2888
  %2890 = vrot.lane.b32.xlu0 %v2883, 124
  %v2891 = vpop.permute.xlu0 %2890
  %2892 = vrot.lane.b32.xlu0 %v2885, 124
  %v2893 = vpop.permute.xlu0 %2892
  %v2898 = vadd.f32 %v2851, %v2887
  %v2899 = vadd.f32 %v2852, %v2889
  %v2900 = vadd.f32 %v2853, %v2891
  %v2901 = vadd.f32 %v2854, %v2893
  %v2902 = vld [vmem:[%s3 + $0x14] sm:$0x1]
  %v2903 = vlaneseq
  %v2904 = vshrl.u32 %v2903, 7
  %v2905 = vsub.s32 0, %v2904
  %v2906 = vrot.slane %v2902, %v2905
  %2908 = vrot.lane.b32.xlu0 %v2906, 6
  %v2909 = vpop.permute.xlu0 %2908
  %v2911 = vmul.f32 %v2190, %v2909
  %v2912 = vmul.f32 %v2191, %v2909
  %v2913 = vmul.f32 %v2192, %v2909
  %v2914 = vmul.f32 %v2193, %v2909
  %v2915 = vmul.f32 %v2194, %v2909
  %v2916 = vmul.f32 %v2195, %v2909
  %v2923 = vrot.slane %v2911, 1
  %v2924 = vrot.slane %v2912, 1
  %v2925 = vsel %vm544, %v2923, %v2924
  %v2926 = vrot.slane %v2913, 1
  %v2927 = vsel %vm544, %v2924, %v2926
  %v2928 = vrot.slane %v2914, 1
  %v2929 = vrot.slane %v2915, 1
  %v2930 = vsel %vm544, %v2928, %v2929
  %v2931 = vrot.slane %v2916, 1
  %v2932 = vsel %vm544, %v2929, %v2931
  %2933 = vrot.lane.b32.xlu0 %v2925, 123
  %v2934 = vpop.permute.xlu0 %2933
  %2935 = vrot.lane.b32.xlu0 %v2927, 123
  %v2936 = vpop.permute.xlu0 %2935
  %2937 = vrot.lane.b32.xlu0 %v2930, 123
  %v2938 = vpop.permute.xlu0 %2937
  %2939 = vrot.lane.b32.xlu0 %v2932, 123
  %v2940 = vpop.permute.xlu0 %2939
  %v2945 = vadd.f32 %v2898, %v2934
  %v2946 = vadd.f32 %v2899, %v2936
  %v2947 = vadd.f32 %v2900, %v2938
  %v2948 = vadd.f32 %v2901, %v2940
  %v2949 = vld [vmem:[%s3 + $0x15] sm:$0x1]
  %v2950 = vlaneseq
  %v2951 = vshrl.u32 %v2950, 7
  %v2952 = vsub.s32 0, %v2951
  %v2953 = vrot.slane %v2949, %v2952
  %2955 = vrot.lane.b32.xlu0 %v2953, 7
  %v2956 = vpop.permute.xlu0 %2955
  %v2958 = vmul.f32 %v2190, %v2956
  %v2959 = vmul.f32 %v2191, %v2956
  %v2960 = vmul.f32 %v2192, %v2956
  %v2961 = vmul.f32 %v2193, %v2956
  %v2962 = vmul.f32 %v2194, %v2956
  %v2963 = vmul.f32 %v2195, %v2956
  %v2970 = vrot.slane %v2958, 1
  %v2971 = vrot.slane %v2959, 1
  %v2972 = vsel %vm544, %v2970, %v2971
  %v2973 = vrot.slane %v2960, 1
  %v2974 = vsel %vm544, %v2971, %v2973
  %v2975 = vrot.slane %v2961, 1
  %v2976 = vrot.slane %v2962, 1
  %v2977 = vsel %vm544, %v2975, %v2976
  %v2978 = vrot.slane %v2963, 1
  %v2979 = vsel %vm544, %v2976, %v2978
  %2980 = vrot.lane.b32.xlu0 %v2972, 122
  %v2981 = vpop.permute.xlu0 %2980
  %2982 = vrot.lane.b32.xlu0 %v2974, 122
  %v2983 = vpop.permute.xlu0 %2982
  %2984 = vrot.lane.b32.xlu0 %v2977, 122
  %v2985 = vpop.permute.xlu0 %2984
  %2986 = vrot.lane.b32.xlu0 %v2979, 122
  %v2987 = vpop.permute.xlu0 %2986
  %v2992 = vadd.f32 %v2945, %v2981
  %v2993 = vadd.f32 %v2946, %v2983
  %v2994 = vadd.f32 %v2947, %v2985
  %v2995 = vadd.f32 %v2948, %v2987
  %v2996 = vld [vmem:[%s3 + $0x16] sm:$0x1]
  %v2997 = vlaneseq
  %v2998 = vshrl.u32 %v2997, 7
  %v2999 = vsub.s32 0, %v2998
  %v3000 = vrot.slane %v2996, %v2999
  %3002 = vrot.lane.b32.xlu0 %v3000, 8
  %v3003 = vpop.permute.xlu0 %3002
  %v3005 = vmul.f32 %v2190, %v3003
  %v3006 = vmul.f32 %v2191, %v3003
  %v3007 = vmul.f32 %v2192, %v3003
  %v3008 = vmul.f32 %v2193, %v3003
  %v3009 = vmul.f32 %v2194, %v3003
  %v3010 = vmul.f32 %v2195, %v3003
  %v3017 = vrot.slane %v3005, 1
  %v3018 = vrot.slane %v3006, 1
  %v3019 = vsel %vm544, %v3017, %v3018
  %v3020 = vrot.slane %v3007, 1
  %v3021 = vsel %vm544, %v3018, %v3020
  %v3022 = vrot.slane %v3008, 1
  %v3023 = vrot.slane %v3009, 1
  %v3024 = vsel %vm544, %v3022, %v3023
  %v3025 = vrot.slane %v3010, 1
  %v3026 = vsel %vm544, %v3023, %v3025
  %3027 = vrot.lane.b32.xlu0 %v3019, 121
  %v3028 = vpop.permute.xlu0 %3027
  %3029 = vrot.lane.b32.xlu0 %v3021, 121
  %v3030 = vpop.permute.xlu0 %3029
  %3031 = vrot.lane.b32.xlu0 %v3024, 121
  %v3032 = vpop.permute.xlu0 %3031
  %3033 = vrot.lane.b32.xlu0 %v3026, 121
  %v3034 = vpop.permute.xlu0 %3033
  %v3039 = vadd.f32 %v2992, %v3028
  %v3040 = vadd.f32 %v2993, %v3030
  %v3041 = vadd.f32 %v2994, %v3032
  %v3042 = vadd.f32 %v2995, %v3034
  %v3043 = vld [vmem:[%s3 + $0x17] sm:$0x1]
  %v3044 = vlaneseq
  %v3045 = vshrl.u32 %v3044, 7
  %v3046 = vsub.s32 0, %v3045
  %v3047 = vrot.slane %v3043, %v3046
  %3049 = vrot.lane.b32.xlu0 %v3047, 9
  %v3050 = vpop.permute.xlu0 %3049
  %v3052 = vmul.f32 %v2190, %v3050
  %v3053 = vmul.f32 %v2191, %v3050
  %v3054 = vmul.f32 %v2192, %v3050
  %v3055 = vmul.f32 %v2193, %v3050
  %v3056 = vmul.f32 %v2194, %v3050
  %v3057 = vmul.f32 %v2195, %v3050
  %v3064 = vrot.slane %v3052, 1
  %v3065 = vrot.slane %v3053, 1
  %v3066 = vsel %vm544, %v3064, %v3065
  %v3067 = vrot.slane %v3054, 1
  %v3068 = vsel %vm544, %v3065, %v3067
  %v3069 = vrot.slane %v3055, 1
  %v3070 = vrot.slane %v3056, 1
  %v3071 = vsel %vm544, %v3069, %v3070
  %v3072 = vrot.slane %v3057, 1
  %v3073 = vsel %vm544, %v3070, %v3072
  %3074 = vrot.lane.b32.xlu0 %v3066, 120
  %v3075 = vpop.permute.xlu0 %3074
  %3076 = vrot.lane.b32.xlu0 %v3068, 120
  %v3077 = vpop.permute.xlu0 %3076
  %3078 = vrot.lane.b32.xlu0 %v3071, 120
  %v3079 = vpop.permute.xlu0 %3078
  %3080 = vrot.lane.b32.xlu0 %v3073, 120
  %v3081 = vpop.permute.xlu0 %3080
  %v3086 = vadd.f32 %v3039, %v3075
  %v3087 = vadd.f32 %v3040, %v3077
  %v3088 = vadd.f32 %v3041, %v3079
  %v3089 = vadd.f32 %v3042, %v3081
  %v3090 = vld [vmem:[%s3 + $0x18] sm:$0x1]
  %v3091 = vlaneseq
  %v3092 = vshrl.u32 %v3091, 7
  %v3093 = vsub.s32 0, %v3092
  %v3094 = vrot.slane %v3090, %v3093
  %3096 = vrot.lane.b32.xlu0 %v3094, 10
  %v3097 = vpop.permute.xlu0 %3096
  %v3099 = vmul.f32 %v2190, %v3097
  %v3100 = vmul.f32 %v2191, %v3097
  %v3101 = vmul.f32 %v2192, %v3097
  %v3102 = vmul.f32 %v2193, %v3097
  %v3103 = vmul.f32 %v2194, %v3097
  %v3104 = vmul.f32 %v2195, %v3097
  %v3111 = vrot.slane %v3099, 1
  %v3112 = vrot.slane %v3100, 1
  %v3113 = vsel %vm544, %v3111, %v3112
  %v3114 = vrot.slane %v3101, 1
  %v3115 = vsel %vm544, %v3112, %v3114
  %v3116 = vrot.slane %v3102, 1
  %v3117 = vrot.slane %v3103, 1
  %v3118 = vsel %vm544, %v3116, %v3117
  %v3119 = vrot.slane %v3104, 1
  %v3120 = vsel %vm544, %v3117, %v3119
  %3121 = vrot.lane.b32.xlu0 %v3113, 119
  %v3122 = vpop.permute.xlu0 %3121
  %3123 = vrot.lane.b32.xlu0 %v3115, 119
  %v3124 = vpop.permute.xlu0 %3123
  %3125 = vrot.lane.b32.xlu0 %v3118, 119
  %v3126 = vpop.permute.xlu0 %3125
  %3127 = vrot.lane.b32.xlu0 %v3120, 119
  %v3128 = vpop.permute.xlu0 %3127
  %v3133 = vadd.f32 %v3086, %v3122
  %v3134 = vadd.f32 %v3087, %v3124
  %v3135 = vadd.f32 %v3088, %v3126
  %v3136 = vadd.f32 %v3089, %v3128
  %v3137 = vld [vmem:[%s3 + $0x19] sm:$0x1]
  %v3138 = vlaneseq
  %v3139 = vshrl.u32 %v3138, 7
  %v3140 = vsub.s32 0, %v3139
  %v3141 = vrot.slane %v3137, %v3140
  %3143 = vrot.lane.b32.xlu0 %v3141, 11
  %v3144 = vpop.permute.xlu0 %3143
  %v3146 = vmul.f32 %v2190, %v3144
  %v3147 = vmul.f32 %v2191, %v3144
  %v3148 = vmul.f32 %v2192, %v3144
  %v3149 = vmul.f32 %v2193, %v3144
  %v3150 = vmul.f32 %v2194, %v3144
  %v3151 = vmul.f32 %v2195, %v3144
  %v3158 = vrot.slane %v3146, 1
  %v3159 = vrot.slane %v3147, 1
  %v3160 = vsel %vm544, %v3158, %v3159
  %v3161 = vrot.slane %v3148, 1
  %v3162 = vsel %vm544, %v3159, %v3161
  %v3163 = vrot.slane %v3149, 1
  %v3164 = vrot.slane %v3150, 1
  %v3165 = vsel %vm544, %v3163, %v3164
  %v3166 = vrot.slane %v3151, 1
  %v3167 = vsel %vm544, %v3164, %v3166
  %3168 = vrot.lane.b32.xlu0 %v3160, 118
  %v3169 = vpop.permute.xlu0 %3168
  %3170 = vrot.lane.b32.xlu0 %v3162, 118
  %v3171 = vpop.permute.xlu0 %3170
  %3172 = vrot.lane.b32.xlu0 %v3165, 118
  %v3173 = vpop.permute.xlu0 %3172
  %3174 = vrot.lane.b32.xlu0 %v3167, 118
  %v3175 = vpop.permute.xlu0 %3174
  %v3180 = vadd.f32 %v3133, %v3169
  %v3181 = vadd.f32 %v3134, %v3171
  %v3182 = vadd.f32 %v3135, %v3173
  %v3183 = vadd.f32 %v3136, %v3175
  %v3184 = vld [vmem:[%s3 + $0x1a] sm:$0x1]
  %v3185 = vlaneseq
  %v3186 = vshrl.u32 %v3185, 7
  %v3187 = vsub.s32 0, %v3186
  %v3188 = vrot.slane %v3184, %v3187
  %3190 = vrot.lane.b32.xlu0 %v3188, 12
  %v3191 = vpop.permute.xlu0 %3190
  %v3193 = vmul.f32 %v2190, %v3191
  %v3194 = vmul.f32 %v2191, %v3191
  %v3195 = vmul.f32 %v2192, %v3191
  %v3196 = vmul.f32 %v2193, %v3191
  %v3197 = vmul.f32 %v2194, %v3191
  %v3198 = vmul.f32 %v2195, %v3191
  %v3205 = vrot.slane %v3193, 1
  %v3206 = vrot.slane %v3194, 1
  %v3207 = vsel %vm544, %v3205, %v3206
  %v3208 = vrot.slane %v3195, 1
  %v3209 = vsel %vm544, %v3206, %v3208
  %v3210 = vrot.slane %v3196, 1
  %v3211 = vrot.slane %v3197, 1
  %v3212 = vsel %vm544, %v3210, %v3211
  %v3213 = vrot.slane %v3198, 1
  %v3214 = vsel %vm544, %v3211, %v3213
  %3215 = vrot.lane.b32.xlu0 %v3207, 117
  %v3216 = vpop.permute.xlu0 %3215
  %3217 = vrot.lane.b32.xlu0 %v3209, 117
  %v3218 = vpop.permute.xlu0 %3217
  %3219 = vrot.lane.b32.xlu0 %v3212, 117
  %v3220 = vpop.permute.xlu0 %3219
  %3221 = vrot.lane.b32.xlu0 %v3214, 117
  %v3222 = vpop.permute.xlu0 %3221
  %v3227 = vadd.f32 %v3180, %v3216
  %v3228 = vadd.f32 %v3181, %v3218
  %v3229 = vadd.f32 %v3182, %v3220
  %v3230 = vadd.f32 %v3183, %v3222
  %v3231 = vld [vmem:[%s3 + $0x1b] sm:$0x1]
  %v3232 = vlaneseq
  %v3233 = vshrl.u32 %v3232, 7
  %v3234 = vsub.s32 0, %v3233
  %v3235 = vrot.slane %v3231, %v3234
  %3237 = vrot.lane.b32.xlu0 %v3235, 13
  %v3238 = vpop.permute.xlu0 %3237
  %v3240 = vmul.f32 %v2190, %v3238
  %v3241 = vmul.f32 %v2191, %v3238
  %v3242 = vmul.f32 %v2192, %v3238
  %v3243 = vmul.f32 %v2193, %v3238
  %v3244 = vmul.f32 %v2194, %v3238
  %v3245 = vmul.f32 %v2195, %v3238
  %v3252 = vrot.slane %v3240, 1
  %v3253 = vrot.slane %v3241, 1
  %v3254 = vsel %vm544, %v3252, %v3253
  %v3255 = vrot.slane %v3242, 1
  %v3256 = vsel %vm544, %v3253, %v3255
  %v3257 = vrot.slane %v3243, 1
  %v3258 = vrot.slane %v3244, 1
  %v3259 = vsel %vm544, %v3257, %v3258
  %v3260 = vrot.slane %v3245, 1
  %v3261 = vsel %vm544, %v3258, %v3260
  %3262 = vrot.lane.b32.xlu0 %v3254, 116
  %v3263 = vpop.permute.xlu0 %3262
  %3264 = vrot.lane.b32.xlu0 %v3256, 116
  %v3265 = vpop.permute.xlu0 %3264
  %3266 = vrot.lane.b32.xlu0 %v3259, 116
  %v3267 = vpop.permute.xlu0 %3266
  %3268 = vrot.lane.b32.xlu0 %v3261, 116
  %v3269 = vpop.permute.xlu0 %3268
  %v3274 = vadd.f32 %v3227, %v3263
  %v3275 = vadd.f32 %v3228, %v3265
  %v3276 = vadd.f32 %v3229, %v3267
  %v3277 = vadd.f32 %v3230, %v3269
  %v3278 = vld [vmem:[%s3 + $0x1c] sm:$0x1]
  %v3279 = vlaneseq
  %v3280 = vshrl.u32 %v3279, 7
  %v3281 = vsub.s32 0, %v3280
  %v3282 = vrot.slane %v3278, %v3281
  %3284 = vrot.lane.b32.xlu0 %v3282, 14
  %v3285 = vpop.permute.xlu0 %3284
  %v3287 = vmul.f32 %v2190, %v3285
  %v3288 = vmul.f32 %v2191, %v3285
  %v3289 = vmul.f32 %v2192, %v3285
  %v3290 = vmul.f32 %v2193, %v3285
  %v3291 = vmul.f32 %v2194, %v3285
  %v3292 = vmul.f32 %v2195, %v3285
  %v3299 = vrot.slane %v3287, 1
  %v3300 = vrot.slane %v3288, 1
  %v3301 = vsel %vm544, %v3299, %v3300
  %v3302 = vrot.slane %v3289, 1
  %v3303 = vsel %vm544, %v3300, %v3302
  %v3304 = vrot.slane %v3290, 1
  %v3305 = vrot.slane %v3291, 1
  %v3306 = vsel %vm544, %v3304, %v3305
  %v3307 = vrot.slane %v3292, 1
  %v3308 = vsel %vm544, %v3305, %v3307
  %3309 = vrot.lane.b32.xlu0 %v3301, 115
  %v3310 = vpop.permute.xlu0 %3309
  %3311 = vrot.lane.b32.xlu0 %v3303, 115
  %v3312 = vpop.permute.xlu0 %3311
  %3313 = vrot.lane.b32.xlu0 %v3306, 115
  %v3314 = vpop.permute.xlu0 %3313
  %3315 = vrot.lane.b32.xlu0 %v3308, 115
  %v3316 = vpop.permute.xlu0 %3315
  %v3321 = vadd.f32 %v3274, %v3310
  %v3322 = vadd.f32 %v3275, %v3312
  %v3323 = vadd.f32 %v3276, %v3314
  %v3324 = vadd.f32 %v3277, %v3316
  %v3325 = vld [vmem:[%s3 + $0x1d] sm:$0x1]
  %v3326 = vlaneseq
  %v3327 = vshrl.u32 %v3326, 7
  %v3328 = vsub.s32 0, %v3327
  %v3329 = vrot.slane %v3325, %v3328
  %3331 = vrot.lane.b32.xlu0 %v3329, 15
  %v3332 = vpop.permute.xlu0 %3331
  %v3334 = vmul.f32 %v2190, %v3332
  %v3335 = vmul.f32 %v2191, %v3332
  %v3336 = vmul.f32 %v2192, %v3332
  %v3337 = vmul.f32 %v2193, %v3332
  %v3338 = vmul.f32 %v2194, %v3332
  %v3339 = vmul.f32 %v2195, %v3332
  %v3346 = vrot.slane %v3334, 1
  %v3347 = vrot.slane %v3335, 1
  %v3348 = vsel %vm544, %v3346, %v3347
  %v3349 = vrot.slane %v3336, 1
  %v3350 = vsel %vm544, %v3347, %v3349
  %v3351 = vrot.slane %v3337, 1
  %v3352 = vrot.slane %v3338, 1
  %v3353 = vsel %vm544, %v3351, %v3352
  %v3354 = vrot.slane %v3339, 1
  %v3355 = vsel %vm544, %v3352, %v3354
  %3356 = vrot.lane.b32.xlu0 %v3348, 114
  %v3357 = vpop.permute.xlu0 %3356
  %3358 = vrot.lane.b32.xlu0 %v3350, 114
  %v3359 = vpop.permute.xlu0 %3358
  %3360 = vrot.lane.b32.xlu0 %v3353, 114
  %v3361 = vpop.permute.xlu0 %3360
  %3362 = vrot.lane.b32.xlu0 %v3355, 114
  %v3363 = vpop.permute.xlu0 %3362
  %v3368 = vadd.f32 %v3321, %v3357
  %v3369 = vadd.f32 %v3322, %v3359
  %v3370 = vadd.f32 %v3323, %v3361
  %v3371 = vadd.f32 %v3324, %v3363
  %v3372 = vld [vmem:[%s3 + $0x1e] sm:$0x1]
  %v3373 = vlaneseq
  %v3374 = vshrl.u32 %v3373, 7
  %v3375 = vsub.s32 0, %v3374
  %v3376 = vrot.slane %v3372, %v3375
  %3378 = vrot.lane.b32.xlu0 %v3376, 1
  %v3379 = vpop.permute.xlu0 %3378
  %v3381 = vmul.f32 %v2190, %v3379
  %v3382 = vmul.f32 %v2191, %v3379
  %v3383 = vmul.f32 %v2192, %v3379
  %v3384 = vmul.f32 %v2193, %v3379
  %v3385 = vmul.f32 %v2194, %v3379
  %v3386 = vmul.f32 %v2195, %v3379
  %v3393 = vrot.slane %v3381, 2
  %v3394 = vrot.slane %v3382, 2
  %v3395 = vsel %vm1242, %v3393, %v3394
  %v3396 = vrot.slane %v3383, 2
  %v3397 = vsel %vm1242, %v3394, %v3396
  %v3398 = vrot.slane %v3384, 2
  %v3399 = vrot.slane %v3385, 2
  %v3400 = vsel %vm1242, %v3398, %v3399
  %v3401 = vrot.slane %v3386, 2
  %v3402 = vsel %vm1242, %v3399, %v3401
  %v3407 = vadd.f32 %v3368, %v3395
  %v3408 = vadd.f32 %v3369, %v3397
  %v3409 = vadd.f32 %v3370, %v3400
  %v3410 = vadd.f32 %v3371, %v3402
  %v3411 = vld [vmem:[%s3 + $0x1f] sm:$0x1]
  %v3412 = vlaneseq
  %v3413 = vshrl.u32 %v3412, 7
  %v3414 = vsub.s32 0, %v3413
  %v3415 = vrot.slane %v3411, %v3414
  %3417 = vrot.lane.b32.xlu0 %v3415, 2
  %v3418 = vpop.permute.xlu0 %3417
  %v3420 = vmul.f32 %v2190, %v3418
  %v3421 = vmul.f32 %v2191, %v3418
  %v3422 = vmul.f32 %v2192, %v3418
  %v3423 = vmul.f32 %v2193, %v3418
  %v3424 = vmul.f32 %v2194, %v3418
  %v3425 = vmul.f32 %v2195, %v3418
  %v3432 = vrot.slane %v3420, 2
  %v3433 = vrot.slane %v3421, 2
  %v3434 = vsel %vm1242, %v3432, %v3433
  %v3435 = vrot.slane %v3422, 2
  %v3436 = vsel %vm1242, %v3433, %v3435
  %v3437 = vrot.slane %v3423, 2
  %v3438 = vrot.slane %v3424, 2
  %v3439 = vsel %vm1242, %v3437, %v3438
  %v3440 = vrot.slane %v3425, 2
  %v3441 = vsel %vm1242, %v3438, %v3440
  %3442 = vrot.lane.b32.xlu0 %v3434, 127
  %v3443 = vpop.permute.xlu0 %3442
  %3444 = vrot.lane.b32.xlu0 %v3436, 127
  %v3445 = vpop.permute.xlu0 %3444
  %3446 = vrot.lane.b32.xlu0 %v3439, 127
  %v3447 = vpop.permute.xlu0 %3446
  %3448 = vrot.lane.b32.xlu0 %v3441, 127
  %v3449 = vpop.permute.xlu0 %3448
  %v3454 = vadd.f32 %v3407, %v3443
  %v3455 = vadd.f32 %v3408, %v3445
  %v3456 = vadd.f32 %v3409, %v3447
  %v3457 = vadd.f32 %v3410, %v3449
  %v3458 = vld [vmem:[%s3 + $0x20] sm:$0x1]
  %v3459 = vlaneseq
  %v3460 = vshrl.u32 %v3459, 7
  %v3461 = vsub.s32 0, %v3460
  %v3462 = vrot.slane %v3458, %v3461
  %3464 = vrot.lane.b32.xlu0 %v3462, 3
  %v3465 = vpop.permute.xlu0 %3464
  %v3467 = vmul.f32 %v2190, %v3465
  %v3468 = vmul.f32 %v2191, %v3465
  %v3469 = vmul.f32 %v2192, %v3465
  %v3470 = vmul.f32 %v2193, %v3465
  %v3471 = vmul.f32 %v2194, %v3465
  %v3472 = vmul.f32 %v2195, %v3465
  %v3479 = vrot.slane %v3467, 2
  %v3480 = vrot.slane %v3468, 2
  %v3481 = vsel %vm1242, %v3479, %v3480
  %v3482 = vrot.slane %v3469, 2
  %v3483 = vsel %vm1242, %v3480, %v3482
  %v3484 = vrot.slane %v3470, 2
  %v3485 = vrot.slane %v3471, 2
  %v3486 = vsel %vm1242, %v3484, %v3485
  %v3487 = vrot.slane %v3472, 2
  %v3488 = vsel %vm1242, %v3485, %v3487
  %3489 = vrot.lane.b32.xlu0 %v3481, 126
  %v3490 = vpop.permute.xlu0 %3489
  %3491 = vrot.lane.b32.xlu0 %v3483, 126
  %v3492 = vpop.permute.xlu0 %3491
  %3493 = vrot.lane.b32.xlu0 %v3486, 126
  %v3494 = vpop.permute.xlu0 %3493
  %3495 = vrot.lane.b32.xlu0 %v3488, 126
  %v3496 = vpop.permute.xlu0 %3495
  %v3501 = vadd.f32 %v3454, %v3490
  %v3502 = vadd.f32 %v3455, %v3492
  %v3503 = vadd.f32 %v3456, %v3494
  %v3504 = vadd.f32 %v3457, %v3496
  %v3505 = vld [vmem:[%s3 + $0x21] sm:$0x1]
  %v3506 = vlaneseq
  %v3507 = vshrl.u32 %v3506, 7
  %v3508 = vsub.s32 0, %v3507
  %v3509 = vrot.slane %v3505, %v3508
  %3511 = vrot.lane.b32.xlu0 %v3509, 4
  %v3512 = vpop.permute.xlu0 %3511
  %v3514 = vmul.f32 %v2190, %v3512
  %v3515 = vmul.f32 %v2191, %v3512
  %v3516 = vmul.f32 %v2192, %v3512
  %v3517 = vmul.f32 %v2193, %v3512
  %v3518 = vmul.f32 %v2194, %v3512
  %v3519 = vmul.f32 %v2195, %v3512
  %v3526 = vrot.slane %v3514, 2
  %v3527 = vrot.slane %v3515, 2
  %v3528 = vsel %vm1242, %v3526, %v3527
  %v3529 = vrot.slane %v3516, 2
  %v3530 = vsel %vm1242, %v3527, %v3529
  %v3531 = vrot.slane %v3517, 2
  %v3532 = vrot.slane %v3518, 2
  %v3533 = vsel %vm1242, %v3531, %v3532
  %v3534 = vrot.slane %v3519, 2
  %v3535 = vsel %vm1242, %v3532, %v3534
  %3536 = vrot.lane.b32.xlu0 %v3528, 125
  %v3537 = vpop.permute.xlu0 %3536
  %3538 = vrot.lane.b32.xlu0 %v3530, 125
  %v3539 = vpop.permute.xlu0 %3538
  %3540 = vrot.lane.b32.xlu0 %v3533, 125
  %v3541 = vpop.permute.xlu0 %3540
  %3542 = vrot.lane.b32.xlu0 %v3535, 125
  %v3543 = vpop.permute.xlu0 %3542
  %v3548 = vadd.f32 %v3501, %v3537
  %v3549 = vadd.f32 %v3502, %v3539
  %v3550 = vadd.f32 %v3503, %v3541
  %v3551 = vadd.f32 %v3504, %v3543
  %v3552 = vld [vmem:[%s3 + $0x22] sm:$0x1]
  %v3553 = vlaneseq
  %v3554 = vshrl.u32 %v3553, 7
  %v3555 = vsub.s32 0, %v3554
  %v3556 = vrot.slane %v3552, %v3555
  %3558 = vrot.lane.b32.xlu0 %v3556, 5
  %v3559 = vpop.permute.xlu0 %3558
  %v3561 = vmul.f32 %v2190, %v3559
  %v3562 = vmul.f32 %v2191, %v3559
  %v3563 = vmul.f32 %v2192, %v3559
  %v3564 = vmul.f32 %v2193, %v3559
  %v3565 = vmul.f32 %v2194, %v3559
  %v3566 = vmul.f32 %v2195, %v3559
  %v3573 = vrot.slane %v3561, 2
  %v3574 = vrot.slane %v3562, 2
  %v3575 = vsel %vm1242, %v3573, %v3574
  %v3576 = vrot.slane %v3563, 2
  %v3577 = vsel %vm1242, %v3574, %v3576
  %v3578 = vrot.slane %v3564, 2
  %v3579 = vrot.slane %v3565, 2
  %v3580 = vsel %vm1242, %v3578, %v3579
  %v3581 = vrot.slane %v3566, 2
  %v3582 = vsel %vm1242, %v3579, %v3581
  %3583 = vrot.lane.b32.xlu0 %v3575, 124
  %v3584 = vpop.permute.xlu0 %3583
  %3585 = vrot.lane.b32.xlu0 %v3577, 124
  %v3586 = vpop.permute.xlu0 %3585
  %3587 = vrot.lane.b32.xlu0 %v3580, 124
  %v3588 = vpop.permute.xlu0 %3587
  %3589 = vrot.lane.b32.xlu0 %v3582, 124
  %v3590 = vpop.permute.xlu0 %3589
  %v3595 = vadd.f32 %v3548, %v3584
  %v3596 = vadd.f32 %v3549, %v3586
  %v3597 = vadd.f32 %v3550, %v3588
  %v3598 = vadd.f32 %v3551, %v3590
  %v3599 = vld [vmem:[%s3 + $0x23] sm:$0x1]
  %v3600 = vlaneseq
  %v3601 = vshrl.u32 %v3600, 7
  %v3602 = vsub.s32 0, %v3601
  %v3603 = vrot.slane %v3599, %v3602
  %3605 = vrot.lane.b32.xlu0 %v3603, 6
  %v3606 = vpop.permute.xlu0 %3605
  %v3608 = vmul.f32 %v2190, %v3606
  %v3609 = vmul.f32 %v2191, %v3606
  %v3610 = vmul.f32 %v2192, %v3606
  %v3611 = vmul.f32 %v2193, %v3606
  %v3612 = vmul.f32 %v2194, %v3606
  %v3613 = vmul.f32 %v2195, %v3606
  %v3620 = vrot.slane %v3608, 2
  %v3621 = vrot.slane %v3609, 2
  %v3622 = vsel %vm1242, %v3620, %v3621
  %v3623 = vrot.slane %v3610, 2
  %v3624 = vsel %vm1242, %v3621, %v3623
  %v3625 = vrot.slane %v3611, 2
  %v3626 = vrot.slane %v3612, 2
  %v3627 = vsel %vm1242, %v3625, %v3626
  %v3628 = vrot.slane %v3613, 2
  %v3629 = vsel %vm1242, %v3626, %v3628
  %3630 = vrot.lane.b32.xlu0 %v3622, 123
  %v3631 = vpop.permute.xlu0 %3630
  %3632 = vrot.lane.b32.xlu0 %v3624, 123
  %v3633 = vpop.permute.xlu0 %3632
  %3634 = vrot.lane.b32.xlu0 %v3627, 123
  %v3635 = vpop.permute.xlu0 %3634
  %3636 = vrot.lane.b32.xlu0 %v3629, 123
  %v3637 = vpop.permute.xlu0 %3636
  %v3642 = vadd.f32 %v3595, %v3631
  %v3643 = vadd.f32 %v3596, %v3633
  %v3644 = vadd.f32 %v3597, %v3635
  %v3645 = vadd.f32 %v3598, %v3637
  %v3646 = vld [vmem:[%s3 + $0x24] sm:$0x1]
  %v3647 = vlaneseq
  %v3648 = vshrl.u32 %v3647, 7
  %v3649 = vsub.s32 0, %v3648
  %v3650 = vrot.slane %v3646, %v3649
  %3652 = vrot.lane.b32.xlu0 %v3650, 7
  %v3653 = vpop.permute.xlu0 %3652
  %v3655 = vmul.f32 %v2190, %v3653
  %v3656 = vmul.f32 %v2191, %v3653
  %v3657 = vmul.f32 %v2192, %v3653
  %v3658 = vmul.f32 %v2193, %v3653
  %v3659 = vmul.f32 %v2194, %v3653
  %v3660 = vmul.f32 %v2195, %v3653
  %v3667 = vrot.slane %v3655, 2
  %v3668 = vrot.slane %v3656, 2
  %v3669 = vsel %vm1242, %v3667, %v3668
  %v3670 = vrot.slane %v3657, 2
  %v3671 = vsel %vm1242, %v3668, %v3670
  %v3672 = vrot.slane %v3658, 2
  %v3673 = vrot.slane %v3659, 2
  %v3674 = vsel %vm1242, %v3672, %v3673
  %v3675 = vrot.slane %v3660, 2
  %v3676 = vsel %vm1242, %v3673, %v3675
  %3677 = vrot.lane.b32.xlu0 %v3669, 122
  %v3678 = vpop.permute.xlu0 %3677
  %3679 = vrot.lane.b32.xlu0 %v3671, 122
  %v3680 = vpop.permute.xlu0 %3679
  %3681 = vrot.lane.b32.xlu0 %v3674, 122
  %v3682 = vpop.permute.xlu0 %3681
  %3683 = vrot.lane.b32.xlu0 %v3676, 122
  %v3684 = vpop.permute.xlu0 %3683
  %v3689 = vadd.f32 %v3642, %v3678
  %v3690 = vadd.f32 %v3643, %v3680
  %v3691 = vadd.f32 %v3644, %v3682
  %v3692 = vadd.f32 %v3645, %v3684
  %v3693 = vld [vmem:[%s3 + $0x25] sm:$0x1]
  %v3694 = vlaneseq
  %v3695 = vshrl.u32 %v3694, 7
  %v3696 = vsub.s32 0, %v3695
  %v3697 = vrot.slane %v3693, %v3696
  %3699 = vrot.lane.b32.xlu0 %v3697, 8
  %v3700 = vpop.permute.xlu0 %3699
  %v3702 = vmul.f32 %v2190, %v3700
  %v3703 = vmul.f32 %v2191, %v3700
  %v3704 = vmul.f32 %v2192, %v3700
  %v3705 = vmul.f32 %v2193, %v3700
  %v3706 = vmul.f32 %v2194, %v3700
  %v3707 = vmul.f32 %v2195, %v3700
  %v3714 = vrot.slane %v3702, 2
  %v3715 = vrot.slane %v3703, 2
  %v3716 = vsel %vm1242, %v3714, %v3715
  %v3717 = vrot.slane %v3704, 2
  %v3718 = vsel %vm1242, %v3715, %v3717
  %v3719 = vrot.slane %v3705, 2
  %v3720 = vrot.slane %v3706, 2
  %v3721 = vsel %vm1242, %v3719, %v3720
  %v3722 = vrot.slane %v3707, 2
  %v3723 = vsel %vm1242, %v3720, %v3722
  %3724 = vrot.lane.b32.xlu0 %v3716, 121
  %v3725 = vpop.permute.xlu0 %3724
  %3726 = vrot.lane.b32.xlu0 %v3718, 121
  %v3727 = vpop.permute.xlu0 %3726
  %3728 = vrot.lane.b32.xlu0 %v3721, 121
  %v3729 = vpop.permute.xlu0 %3728
  %3730 = vrot.lane.b32.xlu0 %v3723, 121
  %v3731 = vpop.permute.xlu0 %3730
  %v3736 = vadd.f32 %v3689, %v3725
  %v3737 = vadd.f32 %v3690, %v3727
  %v3738 = vadd.f32 %v3691, %v3729
  %v3739 = vadd.f32 %v3692, %v3731
  %v3740 = vld [vmem:[%s3 + $0x26] sm:$0x1]
  %v3741 = vlaneseq
  %v3742 = vshrl.u32 %v3741, 7
  %v3743 = vsub.s32 0, %v3742
  %v3744 = vrot.slane %v3740, %v3743
  %3746 = vrot.lane.b32.xlu0 %v3744, 9
  %v3747 = vpop.permute.xlu0 %3746
  %v3749 = vmul.f32 %v2190, %v3747
  %v3750 = vmul.f32 %v2191, %v3747
  %v3751 = vmul.f32 %v2192, %v3747
  %v3752 = vmul.f32 %v2193, %v3747
  %v3753 = vmul.f32 %v2194, %v3747
  %v3754 = vmul.f32 %v2195, %v3747
  %v3761 = vrot.slane %v3749, 2
  %v3762 = vrot.slane %v3750, 2
  %v3763 = vsel %vm1242, %v3761, %v3762
  %v3764 = vrot.slane %v3751, 2
  %v3765 = vsel %vm1242, %v3762, %v3764
  %v3766 = vrot.slane %v3752, 2
  %v3767 = vrot.slane %v3753, 2
  %v3768 = vsel %vm1242, %v3766, %v3767
  %v3769 = vrot.slane %v3754, 2
  %v3770 = vsel %vm1242, %v3767, %v3769
  %3771 = vrot.lane.b32.xlu0 %v3763, 120
  %v3772 = vpop.permute.xlu0 %3771
  %3773 = vrot.lane.b32.xlu0 %v3765, 120
  %v3774 = vpop.permute.xlu0 %3773
  %3775 = vrot.lane.b32.xlu0 %v3768, 120
  %v3776 = vpop.permute.xlu0 %3775
  %3777 = vrot.lane.b32.xlu0 %v3770, 120
  %v3778 = vpop.permute.xlu0 %3777
  %v3783 = vadd.f32 %v3736, %v3772
  %v3784 = vadd.f32 %v3737, %v3774
  %v3785 = vadd.f32 %v3738, %v3776
  %v3786 = vadd.f32 %v3739, %v3778
  %v3787 = vld [vmem:[%s3 + $0x27] sm:$0x1]
  %v3788 = vlaneseq
  %v3789 = vshrl.u32 %v3788, 7
  %v3790 = vsub.s32 0, %v3789
  %v3791 = vrot.slane %v3787, %v3790
  %3793 = vrot.lane.b32.xlu0 %v3791, 10
  %v3794 = vpop.permute.xlu0 %3793
  %v3796 = vmul.f32 %v2190, %v3794
  %v3797 = vmul.f32 %v2191, %v3794
  %v3798 = vmul.f32 %v2192, %v3794
  %v3799 = vmul.f32 %v2193, %v3794
  %v3800 = vmul.f32 %v2194, %v3794
  %v3801 = vmul.f32 %v2195, %v3794
  %v3808 = vrot.slane %v3796, 2
  %v3809 = vrot.slane %v3797, 2
  %v3810 = vsel %vm1242, %v3808, %v3809
  %v3811 = vrot.slane %v3798, 2
  %v3812 = vsel %vm1242, %v3809, %v3811
  %v3813 = vrot.slane %v3799, 2
  %v3814 = vrot.slane %v3800, 2
  %v3815 = vsel %vm1242, %v3813, %v3814
  %v3816 = vrot.slane %v3801, 2
  %v3817 = vsel %vm1242, %v3814, %v3816
  %3818 = vrot.lane.b32.xlu0 %v3810, 119
  %v3819 = vpop.permute.xlu0 %3818
  %3820 = vrot.lane.b32.xlu0 %v3812, 119
  %v3821 = vpop.permute.xlu0 %3820
  %3822 = vrot.lane.b32.xlu0 %v3815, 119
  %v3823 = vpop.permute.xlu0 %3822
  %3824 = vrot.lane.b32.xlu0 %v3817, 119
  %v3825 = vpop.permute.xlu0 %3824
  %v3830 = vadd.f32 %v3783, %v3819
  %v3831 = vadd.f32 %v3784, %v3821
  %v3832 = vadd.f32 %v3785, %v3823
  %v3833 = vadd.f32 %v3786, %v3825
  %v3834 = vld [vmem:[%s3 + $0x28] sm:$0x1]
  %v3835 = vlaneseq
  %v3836 = vshrl.u32 %v3835, 7
  %v3837 = vsub.s32 0, %v3836
  %v3838 = vrot.slane %v3834, %v3837
  %3840 = vrot.lane.b32.xlu0 %v3838, 11
  %v3841 = vpop.permute.xlu0 %3840
  %v3843 = vmul.f32 %v2190, %v3841
  %v3844 = vmul.f32 %v2191, %v3841
  %v3845 = vmul.f32 %v2192, %v3841
  %v3846 = vmul.f32 %v2193, %v3841
  %v3847 = vmul.f32 %v2194, %v3841
  %v3848 = vmul.f32 %v2195, %v3841
  %v3855 = vrot.slane %v3843, 2
  %v3856 = vrot.slane %v3844, 2
  %v3857 = vsel %vm1242, %v3855, %v3856
  %v3858 = vrot.slane %v3845, 2
  %v3859 = vsel %vm1242, %v3856, %v3858
  %v3860 = vrot.slane %v3846, 2
  %v3861 = vrot.slane %v3847, 2
  %v3862 = vsel %vm1242, %v3860, %v3861
  %v3863 = vrot.slane %v3848, 2
  %v3864 = vsel %vm1242, %v3861, %v3863
  %3865 = vrot.lane.b32.xlu0 %v3857, 118
  %v3866 = vpop.permute.xlu0 %3865
  %3867 = vrot.lane.b32.xlu0 %v3859, 118
  %v3868 = vpop.permute.xlu0 %3867
  %3869 = vrot.lane.b32.xlu0 %v3862, 118
  %v3870 = vpop.permute.xlu0 %3869
  %3871 = vrot.lane.b32.xlu0 %v3864, 118
  %v3872 = vpop.permute.xlu0 %3871
  %v3877 = vadd.f32 %v3830, %v3866
  %v3878 = vadd.f32 %v3831, %v3868
  %v3879 = vadd.f32 %v3832, %v3870
  %v3880 = vadd.f32 %v3833, %v3872
  %v3881 = vld [vmem:[%s3 + $0x29] sm:$0x1]
  %v3882 = vlaneseq
  %v3883 = vshrl.u32 %v3882, 7
  %v3884 = vsub.s32 0, %v3883
  %v3885 = vrot.slane %v3881, %v3884
  %3887 = vrot.lane.b32.xlu0 %v3885, 12
  %v3888 = vpop.permute.xlu0 %3887
  %v3890 = vmul.f32 %v2190, %v3888
  %v3891 = vmul.f32 %v2191, %v3888
  %v3892 = vmul.f32 %v2192, %v3888
  %v3893 = vmul.f32 %v2193, %v3888
  %v3894 = vmul.f32 %v2194, %v3888
  %v3895 = vmul.f32 %v2195, %v3888
  %v3902 = vrot.slane %v3890, 2
  %v3903 = vrot.slane %v3891, 2
  %v3904 = vsel %vm1242, %v3902, %v3903
  %v3905 = vrot.slane %v3892, 2
  %v3906 = vsel %vm1242, %v3903, %v3905
  %v3907 = vrot.slane %v3893, 2
  %v3908 = vrot.slane %v3894, 2
  %v3909 = vsel %vm1242, %v3907, %v3908
  %v3910 = vrot.slane %v3895, 2
  %v3911 = vsel %vm1242, %v3908, %v3910
  %3912 = vrot.lane.b32.xlu0 %v3904, 117
  %v3913 = vpop.permute.xlu0 %3912
  %3914 = vrot.lane.b32.xlu0 %v3906, 117
  %v3915 = vpop.permute.xlu0 %3914
  %3916 = vrot.lane.b32.xlu0 %v3909, 117
  %v3917 = vpop.permute.xlu0 %3916
  %3918 = vrot.lane.b32.xlu0 %v3911, 117
  %v3919 = vpop.permute.xlu0 %3918
  %v3924 = vadd.f32 %v3877, %v3913
  %v3925 = vadd.f32 %v3878, %v3915
  %v3926 = vadd.f32 %v3879, %v3917
  %v3927 = vadd.f32 %v3880, %v3919
  %v3928 = vld [vmem:[%s3 + $0x2a] sm:$0x1]
  %v3929 = vlaneseq
  %v3930 = vshrl.u32 %v3929, 7
  %v3931 = vsub.s32 0, %v3930
  %v3932 = vrot.slane %v3928, %v3931
  %3934 = vrot.lane.b32.xlu0 %v3932, 13
  %v3935 = vpop.permute.xlu0 %3934
  %v3937 = vmul.f32 %v2190, %v3935
  %v3938 = vmul.f32 %v2191, %v3935
  %v3939 = vmul.f32 %v2192, %v3935
  %v3940 = vmul.f32 %v2193, %v3935
  %v3941 = vmul.f32 %v2194, %v3935
  %v3942 = vmul.f32 %v2195, %v3935
  %v3949 = vrot.slane %v3937, 2
  %v3950 = vrot.slane %v3938, 2
  %v3951 = vsel %vm1242, %v3949, %v3950
  %v3952 = vrot.slane %v3939, 2
  %v3953 = vsel %vm1242, %v3950, %v3952
  %v3954 = vrot.slane %v3940, 2
  %v3955 = vrot.slane %v3941, 2
  %v3956 = vsel %vm1242, %v3954, %v3955
  %v3957 = vrot.slane %v3942, 2
  %v3958 = vsel %vm1242, %v3955, %v3957
  %3959 = vrot.lane.b32.xlu0 %v3951, 116
  %v3960 = vpop.permute.xlu0 %3959
  %3961 = vrot.lane.b32.xlu0 %v3953, 116
  %v3962 = vpop.permute.xlu0 %3961
  %3963 = vrot.lane.b32.xlu0 %v3956, 116
  %v3964 = vpop.permute.xlu0 %3963
  %3965 = vrot.lane.b32.xlu0 %v3958, 116
  %v3966 = vpop.permute.xlu0 %3965
  %v3971 = vadd.f32 %v3924, %v3960
  %v3972 = vadd.f32 %v3925, %v3962
  %v3973 = vadd.f32 %v3926, %v3964
  %v3974 = vadd.f32 %v3927, %v3966
  %v3975 = vld [vmem:[%s3 + $0x2b] sm:$0x1]
  %v3976 = vlaneseq
  %v3977 = vshrl.u32 %v3976, 7
  %v3978 = vsub.s32 0, %v3977
  %v3979 = vrot.slane %v3975, %v3978
  %3981 = vrot.lane.b32.xlu0 %v3979, 14
  %v3982 = vpop.permute.xlu0 %3981
  %v3984 = vmul.f32 %v2190, %v3982
  %v3985 = vmul.f32 %v2191, %v3982
  %v3986 = vmul.f32 %v2192, %v3982
  %v3987 = vmul.f32 %v2193, %v3982
  %v3988 = vmul.f32 %v2194, %v3982
  %v3989 = vmul.f32 %v2195, %v3982
  %v3996 = vrot.slane %v3984, 2
  %v3997 = vrot.slane %v3985, 2
  %v3998 = vsel %vm1242, %v3996, %v3997
  %v3999 = vrot.slane %v3986, 2
  %v4000 = vsel %vm1242, %v3997, %v3999
  %v4001 = vrot.slane %v3987, 2
  %v4002 = vrot.slane %v3988, 2
  %v4003 = vsel %vm1242, %v4001, %v4002
  %v4004 = vrot.slane %v3989, 2
  %v4005 = vsel %vm1242, %v4002, %v4004
  %4006 = vrot.lane.b32.xlu0 %v3998, 115
  %v4007 = vpop.permute.xlu0 %4006
  %4008 = vrot.lane.b32.xlu0 %v4000, 115
  %v4009 = vpop.permute.xlu0 %4008
  %4010 = vrot.lane.b32.xlu0 %v4003, 115
  %v4011 = vpop.permute.xlu0 %4010
  %4012 = vrot.lane.b32.xlu0 %v4005, 115
  %v4013 = vpop.permute.xlu0 %4012
  %v4018 = vadd.f32 %v3971, %v4007
  %v4019 = vadd.f32 %v3972, %v4009
  %v4020 = vadd.f32 %v3973, %v4011
  %v4021 = vadd.f32 %v3974, %v4013
  %v4022 = vld [vmem:[%s3 + $0x2c] sm:$0x1]
  %v4023 = vlaneseq
  %v4024 = vshrl.u32 %v4023, 7
  %v4025 = vsub.s32 0, %v4024
  %v4026 = vrot.slane %v4022, %v4025
  %4028 = vrot.lane.b32.xlu0 %v4026, 15
  %v4029 = vpop.permute.xlu0 %4028
  %v4031 = vmul.f32 %v2190, %v4029
  %v4032 = vmul.f32 %v2191, %v4029
  %v4033 = vmul.f32 %v2192, %v4029
  %v4034 = vmul.f32 %v2193, %v4029
  %v4035 = vmul.f32 %v2194, %v4029
  %v4036 = vmul.f32 %v2195, %v4029
  %v4043 = vrot.slane %v4031, 2
  %v4044 = vrot.slane %v4032, 2
  %v4045 = vsel %vm1242, %v4043, %v4044
  %v4046 = vrot.slane %v4033, 2
  %v4047 = vsel %vm1242, %v4044, %v4046
  %v4048 = vrot.slane %v4034, 2
  %v4049 = vrot.slane %v4035, 2
  %v4050 = vsel %vm1242, %v4048, %v4049
  %v4051 = vrot.slane %v4036, 2
  %v4052 = vsel %vm1242, %v4049, %v4051
  %4053 = vrot.lane.b32.xlu0 %v4045, 114
  %v4054 = vpop.permute.xlu0 %4053
  %4055 = vrot.lane.b32.xlu0 %v4047, 114
  %v4056 = vpop.permute.xlu0 %4055
  %4057 = vrot.lane.b32.xlu0 %v4050, 114
  %v4058 = vpop.permute.xlu0 %4057
  %4059 = vrot.lane.b32.xlu0 %v4052, 114
  %v4060 = vpop.permute.xlu0 %4059
  %v4065 = vadd.f32 %v4018, %v4054
  %v4066 = vadd.f32 %v4019, %v4056
  %v4067 = vadd.f32 %v4020, %v4058
  %v4068 = vadd.f32 %v4021, %v4060
  %v4069 = vld [vmem:[%s8] sm:$0x1]
  %v4071 = vlaneseq
  %v4072 = vshrl.u32 %v4071, 7
  %v4073 = vsub.s32 0, %v4072
  %v4074 = vrot.slane %v4069, %v4073
  %4075 = vrot.lane.b32.xlu0 %v4074, 1
  %v4076 = vpop.permute.xlu0 %4075
  %v4078 = vadd.f32 %v4065, %v4076
  %v4079 = vadd.f32 %v4066, %v4076
  %v4080 = vadd.f32 %v4067, %v4076
  %v4081 = vadd.f32 %v4068, %v4076
  %v4082 = vsel %vm1932, %v4078, 0.0
  %v4083 = vsel %vm1932, %v4079, 0.0
  %v4084 = vadd.f32 %v4082, %v4083
  %v4085 = vsel %vm1932, %v4080, 0.0
  %v4086 = vadd.f32 %v4084, %v4085
  %v4087 = vsel %vm1932, %v4081, 0.0
  %v4088 = vadd.f32 %v4086, %v4087
  %v4089 = vrot.slane %v4088, 4
  %v4090 = vadd.f32 %v4088, %v4089
  %v4091 = vrot.slane %v4090, 2
  %v4092 = vadd.f32 %v4090, %v4091
  %v4093 = vrot.slane %v4092, 1
  %v4094 = vadd.f32 %v4092, %v4093
  %v4095 = vmul.f32 %v4078, %v4078
  %v4096 = vmul.f32 %v4079, %v4079
  %v4097 = vmul.f32 %v4080, %v4080
  %v4098 = vmul.f32 %v4081, %v4081
  %v4099 = vsel %vm1932, %v4095, 0.0
  %v4100 = vsel %vm1932, %v4096, 0.0
  %v4101 = vadd.f32 %v4099, %v4100
  %v4102 = vsel %vm1932, %v4097, 0.0
  %v4103 = vadd.f32 %v4101, %v4102
  %v4104 = vsel %vm1932, %v4098, 0.0
  %v4105 = vadd.f32 %v4103, %v4104
  %v4106 = vrot.slane %v4105, 4
  %v4107 = vadd.f32 %v4105, %v4106
  %v4108 = vrot.slane %v4107, 2
  %v4109 = vadd.f32 %v4107, %v4108
  %v4110 = vrot.slane %v4109, 1
  %v4111 = vadd.f32 %v4109, %v4110
  %v4112 = vld [vmem:[%s4] sm:$0xff]
  %v4113 = vld [vmem:[%s4 + $0x8] sm:$0xff]
  %v4114 = vld [vmem:[%s4 + $0x10] sm:$0xff]
  %v4115 = vld [vmem:[%s4 + $0x18] sm:$0xff]
  %v4116 = vld [vmem:[%s4 + $0x20] sm:$0xff]
  %v4117 = vld [vmem:[%s4 + $0x28] sm:$0xff]
  %v4118 = vld [vmem:[%s4 + $0x30] sm:$0xff]
  %v4119 = vld [vmem:[%s4 + $0x38] sm:$0xff]
  %4121 = vrot.lane.b32.xlu0 %v4094, 127
  %v4122 = vpop.permute.xlu0 %4121
  %v4123 = vsel %vm1974, %v4122, 0
  %4125 = vmatprep.subr.mxu0 0.0
  %4126 = vmatpush1.msra.mxu0 %v4112
  %4127 = vmatprep.subr.mxu0 0.0
  %4128 = vmatpush1.msra.mxu0 %v4113
  %4129 = vmatprep.subr.mxu0 0.0
  %4130 = vmatpush1.msra.mxu0 %v4114
  %4131 = vmatprep.subr.mxu0 0.0
  %4132 = vmatpush1.msra.mxu0 %v4115
  %4133 = vmatprep.subr.mxu0 0.0
  %4134 = vmatpush1.msra.mxu0 %v4116
  %4135 = vmatprep.subr.mxu0 0.0
  %4136 = vmatpush1.msra.mxu0 %v4117
  %4137 = vmatprep.subr.mxu0 0.0
  %4138 = vmatpush1.msra.mxu0 %v4118
  %4139 = vmatprep.subr.mxu0 0.0
  %4140 = vmatpush1.msra.mxu0 %v4119
  %4141 = vmatprep.subr.mxu0 0.0
  %4142 = vmatpush1.msra.mxu0 0.0
  %4143 = vmatprep.subr.mxu0 0.0
  %4144 = vmatpush1.msra.mxu0 0.0
  %4145 = vmatprep.subr.mxu0 0.0
  %4146 = vmatpush1.msra.mxu0 0.0
  %4147 = vmatprep.subr.mxu0 0.0
  %4148 = vmatpush1.msra.mxu0 0.0
  %4149 = vmatprep.subr.mxu0 0.0
  %4150 = vmatpush1.msra.mxu0 0.0
  %4151 = vmatprep.subr.mxu0 0.0
  %4152 = vmatpush1.msra.mxu0 0.0
  %4153 = vmatprep.subr.mxu0 0.0
  %4154 = vmatpush1.msra.mxu0 0.0
  %4155 = vmatprep.subr.mxu0 0.0
  %4156 = vmatpush1.msra.mxu0 0.0
  %4157 = vmatprep.subr.mxu0 0.0
  %4158 = vmatpush1.msra.mxu0 0.0
  %4159 = vmatprep.subr.mxu0 0.0
  %4160 = vmatpush1.msra.mxu0 0.0
  %4161 = vmatprep.subr.mxu0 0.0
  %4162 = vmatpush1.msra.mxu0 0.0
  %4163 = vmatprep.subr.mxu0 0.0
  %4164 = vmatpush1.msra.mxu0 0.0
  %4165 = vmatprep.subr.mxu0 0.0
  %4166 = vmatpush1.msra.mxu0 0.0
  %4167 = vmatprep.subr.mxu0 0.0
  %4168 = vmatpush1.msra.mxu0 0.0
  %4169 = vmatprep.subr.mxu0 0.0
  %4170 = vmatpush1.msra.mxu0 0.0
  %4171 = vmatprep.subr.mxu0 0.0
  %4172 = vmatpush1.msra.mxu0 0.0
  %4173 = vmatprep.subr.mxu0 0.0
  %4174 = vmatpush1.msra.mxu0 0.0
  %4175 = vmatprep.subr.mxu0 0.0
  %4176 = vmatpush1.msra.mxu0 0.0
  %4177 = vmatprep.subr.mxu0 0.0
  %4178 = vmatpush1.msra.mxu0 0.0
  %4179 = vmatprep.subr.mxu0 0.0
  %4180 = vmatpush1.msra.mxu0 0.0
  %4181 = vmatprep.subr.mxu0 0.0
  %4182 = vmatpush1.msra.mxu0 0.0
  %4183 = vmatprep.subr.mxu0 0.0
  %4184 = vmatpush1.msra.mxu0 0.0
  %4185 = vmatprep.subr.mxu0 0.0
  %4186 = vmatpush1.msra.mxu0 0.0
  %4187 = vmatprep.subr.mxu0 0.0
  %4188 = vmatpush1.msra.mxu0 0.0
  %4189 = vmatprep.mubr.f32.mxu0 0.0
  %4190 = vmatmul.mubr.f32.gmra.mrb[0].mxu0 %v4123
  %v4191 = vpop.f32.mrb[0].mxu0
  %v4192 = vadd.f32 0.0, %v4191
  %v4193 = vpop.f32.mrb[0].mxu0
  %4194 = vdwg.mxu0
  %v4195 = vmul.f32 %v4192, 0.001953125
  %4197 = vrot.lane.b32.xlu0 %v4111, 127
  %v4198 = vpop.permute.xlu0 %4197
  %v4199 = vsel %vm1974, %v4198, 0
  %4201 = vmatprep.subr.mxu0 0.0
  %4202 = vmatpush1.msra.mxu0 %v4112
  %4203 = vmatprep.subr.mxu0 0.0
  %4204 = vmatpush1.msra.mxu0 %v4113
  %4205 = vmatprep.subr.mxu0 0.0
  %4206 = vmatpush1.msra.mxu0 %v4114
  %4207 = vmatprep.subr.mxu0 0.0
  %4208 = vmatpush1.msra.mxu0 %v4115
  %4209 = vmatprep.subr.mxu0 0.0
  %4210 = vmatpush1.msra.mxu0 %v4116
  %4211 = vmatprep.subr.mxu0 0.0
  %4212 = vmatpush1.msra.mxu0 %v4117
  %4213 = vmatprep.subr.mxu0 0.0
  %4214 = vmatpush1.msra.mxu0 %v4118
  %4215 = vmatprep.subr.mxu0 0.0
  %4216 = vmatpush1.msra.mxu0 %v4119
  %4217 = vmatprep.subr.mxu0 0.0
  %4218 = vmatpush1.msra.mxu0 0.0
  %4219 = vmatprep.subr.mxu0 0.0
  %4220 = vmatpush1.msra.mxu0 0.0
  %4221 = vmatprep.subr.mxu0 0.0
  %4222 = vmatpush1.msra.mxu0 0.0
  %4223 = vmatprep.subr.mxu0 0.0
  %4224 = vmatpush1.msra.mxu0 0.0
  %4225 = vmatprep.subr.mxu0 0.0
  %4226 = vmatpush1.msra.mxu0 0.0
  %4227 = vmatprep.subr.mxu0 0.0
  %4228 = vmatpush1.msra.mxu0 0.0
  %4229 = vmatprep.subr.mxu0 0.0
  %4230 = vmatpush1.msra.mxu0 0.0
  %4231 = vmatprep.subr.mxu0 0.0
  %4232 = vmatpush1.msra.mxu0 0.0
  %4233 = vmatprep.subr.mxu0 0.0
  %4234 = vmatpush1.msra.mxu0 0.0
  %4235 = vmatprep.subr.mxu0 0.0
  %4236 = vmatpush1.msra.mxu0 0.0
  %4237 = vmatprep.subr.mxu0 0.0
  %4238 = vmatpush1.msra.mxu0 0.0
  %4239 = vmatprep.subr.mxu0 0.0
  %4240 = vmatpush1.msra.mxu0 0.0
  %4241 = vmatprep.subr.mxu0 0.0
  %4242 = vmatpush1.msra.mxu0 0.0
  %4243 = vmatprep.subr.mxu0 0.0
  %4244 = vmatpush1.msra.mxu0 0.0
  %4245 = vmatprep.subr.mxu0 0.0
  %4246 = vmatpush1.msra.mxu0 0.0
  %4247 = vmatprep.subr.mxu0 0.0
  %4248 = vmatpush1.msra.mxu0 0.0
  %4249 = vmatprep.subr.mxu0 0.0
  %4250 = vmatpush1.msra.mxu0 0.0
  %4251 = vmatprep.subr.mxu0 0.0
  %4252 = vmatpush1.msra.mxu0 0.0
  %4253 = vmatprep.subr.mxu0 0.0
  %4254 = vmatpush1.msra.mxu0 0.0
  %4255 = vmatprep.subr.mxu0 0.0
  %4256 = vmatpush1.msra.mxu0 0.0
  %4257 = vmatprep.subr.mxu0 0.0
  %4258 = vmatpush1.msra.mxu0 0.0
  %4259 = vmatprep.subr.mxu0 0.0
  %4260 = vmatpush1.msra.mxu0 0.0
  %4261 = vmatprep.subr.mxu0 0.0
  %4262 = vmatpush1.msra.mxu0 0.0
  %4263 = vmatprep.subr.mxu0 0.0
  %4264 = vmatpush1.msra.mxu0 0.0
  %4265 = vmatprep.mubr.f32.mxu0 0.0
  %4266 = vmatmul.mubr.f32.gmra.mrb[0].mxu0 %v4199
  %v4267 = vpop.f32.mrb[0].mxu0
  %v4268 = vadd.f32 0.0, %v4267
  %v4269 = vpop.f32.mrb[0].mxu0
  %4270 = vdwg.mxu0
  %v4271 = vmul.f32 %v4268, 0.001953125
  %v4272 = vmul.f32 %v4195, %v4195
  %v4273 = vsub.f32 %v4271, %v4272
  %v4274 = vld [vmem:[%s9] sm:$0x1]
  %v4275 = vadd.f32 %v4273, 1e-05
  %v4276 = vrsqrt.pop %v4275
  %v4277 = vmul.f32 %v4274, %v4276
  %v4278 = vld [vmem:[%s10] sm:$0x1]
  %v4279 = vmul.f32 %v4195, %v4277
  %v4280 = vsub.f32 %v4278, %v4279
  %v4282 = vlaneseq
  %v4283 = vshrl.u32 %v4282, 7
  %v4284 = vsub.s32 0, %v4283
  %v4285 = vrot.slane %v4277, %v4284
  %4286 = vrot.lane.b32.xlu0 %v4285, 1
  %v4287 = vpop.permute.xlu0 %4286
  %v4289 = vmul.f32 %v4078, %v4287
  %v4290 = vmul.f32 %v4079, %v4287
  %v4291 = vmul.f32 %v4080, %v4287
  %v4292 = vmul.f32 %v4081, %v4287
  %v4294 = vlaneseq
  %v4295 = vshrl.u32 %v4294, 7
  %v4296 = vsub.s32 0, %v4295
  %v4297 = vrot.slane %v4280, %v4296
  %4298 = vrot.lane.b32.xlu0 %v4297, 1
  %v4299 = vpop.permute.xlu0 %4298
  %v4301 = vadd.f32 %v4289, %v4299
  %v4302 = vadd.f32 %v4290, %v4299
  %v4303 = vadd.f32 %v4291, %v4299
  %v4304 = vadd.f32 %v4292, %v4299
  %v4305 = vld [vmem:[%s1] sm:$0xff]
  %v4306 = vld [vmem:[%s1 + $0x8] sm:$0xff]
  %v4307 = vld [vmem:[%s1 + $0x10] sm:$0xff]
  %v4308 = vld [vmem:[%s1 + $0x18] sm:$0xff]
  %4313 = vrot.lane.b32.xlu0 %v4305, 1
  %v4314 = vpop.permute.xlu0 %4313
  %4315 = vrot.lane.b32.xlu0 %v4306, 1
  %v4316 = vpop.permute.xlu0 %4315
  %4317 = vrot.lane.b32.xlu0 %v4307, 1
  %v4318 = vpop.permute.xlu0 %4317
  %4319 = vrot.lane.b32.xlu0 %v4308, 1
  %v4320 = vpop.permute.xlu0 %4319
  %v4325 = vadd.f32 %v4301, %v4314
  %v4326 = vadd.f32 %v4302, %v4316
  %v4327 = vadd.f32 %v4303, %v4318
  %v4328 = vadd.f32 %v4304, %v4320
  %4333 = vrot.lane.b32.xlu0 %v4325, 127
  %v4334 = vpop.permute.xlu0 %4333
  %4335 = vrot.lane.b32.xlu0 %v4326, 127
  %v4336 = vpop.permute.xlu0 %4335
  %4337 = vrot.lane.b32.xlu0 %v4327, 127
  %v4338 = vpop.permute.xlu0 %4337
  %4339 = vrot.lane.b32.xlu0 %v4328, 127
  %v4340 = vpop.permute.xlu0 %4339
  %4345 = vst.msk [vmem:[%s11] sm:$0xff] %vm1974, %v4334
  %4346 = vst.msk [vmem:[%s11 + $0x8] sm:$0xff] %vm1974, %v4336
  %4347 = vst.msk [vmem:[%s11 + $0x10] sm:$0xff] %vm1974, %v4338
  %4348 = vst.msk [vmem:[%s11 + $0x18] sm:$0xff] %vm1974, %v4340
  // Predicated region
  $region46: #{residual_block.1} parent=0 // pred_check
    _
  $region47: #{residual_block.1} parent=0 // pred_check_branch
    %4350 = sbr.rel (0) target = $region49
  $region48: #{residual_block.1} parent=0 // pred_region
    _
  $region49: #{residual_block.1} parent=0 // pred_fallthru
    _
  // Predicated region
  $region50: #{residual_block.1} parent=0 // pred_check
    _
  $region51: #{residual_block.1} parent=0 // pred_check_branch
    %4352 = sbr.rel (0) target = $region53
  $region52: #{residual_block.1} parent=0 // pred_region
    _
  $region53: #{residual_block.1} parent=0 // pred_fallthru
    _

</llo_original>
